<compile_context>
chip_gen: v7x
topology: tpu7x:2x2x1
jax: 0.10.0
libtpu: 0.0.40
codegen_flags: <defaults>
</compile_context>

<pallas_src>
import functools

import numpy as np
import jax
import jax.numpy as jnp
from jax.experimental import pallas as pl
from jax.experimental.pallas import tpu as pltpu

EPS = 1e-5          # PyTorch BatchNorm2d default
LANES = 128         # TPU lane width; all channel dims are padded to this


# ----------------------------- Pallas kernel --------------------------------
def _bn_act(y, gamma, beta, relu):
    """Training-mode BatchNorm on a conv output y:(rows, Cp), f32 math.

    Per-channel scale/shift so normalization is one FMA per element.  Padded
    channels have gamma == 0 and zero inputs, so they stay exactly zero.
    """
    mean = jnp.mean(y, axis=0, keepdims=True)                  # (1, Cp)
    msq = jnp.mean(y * y, axis=0, keepdims=True)               # (1, Cp)
    var = jnp.maximum(msq - mean * mean, 0.0)                  # biased variance
    scale = gamma * jax.lax.rsqrt(var + EPS)                   # (1, Cp), EUP
    shift = beta - mean * scale
    y = y * scale + shift
    return jnp.maximum(y, 0.0) if relu else y


def _bottleneck_kernel(x_ref, w1_ref, w2_ref, sel_ref, w3_ref, ws_ref, bn_ref,
                       o_ref, *, has_proj, stride_one):
    f32 = jnp.float32
    bf16 = jnp.bfloat16

    bn = bn_ref[...]                                           # (8, LANES) f32
    x = x_ref[...]                                             # (M, Cp) bf16
    mo, cp = o_ref.shape

    # conv1 (1x1) + bn1 + relu ------------------------------------------------
    y1 = jnp.dot(x, w1_ref[...], preferred_element_type=f32)   # (M, Cp) f32
    o1 = _bn_act(y1, bn[0:1, :], bn[1:2, :], relu=True).astype(bf16)

    # conv2 (3x3, stride, pad=1) + bn2 + relu ----------------------------------
    # In-VMEM im2col: one stacked gather matmul (all 9 taps at once); selector
    # entries are 0/1 so the bf16 round-trip of the gathered rows is exact.
    gall = jnp.dot(sel_ref[...], o1,
                   preferred_element_type=f32).astype(bf16)    # (9*Mo, Cp)
    acc = jnp.zeros((mo, cp), f32)
    for t in range(9):
        acc = acc + jnp.dot(gall[t * mo:(t + 1) * mo, :], w2_ref[t],
                            preferred_element_type=f32)
    o2 = _bn_act(acc, bn[2:3, :], bn[3:4, :], relu=True).astype(bf16)

    # conv3 (1x1) + bn3 --------------------------------------------------------
    y3 = jnp.dot(o2, w3_ref[...], preferred_element_type=f32)
    o3 = _bn_act(y3, bn[4:5, :], bn[5:6, :], relu=False)

    # shortcut: centre-tap selector rows == stride subsample of the input ------
    if stride_one:
        xs = x                                                  # identity gather
    else:
        xs = jnp.dot(sel_ref[4 * mo:5 * mo, :], x,
                     preferred_element_type=f32).astype(bf16)   # (Mo, Cp)
    if has_proj:
        ysc = jnp.dot(xs, ws_ref[...], preferred_element_type=f32)
        sc = _bn_act(ysc, bn[6:7, :], bn[7:8, :], relu=False)
    else:
        sc = xs.astype(f32)

    # residual add + final relu; single lane-dense HBM store -------------------
    o_ref[...] = jnp.maximum(o3 + sc, 0.0).astype(o_ref.dtype)


def _fused_bottleneck(x_flat, w1, w2, sels, w3, ws, bn, mo, has_proj, stride_one):
    kernel = functools.partial(_bottleneck_kernel, has_proj=has_proj,
                               stride_one=stride_one)
    vmem = pl.BlockSpec(memory_space=pltpu.MemorySpace.VMEM)
    return pl.pallas_call(
        kernel,
        out_shape=jax.ShapeDtypeStruct((mo, LANES), jnp.float32),
        in_specs=[vmem] * 7,
        out_specs=vmem,
    )(x_flat, w1, w2, sels, w3, ws, bn)


# ------------------------------ JAX glue -------------------------------------
def _pad_last(a, n=LANES):
    pad = [(0, 0)] * a.ndim
    pad[-1] = (0, n - a.shape[-1])
    return jnp.pad(a, pad)


def _pad_last2(a, n=LANES):
    pad = [(0, 0)] * (a.ndim - 2) + [(0, n - a.shape[-2]), (0, n - a.shape[-1])]
    return jnp.pad(a, pad)


def _build_tap_selectors(N, H, W, stride):
    """Static 0/1 matrices: sel[t] @ flat_NHWC gathers tap t=(di*3+dj) of a
    3x3 conv with padding=1 and the given stride (zero rows for OOB taps)."""
    Ho = (H - 1) // stride + 1
    Wo = (W - 1) // stride + 1
    M, Mo = N * H * W, N * Ho * Wo
    nn, hh, ww = np.indices((N, Ho, Wo))
    rows = (nn * Ho * Wo + hh * Wo + ww).ravel()
    sels = np.zeros((9, Mo, M), np.float32)
    for di in range(3):
        for dj in range(3):
            hi = (stride * hh + di - 1).ravel()
            wi = (stride * ww + dj - 1).ravel()
            ok = (hi >= 0) & (hi < H) & (wi >= 0) & (wi < W)
            cols = nn.ravel() * H * W + hi * W + wi
            sels[di * 3 + dj, rows[ok], cols[ok]] = 1.0
    return sels, Ho, Wo


def init_bottleneck_params(key, in_planes, planes, stride, expansion=4):
    out_planes = expansion * planes
    ks = jax.random.split(key, 12)
    p = {
        "w1": 0.2 * jax.random.normal(ks[0], (planes, in_planes, 1, 1), jnp.float32),
        "g1": 1.0 + 0.1 * jax.random.normal(ks[1], (planes,), jnp.float32),
        "b1": 0.1 * jax.random.normal(ks[2], (planes,), jnp.float32),
        "w2": 0.2 * jax.random.normal(ks[3], (planes, planes, 3, 3), jnp.float32),
        "g2": 1.0 + 0.1 * jax.random.normal(ks[4], (planes,), jnp.float32),
        "b2": 0.1 * jax.random.normal(ks[5], (planes,), jnp.float32),
        "w3": 0.2 * jax.random.normal(ks[6], (out_planes, planes, 1, 1), jnp.float32),
        "g3": 1.0 + 0.1 * jax.random.normal(ks[7], (out_planes,), jnp.float32),
        "b3": 0.1 * jax.random.normal(ks[8], (out_planes,), jnp.float32),
    }
    if stride != 1 or in_planes != out_planes:
        p["ws"] = 0.2 * jax.random.normal(ks[9], (out_planes, in_planes, 1, 1), jnp.float32)
        p["gs"] = 1.0 + 0.1 * jax.random.normal(ks[10], (out_planes,), jnp.float32)
        p["bs"] = 0.1 * jax.random.normal(ks[11], (out_planes,), jnp.float32)
    return p


def bottleneck_forward(x_nchw, params, in_planes, planes, stride, expansion=4):
    out_planes = expansion * planes
    has_proj = (stride != 1) or (in_planes != out_planes)
    N, C, H, W = x_nchw.shape
    x = jnp.transpose(x_nchw, (0, 2, 3, 1)).astype(jnp.float32)     # NCHW -> NHWC
    M = N * H * W

    sels_np, Ho, Wo = _build_tap_selectors(N, H, W, stride)
    Mo = N * Ho * Wo

    bf = jnp.bfloat16
    x_flat = _pad_last(x.reshape(M, C)).astype(bf)                   # (M, 128)
    sels = jnp.asarray(sels_np.reshape(9 * Mo, M), dtype=bf)         # exact in bf16

    w1 = _pad_last2(params["w1"][:, :, 0, 0].T).astype(bf)           # (128, 128)
    w2 = jnp.transpose(params["w2"], (2, 3, 1, 0)).reshape(9, planes, planes)
    w2 = _pad_last2(w2).astype(bf)                                   # (9, 128, 128)
    w3 = _pad_last2(params["w3"][:, :, 0, 0].T).astype(bf)           # (128, 128)
    if has_proj:
        ws = _pad_last2(params["ws"][:, :, 0, 0].T).astype(bf)
    else:
        ws = jnp.zeros((LANES, LANES), bf)

    def row(v):
        return _pad_last(v.reshape(1, -1)).astype(jnp.float32)

    zrow = jnp.zeros((1, LANES), jnp.float32)
    bn = jnp.concatenate([
        row(params["g1"]), row(params["b1"]),
        row(params["g2"]), row(params["b2"]),
        row(params["g3"]), row(params["b3"]),
        row(params["gs"]) if has_proj else zrow,
        row(params["bs"]) if has_proj else zrow,
    ], axis=0)                                                       # (8, 128) f32

    out = _fused_bottleneck(x_flat, w1, w2, sels, w3, ws, bn, Mo,
                            has_proj, stride == 1)
    out = out[:, :out_planes].reshape(N, Ho, Wo, out_planes)
    return jnp.transpose(out, (0, 3, 1, 2))                          # back to NCHW


# ------------------------- pure-JAX f32 reference ----------------------------
def reference_forward(x, params, in_planes, planes, stride, expansion=4):
    def conv(x, w, s=1, p=0):
        return jax.lax.conv_general_dilated(
            x, w, (s, s), [(p, p), (p, p)],
            dimension_numbers=("NCHW", "OIHW", "NCHW"))

    def bn(x, g, b):
        mean = jnp.mean(x, axis=(0, 2, 3), keepdims=True)
        var = jnp.mean((x - mean) ** 2, axis=(0, 2, 3), keepdims=True)
        return ((x - mean) * jax.lax.rsqrt(var + EPS)
                * g.reshape(1, -1, 1, 1) + b.reshape(1, -1, 1, 1))

    out = jax.nn.relu(bn(conv(x, params["w1"]), params["g1"], params["b1"]))
    out = jax.nn.relu(bn(conv(out, params["w2"], stride, 1), params["g2"], params["b2"]))
    out = bn(conv(out, params["w3"]), params["g3"], params["b3"])
    if stride != 1 or in_planes != expansion * planes:
        sc = bn(conv(x, params["ws"], stride), params["gs"], params["bs"])
    else:
        sc = x
    return jax.nn.relu(out + sc)


# ----------------------------------- main -------------------------------------
if __name__ == "__main__":
    key = jax.random.PRNGKey(0)

    # Case 1: stride-2 projection shortcut.
    in_planes, planes, stride = 8, 4, 2
    kx, kp, key = jax.random.split(key, 3)
    x = jax.random.normal(kx, (2, in_planes, 16, 16), dtype=jnp.float32)
    params = init_bottleneck_params(kp, in_planes, planes, stride)
    out = jax.block_until_ready(bottleneck_forward(x, params, in_planes, planes, stride))
    ref = reference_forward(x, params, in_planes, planes, stride)
    assert out.shape == ref.shape == (2, 16, 8, 8), out.shape
    err = float(jnp.max(jnp.abs(out - ref)))
    # Tolerance reflects bf16 MXU operands (f32 accumulation + f32 BatchNorm).
    assert jnp.allclose(out, ref, atol=1e-1, rtol=1e-1), err

    # Case 2: stride-1 identity shortcut (no projection).
    in_planes, planes, stride = 16, 4, 1
    kx, kp, key = jax.random.split(key, 3)
    x = jax.random.normal(kx, (2, in_planes, 16, 16), dtype=jnp.float32)
    params = init_bottleneck_params(kp, in_planes, planes, stride)
    out = jax.block_until_ready(bottleneck_forward(x, params, in_planes, planes, stride))
    ref = reference_forward(x, params, in_planes, planes, stride)
    assert out.shape == ref.shape == (2, 16, 16, 16), out.shape
    err = float(jnp.max(jnp.abs(out - ref)))
    assert jnp.allclose(out, ref, atol=1e-1, rtol=1e-1), err

    print("KERNEL_OK")
</pallas_src>

<mosaic_0001>
module attributes {stable_mosaic.version = 11 : i64} {
  func.func @_bottleneck_kernel(%arg0: memref<512x128xbf16, #tpu.memory_space<vmem>>, %arg1: memref<128x128xbf16, #tpu.memory_space<vmem>>, %arg2: memref<9x128x128xbf16, #tpu.memory_space<vmem>>, %arg3: memref<1152x512xbf16, #tpu.memory_space<vmem>>, %arg4: memref<128x128xbf16, #tpu.memory_space<vmem>>, %arg5: memref<128x128xbf16, #tpu.memory_space<vmem>>, %arg6: memref<8x128xf32, #tpu.memory_space<vmem>>, %arg7: memref<128x128xf32, #tpu.memory_space<vmem>>) attributes {dimension_semantics = [], scalar_prefetch = 0 : i64, scratch_operands = 0 : i64, tpu.core_type = #tpu.core_type<tc>} {
    %c0 = arith.constant 0 : index
    %c0_0 = arith.constant 0 : index
    %0 = vector.load %arg6[%c0, %c0_0] : memref<8x128xf32, #tpu.memory_space<vmem>>, vector<8x128xf32>
    %c0_1 = arith.constant 0 : index
    %c0_2 = arith.constant 0 : index
    %1 = vector.load %arg0[%c0_1, %c0_2] : memref<512x128xbf16, #tpu.memory_space<vmem>>, vector<512x128xbf16>
    %c0_3 = arith.constant 0 : index
    %c0_4 = arith.constant 0 : index
    %2 = vector.load %arg1[%c0_3, %c0_4] : memref<128x128xbf16, #tpu.memory_space<vmem>>, vector<128x128xbf16>
    %cst = arith.constant dense<0.000000e+00> : vector<512x128xf32>
    %3 = tpu.matmul %1, %2, %cst {dimension_numbers = #tpu.dot_dimension_numbers<[1], [0], [0], [1], [0, 0, 1, 1], [], []>} : vector<512x128xbf16>, vector<128x128xbf16>, vector<512x128xf32> -> vector<512x128xf32>
    %4 = vector.extract_strided_slice %0 {offsets = [0, 0], sizes = [1, 128], strides = [1, 1]} : vector<8x128xf32> to vector<1x128xf32>
    %5 = vector.extract_strided_slice %0 {offsets = [1, 0], sizes = [1, 128], strides = [1, 1]} : vector<8x128xf32> to vector<1x128xf32>
    %cst_5 = arith.constant dense<0.000000e+00> : vector<128xf32>
    %6 = vector.multi_reduction <add>, %3, %cst_5 [0] : vector<512x128xf32> to vector<128xf32>
    %7 = vector.shape_cast %6 : vector<128xf32> to vector<1x128xf32>
    %cst_6 = arith.constant 5.120000e+02 : f32
    %8 = vector.broadcast %cst_6 : f32 to vector<1x128xf32>
    %9 = arith.divf %7, %8 : vector<1x128xf32>
    %10 = arith.mulf %3, %3 : vector<512x128xf32>
    %cst_7 = arith.constant dense<0.000000e+00> : vector<128xf32>
    %11 = vector.multi_reduction <add>, %10, %cst_7 [0] : vector<512x128xf32> to vector<128xf32>
    %12 = vector.shape_cast %11 : vector<128xf32> to vector<1x128xf32>
    %cst_8 = arith.constant 5.120000e+02 : f32
    %13 = vector.broadcast %cst_8 : f32 to vector<1x128xf32>
    %14 = arith.divf %12, %13 : vector<1x128xf32>
    %15 = arith.mulf %9, %9 : vector<1x128xf32>
    %16 = arith.subf %14, %15 : vector<1x128xf32>
    %cst_9 = arith.constant 0.000000e+00 : f32
    %17 = vector.broadcast %cst_9 : f32 to vector<1x128xf32>
    %18 = arith.maximumf %16, %17 : vector<1x128xf32>
    %cst_10 = arith.constant 9.99999974E-6 : f32
    %19 = vector.broadcast %cst_10 : f32 to vector<1x128xf32>
    %20 = arith.addf %18, %19 : vector<1x128xf32>
    %21 = math.rsqrt %20 : vector<1x128xf32>
    %22 = arith.mulf %4, %21 : vector<1x128xf32>
    %23 = arith.mulf %9, %22 : vector<1x128xf32>
    %24 = arith.subf %5, %23 : vector<1x128xf32>
    %25 = vector.broadcast %22 : vector<1x128xf32> to vector<512x128xf32>
    %26 = arith.mulf %3, %25 : vector<512x128xf32>
    %27 = vector.broadcast %24 : vector<1x128xf32> to vector<512x128xf32>
    %28 = arith.addf %26, %27 : vector<512x128xf32>
    %cst_11 = arith.constant 0.000000e+00 : f32
    %29 = vector.broadcast %cst_11 : f32 to vector<512x128xf32>
    %30 = arith.maximumf %28, %29 : vector<512x128xf32>
    %31 = arith.truncf %30 : vector<512x128xf32> to vector<512x128xbf16>
    %c0_12 = arith.constant 0 : index
    %c0_13 = arith.constant 0 : index
    %32 = vector.load %arg3[%c0_12, %c0_13] : memref<1152x512xbf16, #tpu.memory_space<vmem>>, vector<1152x512xbf16>
    %cst_14 = arith.constant dense<0.000000e+00> : vector<1152x128xf32>
    %33 = tpu.matmul %32, %31, %cst_14 {dimension_numbers = #tpu.dot_dimension_numbers<[1], [0], [0], [1], [0, 0, 1, 1], [], []>} : vector<1152x512xbf16>, vector<512x128xbf16>, vector<1152x128xf32> -> vector<1152x128xf32>
    %34 = arith.truncf %33 : vector<1152x128xf32> to vector<1152x128xbf16>
    %cst_15 = arith.constant 0.000000e+00 : f32
    %35 = vector.broadcast %cst_15 : f32 to vector<128x128xf32>
    %36 = vector.extract_strided_slice %34 {offsets = [0, 0], sizes = [128, 128], strides = [1, 1]} : vector<1152x128xbf16> to vector<128x128xbf16>
    %c0_16 = arith.constant 0 : index
    %c0_17 = arith.constant 0 : index
    %c0_18 = arith.constant 0 : index
    %37 = vector.load %arg2[%c0_16, %c0_17, %c0_18] : memref<9x128x128xbf16, #tpu.memory_space<vmem>>, vector<1x128x128xbf16>
    %38 = vector.shape_cast %37 : vector<1x128x128xbf16> to vector<128x128xbf16>
    %cst_19 = arith.constant dense<0.000000e+00> : vector<128x128xf32>
    %39 = tpu.matmul %36, %38, %cst_19 {dimension_numbers = #tpu.dot_dimension_numbers<[1], [0], [0], [1], [0, 0, 1, 1], [], []>} : vector<128x128xbf16>, vector<128x128xbf16>, vector<128x128xf32> -> vector<128x128xf32>
    %40 = arith.addf %35, %39 : vector<128x128xf32>
    %41 = vector.extract_strided_slice %34 {offsets = [128, 0], sizes = [128, 128], strides = [1, 1]} : vector<1152x128xbf16> to vector<128x128xbf16>
    %c1 = arith.constant 1 : index
    %c0_20 = arith.constant 0 : index
    %c0_21 = arith.constant 0 : index
    %42 = vector.load %arg2[%c1, %c0_20, %c0_21] : memref<9x128x128xbf16, #tpu.memory_space<vmem>>, vector<1x128x128xbf16>
    %43 = vector.shape_cast %42 : vector<1x128x128xbf16> to vector<128x128xbf16>
    %cst_22 = arith.constant dense<0.000000e+00> : vector<128x128xf32>
    %44 = tpu.matmul %41, %43, %cst_22 {dimension_numbers = #tpu.dot_dimension_numbers<[1], [0], [0], [1], [0, 0, 1, 1], [], []>} : vector<128x128xbf16>, vector<128x128xbf16>, vector<128x128xf32> -> vector<128x128xf32>
    %45 = arith.addf %40, %44 : vector<128x128xf32>
    %46 = vector.extract_strided_slice %34 {offsets = [256, 0], sizes = [128, 128], strides = [1, 1]} : vector<1152x128xbf16> to vector<128x128xbf16>
    %c2 = arith.constant 2 : index
    %c0_23 = arith.constant 0 : index
    %c0_24 = arith.constant 0 : index
    %47 = vector.load %arg2[%c2, %c0_23, %c0_24] : memref<9x128x128xbf16, #tpu.memory_space<vmem>>, vector<1x128x128xbf16>
    %48 = vector.shape_cast %47 : vector<1x128x128xbf16> to vector<128x128xbf16>
    %cst_25 = arith.constant dense<0.000000e+00> : vector<128x128xf32>
    %49 = tpu.matmul %46, %48, %cst_25 {dimension_numbers = #tpu.dot_dimension_numbers<[1], [0], [0], [1], [0, 0, 1, 1], [], []>} : vector<128x128xbf16>, vector<128x128xbf16>, vector<128x128xf32> -> vector<128x128xf32>
    %50 = arith.addf %45, %49 : vector<128x128xf32>
    %51 = vector.extract_strided_slice %34 {offsets = [384, 0], sizes = [128, 128], strides = [1, 1]} : vector<1152x128xbf16> to vector<128x128xbf16>
    %c3 = arith.constant 3 : index
    %c0_26 = arith.constant 0 : index
    %c0_27 = arith.constant 0 : index
    %52 = vector.load %arg2[%c3, %c0_26, %c0_27] : memref<9x128x128xbf16, #tpu.memory_space<vmem>>, vector<1x128x128xbf16>
    %53 = vector.shape_cast %52 : vector<1x128x128xbf16> to vector<128x128xbf16>
    %cst_28 = arith.constant dense<0.000000e+00> : vector<128x128xf32>
    %54 = tpu.matmul %51, %53, %cst_28 {dimension_numbers = #tpu.dot_dimension_numbers<[1], [0], [0], [1], [0, 0, 1, 1], [], []>} : vector<128x128xbf16>, vector<128x128xbf16>, vector<128x128xf32> -> vector<128x128xf32>
    %55 = arith.addf %50, %54 : vector<128x128xf32>
    %56 = vector.extract_strided_slice %34 {offsets = [512, 0], sizes = [128, 128], strides = [1, 1]} : vector<1152x128xbf16> to vector<128x128xbf16>
    %c4 = arith.constant 4 : index
    %c0_29 = arith.constant 0 : index
    %c0_30 = arith.constant 0 : index
    %57 = vector.load %arg2[%c4, %c0_29, %c0_30] : memref<9x128x128xbf16, #tpu.memory_space<vmem>>, vector<1x128x128xbf16>
    %58 = vector.shape_cast %57 : vector<1x128x128xbf16> to vector<128x128xbf16>
    %cst_31 = arith.constant dense<0.000000e+00> : vector<128x128xf32>
    %59 = tpu.matmul %56, %58, %cst_31 {dimension_numbers = #tpu.dot_dimension_numbers<[1], [0], [0], [1], [0, 0, 1, 1], [], []>} : vector<128x128xbf16>, vector<128x128xbf16>, vector<128x128xf32> -> vector<128x128xf32>
    %60 = arith.addf %55, %59 : vector<128x128xf32>
    %61 = vector.extract_strided_slice %34 {offsets = [640, 0], sizes = [128, 128], strides = [1, 1]} : vector<1152x128xbf16> to vector<128x128xbf16>
    %c5 = arith.constant 5 : index
    %c0_32 = arith.constant 0 : index
    %c0_33 = arith.constant 0 : index
    %62 = vector.load %arg2[%c5, %c0_32, %c0_33] : memref<9x128x128xbf16, #tpu.memory_space<vmem>>, vector<1x128x128xbf16>
    %63 = vector.shape_cast %62 : vector<1x128x128xbf16> to vector<128x128xbf16>
    %cst_34 = arith.constant dense<0.000000e+00> : vector<128x128xf32>
    %64 = tpu.matmul %61, %63, %cst_34 {dimension_numbers = #tpu.dot_dimension_numbers<[1], [0], [0], [1], [0, 0, 1, 1], [], []>} : vector<128x128xbf16>, vector<128x128xbf16>, vector<128x128xf32> -> vector<128x128xf32>
    %65 = arith.addf %60, %64 : vector<128x128xf32>
    %66 = vector.extract_strided_slice %34 {offsets = [768, 0], sizes = [128, 128], strides = [1, 1]} : vector<1152x128xbf16> to vector<128x128xbf16>
    %c6 = arith.constant 6 : index
    %c0_35 = arith.constant 0 : index
    %c0_36 = arith.constant 0 : index
    %67 = vector.load %arg2[%c6, %c0_35, %c0_36] : memref<9x128x128xbf16, #tpu.memory_space<vmem>>, vector<1x128x128xbf16>
    %68 = vector.shape_cast %67 : vector<1x128x128xbf16> to vector<128x128xbf16>
    %cst_37 = arith.constant dense<0.000000e+00> : vector<128x128xf32>
    %69 = tpu.matmul %66, %68, %cst_37 {dimension_numbers = #tpu.dot_dimension_numbers<[1], [0], [0], [1], [0, 0, 1, 1], [], []>} : vector<128x128xbf16>, vector<128x128xbf16>, vector<128x128xf32> -> vector<128x128xf32>
    %70 = arith.addf %65, %69 : vector<128x128xf32>
    %71 = vector.extract_strided_slice %34 {offsets = [896, 0], sizes = [128, 128], strides = [1, 1]} : vector<1152x128xbf16> to vector<128x128xbf16>
    %c7 = arith.constant 7 : index
    %c0_38 = arith.constant 0 : index
    %c0_39 = arith.constant 0 : index
    %72 = vector.load %arg2[%c7, %c0_38, %c0_39] : memref<9x128x128xbf16, #tpu.memory_space<vmem>>, vector<1x128x128xbf16>
    %73 = vector.shape_cast %72 : vector<1x128x128xbf16> to vector<128x128xbf16>
    %cst_40 = arith.constant dense<0.000000e+00> : vector<128x128xf32>
    %74 = tpu.matmul %71, %73, %cst_40 {dimension_numbers = #tpu.dot_dimension_numbers<[1], [0], [0], [1], [0, 0, 1, 1], [], []>} : vector<128x128xbf16>, vector<128x128xbf16>, vector<128x128xf32> -> vector<128x128xf32>
    %75 = arith.addf %70, %74 : vector<128x128xf32>
    %76 = vector.extract_strided_slice %34 {offsets = [1024, 0], sizes = [128, 128], strides = [1, 1]} : vector<1152x128xbf16> to vector<128x128xbf16>
    %c8 = arith.constant 8 : index
    %c0_41 = arith.constant 0 : index
    %c0_42 = arith.constant 0 : index
    %77 = vector.load %arg2[%c8, %c0_41, %c0_42] : memref<9x128x128xbf16, #tpu.memory_space<vmem>>, vector<1x128x128xbf16>
    %78 = vector.shape_cast %77 : vector<1x128x128xbf16> to vector<128x128xbf16>
    %cst_43 = arith.constant dense<0.000000e+00> : vector<128x128xf32>
    %79 = tpu.matmul %76, %78, %cst_43 {dimension_numbers = #tpu.dot_dimension_numbers<[1], [0], [0], [1], [0, 0, 1, 1], [], []>} : vector<128x128xbf16>, vector<128x128xbf16>, vector<128x128xf32> -> vector<128x128xf32>
    %80 = arith.addf %75, %79 : vector<128x128xf32>
    %81 = vector.extract_strided_slice %0 {offsets = [2, 0], sizes = [1, 128], strides = [1, 1]} : vector<8x128xf32> to vector<1x128xf32>
    %82 = vector.extract_strided_slice %0 {offsets = [3, 0], sizes = [1, 128], strides = [1, 1]} : vector<8x128xf32> to vector<1x128xf32>
    %cst_44 = arith.constant dense<0.000000e+00> : vector<128xf32>
    %83 = vector.multi_reduction <add>, %80, %cst_44 [0] : vector<128x128xf32> to vector<128xf32>
    %84 = vector.shape_cast %83 : vector<128xf32> to vector<1x128xf32>
    %cst_45 = arith.constant 1.280000e+02 : f32
    %85 = vector.broadcast %cst_45 : f32 to vector<1x128xf32>
    %86 = arith.divf %84, %85 : vector<1x128xf32>
    %87 = arith.mulf %80, %80 : vector<128x128xf32>
    %cst_46 = arith.constant dense<0.000000e+00> : vector<128xf32>
    %88 = vector.multi_reduction <add>, %87, %cst_46 [0] : vector<128x128xf32> to vector<128xf32>
    %89 = vector.shape_cast %88 : vector<128xf32> to vector<1x128xf32>
    %cst_47 = arith.constant 1.280000e+02 : f32
    %90 = vector.broadcast %cst_47 : f32 to vector<1x128xf32>
    %91 = arith.divf %89, %90 : vector<1x128xf32>
    %92 = arith.mulf %86, %86 : vector<1x128xf32>
    %93 = arith.subf %91, %92 : vector<1x128xf32>
    %cst_48 = arith.constant 0.000000e+00 : f32
    %94 = vector.broadcast %cst_48 : f32 to vector<1x128xf32>
    %95 = arith.maximumf %93, %94 : vector<1x128xf32>
    %cst_49 = arith.constant 9.99999974E-6 : f32
    %96 = vector.broadcast %cst_49 : f32 to vector<1x128xf32>
    %97 = arith.addf %95, %96 : vector<1x128xf32>
    %98 = math.rsqrt %97 : vector<1x128xf32>
    %99 = arith.mulf %81, %98 : vector<1x128xf32>
    %100 = arith.mulf %86, %99 : vector<1x128xf32>
    %101 = arith.subf %82, %100 : vector<1x128xf32>
    %102 = vector.broadcast %99 : vector<1x128xf32> to vector<128x128xf32>
    %103 = arith.mulf %80, %102 : vector<128x128xf32>
    %104 = vector.broadcast %101 : vector<1x128xf32> to vector<128x128xf32>
    %105 = arith.addf %103, %104 : vector<128x128xf32>
    %cst_50 = arith.constant 0.000000e+00 : f32
    %106 = vector.broadcast %cst_50 : f32 to vector<128x128xf32>
    %107 = arith.maximumf %105, %106 : vector<128x128xf32>
    %108 = arith.truncf %107 : vector<128x128xf32> to vector<128x128xbf16>
    %c0_51 = arith.constant 0 : index
    %c0_52 = arith.constant 0 : index
    %109 = vector.load %arg4[%c0_51, %c0_52] : memref<128x128xbf16, #tpu.memory_space<vmem>>, vector<128x128xbf16>
    %cst_53 = arith.constant dense<0.000000e+00> : vector<128x128xf32>
    %110 = tpu.matmul %108, %109, %cst_53 {dimension_numbers = #tpu.dot_dimension_numbers<[1], [0], [0], [1], [0, 0, 1, 1], [], []>} : vector<128x128xbf16>, vector<128x128xbf16>, vector<128x128xf32> -> vector<128x128xf32>
    %111 = vector.extract_strided_slice %0 {offsets = [4, 0], sizes = [1, 128], strides = [1, 1]} : vector<8x128xf32> to vector<1x128xf32>
    %112 = vector.extract_strided_slice %0 {offsets = [5, 0], sizes = [1, 128], strides = [1, 1]} : vector<8x128xf32> to vector<1x128xf32>
    %cst_54 = arith.constant dense<0.000000e+00> : vector<128xf32>
    %113 = vector.multi_reduction <add>, %110, %cst_54 [0] : vector<128x128xf32> to vector<128xf32>
    %114 = vector.shape_cast %113 : vector<128xf32> to vector<1x128xf32>
    %cst_55 = arith.constant 1.280000e+02 : f32
    %115 = vector.broadcast %cst_55 : f32 to vector<1x128xf32>
    %116 = arith.divf %114, %115 : vector<1x128xf32>
    %117 = arith.mulf %110, %110 : vector<128x128xf32>
    %cst_56 = arith.constant dense<0.000000e+00> : vector<128xf32>
    %118 = vector.multi_reduction <add>, %117, %cst_56 [0] : vector<128x128xf32> to vector<128xf32>
    %119 = vector.shape_cast %118 : vector<128xf32> to vector<1x128xf32>
    %cst_57 = arith.constant 1.280000e+02 : f32
    %120 = vector.broadcast %cst_57 : f32 to vector<1x128xf32>
    %121 = arith.divf %119, %120 : vector<1x128xf32>
    %122 = arith.mulf %116, %116 : vector<1x128xf32>
    %123 = arith.subf %121, %122 : vector<1x128xf32>
    %cst_58 = arith.constant 0.000000e+00 : f32
    %124 = vector.broadcast %cst_58 : f32 to vector<1x128xf32>
    %125 = arith.maximumf %123, %124 : vector<1x128xf32>
    %cst_59 = arith.constant 9.99999974E-6 : f32
    %126 = vector.broadcast %cst_59 : f32 to vector<1x128xf32>
    %127 = arith.addf %125, %126 : vector<1x128xf32>
    %128 = math.rsqrt %127 : vector<1x128xf32>
    %129 = arith.mulf %111, %128 : vector<1x128xf32>
    %130 = arith.mulf %116, %129 : vector<1x128xf32>
    %131 = arith.subf %112, %130 : vector<1x128xf32>
    %132 = vector.broadcast %129 : vector<1x128xf32> to vector<128x128xf32>
    %133 = arith.mulf %110, %132 : vector<128x128xf32>
    %134 = vector.broadcast %131 : vector<1x128xf32> to vector<128x128xf32>
    %135 = arith.addf %133, %134 : vector<128x128xf32>
    %c512 = arith.constant 512 : index
    %c0_60 = arith.constant 0 : index
    %136 = vector.load %arg3[%c512, %c0_60] : memref<1152x512xbf16, #tpu.memory_space<vmem>>, vector<128x512xbf16>
    %cst_61 = arith.constant dense<0.000000e+00> : vector<128x128xf32>
    %137 = tpu.matmul %136, %1, %cst_61 {dimension_numbers = #tpu.dot_dimension_numbers<[1], [0], [0], [1], [0, 0, 1, 1], [], []>} : vector<128x512xbf16>, vector<512x128xbf16>, vector<128x128xf32> -> vector<128x128xf32>
    %138 = arith.truncf %137 : vector<128x128xf32> to vector<128x128xbf16>
    %c0_62 = arith.constant 0 : index
    %c0_63 = arith.constant 0 : index
    %139 = vector.load %arg5[%c0_62, %c0_63] : memref<128x128xbf16, #tpu.memory_space<vmem>>, vector<128x128xbf16>
    %cst_64 = arith.constant dense<0.000000e+00> : vector<128x128xf32>
    %140 = tpu.matmul %138, %139, %cst_64 {dimension_numbers = #tpu.dot_dimension_numbers<[1], [0], [0], [1], [0, 0, 1, 1], [], []>} : vector<128x128xbf16>, vector<128x128xbf16>, vector<128x128xf32> -> vector<128x128xf32>
    %141 = vector.extract_strided_slice %0 {offsets = [6, 0], sizes = [1, 128], strides = [1, 1]} : vector<8x128xf32> to vector<1x128xf32>
    %142 = vector.extract_strided_slice %0 {offsets = [7, 0], sizes = [1, 128], strides = [1, 1]} : vector<8x128xf32> to vector<1x128xf32>
    %cst_65 = arith.constant dense<0.000000e+00> : vector<128xf32>
    %143 = vector.multi_reduction <add>, %140, %cst_65 [0] : vector<128x128xf32> to vector<128xf32>
    %144 = vector.shape_cast %143 : vector<128xf32> to vector<1x128xf32>
    %cst_66 = arith.constant 1.280000e+02 : f32
    %145 = vector.broadcast %cst_66 : f32 to vector<1x128xf32>
    %146 = arith.divf %144, %145 : vector<1x128xf32>
    %147 = arith.mulf %140, %140 : vector<128x128xf32>
    %cst_67 = arith.constant dense<0.000000e+00> : vector<128xf32>
    %148 = vector.multi_reduction <add>, %147, %cst_67 [0] : vector<128x128xf32> to vector<128xf32>
    %149 = vector.shape_cast %148 : vector<128xf32> to vector<1x128xf32>
    %cst_68 = arith.constant 1.280000e+02 : f32
    %150 = vector.broadcast %cst_68 : f32 to vector<1x128xf32>
    %151 = arith.divf %149, %150 : vector<1x128xf32>
    %152 = arith.mulf %146, %146 : vector<1x128xf32>
    %153 = arith.subf %151, %152 : vector<1x128xf32>
    %cst_69 = arith.constant 0.000000e+00 : f32
    %154 = vector.broadcast %cst_69 : f32 to vector<1x128xf32>
    %155 = arith.maximumf %153, %154 : vector<1x128xf32>
    %cst_70 = arith.constant 9.99999974E-6 : f32
    %156 = vector.broadcast %cst_70 : f32 to vector<1x128xf32>
    %157 = arith.addf %155, %156 : vector<1x128xf32>
    %158 = math.rsqrt %157 : vector<1x128xf32>
    %159 = arith.mulf %141, %158 : vector<1x128xf32>
    %160 = arith.mulf %146, %159 : vector<1x128xf32>
    %161 = arith.subf %142, %160 : vector<1x128xf32>
    %162 = vector.broadcast %159 : vector<1x128xf32> to vector<128x128xf32>
    %163 = arith.mulf %140, %162 : vector<128x128xf32>
    %164 = vector.broadcast %161 : vector<1x128xf32> to vector<128x128xf32>
    %165 = arith.addf %163, %164 : vector<128x128xf32>
    %166 = arith.addf %135, %165 : vector<128x128xf32>
    %cst_71 = arith.constant 0.000000e+00 : f32
    %167 = vector.broadcast %cst_71 : f32 to vector<128x128xf32>
    %168 = arith.maximumf %166, %167 : vector<128x128xf32>
    %c0_72 = arith.constant 0 : index
    %c0_73 = arith.constant 0 : index
    %169 = vector.load %arg7[%c0_72, %c0_73] : memref<128x128xf32, #tpu.memory_space<vmem>>, vector<128x128xf32>
    tpu.vector_store %arg7[%c0_72, %c0_73], %168 {strides = array<i32>} : memref<128x128xf32, #tpu.memory_space<vmem>>, vector<128x128xf32>,
    return
  }
}

</mosaic_0001>

<llo_original>
// kernel: tpu_custom_call.1
$region0: #{tpu_custom_call.1}
  #allocation0 [shape = 'u32[]', space=smem, size = 0x4, offset = 0x4, fixed_abs, tag = 'smem constant byte address 0x4 - core index']
  #allocation1 [shape = 'u32[144,128]{1,0:T(1,128)}', space=vmem, size = 0x12000, scoped, tag = 'internal scratch']
  %s0 = inlined_call_operand.hbm [shape: bf16[512,128], index: 0, kind: input, shape index: {}]
  %s1 = inlined_call_operand.hbm [shape: bf16[128,128], index: 1, kind: input, shape index: {}]
  %s2 = inlined_call_operand.hbm [shape: bf16[9,128,128], index: 2, kind: input, shape index: {}]
  %s3 = inlined_call_operand.hbm [shape: bf16[1152,512], index: 3, kind: input, shape index: {}]
  %s4 = inlined_call_operand.hbm [shape: bf16[128,128], index: 4, kind: input, shape index: {}]
  %s5 = inlined_call_operand.hbm [shape: bf16[128,128], index: 5, kind: input, shape index: {}]
  %s6 = inlined_call_operand.hbm [shape: f32[8,128], index: 6, kind: input, shape index: {}]
  %s7 = inlined_call_operand.hbm [shape: f32[128,128], index: 7, kind: output, shape index: {}]
  %s8 = sld [smem:[#allocation0]]
  $region66: #{tpu_custom_call.1} parent=0
    _
  %s10 = ssub.s32 1, %s8
  %s11 = scalar_select 0, %s10, %s8
  $region1: #{tpu_custom_call.1} parent=0
    #allocation2 [shape = 'u8[131072]{0}', space=vmem, size = 0x20000, scoped, tag = 'input window, operand 0, single buffered']
    #allocation3 [shape = 's32[1]{0}', space=sflag, size = 0x4, scoped, tag = 'scoped memory for tpu_custom_call.1']
    #allocation4 [shape = 's32[1]{0}', space=sflag, size = 0x4, scoped, tag = 'scoped memory for tpu_custom_call.1']
    #allocation5 [shape = 'u8[32768]{0}', space=vmem, size = 0x8000, scoped, tag = 'input window, operand 1, single buffered']
    #allocation6 [shape = 's32[1]{0}', space=sflag, size = 0x4, scoped, tag = 'scoped memory for tpu_custom_call.1']
    #allocation7 [shape = 'u8[294912]{0}', space=vmem, size = 0x48000, scoped, tag = 'input window, operand 2, single buffered']
    #allocation8 [shape = 'u8[1179648]{0}', space=vmem, size = 0x120000, scoped, tag = 'input window, operand 3, single buffered']
    #allocation9 [shape = 's32[1]{0}', space=sflag, size = 0x4, scoped, tag = 'scoped memory for tpu_custom_call.1']
    #allocation10 [shape = 'u8[32768]{0}', space=vmem, size = 0x8000, scoped, tag = 'input window, operand 4, single buffered']
    #allocation11 [shape = 'u8[32768]{0}', space=vmem, size = 0x8000, scoped, tag = 'input window, operand 5, single buffered']
    #allocation12 [shape = 's32[1]{0}', space=sflag, size = 0x4, scoped, tag = 'scoped memory for tpu_custom_call.1']
    #allocation13 [shape = 'u8[4096]{0}', space=vmem, size = 0x1000, scoped, tag = 'input window, operand 6, single buffered']
    #allocation14 [shape = 'u8[65536]{0}', space=vmem, size = 0x10000, scoped, tag = 'output window, operand 0, single buffered']
    %12 = vsyncpa [#allocation3], 0
    %13 = vsyncpa [#allocation6], 0
    %14 = vsyncpa [#allocation9], 0
    %15 = vsyncpa [#allocation12], 0
    %16 = vsyncpa [#allocation4], 0
    // Predicated region
    $region2: #{tpu_custom_call.1} parent=1 // pred_check
      _
    $region3: #{tpu_custom_call.1} parent=1 // pred_check_branch
      %18 = sbr.rel (0) target = $region5
    $region4: #{tpu_custom_call.1} parent=1 // pred_region
      %s20 = ssub.s32 4096, 4096
      %21 = vsyncadd [#allocation3], %s20
      %s22 = sshll.u32 [#allocation2], 4
      %s23 = int_to_ptr.vmem [resolvable:$true] %s22
      %28 = dma.hbm_to_vmem [thread:$0]  %s0, 4096, %s23, [#allocation3], 64, 64, 4
    $region5: #{tpu_custom_call.1} parent=1 // pred_fallthru
      _
    // Predicated region
    $region6: #{tpu_custom_call.1} parent=1 // pred_check
      _
    $region7: #{tpu_custom_call.1} parent=1 // pred_check_branch
      %30 = sbr.rel (0) target = $region9
    $region8: #{tpu_custom_call.1} parent=1 // pred_region
      %s32 = ssub.s32 1024, 1024
      %33 = vsyncadd [#allocation6], %s32
      %s34 = sshll.u32 [#allocation5], 4
      %s35 = int_to_ptr.vmem [resolvable:$true] %s34
      %40 = dma.hbm_to_vmem [thread:$0]  %s1, 1024, %s35, [#allocation6], 64, 64, 4
    $region9: #{tpu_custom_call.1} parent=1 // pred_fallthru
      _
    // Predicated region
    $region10: #{tpu_custom_call.1} parent=1 // pred_check
      _
    $region11: #{tpu_custom_call.1} parent=1 // pred_check_branch
      %42 = sbr.rel (0) target = $region13
    $region12: #{tpu_custom_call.1} parent=1 // pred_region
      %s44 = ssub.s32 9216, 9216
      %45 = vsyncadd [#allocation6], %s44
      %s46 = sshll.u32 [#allocation7], 4
      %s47 = int_to_ptr.vmem [resolvable:$true] %s46
      %52 = dma.hbm_to_vmem [thread:$0]  %s2, 9216, %s47, [#allocation6], 64, 64, 4
    $region13: #{tpu_custom_call.1} parent=1 // pred_fallthru
      _
    // Predicated region
    $region14: #{tpu_custom_call.1} parent=1 // pred_check
      _
    $region15: #{tpu_custom_call.1} parent=1 // pred_check_branch
      %54 = sbr.rel (0) target = $region17
    $region16: #{tpu_custom_call.1} parent=1 // pred_region
      %s56 = ssub.s32 36864, 36864
      %57 = vsyncadd [#allocation9], %s56
      %s58 = sshll.u32 [#allocation8], 4
      %s59 = int_to_ptr.vmem [resolvable:$true] %s58
      %64 = dma.hbm_to_vmem [thread:$0]  %s3, 36864, %s59, [#allocation9], 256, 256, 16
    $region17: #{tpu_custom_call.1} parent=1 // pred_fallthru
      _
    // Predicated region
    $region18: #{tpu_custom_call.1} parent=1 // pred_check
      _
    $region19: #{tpu_custom_call.1} parent=1 // pred_check_branch
      %66 = sbr.rel (0) target = $region21
    $region20: #{tpu_custom_call.1} parent=1 // pred_region
      %s68 = ssub.s32 1024, 1024
      %69 = vsyncadd [#allocation9], %s68
      %s70 = sshll.u32 [#allocation10], 4
      %s71 = int_to_ptr.vmem [resolvable:$true] %s70
      %76 = dma.hbm_to_vmem [thread:$0]  %s4, 1024, %s71, [#allocation9], 64, 64, 4
    $region21: #{tpu_custom_call.1} parent=1 // pred_fallthru
      _
    // Predicated region
    $region22: #{tpu_custom_call.1} parent=1 // pred_check
      _
    $region23: #{tpu_custom_call.1} parent=1 // pred_check_branch
      %78 = sbr.rel (0) target = $region25
    $region24: #{tpu_custom_call.1} parent=1 // pred_region
      %s80 = ssub.s32 1024, 1024
      %81 = vsyncadd [#allocation12], %s80
      %s82 = sshll.u32 [#allocation11], 4
      %s83 = int_to_ptr.vmem [resolvable:$true] %s82
      %88 = dma.hbm_to_vmem [thread:$0]  %s5, 1024, %s83, [#allocation12], 64, 64, 4
    $region25: #{tpu_custom_call.1} parent=1 // pred_fallthru
      _
    // Predicated region
    $region26: #{tpu_custom_call.1} parent=1 // pred_check
      _
    $region27: #{tpu_custom_call.1} parent=1 // pred_check_branch
      %90 = sbr.rel (0) target = $region29
    $region28: #{tpu_custom_call.1} parent=1 // pred_region
      %s92 = ssub.s32 128, 128
      %93 = vsyncadd [#allocation12], %s92
      %s95 = sshll.u32 [#allocation13], 4
      %s96 = int_to_ptr.vmem [resolvable:$true] %s95
      %98 = dma.hbm_to_vmem [thread:$0]  %s6, 128, %s96, [#allocation12]
    $region29: #{tpu_custom_call.1} parent=1 // pred_fallthru
      _
    // Predicated region
    $region30: #{tpu_custom_call.1} parent=1 // pred_check
      _
    $region31: #{tpu_custom_call.1} parent=1 // pred_check_branch
      %100 = sbr.rel (0) target = $region33
    $region32: #{tpu_custom_call.1} parent=1 // pred_region
      %101 = dma.done [#allocation3], 4096
    $region33: #{tpu_custom_call.1} parent=1 // pred_fallthru
      _
    // Predicated region
    $region34: #{tpu_custom_call.1} parent=1 // pred_check
      _
    $region35: #{tpu_custom_call.1} parent=1 // pred_check_branch
      %103 = sbr.rel (0) target = $region37
    $region36: #{tpu_custom_call.1} parent=1 // pred_region
      %104 = dma.done [#allocation6], 1024
    $region37: #{tpu_custom_call.1} parent=1 // pred_fallthru
      _
    // Predicated region
    $region38: #{tpu_custom_call.1} parent=1 // pred_check
      _
    $region39: #{tpu_custom_call.1} parent=1 // pred_check_branch
      %106 = sbr.rel (0) target = $region41
    $region40: #{tpu_custom_call.1} parent=1 // pred_region
      %107 = dma.done [#allocation6], 9216
    $region41: #{tpu_custom_call.1} parent=1 // pred_fallthru
      _
    // Predicated region
    $region42: #{tpu_custom_call.1} parent=1 // pred_check
      _
    $region43: #{tpu_custom_call.1} parent=1 // pred_check_branch
      %109 = sbr.rel (0) target = $region45
    $region44: #{tpu_custom_call.1} parent=1 // pred_region
      %110 = dma.done [#allocation9], 36864
    $region45: #{tpu_custom_call.1} parent=1 // pred_fallthru
      _
    // Predicated region
    $region46: #{tpu_custom_call.1} parent=1 // pred_check
      _
    $region47: #{tpu_custom_call.1} parent=1 // pred_check_branch
      %112 = sbr.rel (0) target = $region49
    $region48: #{tpu_custom_call.1} parent=1 // pred_region
      %113 = dma.done [#allocation9], 1024
    $region49: #{tpu_custom_call.1} parent=1 // pred_fallthru
      _
    // Predicated region
    $region50: #{tpu_custom_call.1} parent=1 // pred_check
      _
    $region51: #{tpu_custom_call.1} parent=1 // pred_check_branch
      %115 = sbr.rel (0) target = $region53
    $region52: #{tpu_custom_call.1} parent=1 // pred_region
      %116 = dma.done [#allocation12], 1024
    $region53: #{tpu_custom_call.1} parent=1 // pred_fallthru
      _
    // Predicated region
    $region54: #{tpu_custom_call.1} parent=1 // pred_check
      _
    $region55: #{tpu_custom_call.1} parent=1 // pred_check_branch
      %118 = sbr.rel (0) target = $region57
    $region56: #{tpu_custom_call.1} parent=1 // pred_region
      %119 = dma.done [#allocation12], 128
    $region57: #{tpu_custom_call.1} parent=1 // pred_fallthru
      _
    %v121 = vld [vmem:[#allocation13] sm:$0xff]
    %v122 = vld [vmem:[#allocation2] sm:$0xf]
    %v123 = vld [vmem:[#allocation2 + $0x4] sm:$0xf]
    %v124 = vld [vmem:[#allocation2 + $0x8] sm:$0xf]
    %v125 = vld [vmem:[#allocation2 + $0xc] sm:$0xf]
    %v126 = vld [vmem:[#allocation2 + $0x10] sm:$0xf]
    %v127 = vld [vmem:[#allocation2 + $0x14] sm:$0xf]
    %v128 = vld [vmem:[#allocation2 + $0x18] sm:$0xf]
    %v129 = vld [vmem:[#allocation2 + $0x1c] sm:$0xf]
    %v130 = vld [vmem:[#allocation2 + $0x20] sm:$0xf]
    %v131 = vld [vmem:[#allocation2 + $0x24] sm:$0xf]
    %v132 = vld [vmem:[#allocation2 + $0x28] sm:$0xf]
    %v133 = vld [vmem:[#allocation2 + $0x2c] sm:$0xf]
    %v134 = vld [vmem:[#allocation2 + $0x30] sm:$0xf]
    %v135 = vld [vmem:[#allocation2 + $0x34] sm:$0xf]
    %v136 = vld [vmem:[#allocation2 + $0x38] sm:$0xf]
    %v137 = vld [vmem:[#allocation2 + $0x3c] sm:$0xf]
    %v138 = vld [vmem:[#allocation2 + $0x40] sm:$0xf]
    %v139 = vld [vmem:[#allocation2 + $0x44] sm:$0xf]
    %v140 = vld [vmem:[#allocation2 + $0x48] sm:$0xf]
    %v141 = vld [vmem:[#allocation2 + $0x4c] sm:$0xf]
    %v142 = vld [vmem:[#allocation2 + $0x50] sm:$0xf]
    %v143 = vld [vmem:[#allocation2 + $0x54] sm:$0xf]
    %v144 = vld [vmem:[#allocation2 + $0x58] sm:$0xf]
    %v145 = vld [vmem:[#allocation2 + $0x5c] sm:$0xf]
    %v146 = vld [vmem:[#allocation2 + $0x60] sm:$0xf]
    %v147 = vld [vmem:[#allocation2 + $0x64] sm:$0xf]
    %v148 = vld [vmem:[#allocation2 + $0x68] sm:$0xf]
    %v149 = vld [vmem:[#allocation2 + $0x6c] sm:$0xf]
    %v150 = vld [vmem:[#allocation2 + $0x70] sm:$0xf]
    %v151 = vld [vmem:[#allocation2 + $0x74] sm:$0xf]
    %v152 = vld [vmem:[#allocation2 + $0x78] sm:$0xf]
    %v153 = vld [vmem:[#allocation2 + $0x7c] sm:$0xf]
    %v154 = vld [vmem:[#allocation2 + $0x80] sm:$0xf]
    %v155 = vld [vmem:[#allocation2 + $0x84] sm:$0xf]
    %v156 = vld [vmem:[#allocation2 + $0x88] sm:$0xf]
    %v157 = vld [vmem:[#allocation2 + $0x8c] sm:$0xf]
    %v158 = vld [vmem:[#allocation2 + $0x90] sm:$0xf]
    %v159 = vld [vmem:[#allocation2 + $0x94] sm:$0xf]
    %v160 = vld [vmem:[#allocation2 + $0x98] sm:$0xf]
    %v161 = vld [vmem:[#allocation2 + $0x9c] sm:$0xf]
    %v162 = vld [vmem:[#allocation2 + $0xa0] sm:$0xf]
    %v163 = vld [vmem:[#allocation2 + $0xa4] sm:$0xf]
    %v164 = vld [vmem:[#allocation2 + $0xa8] sm:$0xf]
    %v165 = vld [vmem:[#allocation2 + $0xac] sm:$0xf]
    %v166 = vld [vmem:[#allocation2 + $0xb0] sm:$0xf]
    %v167 = vld [vmem:[#allocation2 + $0xb4] sm:$0xf]
    %v168 = vld [vmem:[#allocation2 + $0xb8] sm:$0xf]
    %v169 = vld [vmem:[#allocation2 + $0xbc] sm:$0xf]
    %v170 = vld [vmem:[#allocation2 + $0xc0] sm:$0xf]
    %v171 = vld [vmem:[#allocation2 + $0xc4] sm:$0xf]
    %v172 = vld [vmem:[#allocation2 + $0xc8] sm:$0xf]
    %v173 = vld [vmem:[#allocation2 + $0xcc] sm:$0xf]
    %v174 = vld [vmem:[#allocation2 + $0xd0] sm:$0xf]
    %v175 = vld [vmem:[#allocation2 + $0xd4] sm:$0xf]
    %v176 = vld [vmem:[#allocation2 + $0xd8] sm:$0xf]
    %v177 = vld [vmem:[#allocation2 + $0xdc] sm:$0xf]
    %v178 = vld [vmem:[#allocation2 + $0xe0] sm:$0xf]
    %v179 = vld [vmem:[#allocation2 + $0xe4] sm:$0xf]
    %v180 = vld [vmem:[#allocation2 + $0xe8] sm:$0xf]
    %v181 = vld [vmem:[#allocation2 + $0xec] sm:$0xf]
    %v182 = vld [vmem:[#allocation2 + $0xf0] sm:$0xf]
    %v183 = vld [vmem:[#allocation2 + $0xf4] sm:$0xf]
    %v184 = vld [vmem:[#allocation2 + $0xf8] sm:$0xf]
    %v185 = vld [vmem:[#allocation2 + $0xfc] sm:$0xf]
    %v186 = vld [vmem:[#allocation5] sm:$0xf]
    %v187 = vld [vmem:[#allocation5 + $0x4] sm:$0xf]
    %v188 = vld [vmem:[#allocation5 + $0x8] sm:$0xf]
    %v189 = vld [vmem:[#allocation5 + $0xc] sm:$0xf]
    %v190 = vld [vmem:[#allocation5 + $0x10] sm:$0xf]
    %v191 = vld [vmem:[#allocation5 + $0x14] sm:$0xf]
    %v192 = vld [vmem:[#allocation5 + $0x18] sm:$0xf]
    %v193 = vld [vmem:[#allocation5 + $0x1c] sm:$0xf]
    %v194 = vld [vmem:[#allocation5 + $0x20] sm:$0xf]
    %v195 = vld [vmem:[#allocation5 + $0x24] sm:$0xf]
    %v196 = vld [vmem:[#allocation5 + $0x28] sm:$0xf]
    %v197 = vld [vmem:[#allocation5 + $0x2c] sm:$0xf]
    %v198 = vld [vmem:[#allocation5 + $0x30] sm:$0xf]
    %v199 = vld [vmem:[#allocation5 + $0x34] sm:$0xf]
    %v200 = vld [vmem:[#allocation5 + $0x38] sm:$0xf]
    %v201 = vld [vmem:[#allocation5 + $0x3c] sm:$0xf]
    %v266 = vunpack.c.l.b16 %v122
    %v267 = vunpack.c.l.b16 %v123
    %v268 = vunpack.c.l.b16 %v124
    %v269 = vunpack.c.l.b16 %v125
    %v270 = vunpack.c.l.b16 %v126
    %v271 = vunpack.c.l.b16 %v127
    %v272 = vunpack.c.l.b16 %v128
    %v273 = vunpack.c.l.b16 %v129
    %v274 = vunpack.c.l.b16 %v130
    %v275 = vunpack.c.l.b16 %v131
    %v276 = vunpack.c.l.b16 %v132
    %v277 = vunpack.c.l.b16 %v133
    %v278 = vunpack.c.l.b16 %v134
    %v279 = vunpack.c.l.b16 %v135
    %v280 = vunpack.c.l.b16 %v136
    %v281 = vunpack.c.l.b16 %v137
    %v282 = vunpack.c.l.b16 %v138
    %v283 = vunpack.c.l.b16 %v139
    %v284 = vunpack.c.l.b16 %v140
    %v285 = vunpack.c.l.b16 %v141
    %v286 = vunpack.c.l.b16 %v142
    %v287 = vunpack.c.l.b16 %v143
    %v288 = vunpack.c.l.b16 %v144
    %v289 = vunpack.c.l.b16 %v145
    %v290 = vunpack.c.l.b16 %v146
    %v291 = vunpack.c.l.b16 %v147
    %v292 = vunpack.c.l.b16 %v148
    %v293 = vunpack.c.l.b16 %v149
    %v294 = vunpack.c.l.b16 %v150
    %v295 = vunpack.c.l.b16 %v151
    %v296 = vunpack.c.l.b16 %v152
    %v297 = vunpack.c.l.b16 %v153
    %v298 = vunpack.c.l.b16 %v154
    %v299 = vunpack.c.l.b16 %v155
    %v300 = vunpack.c.l.b16 %v156
    %v301 = vunpack.c.l.b16 %v157
    %v302 = vunpack.c.l.b16 %v158
    %v303 = vunpack.c.l.b16 %v159
    %v304 = vunpack.c.l.b16 %v160
    %v305 = vunpack.c.l.b16 %v161
    %v306 = vunpack.c.l.b16 %v162
    %v307 = vunpack.c.l.b16 %v163
    %v308 = vunpack.c.l.b16 %v164
    %v309 = vunpack.c.l.b16 %v165
    %v310 = vunpack.c.l.b16 %v166
    %v311 = vunpack.c.l.b16 %v167
    %v312 = vunpack.c.l.b16 %v168
    %v313 = vunpack.c.l.b16 %v169
    %v314 = vunpack.c.l.b16 %v170
    %v315 = vunpack.c.l.b16 %v171
    %v316 = vunpack.c.l.b16 %v172
    %v317 = vunpack.c.l.b16 %v173
    %v318 = vunpack.c.l.b16 %v174
    %v319 = vunpack.c.l.b16 %v175
    %v320 = vunpack.c.l.b16 %v176
    %v321 = vunpack.c.l.b16 %v177
    %v322 = vunpack.c.l.b16 %v178
    %v323 = vunpack.c.l.b16 %v179
    %v324 = vunpack.c.l.b16 %v180
    %v325 = vunpack.c.l.b16 %v181
    %v326 = vunpack.c.l.b16 %v182
    %v327 = vunpack.c.l.b16 %v183
    %v328 = vunpack.c.l.b16 %v184
    %v329 = vunpack.c.l.b16 %v185
    %v330 = vpack.c.b16 %v267, %v266
    %v331 = vpack.c.b16 %v269, %v268
    %v332 = vpack.c.b16 %v271, %v270
    %v333 = vpack.c.b16 %v273, %v272
    %v334 = vpack.c.b16 %v275, %v274
    %v335 = vpack.c.b16 %v277, %v276
    %v336 = vpack.c.b16 %v279, %v278
    %v337 = vpack.c.b16 %v281, %v280
    %v338 = vpack.c.b16 %v283, %v282
    %v339 = vpack.c.b16 %v285, %v284
    %v340 = vpack.c.b16 %v287, %v286
    %v341 = vpack.c.b16 %v289, %v288
    %v342 = vpack.c.b16 %v291, %v290
    %v343 = vpack.c.b16 %v293, %v292
    %v344 = vpack.c.b16 %v295, %v294
    %v345 = vpack.c.b16 %v297, %v296
    %v346 = vpack.c.b16 %v299, %v298
    %v347 = vpack.c.b16 %v301, %v300
    %v348 = vpack.c.b16 %v303, %v302
    %v349 = vpack.c.b16 %v305, %v304
    %v350 = vpack.c.b16 %v307, %v306
    %v351 = vpack.c.b16 %v309, %v308
    %v352 = vpack.c.b16 %v311, %v310
    %v353 = vpack.c.b16 %v313, %v312
    %v354 = vpack.c.b16 %v315, %v314
    %v355 = vpack.c.b16 %v317, %v316
    %v356 = vpack.c.b16 %v319, %v318
    %v357 = vpack.c.b16 %v321, %v320
    %v358 = vpack.c.b16 %v323, %v322
    %v359 = vpack.c.b16 %v325, %v324
    %v360 = vpack.c.b16 %v327, %v326
    %v361 = vpack.c.b16 %v329, %v328
    %v410 = vunpack.c.l.b16 %v186
    %v411 = vunpack.c.l.b16 %v187
    %v412 = vunpack.c.l.b16 %v188
    %v413 = vunpack.c.l.b16 %v189
    %v414 = vunpack.c.l.b16 %v190
    %v415 = vunpack.c.l.b16 %v191
    %v416 = vunpack.c.l.b16 %v192
    %v417 = vunpack.c.l.b16 %v193
    %v418 = vunpack.c.l.b16 %v194
    %v419 = vunpack.c.l.b16 %v195
    %v420 = vunpack.c.l.b16 %v196
    %v421 = vunpack.c.l.b16 %v197
    %v422 = vunpack.c.l.b16 %v198
    %v423 = vunpack.c.l.b16 %v199
    %v424 = vunpack.c.l.b16 %v200
    %v425 = vunpack.c.l.b16 %v201
    %v426 = vpack.c.b16 %v411, %v410
    %v427 = vpack.c.b16 %v413, %v412
    %v428 = vpack.c.b16 %v415, %v414
    %v429 = vpack.c.b16 %v417, %v416
    %v430 = vpack.c.b16 %v419, %v418
    %v431 = vpack.c.b16 %v421, %v420
    %v432 = vpack.c.b16 %v423, %v422
    %v433 = vpack.c.b16 %v425, %v424
    %442 = vmatprep.subr.bf16.mxu0 0
    %443 = vmatpush1.bf16.msra.mxu0 %v426
    %444 = vmatprep.subr.bf16.mxu0 0
    %445 = vmatpush1.bf16.msra.mxu0 %v427
    %446 = vmatprep.subr.bf16.mxu0 0
    %447 = vmatpush1.bf16.msra.mxu0 %v428
    %448 = vmatprep.subr.bf16.mxu0 0
    %449 = vmatpush1.bf16.msra.mxu0 %v429
    %450 = vmatprep.subr.bf16.mxu0 0
    %451 = vmatpush1.bf16.msra.mxu0 %v430
    %452 = vmatprep.subr.bf16.mxu0 0
    %453 = vmatpush1.bf16.msra.mxu0 %v431
    %454 = vmatprep.subr.bf16.mxu0 0
    %455 = vmatpush1.bf16.msra.mxu0 %v432
    %456 = vmatprep.subr.bf16.mxu0 0
    %457 = vmatpush1.bf16.msra.mxu0 %v433
    %458 = vmatprep.subr.bf16.mxu0 0
    %459 = vmatpush1.bf16.msra.mxu0 0
    %460 = vmatprep.subr.bf16.mxu0 0
    %461 = vmatpush1.bf16.msra.mxu0 0
    %462 = vmatprep.subr.bf16.mxu0 0
    %463 = vmatpush1.bf16.msra.mxu0 0
    %464 = vmatprep.subr.bf16.mxu0 0
    %465 = vmatpush1.bf16.msra.mxu0 0
    %466 = vmatprep.subr.bf16.mxu0 0
    %467 = vmatpush1.bf16.msra.mxu0 0
    %468 = vmatprep.subr.bf16.mxu0 0
    %469 = vmatpush1.bf16.msra.mxu0 0
    %470 = vmatprep.subr.bf16.mxu0 0
    %471 = vmatpush1.bf16.msra.mxu0 0
    %472 = vmatprep.subr.bf16.mxu0 0
    %473 = vmatpush1.bf16.msra.mxu0 0
    %474 = vmatprep.mubr.bf16.mxu0 0
    %475 = vmatmul.mubr.bf16.gmra.mrb[0].mxu0 %v330
    %v476 = vpop.f32.mrb[0].mxu0
    %v477 = vadd.f32 0.0, %v476
    %v478 = vpop.f32.mrb[0].mxu0
    %v479 = vpop.f32.mrb[0].mxu0
    %v480 = vadd.f32 0.0, %v479
    %v481 = vpop.f32.mrb[0].mxu0
    %482 = vmatprep.mubr.bf16.mxu0 0
    %483 = vmatmul.mubr.bf16.gmra.mrb[0].mxu0 %v331
    %v484 = vpop.f32.mrb[0].mxu0
    %v485 = vadd.f32 0.0, %v484
    %v486 = vpop.f32.mrb[0].mxu0
    %v487 = vpop.f32.mrb[0].mxu0
    %v488 = vadd.f32 0.0, %v487
    %v489 = vpop.f32.mrb[0].mxu0
    %490 = vmatprep.mubr.bf16.mxu0 0
    %491 = vmatmul.mubr.bf16.gmra.mrb[0].mxu0 %v332
    %v492 = vpop.f32.mrb[0].mxu0
    %v493 = vadd.f32 0.0, %v492
    %v494 = vpop.f32.mrb[0].mxu0
    %v495 = vpop.f32.mrb[0].mxu0
    %v496 = vadd.f32 0.0, %v495
    %v497 = vpop.f32.mrb[0].mxu0
    %498 = vmatprep.mubr.bf16.mxu0 0
    %499 = vmatmul.mubr.bf16.gmra.mrb[0].mxu0 %v333
    %v500 = vpop.f32.mrb[0].mxu0
    %v501 = vadd.f32 0.0, %v500
    %v502 = vpop.f32.mrb[0].mxu0
    %v503 = vpop.f32.mrb[0].mxu0
    %v504 = vadd.f32 0.0, %v503
    %v505 = vpop.f32.mrb[0].mxu0
    %506 = vmatprep.mubr.bf16.mxu0 0
    %507 = vmatmul.mubr.bf16.gmra.mrb[0].mxu0 %v334
    %v508 = vpop.f32.mrb[0].mxu0
    %v509 = vadd.f32 0.0, %v508
    %v510 = vpop.f32.mrb[0].mxu0
    %v511 = vpop.f32.mrb[0].mxu0
    %v512 = vadd.f32 0.0, %v511
    %v513 = vpop.f32.mrb[0].mxu0
    %514 = vmatprep.mubr.bf16.mxu0 0
    %515 = vmatmul.mubr.bf16.gmra.mrb[0].mxu0 %v335
    %v516 = vpop.f32.mrb[0].mxu0
    %v517 = vadd.f32 0.0, %v516
    %v518 = vpop.f32.mrb[0].mxu0
    %v519 = vpop.f32.mrb[0].mxu0
    %v520 = vadd.f32 0.0, %v519
    %v521 = vpop.f32.mrb[0].mxu0
    %522 = vmatprep.mubr.bf16.mxu0 0
    %523 = vmatmul.mubr.bf16.gmra.mrb[0].mxu0 %v336
    %v524 = vpop.f32.mrb[0].mxu0
    %v525 = vadd.f32 0.0, %v524
    %v526 = vpop.f32.mrb[0].mxu0
    %v527 = vpop.f32.mrb[0].mxu0
    %v528 = vadd.f32 0.0, %v527
    %v529 = vpop.f32.mrb[0].mxu0
    %530 = vmatprep.mubr.bf16.mxu0 0
    %531 = vmatmul.mubr.bf16.gmra.mrb[0].mxu0 %v337
    %v532 = vpop.f32.mrb[0].mxu0
    %v533 = vadd.f32 0.0, %v532
    %v534 = vpop.f32.mrb[0].mxu0
    %v535 = vpop.f32.mrb[0].mxu0
    %v536 = vadd.f32 0.0, %v535
    %v537 = vpop.f32.mrb[0].mxu0
    %538 = vmatprep.mubr.bf16.mxu0 0
    %539 = vmatmul.mubr.bf16.gmra.mrb[0].mxu0 %v338
    %v540 = vpop.f32.mrb[0].mxu0
    %v541 = vadd.f32 0.0, %v540
    %v542 = vpop.f32.mrb[0].mxu0
    %v543 = vpop.f32.mrb[0].mxu0
    %v544 = vadd.f32 0.0, %v543
    %v545 = vpop.f32.mrb[0].mxu0
    %546 = vmatprep.mubr.bf16.mxu0 0
    %547 = vmatmul.mubr.bf16.gmra.mrb[0].mxu0 %v339
    %v548 = vpop.f32.mrb[0].mxu0
    %v549 = vadd.f32 0.0, %v548
    %v550 = vpop.f32.mrb[0].mxu0
    %v551 = vpop.f32.mrb[0].mxu0
    %v552 = vadd.f32 0.0, %v551
    %v553 = vpop.f32.mrb[0].mxu0
    %554 = vmatprep.mubr.bf16.mxu0 0
    %555 = vmatmul.mubr.bf16.gmra.mrb[0].mxu0 %v340
    %v556 = vpop.f32.mrb[0].mxu0
    %v557 = vadd.f32 0.0, %v556
    %v558 = vpop.f32.mrb[0].mxu0
    %v559 = vpop.f32.mrb[0].mxu0
    %v560 = vadd.f32 0.0, %v559
    %v561 = vpop.f32.mrb[0].mxu0
    %562 = vmatprep.mubr.bf16.mxu0 0
    %563 = vmatmul.mubr.bf16.gmra.mrb[0].mxu0 %v341
    %v564 = vpop.f32.mrb[0].mxu0
    %v565 = vadd.f32 0.0, %v564
    %v566 = vpop.f32.mrb[0].mxu0
    %v567 = vpop.f32.mrb[0].mxu0
    %v568 = vadd.f32 0.0, %v567
    %v569 = vpop.f32.mrb[0].mxu0
    %570 = vmatprep.mubr.bf16.mxu0 0
    %571 = vmatmul.mubr.bf16.gmra.mrb[0].mxu0 %v342
    %v572 = vpop.f32.mrb[0].mxu0
    %v573 = vadd.f32 0.0, %v572
    %v574 = vpop.f32.mrb[0].mxu0
    %v575 = vpop.f32.mrb[0].mxu0
    %v576 = vadd.f32 0.0, %v575
    %v577 = vpop.f32.mrb[0].mxu0
    %578 = vmatprep.mubr.bf16.mxu0 0
    %579 = vmatmul.mubr.bf16.gmra.mrb[0].mxu0 %v343
    %v580 = vpop.f32.mrb[0].mxu0
    %v581 = vadd.f32 0.0, %v580
    %v582 = vpop.f32.mrb[0].mxu0
    %v583 = vpop.f32.mrb[0].mxu0
    %v584 = vadd.f32 0.0, %v583
    %v585 = vpop.f32.mrb[0].mxu0
    %586 = vmatprep.mubr.bf16.mxu0 0
    %587 = vmatmul.mubr.bf16.gmra.mrb[0].mxu0 %v344
    %v588 = vpop.f32.mrb[0].mxu0
    %v589 = vadd.f32 0.0, %v588
    %v590 = vpop.f32.mrb[0].mxu0
    %v591 = vpop.f32.mrb[0].mxu0
    %v592 = vadd.f32 0.0, %v591
    %v593 = vpop.f32.mrb[0].mxu0
    %594 = vmatprep.mubr.bf16.mxu0 0
    %595 = vmatmul.mubr.bf16.gmra.mrb[0].mxu0 %v345
    %v596 = vpop.f32.mrb[0].mxu0
    %v597 = vadd.f32 0.0, %v596
    %v598 = vpop.f32.mrb[0].mxu0
    %v599 = vpop.f32.mrb[0].mxu0
    %v600 = vadd.f32 0.0, %v599
    %v601 = vpop.f32.mrb[0].mxu0
    %602 = vmatprep.mubr.bf16.mxu0 0
    %603 = vmatmul.mubr.bf16.gmra.mrb[0].mxu0 %v346
    %v604 = vpop.f32.mrb[0].mxu0
    %v605 = vadd.f32 0.0, %v604
    %v606 = vpop.f32.mrb[0].mxu0
    %v607 = vpop.f32.mrb[0].mxu0
    %v608 = vadd.f32 0.0, %v607
    %v609 = vpop.f32.mrb[0].mxu0
    %610 = vmatprep.mubr.bf16.mxu0 0
    %611 = vmatmul.mubr.bf16.gmra.mrb[0].mxu0 %v347
    %v612 = vpop.f32.mrb[0].mxu0
    %v613 = vadd.f32 0.0, %v612
    %v614 = vpop.f32.mrb[0].mxu0
    %v615 = vpop.f32.mrb[0].mxu0
    %v616 = vadd.f32 0.0, %v615
    %v617 = vpop.f32.mrb[0].mxu0
    %618 = vmatprep.mubr.bf16.mxu0 0
    %619 = vmatmul.mubr.bf16.gmra.mrb[0].mxu0 %v348
    %v620 = vpop.f32.mrb[0].mxu0
    %v621 = vadd.f32 0.0, %v620
    %v622 = vpop.f32.mrb[0].mxu0
    %v623 = vpop.f32.mrb[0].mxu0
    %v624 = vadd.f32 0.0, %v623
    %v625 = vpop.f32.mrb[0].mxu0
    %626 = vmatprep.mubr.bf16.mxu0 0
    %627 = vmatmul.mubr.bf16.gmra.mrb[0].mxu0 %v349
    %v628 = vpop.f32.mrb[0].mxu0
    %v629 = vadd.f32 0.0, %v628
    %v630 = vpop.f32.mrb[0].mxu0
    %v631 = vpop.f32.mrb[0].mxu0
    %v632 = vadd.f32 0.0, %v631
    %v633 = vpop.f32.mrb[0].mxu0
    %634 = vmatprep.mubr.bf16.mxu0 0
    %635 = vmatmul.mubr.bf16.gmra.mrb[0].mxu0 %v350
    %v636 = vpop.f32.mrb[0].mxu0
    %v637 = vadd.f32 0.0, %v636
    %v638 = vpop.f32.mrb[0].mxu0
    %v639 = vpop.f32.mrb[0].mxu0
    %v640 = vadd.f32 0.0, %v639
    %v641 = vpop.f32.mrb[0].mxu0
    %642 = vmatprep.mubr.bf16.mxu0 0
    %643 = vmatmul.mubr.bf16.gmra.mrb[0].mxu0 %v351
    %v644 = vpop.f32.mrb[0].mxu0
    %v645 = vadd.f32 0.0, %v644
    %v646 = vpop.f32.mrb[0].mxu0
    %v647 = vpop.f32.mrb[0].mxu0
    %v648 = vadd.f32 0.0, %v647
    %v649 = vpop.f32.mrb[0].mxu0
    %650 = vmatprep.mubr.bf16.mxu0 0
    %651 = vmatmul.mubr.bf16.gmra.mrb[0].mxu0 %v352
    %v652 = vpop.f32.mrb[0].mxu0
    %v653 = vadd.f32 0.0, %v652
    %v654 = vpop.f32.mrb[0].mxu0
    %v655 = vpop.f32.mrb[0].mxu0
    %v656 = vadd.f32 0.0, %v655
    %v657 = vpop.f32.mrb[0].mxu0
    %658 = vmatprep.mubr.bf16.mxu0 0
    %659 = vmatmul.mubr.bf16.gmra.mrb[0].mxu0 %v353
    %v660 = vpop.f32.mrb[0].mxu0
    %v661 = vadd.f32 0.0, %v660
    %v662 = vpop.f32.mrb[0].mxu0
    %v663 = vpop.f32.mrb[0].mxu0
    %v664 = vadd.f32 0.0, %v663
    %v665 = vpop.f32.mrb[0].mxu0
    %666 = vmatprep.mubr.bf16.mxu0 0
    %667 = vmatmul.mubr.bf16.gmra.mrb[0].mxu0 %v354
    %v668 = vpop.f32.mrb[0].mxu0
    %v669 = vadd.f32 0.0, %v668
    %v670 = vpop.f32.mrb[0].mxu0
    %v671 = vpop.f32.mrb[0].mxu0
    %v672 = vadd.f32 0.0, %v671
    %v673 = vpop.f32.mrb[0].mxu0
    %674 = vmatprep.mubr.bf16.mxu0 0
    %675 = vmatmul.mubr.bf16.gmra.mrb[0].mxu0 %v355
    %v676 = vpop.f32.mrb[0].mxu0
    %v677 = vadd.f32 0.0, %v676
    %v678 = vpop.f32.mrb[0].mxu0
    %v679 = vpop.f32.mrb[0].mxu0
    %v680 = vadd.f32 0.0, %v679
    %v681 = vpop.f32.mrb[0].mxu0
    %682 = vmatprep.mubr.bf16.mxu0 0
    %683 = vmatmul.mubr.bf16.gmra.mrb[0].mxu0 %v356
    %v684 = vpop.f32.mrb[0].mxu0
    %v685 = vadd.f32 0.0, %v684
    %v686 = vpop.f32.mrb[0].mxu0
    %v687 = vpop.f32.mrb[0].mxu0
    %v688 = vadd.f32 0.0, %v687
    %v689 = vpop.f32.mrb[0].mxu0
    %690 = vmatprep.mubr.bf16.mxu0 0
    %691 = vmatmul.mubr.bf16.gmra.mrb[0].mxu0 %v357
    %v692 = vpop.f32.mrb[0].mxu0
    %v693 = vadd.f32 0.0, %v692
    %v694 = vpop.f32.mrb[0].mxu0
    %v695 = vpop.f32.mrb[0].mxu0
    %v696 = vadd.f32 0.0, %v695
    %v697 = vpop.f32.mrb[0].mxu0
    %698 = vmatprep.mubr.bf16.mxu0 0
    %699 = vmatmul.mubr.bf16.gmra.mrb[0].mxu0 %v358
    %v700 = vpop.f32.mrb[0].mxu0
    %v701 = vadd.f32 0.0, %v700
    %v702 = vpop.f32.mrb[0].mxu0
    %v703 = vpop.f32.mrb[0].mxu0
    %v704 = vadd.f32 0.0, %v703
    %v705 = vpop.f32.mrb[0].mxu0
    %706 = vmatprep.mubr.bf16.mxu0 0
    %707 = vmatmul.mubr.bf16.gmra.mrb[0].mxu0 %v359
    %v708 = vpop.f32.mrb[0].mxu0
    %v709 = vadd.f32 0.0, %v708
    %v710 = vpop.f32.mrb[0].mxu0
    %v711 = vpop.f32.mrb[0].mxu0
    %v712 = vadd.f32 0.0, %v711
    %v713 = vpop.f32.mrb[0].mxu0
    %714 = vmatprep.mubr.bf16.mxu0 0
    %715 = vmatmul.mubr.bf16.gmra.mrb[0].mxu0 %v360
    %v716 = vpop.f32.mrb[0].mxu0
    %v717 = vadd.f32 0.0, %v716
    %v718 = vpop.f32.mrb[0].mxu0
    %v719 = vpop.f32.mrb[0].mxu0
    %v720 = vadd.f32 0.0, %v719
    %v721 = vpop.f32.mrb[0].mxu0
    %722 = vmatprep.mubr.bf16.mxu0 0
    %723 = vmatmul.mubr.bf16.gmra.mrb[0].mxu0 %v361
    %v724 = vpop.f32.mrb[0].mxu0
    %v725 = vadd.f32 0.0, %v724
    %v726 = vpop.f32.mrb[0].mxu0
    %v727 = vpop.f32.mrb[0].mxu0
    %v728 = vadd.f32 0.0, %v727
    %v729 = vpop.f32.mrb[0].mxu0
    %730 = vdwg.mxu0
    %v731 = vadd.f32 %v477, %v480
    %v732 = vadd.f32 %v731, %v485
    %v733 = vadd.f32 %v732, %v488
    %v734 = vadd.f32 %v733, %v493
    %v735 = vadd.f32 %v734, %v496
    %v736 = vadd.f32 %v735, %v501
    %v737 = vadd.f32 %v736, %v504
    %v738 = vadd.f32 %v737, %v509
    %v739 = vadd.f32 %v738, %v512
    %v740 = vadd.f32 %v739, %v517
    %v741 = vadd.f32 %v740, %v520
    %v742 = vadd.f32 %v741, %v525
    %v743 = vadd.f32 %v742, %v528
    %v744 = vadd.f32 %v743, %v533
    %v745 = vadd.f32 %v744, %v536
    %v746 = vadd.f32 %v745, %v541
    %v747 = vadd.f32 %v746, %v544
    %v748 = vadd.f32 %v747, %v549
    %v749 = vadd.f32 %v748, %v552
    %v750 = vadd.f32 %v749, %v557
    %v751 = vadd.f32 %v750, %v560
    %v752 = vadd.f32 %v751, %v565
    %v753 = vadd.f32 %v752, %v568
    %v754 = vadd.f32 %v753, %v573
    %v755 = vadd.f32 %v754, %v576
    %v756 = vadd.f32 %v755, %v581
    %v757 = vadd.f32 %v756, %v584
    %v758 = vadd.f32 %v757, %v589
    %v759 = vadd.f32 %v758, %v592
    %v760 = vadd.f32 %v759, %v597
    %v761 = vadd.f32 %v760, %v600
    %v762 = vadd.f32 %v761, %v605
    %v763 = vadd.f32 %v762, %v608
    %v764 = vadd.f32 %v763, %v613
    %v765 = vadd.f32 %v764, %v616
    %v766 = vadd.f32 %v765, %v621
    %v767 = vadd.f32 %v766, %v624
    %v768 = vadd.f32 %v767, %v629
    %v769 = vadd.f32 %v768, %v632
    %v770 = vadd.f32 %v769, %v637
    %v771 = vadd.f32 %v770, %v640
    %v772 = vadd.f32 %v771, %v645
    %v773 = vadd.f32 %v772, %v648
    %v774 = vadd.f32 %v773, %v653
    %v775 = vadd.f32 %v774, %v656
    %v776 = vadd.f32 %v775, %v661
    %v777 = vadd.f32 %v776, %v664
    %v778 = vadd.f32 %v777, %v669
    %v779 = vadd.f32 %v778, %v672
    %v780 = vadd.f32 %v779, %v677
    %v781 = vadd.f32 %v780, %v680
    %v782 = vadd.f32 %v781, %v685
    %v783 = vadd.f32 %v782, %v688
    %v784 = vadd.f32 %v783, %v693
    %v785 = vadd.f32 %v784, %v696
    %v786 = vadd.f32 %v785, %v701
    %v787 = vadd.f32 %v786, %v704
    %v788 = vadd.f32 %v787, %v709
    %v789 = vadd.f32 %v788, %v712
    %v790 = vadd.f32 %v789, %v717
    %v791 = vadd.f32 %v790, %v720
    %v792 = vadd.f32 %v791, %v725
    %v793 = vadd.f32 %v792, %v728
    %v794 = vrot.slane %v793, 4
    %v795 = vadd.f32 %v793, %v794
    %v796 = vrot.slane %v795, 2
    %v797 = vadd.f32 %v795, %v796
    %v798 = vrot.slane %v797, 1
    %v799 = vadd.f32 %v797, %v798
    %v800 = vrcp.pop 512.0
    %v801 = vmul.f32 %v799, %v800
    %v802 = vmul.f32 %v477, %v477
    %v803 = vmul.f32 %v480, %v480
    %v804 = vmul.f32 %v485, %v485
    %v805 = vmul.f32 %v488, %v488
    %v806 = vmul.f32 %v493, %v493
    %v807 = vmul.f32 %v496, %v496
    %v808 = vmul.f32 %v501, %v501
    %v809 = vmul.f32 %v504, %v504
    %v810 = vmul.f32 %v509, %v509
    %v811 = vmul.f32 %v512, %v512
    %v812 = vmul.f32 %v517, %v517
    %v813 = vmul.f32 %v520, %v520
    %v814 = vmul.f32 %v525, %v525
    %v815 = vmul.f32 %v528, %v528
    %v816 = vmul.f32 %v533, %v533
    %v817 = vmul.f32 %v536, %v536
    %v818 = vmul.f32 %v541, %v541
    %v819 = vmul.f32 %v544, %v544
    %v820 = vmul.f32 %v549, %v549
    %v821 = vmul.f32 %v552, %v552
    %v822 = vmul.f32 %v557, %v557
    %v823 = vmul.f32 %v560, %v560
    %v824 = vmul.f32 %v565, %v565
    %v825 = vmul.f32 %v568, %v568
    %v826 = vmul.f32 %v573, %v573
    %v827 = vmul.f32 %v576, %v576
    %v828 = vmul.f32 %v581, %v581
    %v829 = vmul.f32 %v584, %v584
    %v830 = vmul.f32 %v589, %v589
    %v831 = vmul.f32 %v592, %v592
    %v832 = vmul.f32 %v597, %v597
    %v833 = vmul.f32 %v600, %v600
    %v834 = vmul.f32 %v605, %v605
    %v835 = vmul.f32 %v608, %v608
    %v836 = vmul.f32 %v613, %v613
    %v837 = vmul.f32 %v616, %v616
    %v838 = vmul.f32 %v621, %v621
    %v839 = vmul.f32 %v624, %v624
    %v840 = vmul.f32 %v629, %v629
    %v841 = vmul.f32 %v632, %v632
    %v842 = vmul.f32 %v637, %v637
    %v843 = vmul.f32 %v640, %v640
    %v844 = vmul.f32 %v645, %v645
    %v845 = vmul.f32 %v648, %v648
    %v846 = vmul.f32 %v653, %v653
    %v847 = vmul.f32 %v656, %v656
    %v848 = vmul.f32 %v661, %v661
    %v849 = vmul.f32 %v664, %v664
    %v850 = vmul.f32 %v669, %v669
    %v851 = vmul.f32 %v672, %v672
    %v852 = vmul.f32 %v677, %v677
    %v853 = vmul.f32 %v680, %v680
    %v854 = vmul.f32 %v685, %v685
    %v855 = vmul.f32 %v688, %v688
    %v856 = vmul.f32 %v693, %v693
    %v857 = vmul.f32 %v696, %v696
    %v858 = vmul.f32 %v701, %v701
    %v859 = vmul.f32 %v704, %v704
    %v860 = vmul.f32 %v709, %v709
    %v861 = vmul.f32 %v712, %v712
    %v862 = vmul.f32 %v717, %v717
    %v863 = vmul.f32 %v720, %v720
    %v864 = vmul.f32 %v725, %v725
    %v865 = vmul.f32 %v728, %v728
    %v866 = vadd.f32 %v802, %v803
    %v867 = vadd.f32 %v866, %v804
    %v868 = vadd.f32 %v867, %v805
    %v869 = vadd.f32 %v868, %v806
    %v870 = vadd.f32 %v869, %v807
    %v871 = vadd.f32 %v870, %v808
    %v872 = vadd.f32 %v871, %v809
    %v873 = vadd.f32 %v872, %v810
    %v874 = vadd.f32 %v873, %v811
    %v875 = vadd.f32 %v874, %v812
    %v876 = vadd.f32 %v875, %v813
    %v877 = vadd.f32 %v876, %v814
    %v878 = vadd.f32 %v877, %v815
    %v879 = vadd.f32 %v878, %v816
    %v880 = vadd.f32 %v879, %v817
    %v881 = vadd.f32 %v880, %v818
    %v882 = vadd.f32 %v881, %v819
    %v883 = vadd.f32 %v882, %v820
    %v884 = vadd.f32 %v883, %v821
    %v885 = vadd.f32 %v884, %v822
    %v886 = vadd.f32 %v885, %v823
    %v887 = vadd.f32 %v886, %v824
    %v888 = vadd.f32 %v887, %v825
    %v889 = vadd.f32 %v888, %v826
    %v890 = vadd.f32 %v889, %v827
    %v891 = vadd.f32 %v890, %v828
    %v892 = vadd.f32 %v891, %v829
    %v893 = vadd.f32 %v892, %v830
    %v894 = vadd.f32 %v893, %v831
    %v895 = vadd.f32 %v894, %v832
    %v896 = vadd.f32 %v895, %v833
    %v897 = vadd.f32 %v896, %v834
    %v898 = vadd.f32 %v897, %v835
    %v899 = vadd.f32 %v898, %v836
    %v900 = vadd.f32 %v899, %v837
    %v901 = vadd.f32 %v900, %v838
    %v902 = vadd.f32 %v901, %v839
    %v903 = vadd.f32 %v902, %v840
    %v904 = vadd.f32 %v903, %v841
    %v905 = vadd.f32 %v904, %v842
    %v906 = vadd.f32 %v905, %v843
    %v907 = vadd.f32 %v906, %v844
    %v908 = vadd.f32 %v907, %v845
    %v909 = vadd.f32 %v908, %v846
    %v910 = vadd.f32 %v909, %v847
    %v911 = vadd.f32 %v910, %v848
    %v912 = vadd.f32 %v911, %v849
    %v913 = vadd.f32 %v912, %v850
    %v914 = vadd.f32 %v913, %v851
    %v915 = vadd.f32 %v914, %v852
    %v916 = vadd.f32 %v915, %v853
    %v917 = vadd.f32 %v916, %v854
    %v918 = vadd.f32 %v917, %v855
    %v919 = vadd.f32 %v918, %v856
    %v920 = vadd.f32 %v919, %v857
    %v921 = vadd.f32 %v920, %v858
    %v922 = vadd.f32 %v921, %v859
    %v923 = vadd.f32 %v922, %v860
    %v924 = vadd.f32 %v923, %v861
    %v925 = vadd.f32 %v924, %v862
    %v926 = vadd.f32 %v925, %v863
    %v927 = vadd.f32 %v926, %v864
    %v928 = vadd.f32 %v927, %v865
    %v929 = vrot.slane %v928, 4
    %v930 = vadd.f32 %v928, %v929
    %v931 = vrot.slane %v930, 2
    %v932 = vadd.f32 %v930, %v931
    %v933 = vrot.slane %v932, 1
    %v934 = vadd.f32 %v932, %v933
    %v935 = vmul.f32 %v934, %v800
    %v936 = vmul.f32 %v801, %v801
    %v937 = vsub.f32 %v935, %v936
    %v938 = vmax.f32 %v937, 0.0
    %v939 = vadd.f32 %v938, 1e-05
    %v940 = vrsqrt.pop %v939
    %v941 = vmul.f32 %v121, %v940
    %v942 = vmul.f32 %v801, %v941
    %v944 = vrot.slane %v942, 7
    %v946 = vsub.f32 %v121, %v944
    %v947 = vlaneseq
    %v948 = vshrl.u32 %v947, 7
    %v949 = vsub.s32 0, %v948
    %v950 = vrot.slane %v941, %v949
    %v951 = vmul.f32 %v477, %v950
    %v952 = vmul.f32 %v480, %v950
    %v953 = vmul.f32 %v485, %v950
    %v954 = vmul.f32 %v488, %v950
    %v955 = vmul.f32 %v493, %v950
    %v956 = vmul.f32 %v496, %v950
    %v957 = vmul.f32 %v501, %v950
    %v958 = vmul.f32 %v504, %v950
    %v959 = vmul.f32 %v509, %v950
    %v960 = vmul.f32 %v512, %v950
    %v961 = vmul.f32 %v517, %v950
    %v962 = vmul.f32 %v520, %v950
    %v963 = vmul.f32 %v525, %v950
    %v964 = vmul.f32 %v528, %v950
    %v965 = vmul.f32 %v533, %v950
    %v966 = vmul.f32 %v536, %v950
    %v967 = vmul.f32 %v541, %v950
    %v968 = vmul.f32 %v544, %v950
    %v969 = vmul.f32 %v549, %v950
    %v970 = vmul.f32 %v552, %v950
    %v971 = vmul.f32 %v557, %v950
    %v972 = vmul.f32 %v560, %v950
    %v973 = vmul.f32 %v565, %v950
    %v974 = vmul.f32 %v568, %v950
    %v975 = vmul.f32 %v573, %v950
    %v976 = vmul.f32 %v576, %v950
    %v977 = vmul.f32 %v581, %v950
    %v978 = vmul.f32 %v584, %v950
    %v979 = vmul.f32 %v589, %v950
    %v980 = vmul.f32 %v592, %v950
    %v981 = vmul.f32 %v597, %v950
    %v982 = vmul.f32 %v600, %v950
    %v983 = vmul.f32 %v605, %v950
    %v984 = vmul.f32 %v608, %v950
    %v985 = vmul.f32 %v613, %v950
    %v986 = vmul.f32 %v616, %v950
    %v987 = vmul.f32 %v621, %v950
    %v988 = vmul.f32 %v624, %v950
    %v989 = vmul.f32 %v629, %v950
    %v990 = vmul.f32 %v632, %v950
    %v991 = vmul.f32 %v637, %v950
    %v992 = vmul.f32 %v640, %v950
    %v993 = vmul.f32 %v645, %v950
    %v994 = vmul.f32 %v648, %v950
    %v995 = vmul.f32 %v653, %v950
    %v996 = vmul.f32 %v656, %v950
    %v997 = vmul.f32 %v661, %v950
    %v998 = vmul.f32 %v664, %v950
    %v999 = vmul.f32 %v669, %v950
    %v1000 = vmul.f32 %v672, %v950
    %v1001 = vmul.f32 %v677, %v950
    %v1002 = vmul.f32 %v680, %v950
    %v1003 = vmul.f32 %v685, %v950
    %v1004 = vmul.f32 %v688, %v950
    %v1005 = vmul.f32 %v693, %v950
    %v1006 = vmul.f32 %v696, %v950
    %v1007 = vmul.f32 %v701, %v950
    %v1008 = vmul.f32 %v704, %v950
    %v1009 = vmul.f32 %v709, %v950
    %v1010 = vmul.f32 %v712, %v950
    %v1011 = vmul.f32 %v717, %v950
    %v1012 = vmul.f32 %v720, %v950
    %v1013 = vmul.f32 %v725, %v950
    %v1014 = vmul.f32 %v728, %v950
    %v1015 = vlaneseq
    %v1016 = vshrl.u32 %v1015, 7
    %v1017 = vsub.s32 1, %v1016
    %v1018 = vrot.slane %v946, %v1017
    %v1019 = vadd.f32 %v951, %v1018
    %v1020 = vadd.f32 %v952, %v1018
    %v1021 = vadd.f32 %v953, %v1018
    %v1022 = vadd.f32 %v954, %v1018
    %v1023 = vadd.f32 %v955, %v1018
    %v1024 = vadd.f32 %v956, %v1018
    %v1025 = vadd.f32 %v957, %v1018
    %v1026 = vadd.f32 %v958, %v1018
    %v1027 = vadd.f32 %v959, %v1018
    %v1028 = vadd.f32 %v960, %v1018
    %v1029 = vadd.f32 %v961, %v1018
    %v1030 = vadd.f32 %v962, %v1018
    %v1031 = vadd.f32 %v963, %v1018
    %v1032 = vadd.f32 %v964, %v1018
    %v1033 = vadd.f32 %v965, %v1018
    %v1034 = vadd.f32 %v966, %v1018
    %v1035 = vadd.f32 %v967, %v1018
    %v1036 = vadd.f32 %v968, %v1018
    %v1037 = vadd.f32 %v969, %v1018
    %v1038 = vadd.f32 %v970, %v1018
    %v1039 = vadd.f32 %v971, %v1018
    %v1040 = vadd.f32 %v972, %v1018
    %v1041 = vadd.f32 %v973, %v1018
    %v1042 = vadd.f32 %v974, %v1018
    %v1043 = vadd.f32 %v975, %v1018
    %v1044 = vadd.f32 %v976, %v1018
    %v1045 = vadd.f32 %v977, %v1018
    %v1046 = vadd.f32 %v978, %v1018
    %v1047 = vadd.f32 %v979, %v1018
    %v1048 = vadd.f32 %v980, %v1018
    %v1049 = vadd.f32 %v981, %v1018
    %v1050 = vadd.f32 %v982, %v1018
    %v1051 = vadd.f32 %v983, %v1018
    %v1052 = vadd.f32 %v984, %v1018
    %v1053 = vadd.f32 %v985, %v1018
    %v1054 = vadd.f32 %v986, %v1018
    %v1055 = vadd.f32 %v987, %v1018
    %v1056 = vadd.f32 %v988, %v1018
    %v1057 = vadd.f32 %v989, %v1018
    %v1058 = vadd.f32 %v990, %v1018
    %v1059 = vadd.f32 %v991, %v1018
    %v1060 = vadd.f32 %v992, %v1018
    %v1061 = vadd.f32 %v993, %v1018
    %v1062 = vadd.f32 %v994, %v1018
    %v1063 = vadd.f32 %v995, %v1018
    %v1064 = vadd.f32 %v996, %v1018
    %v1065 = vadd.f32 %v997, %v1018
    %v1066 = vadd.f32 %v998, %v1018
    %v1067 = vadd.f32 %v999, %v1018
    %v1068 = vadd.f32 %v1000, %v1018
    %v1069 = vadd.f32 %v1001, %v1018
    %v1070 = vadd.f32 %v1002, %v1018
    %v1071 = vadd.f32 %v1003, %v1018
    %v1072 = vadd.f32 %v1004, %v1018
    %v1073 = vadd.f32 %v1005, %v1018
    %v1074 = vadd.f32 %v1006, %v1018
    %v1075 = vadd.f32 %v1007, %v1018
    %v1076 = vadd.f32 %v1008, %v1018
    %v1077 = vadd.f32 %v1009, %v1018
    %v1078 = vadd.f32 %v1010, %v1018
    %v1079 = vadd.f32 %v1011, %v1018
    %v1080 = vadd.f32 %v1012, %v1018
    %v1081 = vadd.f32 %v1013, %v1018
    %v1082 = vadd.f32 %v1014, %v1018
    %v1083 = vmax.f32 %v1019, 0.0
    %v1084 = vmax.f32 %v1020, 0.0
    %v1085 = vmax.f32 %v1021, 0.0
    %v1086 = vmax.f32 %v1022, 0.0
    %v1087 = vmax.f32 %v1023, 0.0
    %v1088 = vmax.f32 %v1024, 0.0
    %v1089 = vmax.f32 %v1025, 0.0
    %v1090 = vmax.f32 %v1026, 0.0
    %v1091 = vmax.f32 %v1027, 0.0
    %v1092 = vmax.f32 %v1028, 0.0
    %v1093 = vmax.f32 %v1029, 0.0
    %v1094 = vmax.f32 %v1030, 0.0
    %v1095 = vmax.f32 %v1031, 0.0
    %v1096 = vmax.f32 %v1032, 0.0
    %v1097 = vmax.f32 %v1033, 0.0
    %v1098 = vmax.f32 %v1034, 0.0
    %v1099 = vmax.f32 %v1035, 0.0
    %v1100 = vmax.f32 %v1036, 0.0
    %v1101 = vmax.f32 %v1037, 0.0
    %v1102 = vmax.f32 %v1038, 0.0
    %v1103 = vmax.f32 %v1039, 0.0
    %v1104 = vmax.f32 %v1040, 0.0
    %v1105 = vmax.f32 %v1041, 0.0
    %v1106 = vmax.f32 %v1042, 0.0
    %v1107 = vmax.f32 %v1043, 0.0
    %v1108 = vmax.f32 %v1044, 0.0
    %v1109 = vmax.f32 %v1045, 0.0
    %v1110 = vmax.f32 %v1046, 0.0
    %v1111 = vmax.f32 %v1047, 0.0
    %v1112 = vmax.f32 %v1048, 0.0
    %v1113 = vmax.f32 %v1049, 0.0
    %v1114 = vmax.f32 %v1050, 0.0
    %v1115 = vmax.f32 %v1051, 0.0
    %v1116 = vmax.f32 %v1052, 0.0
    %v1117 = vmax.f32 %v1053, 0.0
    %v1118 = vmax.f32 %v1054, 0.0
    %v1119 = vmax.f32 %v1055, 0.0
    %v1120 = vmax.f32 %v1056, 0.0
    %v1121 = vmax.f32 %v1057, 0.0
    %v1122 = vmax.f32 %v1058, 0.0
    %v1123 = vmax.f32 %v1059, 0.0
    %v1124 = vmax.f32 %v1060, 0.0
    %v1125 = vmax.f32 %v1061, 0.0
    %v1126 = vmax.f32 %v1062, 0.0
    %v1127 = vmax.f32 %v1063, 0.0
    %v1128 = vmax.f32 %v1064, 0.0
    %v1129 = vmax.f32 %v1065, 0.0
    %v1130 = vmax.f32 %v1066, 0.0
    %v1131 = vmax.f32 %v1067, 0.0
    %v1132 = vmax.f32 %v1068, 0.0
    %v1133 = vmax.f32 %v1069, 0.0
    %v1134 = vmax.f32 %v1070, 0.0
    %v1135 = vmax.f32 %v1071, 0.0
    %v1136 = vmax.f32 %v1072, 0.0
    %v1137 = vmax.f32 %v1073, 0.0
    %v1138 = vmax.f32 %v1074, 0.0
    %v1139 = vmax.f32 %v1075, 0.0
    %v1140 = vmax.f32 %v1076, 0.0
    %v1141 = vmax.f32 %v1077, 0.0
    %v1142 = vmax.f32 %v1078, 0.0
    %v1143 = vmax.f32 %v1079, 0.0
    %v1144 = vmax.f32 %v1080, 0.0
    %v1145 = vmax.f32 %v1081, 0.0
    %v1146 = vmax.f32 %v1082, 0.0
    %v1147 = vpack.c.bf16 %v1084, %v1083
    %v1148 = vpack.c.bf16 %v1086, %v1085
    %v1149 = vpack.c.bf16 %v1088, %v1087
    %v1150 = vpack.c.bf16 %v1090, %v1089
    %v1151 = vpack.c.bf16 %v1092, %v1091
    %v1152 = vpack.c.bf16 %v1094, %v1093
    %v1153 = vpack.c.bf16 %v1096, %v1095
    %v1154 = vpack.c.bf16 %v1098, %v1097
    %v1155 = vpack.c.bf16 %v1100, %v1099
    %v1156 = vpack.c.bf16 %v1102, %v1101
    %v1157 = vpack.c.bf16 %v1104, %v1103
    %v1158 = vpack.c.bf16 %v1106, %v1105
    %v1159 = vpack.c.bf16 %v1108, %v1107
    %v1160 = vpack.c.bf16 %v1110, %v1109
    %v1161 = vpack.c.bf16 %v1112, %v1111
    %v1162 = vpack.c.bf16 %v1114, %v1113
    %v1163 = vpack.c.bf16 %v1116, %v1115
    %v1164 = vpack.c.bf16 %v1118, %v1117
    %v1165 = vpack.c.bf16 %v1120, %v1119
    %v1166 = vpack.c.bf16 %v1122, %v1121
    %v1167 = vpack.c.bf16 %v1124, %v1123
    %v1168 = vpack.c.bf16 %v1126, %v1125
    %v1169 = vpack.c.bf16 %v1128, %v1127
    %v1170 = vpack.c.bf16 %v1130, %v1129
    %v1171 = vpack.c.bf16 %v1132, %v1131
    %v1172 = vpack.c.bf16 %v1134, %v1133
    %v1173 = vpack.c.bf16 %v1136, %v1135
    %v1174 = vpack.c.bf16 %v1138, %v1137
    %v1175 = vpack.c.bf16 %v1140, %v1139
    %v1176 = vpack.c.bf16 %v1142, %v1141
    %v1177 = vpack.c.bf16 %v1144, %v1143
    %v1178 = vpack.c.bf16 %v1146, %v1145
    %v1179 = vld [vmem:[#allocation8] sm:$0xff]
    %v1180 = vld [vmem:[#allocation8 + $0x8] sm:$0xff]
    %v1181 = vld [vmem:[#allocation8 + $0x10] sm:$0xff]
    %v1182 = vld [vmem:[#allocation8 + $0x18] sm:$0xff]
    %v1183 = vld [vmem:[#allocation8 + $0x20] sm:$0xff]
    %v1184 = vld [vmem:[#allocation8 + $0x28] sm:$0xff]
    %v1185 = vld [vmem:[#allocation8 + $0x30] sm:$0xff]
    %v1186 = vld [vmem:[#allocation8 + $0x38] sm:$0xff]
    %v1187 = vld [vmem:[#allocation8 + $0x40] sm:$0xff]
    %v1188 = vld [vmem:[#allocation8 + $0x48] sm:$0xff]
    %v1189 = vld [vmem:[#allocation8 + $0x50] sm:$0xff]
    %v1190 = vld [vmem:[#allocation8 + $0x58] sm:$0xff]
    %v1191 = vld [vmem:[#allocation8 + $0x60] sm:$0xff]
    %v1192 = vld [vmem:[#allocation8 + $0x68] sm:$0xff]
    %v1193 = vld [vmem:[#allocation8 + $0x70] sm:$0xff]
    %v1194 = vld [vmem:[#allocation8 + $0x78] sm:$0xff]
    %v1195 = vld [vmem:[#allocation8 + $0x80] sm:$0xff]
    %v1196 = vld [vmem:[#allocation8 + $0x88] sm:$0xff]
    %v1197 = vld [vmem:[#allocation8 + $0x90] sm:$0xff]
    %v1198 = vld [vmem:[#allocation8 + $0x98] sm:$0xff]
    %v1199 = vld [vmem:[#allocation8 + $0xa0] sm:$0xff]
    %v1200 = vld [vmem:[#allocation8 + $0xa8] sm:$0xff]
    %v1201 = vld [vmem:[#allocation8 + $0xb0] sm:$0xff]
    %v1202 = vld [vmem:[#allocation8 + $0xb8] sm:$0xff]
    %v1203 = vld [vmem:[#allocation8 + $0xc0] sm:$0xff]
    %v1204 = vld [vmem:[#allocation8 + $0xc8] sm:$0xff]
    %v1205 = vld [vmem:[#allocation8 + $0xd0] sm:$0xff]
    %v1206 = vld [vmem:[#allocation8 + $0xd8] sm:$0xff]
    %v1207 = vld [vmem:[#allocation8 + $0xe0] sm:$0xff]
    %v1208 = vld [vmem:[#allocation8 + $0xe8] sm:$0xff]
    %v1209 = vld [vmem:[#allocation8 + $0xf0] sm:$0xff]
    %v1210 = vld [vmem:[#allocation8 + $0xf8] sm:$0xff]
    %v1211 = vld [vmem:[#allocation8 + $0x100] sm:$0xff]
    %v1212 = vld [vmem:[#allocation8 + $0x108] sm:$0xff]
    %v1213 = vld [vmem:[#allocation8 + $0x110] sm:$0xff]
    %v1214 = vld [vmem:[#allocation8 + $0x118] sm:$0xff]
    %v1215 = vld [vmem:[#allocation8 + $0x120] sm:$0xff]
    %v1216 = vld [vmem:[#allocation8 + $0x128] sm:$0xff]
    %v1217 = vld [vmem:[#allocation8 + $0x130] sm:$0xff]
    %v1218 = vld [vmem:[#allocation8 + $0x138] sm:$0xff]
    %v1219 = vld [vmem:[#allocation8 + $0x140] sm:$0xff]
    %v1220 = vld [vmem:[#allocation8 + $0x148] sm:$0xff]
    %v1221 = vld [vmem:[#allocation8 + $0x150] sm:$0xff]
    %v1222 = vld [vmem:[#allocation8 + $0x158] sm:$0xff]
    %v1223 = vld [vmem:[#allocation8 + $0x160] sm:$0xff]
    %v1224 = vld [vmem:[#allocation8 + $0x168] sm:$0xff]
    %v1225 = vld [vmem:[#allocation8 + $0x170] sm:$0xff]
    %v1226 = vld [vmem:[#allocation8 + $0x178] sm:$0xff]
    %v1227 = vld [vmem:[#allocation8 + $0x180] sm:$0xff]
    %v1228 = vld [vmem:[#allocation8 + $0x188] sm:$0xff]
    %v1229 = vld [vmem:[#allocation8 + $0x190] sm:$0xff]
    %v1230 = vld [vmem:[#allocation8 + $0x198] sm:$0xff]
    %v1231 = vld [vmem:[#allocation8 + $0x1a0] sm:$0xff]
    %v1232 = vld [vmem:[#allocation8 + $0x1a8] sm:$0xff]
    %v1233 = vld [vmem:[#allocation8 + $0x1b0] sm:$0xff]
    %v1234 = vld [vmem:[#allocation8 + $0x1b8] sm:$0xff]
    %v1235 = vld [vmem:[#allocation8 + $0x1c0] sm:$0xff]
    %v1236 = vld [vmem:[#allocation8 + $0x1c8] sm:$0xff]
    %v1237 = vld [vmem:[#allocation8 + $0x1d0] sm:$0xff]
    %v1238 = vld [vmem:[#allocation8 + $0x1d8] sm:$0xff]
    %v1239 = vld [vmem:[#allocation8 + $0x1e0] sm:$0xff]
    %v1240 = vld [vmem:[#allocation8 + $0x1e8] sm:$0xff]
    %v1241 = vld [vmem:[#allocation8 + $0x1f0] sm:$0xff]
    %v1242 = vld [vmem:[#allocation8 + $0x1f8] sm:$0xff]
    %v1243 = vld [vmem:[#allocation8 + $0x200] sm:$0xff]
    %v1244 = vld [vmem:[#allocation8 + $0x208] sm:$0xff]
    %v1245 = vld [vmem:[#allocation8 + $0x210] sm:$0xff]
    %v1246 = vld [vmem:[#allocation8 + $0x218] sm:$0xff]
    %v1247 = vld [vmem:[#allocation8 + $0x220] sm:$0xff]
    %v1248 = vld [vmem:[#allocation8 + $0x228] sm:$0xff]
    %v1249 = vld [vmem:[#allocation8 + $0x230] sm:$0xff]
    %v1250 = vld [vmem:[#allocation8 + $0x238] sm:$0xff]
    %v1251 = vld [vmem:[#allocation8 + $0x240] sm:$0xff]
    %v1252 = vld [vmem:[#allocation8 + $0x248] sm:$0xff]
    %v1253 = vld [vmem:[#allocation8 + $0x250] sm:$0xff]
    %v1254 = vld [vmem:[#allocation8 + $0x258] sm:$0xff]
    %v1255 = vld [vmem:[#allocation8 + $0x260] sm:$0xff]
    %v1256 = vld [vmem:[#allocation8 + $0x268] sm:$0xff]
    %v1257 = vld [vmem:[#allocation8 + $0x270] sm:$0xff]
    %v1258 = vld [vmem:[#allocation8 + $0x278] sm:$0xff]
    %v1259 = vld [vmem:[#allocation8 + $0x280] sm:$0xff]
    %v1260 = vld [vmem:[#allocation8 + $0x288] sm:$0xff]
    %v1261 = vld [vmem:[#allocation8 + $0x290] sm:$0xff]
    %v1262 = vld [vmem:[#allocation8 + $0x298] sm:$0xff]
    %v1263 = vld [vmem:[#allocation8 + $0x2a0] sm:$0xff]
    %v1264 = vld [vmem:[#allocation8 + $0x2a8] sm:$0xff]
    %v1265 = vld [vmem:[#allocation8 + $0x2b0] sm:$0xff]
    %v1266 = vld [vmem:[#allocation8 + $0x2b8] sm:$0xff]
    %v1267 = vld [vmem:[#allocation8 + $0x2c0] sm:$0xff]
    %v1268 = vld [vmem:[#allocation8 + $0x2c8] sm:$0xff]
    %v1269 = vld [vmem:[#allocation8 + $0x2d0] sm:$0xff]
    %v1270 = vld [vmem:[#allocation8 + $0x2d8] sm:$0xff]
    %v1271 = vld [vmem:[#allocation8 + $0x2e0] sm:$0xff]
    %v1272 = vld [vmem:[#allocation8 + $0x2e8] sm:$0xff]
    %v1273 = vld [vmem:[#allocation8 + $0x2f0] sm:$0xff]
    %v1274 = vld [vmem:[#allocation8 + $0x2f8] sm:$0xff]
    %v1275 = vld [vmem:[#allocation8 + $0x300] sm:$0xff]
    %v1276 = vld [vmem:[#allocation8 + $0x308] sm:$0xff]
    %v1277 = vld [vmem:[#allocation8 + $0x310] sm:$0xff]
    %v1278 = vld [vmem:[#allocation8 + $0x318] sm:$0xff]
    %v1279 = vld [vmem:[#allocation8 + $0x320] sm:$0xff]
    %v1280 = vld [vmem:[#allocation8 + $0x328] sm:$0xff]
    %v1281 = vld [vmem:[#allocation8 + $0x330] sm:$0xff]
    %v1282 = vld [vmem:[#allocation8 + $0x338] sm:$0xff]
    %v1283 = vld [vmem:[#allocation8 + $0x340] sm:$0xff]
    %v1284 = vld [vmem:[#allocation8 + $0x348] sm:$0xff]
    %v1285 = vld [vmem:[#allocation8 + $0x350] sm:$0xff]
    %v1286 = vld [vmem:[#allocation8 + $0x358] sm:$0xff]
    %v1287 = vld [vmem:[#allocation8 + $0x360] sm:$0xff]
    %v1288 = vld [vmem:[#allocation8 + $0x368] sm:$0xff]
    %v1289 = vld [vmem:[#allocation8 + $0x370] sm:$0xff]
    %v1290 = vld [vmem:[#allocation8 + $0x378] sm:$0xff]
    %v1291 = vld [vmem:[#allocation8 + $0x380] sm:$0xff]
    %v1292 = vld [vmem:[#allocation8 + $0x388] sm:$0xff]
    %v1293 = vld [vmem:[#allocation8 + $0x390] sm:$0xff]
    %v1294 = vld [vmem:[#allocation8 + $0x398] sm:$0xff]
    %v1295 = vld [vmem:[#allocation8 + $0x3a0] sm:$0xff]
    %v1296 = vld [vmem:[#allocation8 + $0x3a8] sm:$0xff]
    %v1297 = vld [vmem:[#allocation8 + $0x3b0] sm:$0xff]
    %v1298 = vld [vmem:[#allocation8 + $0x3b8] sm:$0xff]
    %v1299 = vld [vmem:[#allocation8 + $0x3c0] sm:$0xff]
    %v1300 = vld [vmem:[#allocation8 + $0x3c8] sm:$0xff]
    %v1301 = vld [vmem:[#allocation8 + $0x3d0] sm:$0xff]
    %v1302 = vld [vmem:[#allocation8 + $0x3d8] sm:$0xff]
    %v1303 = vld [vmem:[#allocation8 + $0x3e0] sm:$0xff]
    %v1304 = vld [vmem:[#allocation8 + $0x3e8] sm:$0xff]
    %v1305 = vld [vmem:[#allocation8 + $0x3f0] sm:$0xff]
    %v1306 = vld [vmem:[#allocation8 + $0x3f8] sm:$0xff]
    %v1307 = vld [vmem:[#allocation8 + $0x400] sm:$0xff]
    %v1308 = vld [vmem:[#allocation8 + $0x408] sm:$0xff]
    %v1309 = vld [vmem:[#allocation8 + $0x410] sm:$0xff]
    %v1310 = vld [vmem:[#allocation8 + $0x418] sm:$0xff]
    %v1311 = vld [vmem:[#allocation8 + $0x420] sm:$0xff]
    %v1312 = vld [vmem:[#allocation8 + $0x428] sm:$0xff]
    %v1313 = vld [vmem:[#allocation8 + $0x430] sm:$0xff]
    %v1314 = vld [vmem:[#allocation8 + $0x438] sm:$0xff]
    %v1315 = vld [vmem:[#allocation8 + $0x440] sm:$0xff]
    %v1316 = vld [vmem:[#allocation8 + $0x448] sm:$0xff]
    %v1317 = vld [vmem:[#allocation8 + $0x450] sm:$0xff]
    %v1318 = vld [vmem:[#allocation8 + $0x458] sm:$0xff]
    %v1319 = vld [vmem:[#allocation8 + $0x460] sm:$0xff]
    %v1320 = vld [vmem:[#allocation8 + $0x468] sm:$0xff]
    %v1321 = vld [vmem:[#allocation8 + $0x470] sm:$0xff]
    %v1322 = vld [vmem:[#allocation8 + $0x478] sm:$0xff]
    %v1323 = vld [vmem:[#allocation8 + $0x480] sm:$0xff]
    %v1324 = vld [vmem:[#allocation8 + $0x488] sm:$0xff]
    %v1325 = vld [vmem:[#allocation8 + $0x490] sm:$0xff]
    %v1326 = vld [vmem:[#allocation8 + $0x498] sm:$0xff]
    %v1327 = vld [vmem:[#allocation8 + $0x4a0] sm:$0xff]
    %v1328 = vld [vmem:[#allocation8 + $0x4a8] sm:$0xff]
    %v1329 = vld [vmem:[#allocation8 + $0x4b0] sm:$0xff]
    %v1330 = vld [vmem:[#allocation8 + $0x4b8] sm:$0xff]
    %v1331 = vld [vmem:[#allocation8 + $0x4c0] sm:$0xff]
    %v1332 = vld [vmem:[#allocation8 + $0x4c8] sm:$0xff]
    %v1333 = vld [vmem:[#allocation8 + $0x4d0] sm:$0xff]
    %v1334 = vld [vmem:[#allocation8 + $0x4d8] sm:$0xff]
    %v1335 = vld [vmem:[#allocation8 + $0x4e0] sm:$0xff]
    %v1336 = vld [vmem:[#allocation8 + $0x4e8] sm:$0xff]
    %v1337 = vld [vmem:[#allocation8 + $0x4f0] sm:$0xff]
    %v1338 = vld [vmem:[#allocation8 + $0x4f8] sm:$0xff]
    %v1339 = vld [vmem:[#allocation8 + $0x500] sm:$0xff]
    %v1340 = vld [vmem:[#allocation8 + $0x508] sm:$0xff]
    %v1341 = vld [vmem:[#allocation8 + $0x510] sm:$0xff]
    %v1342 = vld [vmem:[#allocation8 + $0x518] sm:$0xff]
    %v1343 = vld [vmem:[#allocation8 + $0x520] sm:$0xff]
    %v1344 = vld [vmem:[#allocation8 + $0x528] sm:$0xff]
    %v1345 = vld [vmem:[#allocation8 + $0x530] sm:$0xff]
    %v1346 = vld [vmem:[#allocation8 + $0x538] sm:$0xff]
    %v1347 = vld [vmem:[#allocation8 + $0x540] sm:$0xff]
    %v1348 = vld [vmem:[#allocation8 + $0x548] sm:$0xff]
    %v1349 = vld [vmem:[#allocation8 + $0x550] sm:$0xff]
    %v1350 = vld [vmem:[#allocation8 + $0x558] sm:$0xff]
    %v1351 = vld [vmem:[#allocation8 + $0x560] sm:$0xff]
    %v1352 = vld [vmem:[#allocation8 + $0x568] sm:$0xff]
    %v1353 = vld [vmem:[#allocation8 + $0x570] sm:$0xff]
    %v1354 = vld [vmem:[#allocation8 + $0x578] sm:$0xff]
    %v1355 = vld [vmem:[#allocation8 + $0x580] sm:$0xff]
    %v1356 = vld [vmem:[#allocation8 + $0x588] sm:$0xff]
    %v1357 = vld [vmem:[#allocation8 + $0x590] sm:$0xff]
    %v1358 = vld [vmem:[#allocation8 + $0x598] sm:$0xff]
    %v1359 = vld [vmem:[#allocation8 + $0x5a0] sm:$0xff]
    %v1360 = vld [vmem:[#allocation8 + $0x5a8] sm:$0xff]
    %v1361 = vld [vmem:[#allocation8 + $0x5b0] sm:$0xff]
    %v1362 = vld [vmem:[#allocation8 + $0x5b8] sm:$0xff]
    %v1363 = vld [vmem:[#allocation8 + $0x5c0] sm:$0xff]
    %v1364 = vld [vmem:[#allocation8 + $0x5c8] sm:$0xff]
    %v1365 = vld [vmem:[#allocation8 + $0x5d0] sm:$0xff]
    %v1366 = vld [vmem:[#allocation8 + $0x5d8] sm:$0xff]
    %v1367 = vld [vmem:[#allocation8 + $0x5e0] sm:$0xff]
    %v1368 = vld [vmem:[#allocation8 + $0x5e8] sm:$0xff]
    %v1369 = vld [vmem:[#allocation8 + $0x5f0] sm:$0xff]
    %v1370 = vld [vmem:[#allocation8 + $0x5f8] sm:$0xff]
    %v1371 = vld [vmem:[#allocation8 + $0x600] sm:$0xff]
    %v1372 = vld [vmem:[#allocation8 + $0x608] sm:$0xff]
    %v1373 = vld [vmem:[#allocation8 + $0x610] sm:$0xff]
    %v1374 = vld [vmem:[#allocation8 + $0x618] sm:$0xff]
    %v1375 = vld [vmem:[#allocation8 + $0x620] sm:$0xff]
    %v1376 = vld [vmem:[#allocation8 + $0x628] sm:$0xff]
    %v1377 = vld [vmem:[#allocation8 + $0x630] sm:$0xff]
    %v1378 = vld [vmem:[#allocation8 + $0x638] sm:$0xff]
    %v1379 = vld [vmem:[#allocation8 + $0x640] sm:$0xff]
    %v1380 = vld [vmem:[#allocation8 + $0x648] sm:$0xff]
    %v1381 = vld [vmem:[#allocation8 + $0x650] sm:$0xff]
    %v1382 = vld [vmem:[#allocation8 + $0x658] sm:$0xff]
    %v1383 = vld [vmem:[#allocation8 + $0x660] sm:$0xff]
    %v1384 = vld [vmem:[#allocation8 + $0x668] sm:$0xff]
    %v1385 = vld [vmem:[#allocation8 + $0x670] sm:$0xff]
    %v1386 = vld [vmem:[#allocation8 + $0x678] sm:$0xff]
    %v1387 = vld [vmem:[#allocation8 + $0x680] sm:$0xff]
    %v1388 = vld [vmem:[#allocation8 + $0x688] sm:$0xff]
    %v1389 = vld [vmem:[#allocation8 + $0x690] sm:$0xff]
    %v1390 = vld [vmem:[#allocation8 + $0x698] sm:$0xff]
    %v1391 = vld [vmem:[#allocation8 + $0x6a0] sm:$0xff]
    %v1392 = vld [vmem:[#allocation8 + $0x6a8] sm:$0xff]
    %v1393 = vld [vmem:[#allocation8 + $0x6b0] sm:$0xff]
    %v1394 = vld [vmem:[#allocation8 + $0x6b8] sm:$0xff]
    %v1395 = vld [vmem:[#allocation8 + $0x6c0] sm:$0xff]
    %v1396 = vld [vmem:[#allocation8 + $0x6c8] sm:$0xff]
    %v1397 = vld [vmem:[#allocation8 + $0x6d0] sm:$0xff]
    %v1398 = vld [vmem:[#allocation8 + $0x6d8] sm:$0xff]
    %v1399 = vld [vmem:[#allocation8 + $0x6e0] sm:$0xff]
    %v1400 = vld [vmem:[#allocation8 + $0x6e8] sm:$0xff]
    %v1401 = vld [vmem:[#allocation8 + $0x6f0] sm:$0xff]
    %v1402 = vld [vmem:[#allocation8 + $0x6f8] sm:$0xff]
    %v1403 = vld [vmem:[#allocation8 + $0x700] sm:$0xff]
    %v1404 = vld [vmem:[#allocation8 + $0x708] sm:$0xff]
    %v1405 = vld [vmem:[#allocation8 + $0x710] sm:$0xff]
    %v1406 = vld [vmem:[#allocation8 + $0x718] sm:$0xff]
    %v1407 = vld [vmem:[#allocation8 + $0x720] sm:$0xff]
    %v1408 = vld [vmem:[#allocation8 + $0x728] sm:$0xff]
    %v1409 = vld [vmem:[#allocation8 + $0x730] sm:$0xff]
    %v1410 = vld [vmem:[#allocation8 + $0x738] sm:$0xff]
    %v1411 = vld [vmem:[#allocation8 + $0x740] sm:$0xff]
    %v1412 = vld [vmem:[#allocation8 + $0x748] sm:$0xff]
    %v1413 = vld [vmem:[#allocation8 + $0x750] sm:$0xff]
    %v1414 = vld [vmem:[#allocation8 + $0x758] sm:$0xff]
    %v1415 = vld [vmem:[#allocation8 + $0x760] sm:$0xff]
    %v1416 = vld [vmem:[#allocation8 + $0x768] sm:$0xff]
    %v1417 = vld [vmem:[#allocation8 + $0x770] sm:$0xff]
    %v1418 = vld [vmem:[#allocation8 + $0x778] sm:$0xff]
    %v1419 = vld [vmem:[#allocation8 + $0x780] sm:$0xff]
    %v1420 = vld [vmem:[#allocation8 + $0x788] sm:$0xff]
    %v1421 = vld [vmem:[#allocation8 + $0x790] sm:$0xff]
    %v1422 = vld [vmem:[#allocation8 + $0x798] sm:$0xff]
    %v1423 = vld [vmem:[#allocation8 + $0x7a0] sm:$0xff]
    %v1424 = vld [vmem:[#allocation8 + $0x7a8] sm:$0xff]
    %v1425 = vld [vmem:[#allocation8 + $0x7b0] sm:$0xff]
    %v1426 = vld [vmem:[#allocation8 + $0x7b8] sm:$0xff]
    %v1427 = vld [vmem:[#allocation8 + $0x7c0] sm:$0xff]
    %v1428 = vld [vmem:[#allocation8 + $0x7c8] sm:$0xff]
    %v1429 = vld [vmem:[#allocation8 + $0x7d0] sm:$0xff]
    %v1430 = vld [vmem:[#allocation8 + $0x7d8] sm:$0xff]
    %v1431 = vld [vmem:[#allocation8 + $0x7e0] sm:$0xff]
    %v1432 = vld [vmem:[#allocation8 + $0x7e8] sm:$0xff]
    %v1433 = vld [vmem:[#allocation8 + $0x7f0] sm:$0xff]
    %v1434 = vld [vmem:[#allocation8 + $0x7f8] sm:$0xff]
    %v1435 = vld [vmem:[#allocation8 + $0x800] sm:$0xff]
    %v1436 = vld [vmem:[#allocation8 + $0x808] sm:$0xff]
    %v1437 = vld [vmem:[#allocation8 + $0x810] sm:$0xff]
    %v1438 = vld [vmem:[#allocation8 + $0x818] sm:$0xff]
    %v1439 = vld [vmem:[#allocation8 + $0x820] sm:$0xff]
    %v1440 = vld [vmem:[#allocation8 + $0x828] sm:$0xff]
    %v1441 = vld [vmem:[#allocation8 + $0x830] sm:$0xff]
    %v1442 = vld [vmem:[#allocation8 + $0x838] sm:$0xff]
    %v1443 = vld [vmem:[#allocation8 + $0x840] sm:$0xff]
    %v1444 = vld [vmem:[#allocation8 + $0x848] sm:$0xff]
    %v1445 = vld [vmem:[#allocation8 + $0x850] sm:$0xff]
    %v1446 = vld [vmem:[#allocation8 + $0x858] sm:$0xff]
    %v1447 = vld [vmem:[#allocation8 + $0x860] sm:$0xff]
    %v1448 = vld [vmem:[#allocation8 + $0x868] sm:$0xff]
    %v1449 = vld [vmem:[#allocation8 + $0x870] sm:$0xff]
    %v1450 = vld [vmem:[#allocation8 + $0x878] sm:$0xff]
    %v1451 = vld [vmem:[#allocation8 + $0x880] sm:$0xff]
    %v1452 = vld [vmem:[#allocation8 + $0x888] sm:$0xff]
    %v1453 = vld [vmem:[#allocation8 + $0x890] sm:$0xff]
    %v1454 = vld [vmem:[#allocation8 + $0x898] sm:$0xff]
    %v1455 = vld [vmem:[#allocation8 + $0x8a0] sm:$0xff]
    %v1456 = vld [vmem:[#allocation8 + $0x8a8] sm:$0xff]
    %v1457 = vld [vmem:[#allocation8 + $0x8b0] sm:$0xff]
    %v1458 = vld [vmem:[#allocation8 + $0x8b8] sm:$0xff]
    %v1459 = vld [vmem:[#allocation8 + $0x8c0] sm:$0xff]
    %v1460 = vld [vmem:[#allocation8 + $0x8c8] sm:$0xff]
    %v1461 = vld [vmem:[#allocation8 + $0x8d0] sm:$0xff]
    %v1462 = vld [vmem:[#allocation8 + $0x8d8] sm:$0xff]
    %v1463 = vld [vmem:[#allocation8 + $0x8e0] sm:$0xff]
    %v1464 = vld [vmem:[#allocation8 + $0x8e8] sm:$0xff]
    %v1465 = vld [vmem:[#allocation8 + $0x8f0] sm:$0xff]
    %v1466 = vld [vmem:[#allocation8 + $0x8f8] sm:$0xff]
    %v1755 = vunpack.c.l.b16 %v1179
    %v1756 = vunpack.c.h.b16 %v1179
    %v1757 = vunpack.c.l.b16 %v1180
    %v1758 = vunpack.c.h.b16 %v1180
    %v1759 = vunpack.c.l.b16 %v1181
    %v1760 = vunpack.c.h.b16 %v1181
    %v1761 = vunpack.c.l.b16 %v1182
    %v1762 = vunpack.c.h.b16 %v1182
    %v1763 = vunpack.c.l.b16 %v1183
    %v1764 = vunpack.c.h.b16 %v1183
    %v1765 = vunpack.c.l.b16 %v1184
    %v1766 = vunpack.c.h.b16 %v1184
    %v1767 = vunpack.c.l.b16 %v1185
    %v1768 = vunpack.c.h.b16 %v1185
    %v1769 = vunpack.c.l.b16 %v1186
    %v1770 = vunpack.c.h.b16 %v1186
    %v1771 = vunpack.c.l.b16 %v1187
    %v1772 = vunpack.c.h.b16 %v1187
    %v1773 = vunpack.c.l.b16 %v1188
    %v1774 = vunpack.c.h.b16 %v1188
    %v1775 = vunpack.c.l.b16 %v1189
    %v1776 = vunpack.c.h.b16 %v1189
    %v1777 = vunpack.c.l.b16 %v1190
    %v1778 = vunpack.c.h.b16 %v1190
    %v1779 = vunpack.c.l.b16 %v1191
    %v1780 = vunpack.c.h.b16 %v1191
    %v1781 = vunpack.c.l.b16 %v1192
    %v1782 = vunpack.c.h.b16 %v1192
    %v1783 = vunpack.c.l.b16 %v1193
    %v1784 = vunpack.c.h.b16 %v1193
    %v1785 = vunpack.c.l.b16 %v1194
    %v1786 = vunpack.c.h.b16 %v1194
    %v1787 = vunpack.c.l.b16 %v1195
    %v1788 = vunpack.c.h.b16 %v1195
    %v1789 = vunpack.c.l.b16 %v1196
    %v1790 = vunpack.c.h.b16 %v1196
    %v1791 = vunpack.c.l.b16 %v1197
    %v1792 = vunpack.c.h.b16 %v1197
    %v1793 = vunpack.c.l.b16 %v1198
    %v1794 = vunpack.c.h.b16 %v1198
    %v1795 = vunpack.c.l.b16 %v1199
    %v1796 = vunpack.c.h.b16 %v1199
    %v1797 = vunpack.c.l.b16 %v1200
    %v1798 = vunpack.c.h.b16 %v1200
    %v1799 = vunpack.c.l.b16 %v1201
    %v1800 = vunpack.c.h.b16 %v1201
    %v1801 = vunpack.c.l.b16 %v1202
    %v1802 = vunpack.c.h.b16 %v1202
    %v1803 = vunpack.c.l.b16 %v1203
    %v1804 = vunpack.c.h.b16 %v1203
    %v1805 = vunpack.c.l.b16 %v1204
    %v1806 = vunpack.c.h.b16 %v1204
    %v1807 = vunpack.c.l.b16 %v1205
    %v1808 = vunpack.c.h.b16 %v1205
    %v1809 = vunpack.c.l.b16 %v1206
    %v1810 = vunpack.c.h.b16 %v1206
    %v1811 = vunpack.c.l.b16 %v1207
    %v1812 = vunpack.c.h.b16 %v1207
    %v1813 = vunpack.c.l.b16 %v1208
    %v1814 = vunpack.c.h.b16 %v1208
    %v1815 = vunpack.c.l.b16 %v1209
    %v1816 = vunpack.c.h.b16 %v1209
    %v1817 = vunpack.c.l.b16 %v1210
    %v1818 = vunpack.c.h.b16 %v1210
    %v1819 = vunpack.c.l.b16 %v1211
    %v1820 = vunpack.c.h.b16 %v1211
    %v1821 = vunpack.c.l.b16 %v1212
    %v1822 = vunpack.c.h.b16 %v1212
    %v1823 = vunpack.c.l.b16 %v1213
    %v1824 = vunpack.c.h.b16 %v1213
    %v1825 = vunpack.c.l.b16 %v1214
    %v1826 = vunpack.c.h.b16 %v1214
    %v1827 = vunpack.c.l.b16 %v1215
    %v1828 = vunpack.c.h.b16 %v1215
    %v1829 = vunpack.c.l.b16 %v1216
    %v1830 = vunpack.c.h.b16 %v1216
    %v1831 = vunpack.c.l.b16 %v1217
    %v1832 = vunpack.c.h.b16 %v1217
    %v1833 = vunpack.c.l.b16 %v1218
    %v1834 = vunpack.c.h.b16 %v1218
    %v1835 = vunpack.c.l.b16 %v1219
    %v1836 = vunpack.c.h.b16 %v1219
    %v1837 = vunpack.c.l.b16 %v1220
    %v1838 = vunpack.c.h.b16 %v1220
    %v1839 = vunpack.c.l.b16 %v1221
    %v1840 = vunpack.c.h.b16 %v1221
    %v1841 = vunpack.c.l.b16 %v1222
    %v1842 = vunpack.c.h.b16 %v1222
    %v1843 = vunpack.c.l.b16 %v1223
    %v1844 = vunpack.c.h.b16 %v1223
    %v1845 = vunpack.c.l.b16 %v1224
    %v1846 = vunpack.c.h.b16 %v1224
    %v1847 = vunpack.c.l.b16 %v1225
    %v1848 = vunpack.c.h.b16 %v1225
    %v1849 = vunpack.c.l.b16 %v1226
    %v1850 = vunpack.c.h.b16 %v1226
    %v1851 = vunpack.c.l.b16 %v1227
    %v1852 = vunpack.c.h.b16 %v1227
    %v1853 = vunpack.c.l.b16 %v1228
    %v1854 = vunpack.c.h.b16 %v1228
    %v1855 = vunpack.c.l.b16 %v1229
    %v1856 = vunpack.c.h.b16 %v1229
    %v1857 = vunpack.c.l.b16 %v1230
    %v1858 = vunpack.c.h.b16 %v1230
    %v1859 = vunpack.c.l.b16 %v1231
    %v1860 = vunpack.c.h.b16 %v1231
    %v1861 = vunpack.c.l.b16 %v1232
    %v1862 = vunpack.c.h.b16 %v1232
    %v1863 = vunpack.c.l.b16 %v1233
    %v1864 = vunpack.c.h.b16 %v1233
    %v1865 = vunpack.c.l.b16 %v1234
    %v1866 = vunpack.c.h.b16 %v1234
    %v1867 = vunpack.c.l.b16 %v1235
    %v1868 = vunpack.c.h.b16 %v1235
    %v1869 = vunpack.c.l.b16 %v1236
    %v1870 = vunpack.c.h.b16 %v1236
    %v1871 = vunpack.c.l.b16 %v1237
    %v1872 = vunpack.c.h.b16 %v1237
    %v1873 = vunpack.c.l.b16 %v1238
    %v1874 = vunpack.c.h.b16 %v1238
    %v1875 = vunpack.c.l.b16 %v1239
    %v1876 = vunpack.c.h.b16 %v1239
    %v1877 = vunpack.c.l.b16 %v1240
    %v1878 = vunpack.c.h.b16 %v1240
    %v1879 = vunpack.c.l.b16 %v1241
    %v1880 = vunpack.c.h.b16 %v1241
    %v1881 = vunpack.c.l.b16 %v1242
    %v1882 = vunpack.c.h.b16 %v1242
    %v1883 = vunpack.c.l.b16 %v1243
    %v1884 = vunpack.c.h.b16 %v1243
    %v1885 = vunpack.c.l.b16 %v1244
    %v1886 = vunpack.c.h.b16 %v1244
    %v1887 = vunpack.c.l.b16 %v1245
    %v1888 = vunpack.c.h.b16 %v1245
    %v1889 = vunpack.c.l.b16 %v1246
    %v1890 = vunpack.c.h.b16 %v1246
    %v1891 = vunpack.c.l.b16 %v1247
    %v1892 = vunpack.c.h.b16 %v1247
    %v1893 = vunpack.c.l.b16 %v1248
    %v1894 = vunpack.c.h.b16 %v1248
    %v1895 = vunpack.c.l.b16 %v1249
    %v1896 = vunpack.c.h.b16 %v1249
    %v1897 = vunpack.c.l.b16 %v1250
    %v1898 = vunpack.c.h.b16 %v1250
    %v1899 = vunpack.c.l.b16 %v1251
    %v1900 = vunpack.c.h.b16 %v1251
    %v1901 = vunpack.c.l.b16 %v1252
    %v1902 = vunpack.c.h.b16 %v1252
    %v1903 = vunpack.c.l.b16 %v1253
    %v1904 = vunpack.c.h.b16 %v1253
    %v1905 = vunpack.c.l.b16 %v1254
    %v1906 = vunpack.c.h.b16 %v1254
    %v1907 = vunpack.c.l.b16 %v1255
    %v1908 = vunpack.c.h.b16 %v1255
    %v1909 = vunpack.c.l.b16 %v1256
    %v1910 = vunpack.c.h.b16 %v1256
    %v1911 = vunpack.c.l.b16 %v1257
    %v1912 = vunpack.c.h.b16 %v1257
    %v1913 = vunpack.c.l.b16 %v1258
    %v1914 = vunpack.c.h.b16 %v1258
    %v1915 = vunpack.c.l.b16 %v1259
    %v1916 = vunpack.c.h.b16 %v1259
    %v1917 = vunpack.c.l.b16 %v1260
    %v1918 = vunpack.c.h.b16 %v1260
    %v1919 = vunpack.c.l.b16 %v1261
    %v1920 = vunpack.c.h.b16 %v1261
    %v1921 = vunpack.c.l.b16 %v1262
    %v1922 = vunpack.c.h.b16 %v1262
    %v1923 = vunpack.c.l.b16 %v1263
    %v1924 = vunpack.c.h.b16 %v1263
    %v1925 = vunpack.c.l.b16 %v1264
    %v1926 = vunpack.c.h.b16 %v1264
    %v1927 = vunpack.c.l.b16 %v1265
    %v1928 = vunpack.c.h.b16 %v1265
    %v1929 = vunpack.c.l.b16 %v1266
    %v1930 = vunpack.c.h.b16 %v1266
    %v1931 = vunpack.c.l.b16 %v1267
    %v1932 = vunpack.c.h.b16 %v1267
    %v1933 = vunpack.c.l.b16 %v1268
    %v1934 = vunpack.c.h.b16 %v1268
    %v1935 = vunpack.c.l.b16 %v1269
    %v1936 = vunpack.c.h.b16 %v1269
    %v1937 = vunpack.c.l.b16 %v1270
    %v1938 = vunpack.c.h.b16 %v1270
    %v1939 = vunpack.c.l.b16 %v1271
    %v1940 = vunpack.c.h.b16 %v1271
    %v1941 = vunpack.c.l.b16 %v1272
    %v1942 = vunpack.c.h.b16 %v1272
    %v1943 = vunpack.c.l.b16 %v1273
    %v1944 = vunpack.c.h.b16 %v1273
    %v1945 = vunpack.c.l.b16 %v1274
    %v1946 = vunpack.c.h.b16 %v1274
    %v1947 = vunpack.c.l.b16 %v1275
    %v1948 = vunpack.c.h.b16 %v1275
    %v1949 = vunpack.c.l.b16 %v1276
    %v1950 = vunpack.c.h.b16 %v1276
    %v1951 = vunpack.c.l.b16 %v1277
    %v1952 = vunpack.c.h.b16 %v1277
    %v1953 = vunpack.c.l.b16 %v1278
    %v1954 = vunpack.c.h.b16 %v1278
    %v1955 = vunpack.c.l.b16 %v1279
    %v1956 = vunpack.c.h.b16 %v1279
    %v1957 = vunpack.c.l.b16 %v1280
    %v1958 = vunpack.c.h.b16 %v1280
    %v1959 = vunpack.c.l.b16 %v1281
    %v1960 = vunpack.c.h.b16 %v1281
    %v1961 = vunpack.c.l.b16 %v1282
    %v1962 = vunpack.c.h.b16 %v1282
    %v1963 = vunpack.c.l.b16 %v1283
    %v1964 = vunpack.c.h.b16 %v1283
    %v1965 = vunpack.c.l.b16 %v1284
    %v1966 = vunpack.c.h.b16 %v1284
    %v1967 = vunpack.c.l.b16 %v1285
    %v1968 = vunpack.c.h.b16 %v1285
    %v1969 = vunpack.c.l.b16 %v1286
    %v1970 = vunpack.c.h.b16 %v1286
    %v1971 = vunpack.c.l.b16 %v1287
    %v1972 = vunpack.c.h.b16 %v1287
    %v1973 = vunpack.c.l.b16 %v1288
    %v1974 = vunpack.c.h.b16 %v1288
    %v1975 = vunpack.c.l.b16 %v1289
    %v1976 = vunpack.c.h.b16 %v1289
    %v1977 = vunpack.c.l.b16 %v1290
    %v1978 = vunpack.c.h.b16 %v1290
    %v1979 = vunpack.c.l.b16 %v1291
    %v1980 = vunpack.c.h.b16 %v1291
    %v1981 = vunpack.c.l.b16 %v1292
    %v1982 = vunpack.c.h.b16 %v1292
    %v1983 = vunpack.c.l.b16 %v1293
    %v1984 = vunpack.c.h.b16 %v1293
    %v1985 = vunpack.c.l.b16 %v1294
    %v1986 = vunpack.c.h.b16 %v1294
    %v1987 = vunpack.c.l.b16 %v1295
    %v1988 = vunpack.c.h.b16 %v1295
    %v1989 = vunpack.c.l.b16 %v1296
    %v1990 = vunpack.c.h.b16 %v1296
    %v1991 = vunpack.c.l.b16 %v1297
    %v1992 = vunpack.c.h.b16 %v1297
    %v1993 = vunpack.c.l.b16 %v1298
    %v1994 = vunpack.c.h.b16 %v1298
    %v1995 = vunpack.c.l.b16 %v1299
    %v1996 = vunpack.c.h.b16 %v1299
    %v1997 = vunpack.c.l.b16 %v1300
    %v1998 = vunpack.c.h.b16 %v1300
    %v1999 = vunpack.c.l.b16 %v1301
    %v2000 = vunpack.c.h.b16 %v1301
    %v2001 = vunpack.c.l.b16 %v1302
    %v2002 = vunpack.c.h.b16 %v1302
    %v2003 = vunpack.c.l.b16 %v1303
    %v2004 = vunpack.c.h.b16 %v1303
    %v2005 = vunpack.c.l.b16 %v1304
    %v2006 = vunpack.c.h.b16 %v1304
    %v2007 = vunpack.c.l.b16 %v1305
    %v2008 = vunpack.c.h.b16 %v1305
    %v2009 = vunpack.c.l.b16 %v1306
    %v2010 = vunpack.c.h.b16 %v1306
    %v2011 = vunpack.c.l.b16 %v1307
    %v2012 = vunpack.c.h.b16 %v1307
    %v2013 = vunpack.c.l.b16 %v1308
    %v2014 = vunpack.c.h.b16 %v1308
    %v2015 = vunpack.c.l.b16 %v1309
    %v2016 = vunpack.c.h.b16 %v1309
    %v2017 = vunpack.c.l.b16 %v1310
    %v2018 = vunpack.c.h.b16 %v1310
    %v2019 = vunpack.c.l.b16 %v1311
    %v2020 = vunpack.c.h.b16 %v1311
    %v2021 = vunpack.c.l.b16 %v1312
    %v2022 = vunpack.c.h.b16 %v1312
    %v2023 = vunpack.c.l.b16 %v1313
    %v2024 = vunpack.c.h.b16 %v1313
    %v2025 = vunpack.c.l.b16 %v1314
    %v2026 = vunpack.c.h.b16 %v1314
    %v2027 = vunpack.c.l.b16 %v1315
    %v2028 = vunpack.c.h.b16 %v1315
    %v2029 = vunpack.c.l.b16 %v1316
    %v2030 = vunpack.c.h.b16 %v1316
    %v2031 = vunpack.c.l.b16 %v1317
    %v2032 = vunpack.c.h.b16 %v1317
    %v2033 = vunpack.c.l.b16 %v1318
    %v2034 = vunpack.c.h.b16 %v1318
    %v2035 = vunpack.c.l.b16 %v1319
    %v2036 = vunpack.c.h.b16 %v1319
    %v2037 = vunpack.c.l.b16 %v1320
    %v2038 = vunpack.c.h.b16 %v1320
    %v2039 = vunpack.c.l.b16 %v1321
    %v2040 = vunpack.c.h.b16 %v1321
    %v2041 = vunpack.c.l.b16 %v1322
    %v2042 = vunpack.c.h.b16 %v1322
    %v2043 = vunpack.c.l.b16 %v1323
    %v2044 = vunpack.c.h.b16 %v1323
    %v2045 = vunpack.c.l.b16 %v1324
    %v2046 = vunpack.c.h.b16 %v1324
    %v2047 = vunpack.c.l.b16 %v1325
    %v2048 = vunpack.c.h.b16 %v1325
    %v2049 = vunpack.c.l.b16 %v1326
    %v2050 = vunpack.c.h.b16 %v1326
    %v2051 = vunpack.c.l.b16 %v1327
    %v2052 = vunpack.c.h.b16 %v1327
    %v2053 = vunpack.c.l.b16 %v1328
    %v2054 = vunpack.c.h.b16 %v1328
    %v2055 = vunpack.c.l.b16 %v1329
    %v2056 = vunpack.c.h.b16 %v1329
    %v2057 = vunpack.c.l.b16 %v1330
    %v2058 = vunpack.c.h.b16 %v1330
    %v2059 = vunpack.c.l.b16 %v1331
    %v2060 = vunpack.c.h.b16 %v1331
    %v2061 = vunpack.c.l.b16 %v1332
    %v2062 = vunpack.c.h.b16 %v1332
    %v2063 = vunpack.c.l.b16 %v1333
    %v2064 = vunpack.c.h.b16 %v1333
    %v2065 = vunpack.c.l.b16 %v1334
    %v2066 = vunpack.c.h.b16 %v1334
    %v2067 = vunpack.c.l.b16 %v1335
    %v2068 = vunpack.c.h.b16 %v1335
    %v2069 = vunpack.c.l.b16 %v1336
    %v2070 = vunpack.c.h.b16 %v1336
    %v2071 = vunpack.c.l.b16 %v1337
    %v2072 = vunpack.c.h.b16 %v1337
    %v2073 = vunpack.c.l.b16 %v1338
    %v2074 = vunpack.c.h.b16 %v1338
    %v2075 = vunpack.c.l.b16 %v1339
    %v2076 = vunpack.c.h.b16 %v1339
    %v2077 = vunpack.c.l.b16 %v1340
    %v2078 = vunpack.c.h.b16 %v1340
    %v2079 = vunpack.c.l.b16 %v1341
    %v2080 = vunpack.c.h.b16 %v1341
    %v2081 = vunpack.c.l.b16 %v1342
    %v2082 = vunpack.c.h.b16 %v1342
    %v2083 = vunpack.c.l.b16 %v1343
    %v2084 = vunpack.c.h.b16 %v1343
    %v2085 = vunpack.c.l.b16 %v1344
    %v2086 = vunpack.c.h.b16 %v1344
    %v2087 = vunpack.c.l.b16 %v1345
    %v2088 = vunpack.c.h.b16 %v1345
    %v2089 = vunpack.c.l.b16 %v1346
    %v2090 = vunpack.c.h.b16 %v1346
    %v2091 = vunpack.c.l.b16 %v1347
    %v2092 = vunpack.c.h.b16 %v1347
    %v2093 = vunpack.c.l.b16 %v1348
    %v2094 = vunpack.c.h.b16 %v1348
    %v2095 = vunpack.c.l.b16 %v1349
    %v2096 = vunpack.c.h.b16 %v1349
    %v2097 = vunpack.c.l.b16 %v1350
    %v2098 = vunpack.c.h.b16 %v1350
    %v2099 = vunpack.c.l.b16 %v1351
    %v2100 = vunpack.c.h.b16 %v1351
    %v2101 = vunpack.c.l.b16 %v1352
    %v2102 = vunpack.c.h.b16 %v1352
    %v2103 = vunpack.c.l.b16 %v1353
    %v2104 = vunpack.c.h.b16 %v1353
    %v2105 = vunpack.c.l.b16 %v1354
    %v2106 = vunpack.c.h.b16 %v1354
    %v2107 = vunpack.c.l.b16 %v1355
    %v2108 = vunpack.c.h.b16 %v1355
    %v2109 = vunpack.c.l.b16 %v1356
    %v2110 = vunpack.c.h.b16 %v1356
    %v2111 = vunpack.c.l.b16 %v1357
    %v2112 = vunpack.c.h.b16 %v1357
    %v2113 = vunpack.c.l.b16 %v1358
    %v2114 = vunpack.c.h.b16 %v1358
    %v2115 = vunpack.c.l.b16 %v1359
    %v2116 = vunpack.c.h.b16 %v1359
    %v2117 = vunpack.c.l.b16 %v1360
    %v2118 = vunpack.c.h.b16 %v1360
    %v2119 = vunpack.c.l.b16 %v1361
    %v2120 = vunpack.c.h.b16 %v1361
    %v2121 = vunpack.c.l.b16 %v1362
    %v2122 = vunpack.c.h.b16 %v1362
    %v2123 = vunpack.c.l.b16 %v1363
    %v2124 = vunpack.c.h.b16 %v1363
    %v2125 = vunpack.c.l.b16 %v1364
    %v2126 = vunpack.c.h.b16 %v1364
    %v2127 = vunpack.c.l.b16 %v1365
    %v2128 = vunpack.c.h.b16 %v1365
    %v2129 = vunpack.c.l.b16 %v1366
    %v2130 = vunpack.c.h.b16 %v1366
    %v2131 = vunpack.c.l.b16 %v1367
    %v2132 = vunpack.c.h.b16 %v1367
    %v2133 = vunpack.c.l.b16 %v1368
    %v2134 = vunpack.c.h.b16 %v1368
    %v2135 = vunpack.c.l.b16 %v1369
    %v2136 = vunpack.c.h.b16 %v1369
    %v2137 = vunpack.c.l.b16 %v1370
    %v2138 = vunpack.c.h.b16 %v1370
    %v2139 = vunpack.c.l.b16 %v1371
    %v2140 = vunpack.c.h.b16 %v1371
    %v2141 = vunpack.c.l.b16 %v1372
    %v2142 = vunpack.c.h.b16 %v1372
    %v2143 = vunpack.c.l.b16 %v1373
    %v2144 = vunpack.c.h.b16 %v1373
    %v2145 = vunpack.c.l.b16 %v1374
    %v2146 = vunpack.c.h.b16 %v1374
    %v2147 = vunpack.c.l.b16 %v1375
    %v2148 = vunpack.c.h.b16 %v1375
    %v2149 = vunpack.c.l.b16 %v1376
    %v2150 = vunpack.c.h.b16 %v1376
    %v2151 = vunpack.c.l.b16 %v1377
    %v2152 = vunpack.c.h.b16 %v1377
    %v2153 = vunpack.c.l.b16 %v1378
    %v2154 = vunpack.c.h.b16 %v1378
    %v2155 = vunpack.c.l.b16 %v1379
    %v2156 = vunpack.c.h.b16 %v1379
    %v2157 = vunpack.c.l.b16 %v1380
    %v2158 = vunpack.c.h.b16 %v1380
    %v2159 = vunpack.c.l.b16 %v1381
    %v2160 = vunpack.c.h.b16 %v1381
    %v2161 = vunpack.c.l.b16 %v1382
    %v2162 = vunpack.c.h.b16 %v1382
    %v2163 = vunpack.c.l.b16 %v1383
    %v2164 = vunpack.c.h.b16 %v1383
    %v2165 = vunpack.c.l.b16 %v1384
    %v2166 = vunpack.c.h.b16 %v1384
    %v2167 = vunpack.c.l.b16 %v1385
    %v2168 = vunpack.c.h.b16 %v1385
    %v2169 = vunpack.c.l.b16 %v1386
    %v2170 = vunpack.c.h.b16 %v1386
    %v2171 = vunpack.c.l.b16 %v1387
    %v2172 = vunpack.c.h.b16 %v1387
    %v2173 = vunpack.c.l.b16 %v1388
    %v2174 = vunpack.c.h.b16 %v1388
    %v2175 = vunpack.c.l.b16 %v1389
    %v2176 = vunpack.c.h.b16 %v1389
    %v2177 = vunpack.c.l.b16 %v1390
    %v2178 = vunpack.c.h.b16 %v1390
    %v2179 = vunpack.c.l.b16 %v1391
    %v2180 = vunpack.c.h.b16 %v1391
    %v2181 = vunpack.c.l.b16 %v1392
    %v2182 = vunpack.c.h.b16 %v1392
    %v2183 = vunpack.c.l.b16 %v1393
    %v2184 = vunpack.c.h.b16 %v1393
    %v2185 = vunpack.c.l.b16 %v1394
    %v2186 = vunpack.c.h.b16 %v1394
    %v2187 = vunpack.c.l.b16 %v1395
    %v2188 = vunpack.c.h.b16 %v1395
    %v2189 = vunpack.c.l.b16 %v1396
    %v2190 = vunpack.c.h.b16 %v1396
    %v2191 = vunpack.c.l.b16 %v1397
    %v2192 = vunpack.c.h.b16 %v1397
    %v2193 = vunpack.c.l.b16 %v1398
    %v2194 = vunpack.c.h.b16 %v1398
    %v2195 = vunpack.c.l.b16 %v1399
    %v2196 = vunpack.c.h.b16 %v1399
    %v2197 = vunpack.c.l.b16 %v1400
    %v2198 = vunpack.c.h.b16 %v1400
    %v2199 = vunpack.c.l.b16 %v1401
    %v2200 = vunpack.c.h.b16 %v1401
    %v2201 = vunpack.c.l.b16 %v1402
    %v2202 = vunpack.c.h.b16 %v1402
    %v2203 = vunpack.c.l.b16 %v1403
    %v2204 = vunpack.c.h.b16 %v1403
    %v2205 = vunpack.c.l.b16 %v1404
    %v2206 = vunpack.c.h.b16 %v1404
    %v2207 = vunpack.c.l.b16 %v1405
    %v2208 = vunpack.c.h.b16 %v1405
    %v2209 = vunpack.c.l.b16 %v1406
    %v2210 = vunpack.c.h.b16 %v1406
    %v2211 = vunpack.c.l.b16 %v1407
    %v2212 = vunpack.c.h.b16 %v1407
    %v2213 = vunpack.c.l.b16 %v1408
    %v2214 = vunpack.c.h.b16 %v1408
    %v2215 = vunpack.c.l.b16 %v1409
    %v2216 = vunpack.c.h.b16 %v1409
    %v2217 = vunpack.c.l.b16 %v1410
    %v2218 = vunpack.c.h.b16 %v1410
    %v2219 = vunpack.c.l.b16 %v1411
    %v2220 = vunpack.c.h.b16 %v1411
    %v2221 = vunpack.c.l.b16 %v1412
    %v2222 = vunpack.c.h.b16 %v1412
    %v2223 = vunpack.c.l.b16 %v1413
    %v2224 = vunpack.c.h.b16 %v1413
    %v2225 = vunpack.c.l.b16 %v1414
    %v2226 = vunpack.c.h.b16 %v1414
    %v2227 = vunpack.c.l.b16 %v1415
    %v2228 = vunpack.c.h.b16 %v1415
    %v2229 = vunpack.c.l.b16 %v1416
    %v2230 = vunpack.c.h.b16 %v1416
    %v2231 = vunpack.c.l.b16 %v1417
    %v2232 = vunpack.c.h.b16 %v1417
    %v2233 = vunpack.c.l.b16 %v1418
    %v2234 = vunpack.c.h.b16 %v1418
    %v2235 = vunpack.c.l.b16 %v1419
    %v2236 = vunpack.c.h.b16 %v1419
    %v2237 = vunpack.c.l.b16 %v1420
    %v2238 = vunpack.c.h.b16 %v1420
    %v2239 = vunpack.c.l.b16 %v1421
    %v2240 = vunpack.c.h.b16 %v1421
    %v2241 = vunpack.c.l.b16 %v1422
    %v2242 = vunpack.c.h.b16 %v1422
    %v2243 = vunpack.c.l.b16 %v1423
    %v2244 = vunpack.c.h.b16 %v1423
    %v2245 = vunpack.c.l.b16 %v1424
    %v2246 = vunpack.c.h.b16 %v1424
    %v2247 = vunpack.c.l.b16 %v1425
    %v2248 = vunpack.c.h.b16 %v1425
    %v2249 = vunpack.c.l.b16 %v1426
    %v2250 = vunpack.c.h.b16 %v1426
    %v2251 = vunpack.c.l.b16 %v1427
    %v2252 = vunpack.c.h.b16 %v1427
    %v2253 = vunpack.c.l.b16 %v1428
    %v2254 = vunpack.c.h.b16 %v1428
    %v2255 = vunpack.c.l.b16 %v1429
    %v2256 = vunpack.c.h.b16 %v1429
    %v2257 = vunpack.c.l.b16 %v1430
    %v2258 = vunpack.c.h.b16 %v1430
    %v2259 = vunpack.c.l.b16 %v1431
    %v2260 = vunpack.c.h.b16 %v1431
    %v2261 = vunpack.c.l.b16 %v1432
    %v2262 = vunpack.c.h.b16 %v1432
    %v2263 = vunpack.c.l.b16 %v1433
    %v2264 = vunpack.c.h.b16 %v1433
    %v2265 = vunpack.c.l.b16 %v1434
    %v2266 = vunpack.c.h.b16 %v1434
    %v2267 = vunpack.c.l.b16 %v1435
    %v2268 = vunpack.c.h.b16 %v1435
    %v2269 = vunpack.c.l.b16 %v1436
    %v2270 = vunpack.c.h.b16 %v1436
    %v2271 = vunpack.c.l.b16 %v1437
    %v2272 = vunpack.c.h.b16 %v1437
    %v2273 = vunpack.c.l.b16 %v1438
    %v2274 = vunpack.c.h.b16 %v1438
    %v2275 = vunpack.c.l.b16 %v1439
    %v2276 = vunpack.c.h.b16 %v1439
    %v2277 = vunpack.c.l.b16 %v1440
    %v2278 = vunpack.c.h.b16 %v1440
    %v2279 = vunpack.c.l.b16 %v1441
    %v2280 = vunpack.c.h.b16 %v1441
    %v2281 = vunpack.c.l.b16 %v1442
    %v2282 = vunpack.c.h.b16 %v1442
    %v2283 = vunpack.c.l.b16 %v1443
    %v2284 = vunpack.c.h.b16 %v1443
    %v2285 = vunpack.c.l.b16 %v1444
    %v2286 = vunpack.c.h.b16 %v1444
    %v2287 = vunpack.c.l.b16 %v1445
    %v2288 = vunpack.c.h.b16 %v1445
    %v2289 = vunpack.c.l.b16 %v1446
    %v2290 = vunpack.c.h.b16 %v1446
    %v2291 = vunpack.c.l.b16 %v1447
    %v2292 = vunpack.c.h.b16 %v1447
    %v2293 = vunpack.c.l.b16 %v1448
    %v2294 = vunpack.c.h.b16 %v1448
    %v2295 = vunpack.c.l.b16 %v1449
    %v2296 = vunpack.c.h.b16 %v1449
    %v2297 = vunpack.c.l.b16 %v1450
    %v2298 = vunpack.c.h.b16 %v1450
    %v2299 = vunpack.c.l.b16 %v1451
    %v2300 = vunpack.c.h.b16 %v1451
    %v2301 = vunpack.c.l.b16 %v1452
    %v2302 = vunpack.c.h.b16 %v1452
    %v2303 = vunpack.c.l.b16 %v1453
    %v2304 = vunpack.c.h.b16 %v1453
    %v2305 = vunpack.c.l.b16 %v1454
    %v2306 = vunpack.c.h.b16 %v1454
    %v2307 = vunpack.c.l.b16 %v1455
    %v2308 = vunpack.c.h.b16 %v1455
    %v2309 = vunpack.c.l.b16 %v1456
    %v2310 = vunpack.c.h.b16 %v1456
    %v2311 = vunpack.c.l.b16 %v1457
    %v2312 = vunpack.c.h.b16 %v1457
    %v2313 = vunpack.c.l.b16 %v1458
    %v2314 = vunpack.c.h.b16 %v1458
    %v2315 = vunpack.c.l.b16 %v1459
    %v2316 = vunpack.c.h.b16 %v1459
    %v2317 = vunpack.c.l.b16 %v1460
    %v2318 = vunpack.c.h.b16 %v1460
    %v2319 = vunpack.c.l.b16 %v1461
    %v2320 = vunpack.c.h.b16 %v1461
    %v2321 = vunpack.c.l.b16 %v1462
    %v2322 = vunpack.c.h.b16 %v1462
    %v2323 = vunpack.c.l.b16 %v1463
    %v2324 = vunpack.c.h.b16 %v1463
    %v2325 = vunpack.c.l.b16 %v1464
    %v2326 = vunpack.c.h.b16 %v1464
    %v2327 = vunpack.c.l.b16 %v1465
    %v2328 = vunpack.c.h.b16 %v1465
    %v2329 = vunpack.c.l.b16 %v1466
    %v2330 = vunpack.c.h.b16 %v1466
    %v2331 = vpack.c.b16 %v1759, %v1755
    %v2332 = vpack.c.b16 %v1760, %v1756
    %v2333 = vpack.c.b16 %v1761, %v1757
    %v2334 = vpack.c.b16 %v1762, %v1758
    %v2335 = vpack.c.b16 %v1767, %v1763
    %v2336 = vpack.c.b16 %v1768, %v1764
    %v2337 = vpack.c.b16 %v1769, %v1765
    %v2338 = vpack.c.b16 %v1770, %v1766
    %v2339 = vpack.c.b16 %v1775, %v1771
    %v2340 = vpack.c.b16 %v1776, %v1772
    %v2341 = vpack.c.b16 %v1777, %v1773
    %v2342 = vpack.c.b16 %v1778, %v1774
    %v2343 = vpack.c.b16 %v1783, %v1779
    %v2344 = vpack.c.b16 %v1784, %v1780
    %v2345 = vpack.c.b16 %v1785, %v1781
    %v2346 = vpack.c.b16 %v1786, %v1782
    %v2347 = vpack.c.b16 %v1791, %v1787
    %v2348 = vpack.c.b16 %v1792, %v1788
    %v2349 = vpack.c.b16 %v1793, %v1789
    %v2350 = vpack.c.b16 %v1794, %v1790
    %v2351 = vpack.c.b16 %v1799, %v1795
    %v2352 = vpack.c.b16 %v1800, %v1796
    %v2353 = vpack.c.b16 %v1801, %v1797
    %v2354 = vpack.c.b16 %v1802, %v1798
    %v2355 = vpack.c.b16 %v1807, %v1803
    %v2356 = vpack.c.b16 %v1808, %v1804
    %v2357 = vpack.c.b16 %v1809, %v1805
    %v2358 = vpack.c.b16 %v1810, %v1806
    %v2359 = vpack.c.b16 %v1815, %v1811
    %v2360 = vpack.c.b16 %v1816, %v1812
    %v2361 = vpack.c.b16 %v1817, %v1813
    %v2362 = vpack.c.b16 %v1818, %v1814
    %v2363 = vpack.c.b16 %v1823, %v1819
    %v2364 = vpack.c.b16 %v1824, %v1820
    %v2365 = vpack.c.b16 %v1825, %v1821
    %v2366 = vpack.c.b16 %v1826, %v1822
    %v2367 = vpack.c.b16 %v1831, %v1827
    %v2368 = vpack.c.b16 %v1832, %v1828
    %v2369 = vpack.c.b16 %v1833, %v1829
    %v2370 = vpack.c.b16 %v1834, %v1830
    %v2371 = vpack.c.b16 %v1839, %v1835
    %v2372 = vpack.c.b16 %v1840, %v1836
    %v2373 = vpack.c.b16 %v1841, %v1837
    %v2374 = vpack.c.b16 %v1842, %v1838
    %v2375 = vpack.c.b16 %v1847, %v1843
    %v2376 = vpack.c.b16 %v1848, %v1844
    %v2377 = vpack.c.b16 %v1849, %v1845
    %v2378 = vpack.c.b16 %v1850, %v1846
    %v2379 = vpack.c.b16 %v1855, %v1851
    %v2380 = vpack.c.b16 %v1856, %v1852
    %v2381 = vpack.c.b16 %v1857, %v1853
    %v2382 = vpack.c.b16 %v1858, %v1854
    %v2383 = vpack.c.b16 %v1863, %v1859
    %v2384 = vpack.c.b16 %v1864, %v1860
    %v2385 = vpack.c.b16 %v1865, %v1861
    %v2386 = vpack.c.b16 %v1866, %v1862
    %v2387 = vpack.c.b16 %v1871, %v1867
    %v2388 = vpack.c.b16 %v1872, %v1868
    %v2389 = vpack.c.b16 %v1873, %v1869
    %v2390 = vpack.c.b16 %v1874, %v1870
    %v2391 = vpack.c.b16 %v1879, %v1875
    %v2392 = vpack.c.b16 %v1880, %v1876
    %v2393 = vpack.c.b16 %v1881, %v1877
    %v2394 = vpack.c.b16 %v1882, %v1878
    %v2395 = vpack.c.b16 %v1887, %v1883
    %v2396 = vpack.c.b16 %v1888, %v1884
    %v2397 = vpack.c.b16 %v1889, %v1885
    %v2398 = vpack.c.b16 %v1890, %v1886
    %v2399 = vpack.c.b16 %v1895, %v1891
    %v2400 = vpack.c.b16 %v1896, %v1892
    %v2401 = vpack.c.b16 %v1897, %v1893
    %v2402 = vpack.c.b16 %v1898, %v1894
    %v2403 = vpack.c.b16 %v1903, %v1899
    %v2404 = vpack.c.b16 %v1904, %v1900
    %v2405 = vpack.c.b16 %v1905, %v1901
    %v2406 = vpack.c.b16 %v1906, %v1902
    %v2407 = vpack.c.b16 %v1911, %v1907
    %v2408 = vpack.c.b16 %v1912, %v1908
    %v2409 = vpack.c.b16 %v1913, %v1909
    %v2410 = vpack.c.b16 %v1914, %v1910
    %v2411 = vpack.c.b16 %v1919, %v1915
    %v2412 = vpack.c.b16 %v1920, %v1916
    %v2413 = vpack.c.b16 %v1921, %v1917
    %v2414 = vpack.c.b16 %v1922, %v1918
    %v2415 = vpack.c.b16 %v1927, %v1923
    %v2416 = vpack.c.b16 %v1928, %v1924
    %v2417 = vpack.c.b16 %v1929, %v1925
    %v2418 = vpack.c.b16 %v1930, %v1926
    %v2419 = vpack.c.b16 %v1935, %v1931
    %v2420 = vpack.c.b16 %v1936, %v1932
    %v2421 = vpack.c.b16 %v1937, %v1933
    %v2422 = vpack.c.b16 %v1938, %v1934
    %v2423 = vpack.c.b16 %v1943, %v1939
    %v2424 = vpack.c.b16 %v1944, %v1940
    %v2425 = vpack.c.b16 %v1945, %v1941
    %v2426 = vpack.c.b16 %v1946, %v1942
    %v2427 = vpack.c.b16 %v1951, %v1947
    %v2428 = vpack.c.b16 %v1952, %v1948
    %v2429 = vpack.c.b16 %v1953, %v1949
    %v2430 = vpack.c.b16 %v1954, %v1950
    %v2431 = vpack.c.b16 %v1959, %v1955
    %v2432 = vpack.c.b16 %v1960, %v1956
    %v2433 = vpack.c.b16 %v1961, %v1957
    %v2434 = vpack.c.b16 %v1962, %v1958
    %v2435 = vpack.c.b16 %v1967, %v1963
    %v2436 = vpack.c.b16 %v1968, %v1964
    %v2437 = vpack.c.b16 %v1969, %v1965
    %v2438 = vpack.c.b16 %v1970, %v1966
    %v2439 = vpack.c.b16 %v1975, %v1971
    %v2440 = vpack.c.b16 %v1976, %v1972
    %v2441 = vpack.c.b16 %v1977, %v1973
    %v2442 = vpack.c.b16 %v1978, %v1974
    %v2443 = vpack.c.b16 %v1983, %v1979
    %v2444 = vpack.c.b16 %v1984, %v1980
    %v2445 = vpack.c.b16 %v1985, %v1981
    %v2446 = vpack.c.b16 %v1986, %v1982
    %v2447 = vpack.c.b16 %v1991, %v1987
    %v2448 = vpack.c.b16 %v1992, %v1988
    %v2449 = vpack.c.b16 %v1993, %v1989
    %v2450 = vpack.c.b16 %v1994, %v1990
    %v2451 = vpack.c.b16 %v1999, %v1995
    %v2452 = vpack.c.b16 %v2000, %v1996
    %v2453 = vpack.c.b16 %v2001, %v1997
    %v2454 = vpack.c.b16 %v2002, %v1998
    %v2455 = vpack.c.b16 %v2007, %v2003
    %v2456 = vpack.c.b16 %v2008, %v2004
    %v2457 = vpack.c.b16 %v2009, %v2005
    %v2458 = vpack.c.b16 %v2010, %v2006
    %v2459 = vpack.c.b16 %v2015, %v2011
    %v2460 = vpack.c.b16 %v2016, %v2012
    %v2461 = vpack.c.b16 %v2017, %v2013
    %v2462 = vpack.c.b16 %v2018, %v2014
    %v2463 = vpack.c.b16 %v2023, %v2019
    %v2464 = vpack.c.b16 %v2024, %v2020
    %v2465 = vpack.c.b16 %v2025, %v2021
    %v2466 = vpack.c.b16 %v2026, %v2022
    %v2467 = vpack.c.b16 %v2031, %v2027
    %v2468 = vpack.c.b16 %v2032, %v2028
    %v2469 = vpack.c.b16 %v2033, %v2029
    %v2470 = vpack.c.b16 %v2034, %v2030
    %v2471 = vpack.c.b16 %v2039, %v2035
    %v2472 = vpack.c.b16 %v2040, %v2036
    %v2473 = vpack.c.b16 %v2041, %v2037
    %v2474 = vpack.c.b16 %v2042, %v2038
    %v2475 = vpack.c.b16 %v2047, %v2043
    %v2476 = vpack.c.b16 %v2048, %v2044
    %v2477 = vpack.c.b16 %v2049, %v2045
    %v2478 = vpack.c.b16 %v2050, %v2046
    %v2479 = vpack.c.b16 %v2055, %v2051
    %v2480 = vpack.c.b16 %v2056, %v2052
    %v2481 = vpack.c.b16 %v2057, %v2053
    %v2482 = vpack.c.b16 %v2058, %v2054
    %v2483 = vpack.c.b16 %v2063, %v2059
    %v2484 = vpack.c.b16 %v2064, %v2060
    %v2485 = vpack.c.b16 %v2065, %v2061
    %v2486 = vpack.c.b16 %v2066, %v2062
    %v2487 = vpack.c.b16 %v2071, %v2067
    %v2488 = vpack.c.b16 %v2072, %v2068
    %v2489 = vpack.c.b16 %v2073, %v2069
    %v2490 = vpack.c.b16 %v2074, %v2070
    %v2491 = vpack.c.b16 %v2079, %v2075
    %v2492 = vpack.c.b16 %v2080, %v2076
    %v2493 = vpack.c.b16 %v2081, %v2077
    %v2494 = vpack.c.b16 %v2082, %v2078
    %v2495 = vpack.c.b16 %v2087, %v2083
    %v2496 = vpack.c.b16 %v2088, %v2084
    %v2497 = vpack.c.b16 %v2089, %v2085
    %v2498 = vpack.c.b16 %v2090, %v2086
    %v2499 = vpack.c.b16 %v2095, %v2091
    %v2500 = vpack.c.b16 %v2096, %v2092
    %v2501 = vpack.c.b16 %v2097, %v2093
    %v2502 = vpack.c.b16 %v2098, %v2094
    %v2503 = vpack.c.b16 %v2103, %v2099
    %v2504 = vpack.c.b16 %v2104, %v2100
    %v2505 = vpack.c.b16 %v2105, %v2101
    %v2506 = vpack.c.b16 %v2106, %v2102
    %v2507 = vpack.c.b16 %v2111, %v2107
    %v2508 = vpack.c.b16 %v2112, %v2108
    %v2509 = vpack.c.b16 %v2113, %v2109
    %v2510 = vpack.c.b16 %v2114, %v2110
    %v2511 = vpack.c.b16 %v2119, %v2115
    %v2512 = vpack.c.b16 %v2120, %v2116
    %v2513 = vpack.c.b16 %v2121, %v2117
    %v2514 = vpack.c.b16 %v2122, %v2118
    %v2515 = vpack.c.b16 %v2127, %v2123
    %v2516 = vpack.c.b16 %v2128, %v2124
    %v2517 = vpack.c.b16 %v2129, %v2125
    %v2518 = vpack.c.b16 %v2130, %v2126
    %v2519 = vpack.c.b16 %v2135, %v2131
    %v2520 = vpack.c.b16 %v2136, %v2132
    %v2521 = vpack.c.b16 %v2137, %v2133
    %v2522 = vpack.c.b16 %v2138, %v2134
    %v2523 = vpack.c.b16 %v2143, %v2139
    %v2524 = vpack.c.b16 %v2144, %v2140
    %v2525 = vpack.c.b16 %v2145, %v2141
    %v2526 = vpack.c.b16 %v2146, %v2142
    %v2527 = vpack.c.b16 %v2151, %v2147
    %v2528 = vpack.c.b16 %v2152, %v2148
    %v2529 = vpack.c.b16 %v2153, %v2149
    %v2530 = vpack.c.b16 %v2154, %v2150
    %v2531 = vpack.c.b16 %v2159, %v2155
    %v2532 = vpack.c.b16 %v2160, %v2156
    %v2533 = vpack.c.b16 %v2161, %v2157
    %v2534 = vpack.c.b16 %v2162, %v2158
    %v2535 = vpack.c.b16 %v2167, %v2163
    %v2536 = vpack.c.b16 %v2168, %v2164
    %v2537 = vpack.c.b16 %v2169, %v2165
    %v2538 = vpack.c.b16 %v2170, %v2166
    %v2539 = vpack.c.b16 %v2175, %v2171
    %v2540 = vpack.c.b16 %v2176, %v2172
    %v2541 = vpack.c.b16 %v2177, %v2173
    %v2542 = vpack.c.b16 %v2178, %v2174
    %v2543 = vpack.c.b16 %v2183, %v2179
    %v2544 = vpack.c.b16 %v2184, %v2180
    %v2545 = vpack.c.b16 %v2185, %v2181
    %v2546 = vpack.c.b16 %v2186, %v2182
    %v2547 = vpack.c.b16 %v2191, %v2187
    %v2548 = vpack.c.b16 %v2192, %v2188
    %v2549 = vpack.c.b16 %v2193, %v2189
    %v2550 = vpack.c.b16 %v2194, %v2190
    %v2551 = vpack.c.b16 %v2199, %v2195
    %v2552 = vpack.c.b16 %v2200, %v2196
    %v2553 = vpack.c.b16 %v2201, %v2197
    %v2554 = vpack.c.b16 %v2202, %v2198
    %v2555 = vpack.c.b16 %v2207, %v2203
    %v2556 = vpack.c.b16 %v2208, %v2204
    %v2557 = vpack.c.b16 %v2209, %v2205
    %v2558 = vpack.c.b16 %v2210, %v2206
    %v2559 = vpack.c.b16 %v2215, %v2211
    %v2560 = vpack.c.b16 %v2216, %v2212
    %v2561 = vpack.c.b16 %v2217, %v2213
    %v2562 = vpack.c.b16 %v2218, %v2214
    %v2563 = vpack.c.b16 %v2223, %v2219
    %v2564 = vpack.c.b16 %v2224, %v2220
    %v2565 = vpack.c.b16 %v2225, %v2221
    %v2566 = vpack.c.b16 %v2226, %v2222
    %v2567 = vpack.c.b16 %v2231, %v2227
    %v2568 = vpack.c.b16 %v2232, %v2228
    %v2569 = vpack.c.b16 %v2233, %v2229
    %v2570 = vpack.c.b16 %v2234, %v2230
    %v2571 = vpack.c.b16 %v2239, %v2235
    %v2572 = vpack.c.b16 %v2240, %v2236
    %v2573 = vpack.c.b16 %v2241, %v2237
    %v2574 = vpack.c.b16 %v2242, %v2238
    %v2575 = vpack.c.b16 %v2247, %v2243
    %v2576 = vpack.c.b16 %v2248, %v2244
    %v2577 = vpack.c.b16 %v2249, %v2245
    %v2578 = vpack.c.b16 %v2250, %v2246
    %v2579 = vpack.c.b16 %v2255, %v2251
    %v2580 = vpack.c.b16 %v2256, %v2252
    %v2581 = vpack.c.b16 %v2257, %v2253
    %v2582 = vpack.c.b16 %v2258, %v2254
    %v2583 = vpack.c.b16 %v2263, %v2259
    %v2584 = vpack.c.b16 %v2264, %v2260
    %v2585 = vpack.c.b16 %v2265, %v2261
    %v2586 = vpack.c.b16 %v2266, %v2262
    %v2587 = vpack.c.b16 %v2271, %v2267
    %v2588 = vpack.c.b16 %v2272, %v2268
    %v2589 = vpack.c.b16 %v2273, %v2269
    %v2590 = vpack.c.b16 %v2274, %v2270
    %v2591 = vpack.c.b16 %v2279, %v2275
    %v2592 = vpack.c.b16 %v2280, %v2276
    %v2593 = vpack.c.b16 %v2281, %v2277
    %v2594 = vpack.c.b16 %v2282, %v2278
    %v2595 = vpack.c.b16 %v2287, %v2283
    %v2596 = vpack.c.b16 %v2288, %v2284
    %v2597 = vpack.c.b16 %v2289, %v2285
    %v2598 = vpack.c.b16 %v2290, %v2286
    %v2599 = vpack.c.b16 %v2295, %v2291
    %v2600 = vpack.c.b16 %v2296, %v2292
    %v2601 = vpack.c.b16 %v2297, %v2293
    %v2602 = vpack.c.b16 %v2298, %v2294
    %v2603 = vpack.c.b16 %v2303, %v2299
    %v2604 = vpack.c.b16 %v2304, %v2300
    %v2605 = vpack.c.b16 %v2305, %v2301
    %v2606 = vpack.c.b16 %v2306, %v2302
    %v2607 = vpack.c.b16 %v2311, %v2307
    %v2608 = vpack.c.b16 %v2312, %v2308
    %v2609 = vpack.c.b16 %v2313, %v2309
    %v2610 = vpack.c.b16 %v2314, %v2310
    %v2611 = vpack.c.b16 %v2319, %v2315
    %v2612 = vpack.c.b16 %v2320, %v2316
    %v2613 = vpack.c.b16 %v2321, %v2317
    %v2614 = vpack.c.b16 %v2322, %v2318
    %v2615 = vpack.c.b16 %v2327, %v2323
    %v2616 = vpack.c.b16 %v2328, %v2324
    %v2617 = vpack.c.b16 %v2329, %v2325
    %v2618 = vpack.c.b16 %v2330, %v2326
    %2907 = vmatprep.subr.bf16.mxu0 0
    %2908 = vmatpush1.bf16.msra.mxu0 %v1147
    %2909 = vmatprep.subr.bf16.mxu0 0
    %2910 = vmatpush1.bf16.msra.mxu0 %v1148
    %2911 = vmatprep.subr.bf16.mxu0 0
    %2912 = vmatpush1.bf16.msra.mxu0 %v1149
    %2913 = vmatprep.subr.bf16.mxu0 0
    %2914 = vmatpush1.bf16.msra.mxu0 %v1150
    %2915 = vmatprep.subr.bf16.mxu0 0
    %2916 = vmatpush1.bf16.msra.mxu0 %v1151
    %2917 = vmatprep.subr.bf16.mxu0 0
    %2918 = vmatpush1.bf16.msra.mxu0 %v1152
    %2919 = vmatprep.subr.bf16.mxu0 0
    %2920 = vmatpush1.bf16.msra.mxu0 %v1153
    %2921 = vmatprep.subr.bf16.mxu0 0
    %2922 = vmatpush1.bf16.msra.mxu0 %v1154
    %2923 = vmatprep.subr.bf16.mxu0 0
    %2924 = vmatpush1.bf16.msra.mxu0 %v1155
    %2925 = vmatprep.subr.bf16.mxu0 0
    %2926 = vmatpush1.bf16.msra.mxu0 %v1156
    %2927 = vmatprep.subr.bf16.mxu0 0
    %2928 = vmatpush1.bf16.msra.mxu0 %v1157
    %2929 = vmatprep.subr.bf16.mxu0 0
    %2930 = vmatpush1.bf16.msra.mxu0 %v1158
    %2931 = vmatprep.subr.bf16.mxu0 0
    %2932 = vmatpush1.bf16.msra.mxu0 %v1159
    %2933 = vmatprep.subr.bf16.mxu0 0
    %2934 = vmatpush1.bf16.msra.mxu0 %v1160
    %2935 = vmatprep.subr.bf16.mxu0 0
    %2936 = vmatpush1.bf16.msra.mxu0 %v1161
    %2937 = vmatprep.subr.bf16.mxu0 0
    %2938 = vmatpush1.bf16.msra.mxu0 %v1162
    %2939 = vmatprep.mubr.bf16.mxu0 %v2332
    %2940 = vmatmul.mubr.bf16.gmra.mrb[0].mxu0 %v2331
    %v2941 = vpop.f32.mrb[0].mxu0
    %v2942 = vadd.f32 0.0, %v2941
    %v2943 = vpop.f32.mrb[0].mxu0
    %v2944 = vpop.f32.mrb[0].mxu0
    %v2945 = vadd.f32 0.0, %v2944
    %v2946 = vpop.f32.mrb[0].mxu0
    %2947 = vmatprep.mubr.bf16.mxu0 %v2336
    %2948 = vmatmul.mubr.bf16.gmra.mrb[0].mxu0 %v2335
    %v2949 = vpop.f32.mrb[0].mxu0
    %v2950 = vadd.f32 0.0, %v2949
    %v2951 = vpop.f32.mrb[0].mxu0
    %v2952 = vpop.f32.mrb[0].mxu0
    %v2953 = vadd.f32 0.0, %v2952
    %v2954 = vpop.f32.mrb[0].mxu0
    %2955 = vmatprep.mubr.bf16.mxu0 %v2340
    %2956 = vmatmul.mubr.bf16.gmra.mrb[0].mxu0 %v2339
    %v2957 = vpop.f32.mrb[0].mxu0
    %v2958 = vadd.f32 0.0, %v2957
    %v2959 = vpop.f32.mrb[0].mxu0
    %v2960 = vpop.f32.mrb[0].mxu0
    %v2961 = vadd.f32 0.0, %v2960
    %v2962 = vpop.f32.mrb[0].mxu0
    %2963 = vmatprep.mubr.bf16.mxu0 %v2344
    %2964 = vmatmul.mubr.bf16.gmra.mrb[0].mxu0 %v2343
    %v2965 = vpop.f32.mrb[0].mxu0
    %v2966 = vadd.f32 0.0, %v2965
    %v2967 = vpop.f32.mrb[0].mxu0
    %v2968 = vpop.f32.mrb[0].mxu0
    %v2969 = vadd.f32 0.0, %v2968
    %v2970 = vpop.f32.mrb[0].mxu0
    %2971 = vmatprep.mubr.bf16.mxu0 %v2348
    %2972 = vmatmul.mubr.bf16.gmra.mrb[0].mxu0 %v2347
    %v2973 = vpop.f32.mrb[0].mxu0
    %v2974 = vadd.f32 0.0, %v2973
    %v2975 = vpop.f32.mrb[0].mxu0
    %v2976 = vpop.f32.mrb[0].mxu0
    %v2977 = vadd.f32 0.0, %v2976
    %v2978 = vpop.f32.mrb[0].mxu0
    %2979 = vmatprep.mubr.bf16.mxu0 %v2352
    %2980 = vmatmul.mubr.bf16.gmra.mrb[0].mxu0 %v2351
    %v2981 = vpop.f32.mrb[0].mxu0
    %v2982 = vadd.f32 0.0, %v2981
    %v2983 = vpop.f32.mrb[0].mxu0
    %v2984 = vpop.f32.mrb[0].mxu0
    %v2985 = vadd.f32 0.0, %v2984
    %v2986 = vpop.f32.mrb[0].mxu0
    %2987 = vmatprep.mubr.bf16.mxu0 %v2356
    %2988 = vmatmul.mubr.bf16.gmra.mrb[0].mxu0 %v2355
    %v2989 = vpop.f32.mrb[0].mxu0
    %v2990 = vadd.f32 0.0, %v2989
    %v2991 = vpop.f32.mrb[0].mxu0
    %v2992 = vpop.f32.mrb[0].mxu0
    %v2993 = vadd.f32 0.0, %v2992
    %v2994 = vpop.f32.mrb[0].mxu0
    %2995 = vmatprep.mubr.bf16.mxu0 %v2360
    %2996 = vmatmul.mubr.bf16.gmra.mrb[0].mxu0 %v2359
    %v2997 = vpop.f32.mrb[0].mxu0
    %v2998 = vadd.f32 0.0, %v2997
    %v2999 = vpop.f32.mrb[0].mxu0
    %v3000 = vpop.f32.mrb[0].mxu0
    %v3001 = vadd.f32 0.0, %v3000
    %v3002 = vpop.f32.mrb[0].mxu0
    %3003 = vmatprep.mubr.bf16.mxu0 %v2364
    %3004 = vmatmul.mubr.bf16.gmra.mrb[0].mxu0 %v2363
    %v3005 = vpop.f32.mrb[0].mxu0
    %v3006 = vadd.f32 0.0, %v3005
    %v3007 = vpop.f32.mrb[0].mxu0
    %v3008 = vpop.f32.mrb[0].mxu0
    %v3009 = vadd.f32 0.0, %v3008
    %v3010 = vpop.f32.mrb[0].mxu0
    %3011 = vmatprep.mubr.bf16.mxu0 %v2368
    %3012 = vmatmul.mubr.bf16.gmra.mrb[0].mxu0 %v2367
    %v3013 = vpop.f32.mrb[0].mxu0
    %v3014 = vadd.f32 0.0, %v3013
    %v3015 = vpop.f32.mrb[0].mxu0
    %v3016 = vpop.f32.mrb[0].mxu0
    %v3017 = vadd.f32 0.0, %v3016
    %v3018 = vpop.f32.mrb[0].mxu0
    %3019 = vmatprep.mubr.bf16.mxu0 %v2372
    %3020 = vmatmul.mubr.bf16.gmra.mrb[0].mxu0 %v2371
    %v3021 = vpop.f32.mrb[0].mxu0
    %v3022 = vadd.f32 0.0, %v3021
    %v3023 = vpop.f32.mrb[0].mxu0
    %v3024 = vpop.f32.mrb[0].mxu0
    %v3025 = vadd.f32 0.0, %v3024
    %v3026 = vpop.f32.mrb[0].mxu0
    %3027 = vmatprep.mubr.bf16.mxu0 %v2376
    %3028 = vmatmul.mubr.bf16.gmra.mrb[0].mxu0 %v2375
    %v3029 = vpop.f32.mrb[0].mxu0
    %v3030 = vadd.f32 0.0, %v3029
    %v3031 = vpop.f32.mrb[0].mxu0
    %v3032 = vpop.f32.mrb[0].mxu0
    %v3033 = vadd.f32 0.0, %v3032
    %v3034 = vpop.f32.mrb[0].mxu0
    %3035 = vmatprep.mubr.bf16.mxu0 %v2380
    %3036 = vmatmul.mubr.bf16.gmra.mrb[0].mxu0 %v2379
    %v3037 = vpop.f32.mrb[0].mxu0
    %v3038 = vadd.f32 0.0, %v3037
    %v3039 = vpop.f32.mrb[0].mxu0
    %v3040 = vpop.f32.mrb[0].mxu0
    %v3041 = vadd.f32 0.0, %v3040
    %v3042 = vpop.f32.mrb[0].mxu0
    %3043 = vmatprep.mubr.bf16.mxu0 %v2384
    %3044 = vmatmul.mubr.bf16.gmra.mrb[0].mxu0 %v2383
    %v3045 = vpop.f32.mrb[0].mxu0
    %v3046 = vadd.f32 0.0, %v3045
    %v3047 = vpop.f32.mrb[0].mxu0
    %v3048 = vpop.f32.mrb[0].mxu0
    %v3049 = vadd.f32 0.0, %v3048
    %v3050 = vpop.f32.mrb[0].mxu0
    %3051 = vmatprep.mubr.bf16.mxu0 %v2388
    %3052 = vmatmul.mubr.bf16.gmra.mrb[0].mxu0 %v2387
    %v3053 = vpop.f32.mrb[0].mxu0
    %v3054 = vadd.f32 0.0, %v3053
    %v3055 = vpop.f32.mrb[0].mxu0
    %v3056 = vpop.f32.mrb[0].mxu0
    %v3057 = vadd.f32 0.0, %v3056
    %v3058 = vpop.f32.mrb[0].mxu0
    %3059 = vmatprep.mubr.bf16.mxu0 %v2392
    %3060 = vmatmul.mubr.bf16.gmra.mrb[0].mxu0 %v2391
    %v3061 = vpop.f32.mrb[0].mxu0
    %v3062 = vadd.f32 0.0, %v3061
    %v3063 = vpop.f32.mrb[0].mxu0
    %v3064 = vpop.f32.mrb[0].mxu0
    %v3065 = vadd.f32 0.0, %v3064
    %v3066 = vpop.f32.mrb[0].mxu0
    %3067 = vmatprep.mubr.bf16.mxu0 %v2396
    %3068 = vmatmul.mubr.bf16.gmra.mrb[0].mxu0 %v2395
    %v3069 = vpop.f32.mrb[0].mxu0
    %v3070 = vadd.f32 0.0, %v3069
    %v3071 = vpop.f32.mrb[0].mxu0
    %v3072 = vpop.f32.mrb[0].mxu0
    %v3073 = vadd.f32 0.0, %v3072
    %v3074 = vpop.f32.mrb[0].mxu0
    %3075 = vmatprep.mubr.bf16.mxu0 %v2400
    %3076 = vmatmul.mubr.bf16.gmra.mrb[0].mxu0 %v2399
    %v3077 = vpop.f32.mrb[0].mxu0
    %v3078 = vadd.f32 0.0, %v3077
    %v3079 = vpop.f32.mrb[0].mxu0
    %v3080 = vpop.f32.mrb[0].mxu0
    %v3081 = vadd.f32 0.0, %v3080
    %v3082 = vpop.f32.mrb[0].mxu0
    %3083 = vmatprep.mubr.bf16.mxu0 %v2404
    %3084 = vmatmul.mubr.bf16.gmra.mrb[0].mxu0 %v2403
    %v3085 = vpop.f32.mrb[0].mxu0
    %v3086 = vadd.f32 0.0, %v3085
    %v3087 = vpop.f32.mrb[0].mxu0
    %v3088 = vpop.f32.mrb[0].mxu0
    %v3089 = vadd.f32 0.0, %v3088
    %v3090 = vpop.f32.mrb[0].mxu0
    %3091 = vmatprep.mubr.bf16.mxu0 %v2408
    %3092 = vmatmul.mubr.bf16.gmra.mrb[0].mxu0 %v2407
    %v3093 = vpop.f32.mrb[0].mxu0
    %v3094 = vadd.f32 0.0, %v3093
    %v3095 = vpop.f32.mrb[0].mxu0
    %v3096 = vpop.f32.mrb[0].mxu0
    %v3097 = vadd.f32 0.0, %v3096
    %v3098 = vpop.f32.mrb[0].mxu0
    %3099 = vmatprep.mubr.bf16.mxu0 %v2412
    %3100 = vmatmul.mubr.bf16.gmra.mrb[0].mxu0 %v2411
    %v3101 = vpop.f32.mrb[0].mxu0
    %v3102 = vadd.f32 0.0, %v3101
    %v3103 = vpop.f32.mrb[0].mxu0
    %v3104 = vpop.f32.mrb[0].mxu0
    %v3105 = vadd.f32 0.0, %v3104
    %v3106 = vpop.f32.mrb[0].mxu0
    %3107 = vmatprep.mubr.bf16.mxu0 %v2416
    %3108 = vmatmul.mubr.bf16.gmra.mrb[0].mxu0 %v2415
    %v3109 = vpop.f32.mrb[0].mxu0
    %v3110 = vadd.f32 0.0, %v3109
    %v3111 = vpop.f32.mrb[0].mxu0
    %v3112 = vpop.f32.mrb[0].mxu0
    %v3113 = vadd.f32 0.0, %v3112
    %v3114 = vpop.f32.mrb[0].mxu0
    %3115 = vmatprep.mubr.bf16.mxu0 %v2420
    %3116 = vmatmul.mubr.bf16.gmra.mrb[0].mxu0 %v2419
    %v3117 = vpop.f32.mrb[0].mxu0
    %v3118 = vadd.f32 0.0, %v3117
    %v3119 = vpop.f32.mrb[0].mxu0
    %v3120 = vpop.f32.mrb[0].mxu0
    %v3121 = vadd.f32 0.0, %v3120
    %v3122 = vpop.f32.mrb[0].mxu0
    %3123 = vmatprep.mubr.bf16.mxu0 %v2424
    %3124 = vmatmul.mubr.bf16.gmra.mrb[0].mxu0 %v2423
    %v3125 = vpop.f32.mrb[0].mxu0
    %v3126 = vadd.f32 0.0, %v3125
    %v3127 = vpop.f32.mrb[0].mxu0
    %v3128 = vpop.f32.mrb[0].mxu0
    %v3129 = vadd.f32 0.0, %v3128
    %v3130 = vpop.f32.mrb[0].mxu0
    %3131 = vmatprep.mubr.bf16.mxu0 %v2428
    %3132 = vmatmul.mubr.bf16.gmra.mrb[0].mxu0 %v2427
    %v3133 = vpop.f32.mrb[0].mxu0
    %v3134 = vadd.f32 0.0, %v3133
    %v3135 = vpop.f32.mrb[0].mxu0
    %v3136 = vpop.f32.mrb[0].mxu0
    %v3137 = vadd.f32 0.0, %v3136
    %v3138 = vpop.f32.mrb[0].mxu0
    %3139 = vmatprep.mubr.bf16.mxu0 %v2432
    %3140 = vmatmul.mubr.bf16.gmra.mrb[0].mxu0 %v2431
    %v3141 = vpop.f32.mrb[0].mxu0
    %v3142 = vadd.f32 0.0, %v3141
    %v3143 = vpop.f32.mrb[0].mxu0
    %v3144 = vpop.f32.mrb[0].mxu0
    %v3145 = vadd.f32 0.0, %v3144
    %v3146 = vpop.f32.mrb[0].mxu0
    %3147 = vmatprep.mubr.bf16.mxu0 %v2436
    %3148 = vmatmul.mubr.bf16.gmra.mrb[0].mxu0 %v2435
    %v3149 = vpop.f32.mrb[0].mxu0
    %v3150 = vadd.f32 0.0, %v3149
    %v3151 = vpop.f32.mrb[0].mxu0
    %v3152 = vpop.f32.mrb[0].mxu0
    %v3153 = vadd.f32 0.0, %v3152
    %v3154 = vpop.f32.mrb[0].mxu0
    %3155 = vmatprep.mubr.bf16.mxu0 %v2440
    %3156 = vmatmul.mubr.bf16.gmra.mrb[0].mxu0 %v2439
    %v3157 = vpop.f32.mrb[0].mxu0
    %v3158 = vadd.f32 0.0, %v3157
    %v3159 = vpop.f32.mrb[0].mxu0
    %v3160 = vpop.f32.mrb[0].mxu0
    %v3161 = vadd.f32 0.0, %v3160
    %v3162 = vpop.f32.mrb[0].mxu0
    %3163 = vmatprep.mubr.bf16.mxu0 %v2444
    %3164 = vmatmul.mubr.bf16.gmra.mrb[0].mxu0 %v2443
    %v3165 = vpop.f32.mrb[0].mxu0
    %v3166 = vadd.f32 0.0, %v3165
    %v3167 = vpop.f32.mrb[0].mxu0
    %v3168 = vpop.f32.mrb[0].mxu0
    %v3169 = vadd.f32 0.0, %v3168
    %v3170 = vpop.f32.mrb[0].mxu0
    %3171 = vmatprep.mubr.bf16.mxu0 %v2448
    %3172 = vmatmul.mubr.bf16.gmra.mrb[0].mxu0 %v2447
    %v3173 = vpop.f32.mrb[0].mxu0
    %v3174 = vadd.f32 0.0, %v3173
    %v3175 = vpop.f32.mrb[0].mxu0
    %v3176 = vpop.f32.mrb[0].mxu0
    %v3177 = vadd.f32 0.0, %v3176
    %v3178 = vpop.f32.mrb[0].mxu0
    %3179 = vmatprep.mubr.bf16.mxu0 %v2452
    %3180 = vmatmul.mubr.bf16.gmra.mrb[0].mxu0 %v2451
    %v3181 = vpop.f32.mrb[0].mxu0
    %v3182 = vadd.f32 0.0, %v3181
    %v3183 = vpop.f32.mrb[0].mxu0
    %v3184 = vpop.f32.mrb[0].mxu0
    %v3185 = vadd.f32 0.0, %v3184
    %v3186 = vpop.f32.mrb[0].mxu0
    %3187 = vmatprep.mubr.bf16.mxu0 %v2456
    %3188 = vmatmul.mubr.bf16.gmra.mrb[0].mxu0 %v2455
    %v3189 = vpop.f32.mrb[0].mxu0
    %v3190 = vadd.f32 0.0, %v3189
    %v3191 = vpop.f32.mrb[0].mxu0
    %v3192 = vpop.f32.mrb[0].mxu0
    %v3193 = vadd.f32 0.0, %v3192
    %v3194 = vpop.f32.mrb[0].mxu0
    %3195 = vmatprep.mubr.bf16.mxu0 %v2460
    %3196 = vmatmul.mubr.bf16.gmra.mrb[0].mxu0 %v2459
    %v3197 = vpop.f32.mrb[0].mxu0
    %v3198 = vadd.f32 0.0, %v3197
    %v3199 = vpop.f32.mrb[0].mxu0
    %v3200 = vpop.f32.mrb[0].mxu0
    %v3201 = vadd.f32 0.0, %v3200
    %v3202 = vpop.f32.mrb[0].mxu0
    %3203 = vmatprep.mubr.bf16.mxu0 %v2464
    %3204 = vmatmul.mubr.bf16.gmra.mrb[0].mxu0 %v2463
    %v3205 = vpop.f32.mrb[0].mxu0
    %v3206 = vadd.f32 0.0, %v3205
    %v3207 = vpop.f32.mrb[0].mxu0
    %v3208 = vpop.f32.mrb[0].mxu0
    %v3209 = vadd.f32 0.0, %v3208
    %v3210 = vpop.f32.mrb[0].mxu0
    %3211 = vmatprep.mubr.bf16.mxu0 %v2468
    %3212 = vmatmul.mubr.bf16.gmra.mrb[0].mxu0 %v2467
    %v3213 = vpop.f32.mrb[0].mxu0
    %v3214 = vadd.f32 0.0, %v3213
    %v3215 = vpop.f32.mrb[0].mxu0
    %v3216 = vpop.f32.mrb[0].mxu0
    %v3217 = vadd.f32 0.0, %v3216
    %v3218 = vpop.f32.mrb[0].mxu0
    %3219 = vmatprep.mubr.bf16.mxu0 %v2472
    %3220 = vmatmul.mubr.bf16.gmra.mrb[0].mxu0 %v2471
    %v3221 = vpop.f32.mrb[0].mxu0
    %v3222 = vadd.f32 0.0, %v3221
    %v3223 = vpop.f32.mrb[0].mxu0
    %v3224 = vpop.f32.mrb[0].mxu0
    %v3225 = vadd.f32 0.0, %v3224
    %v3226 = vpop.f32.mrb[0].mxu0
    %3227 = vmatprep.mubr.bf16.mxu0 %v2476
    %3228 = vmatmul.mubr.bf16.gmra.mrb[0].mxu0 %v2475
    %v3229 = vpop.f32.mrb[0].mxu0
    %v3230 = vadd.f32 0.0, %v3229
    %v3231 = vpop.f32.mrb[0].mxu0
    %v3232 = vpop.f32.mrb[0].mxu0
    %v3233 = vadd.f32 0.0, %v3232
    %v3234 = vpop.f32.mrb[0].mxu0
    %3235 = vmatprep.mubr.bf16.mxu0 %v2480
    %3236 = vmatmul.mubr.bf16.gmra.mrb[0].mxu0 %v2479
    %v3237 = vpop.f32.mrb[0].mxu0
    %v3238 = vadd.f32 0.0, %v3237
    %v3239 = vpop.f32.mrb[0].mxu0
    %v3240 = vpop.f32.mrb[0].mxu0
    %v3241 = vadd.f32 0.0, %v3240
    %v3242 = vpop.f32.mrb[0].mxu0
    %3243 = vmatprep.mubr.bf16.mxu0 %v2484
    %3244 = vmatmul.mubr.bf16.gmra.mrb[0].mxu0 %v2483
    %v3245 = vpop.f32.mrb[0].mxu0
    %v3246 = vadd.f32 0.0, %v3245
    %v3247 = vpop.f32.mrb[0].mxu0
    %v3248 = vpop.f32.mrb[0].mxu0
    %v3249 = vadd.f32 0.0, %v3248
    %v3250 = vpop.f32.mrb[0].mxu0
    %3251 = vmatprep.mubr.bf16.mxu0 %v2488
    %3252 = vmatmul.mubr.bf16.gmra.mrb[0].mxu0 %v2487
    %v3253 = vpop.f32.mrb[0].mxu0
    %v3254 = vadd.f32 0.0, %v3253
    %v3255 = vpop.f32.mrb[0].mxu0
    %v3256 = vpop.f32.mrb[0].mxu0
    %v3257 = vadd.f32 0.0, %v3256
    %v3258 = vpop.f32.mrb[0].mxu0
    %3259 = vmatprep.mubr.bf16.mxu0 %v2492
    %3260 = vmatmul.mubr.bf16.gmra.mrb[0].mxu0 %v2491
    %v3261 = vpop.f32.mrb[0].mxu0
    %v3262 = vadd.f32 0.0, %v3261
    %v3263 = vpop.f32.mrb[0].mxu0
    %v3264 = vpop.f32.mrb[0].mxu0
    %v3265 = vadd.f32 0.0, %v3264
    %v3266 = vpop.f32.mrb[0].mxu0
    %3267 = vmatprep.mubr.bf16.mxu0 %v2496
    %3268 = vmatmul.mubr.bf16.gmra.mrb[0].mxu0 %v2495
    %v3269 = vpop.f32.mrb[0].mxu0
    %v3270 = vadd.f32 0.0, %v3269
    %v3271 = vpop.f32.mrb[0].mxu0
    %v3272 = vpop.f32.mrb[0].mxu0
    %v3273 = vadd.f32 0.0, %v3272
    %v3274 = vpop.f32.mrb[0].mxu0
    %3275 = vmatprep.mubr.bf16.mxu0 %v2500
    %3276 = vmatmul.mubr.bf16.gmra.mrb[0].mxu0 %v2499
    %v3277 = vpop.f32.mrb[0].mxu0
    %v3278 = vadd.f32 0.0, %v3277
    %v3279 = vpop.f32.mrb[0].mxu0
    %v3280 = vpop.f32.mrb[0].mxu0
    %v3281 = vadd.f32 0.0, %v3280
    %v3282 = vpop.f32.mrb[0].mxu0
    %3283 = vmatprep.mubr.bf16.mxu0 %v2504
    %3284 = vmatmul.mubr.bf16.gmra.mrb[0].mxu0 %v2503
    %v3285 = vpop.f32.mrb[0].mxu0
    %v3286 = vadd.f32 0.0, %v3285
    %v3287 = vpop.f32.mrb[0].mxu0
    %v3288 = vpop.f32.mrb[0].mxu0
    %v3289 = vadd.f32 0.0, %v3288
    %v3290 = vpop.f32.mrb[0].mxu0
    %3291 = vmatprep.mubr.bf16.mxu0 %v2508
    %3292 = vmatmul.mubr.bf16.gmra.mrb[0].mxu0 %v2507
    %v3293 = vpop.f32.mrb[0].mxu0
    %v3294 = vadd.f32 0.0, %v3293
    %v3295 = vpop.f32.mrb[0].mxu0
    %v3296 = vpop.f32.mrb[0].mxu0
    %v3297 = vadd.f32 0.0, %v3296
    %v3298 = vpop.f32.mrb[0].mxu0
    %3299 = vmatprep.mubr.bf16.mxu0 %v2512
    %3300 = vmatmul.mubr.bf16.gmra.mrb[0].mxu0 %v2511
    %v3301 = vpop.f32.mrb[0].mxu0
    %v3302 = vadd.f32 0.0, %v3301
    %v3303 = vpop.f32.mrb[0].mxu0
    %v3304 = vpop.f32.mrb[0].mxu0
    %v3305 = vadd.f32 0.0, %v3304
    %v3306 = vpop.f32.mrb[0].mxu0
    %3307 = vmatprep.mubr.bf16.mxu0 %v2516
    %3308 = vmatmul.mubr.bf16.gmra.mrb[0].mxu0 %v2515
    %v3309 = vpop.f32.mrb[0].mxu0
    %v3310 = vadd.f32 0.0, %v3309
    %v3311 = vpop.f32.mrb[0].mxu0
    %v3312 = vpop.f32.mrb[0].mxu0
    %v3313 = vadd.f32 0.0, %v3312
    %v3314 = vpop.f32.mrb[0].mxu0
    %3315 = vmatprep.mubr.bf16.mxu0 %v2520
    %3316 = vmatmul.mubr.bf16.gmra.mrb[0].mxu0 %v2519
    %v3317 = vpop.f32.mrb[0].mxu0
    %v3318 = vadd.f32 0.0, %v3317
    %v3319 = vpop.f32.mrb[0].mxu0
    %v3320 = vpop.f32.mrb[0].mxu0
    %v3321 = vadd.f32 0.0, %v3320
    %v3322 = vpop.f32.mrb[0].mxu0
    %3323 = vmatprep.mubr.bf16.mxu0 %v2524
    %3324 = vmatmul.mubr.bf16.gmra.mrb[0].mxu0 %v2523
    %v3325 = vpop.f32.mrb[0].mxu0
    %v3326 = vadd.f32 0.0, %v3325
    %v3327 = vpop.f32.mrb[0].mxu0
    %v3328 = vpop.f32.mrb[0].mxu0
    %v3329 = vadd.f32 0.0, %v3328
    %v3330 = vpop.f32.mrb[0].mxu0
    %3331 = vmatprep.mubr.bf16.mxu0 %v2528
    %3332 = vmatmul.mubr.bf16.gmra.mrb[0].mxu0 %v2527
    %v3333 = vpop.f32.mrb[0].mxu0
    %v3334 = vadd.f32 0.0, %v3333
    %v3335 = vpop.f32.mrb[0].mxu0
    %v3336 = vpop.f32.mrb[0].mxu0
    %v3337 = vadd.f32 0.0, %v3336
    %v3338 = vpop.f32.mrb[0].mxu0
    %3339 = vmatprep.mubr.bf16.mxu0 %v2532
    %3340 = vmatmul.mubr.bf16.gmra.mrb[0].mxu0 %v2531
    %v3341 = vpop.f32.mrb[0].mxu0
    %v3342 = vadd.f32 0.0, %v3341
    %v3343 = vpop.f32.mrb[0].mxu0
    %v3344 = vpop.f32.mrb[0].mxu0
    %v3345 = vadd.f32 0.0, %v3344
    %v3346 = vpop.f32.mrb[0].mxu0
    %3347 = vmatprep.mubr.bf16.mxu0 %v2536
    %3348 = vmatmul.mubr.bf16.gmra.mrb[0].mxu0 %v2535
    %v3349 = vpop.f32.mrb[0].mxu0
    %v3350 = vadd.f32 0.0, %v3349
    %v3351 = vpop.f32.mrb[0].mxu0
    %v3352 = vpop.f32.mrb[0].mxu0
    %v3353 = vadd.f32 0.0, %v3352
    %v3354 = vpop.f32.mrb[0].mxu0
    %3355 = vmatprep.mubr.bf16.mxu0 %v2540
    %3356 = vmatmul.mubr.bf16.gmra.mrb[0].mxu0 %v2539
    %v3357 = vpop.f32.mrb[0].mxu0
    %v3358 = vadd.f32 0.0, %v3357
    %v3359 = vpop.f32.mrb[0].mxu0
    %v3360 = vpop.f32.mrb[0].mxu0
    %v3361 = vadd.f32 0.0, %v3360
    %v3362 = vpop.f32.mrb[0].mxu0
    %3363 = vmatprep.mubr.bf16.mxu0 %v2544
    %3364 = vmatmul.mubr.bf16.gmra.mrb[0].mxu0 %v2543
    %v3365 = vpop.f32.mrb[0].mxu0
    %v3366 = vadd.f32 0.0, %v3365
    %v3367 = vpop.f32.mrb[0].mxu0
    %v3368 = vpop.f32.mrb[0].mxu0
    %v3369 = vadd.f32 0.0, %v3368
    %v3370 = vpop.f32.mrb[0].mxu0
    %3371 = vmatprep.mubr.bf16.mxu0 %v2548
    %3372 = vmatmul.mubr.bf16.gmra.mrb[0].mxu0 %v2547
    %v3373 = vpop.f32.mrb[0].mxu0
    %v3374 = vadd.f32 0.0, %v3373
    %v3375 = vpop.f32.mrb[0].mxu0
    %v3376 = vpop.f32.mrb[0].mxu0
    %v3377 = vadd.f32 0.0, %v3376
    %v3378 = vpop.f32.mrb[0].mxu0
    %3379 = vmatprep.mubr.bf16.mxu0 %v2552
    %3380 = vmatmul.mubr.bf16.gmra.mrb[0].mxu0 %v2551
    %v3381 = vpop.f32.mrb[0].mxu0
    %v3382 = vadd.f32 0.0, %v3381
    %v3383 = vpop.f32.mrb[0].mxu0
    %v3384 = vpop.f32.mrb[0].mxu0
    %v3385 = vadd.f32 0.0, %v3384
    %v3386 = vpop.f32.mrb[0].mxu0
    %3387 = vmatprep.mubr.bf16.mxu0 %v2556
    %3388 = vmatmul.mubr.bf16.gmra.mrb[0].mxu0 %v2555
    %v3389 = vpop.f32.mrb[0].mxu0
    %v3390 = vadd.f32 0.0, %v3389
    %v3391 = vpop.f32.mrb[0].mxu0
    %v3392 = vpop.f32.mrb[0].mxu0
    %v3393 = vadd.f32 0.0, %v3392
    %v3394 = vpop.f32.mrb[0].mxu0
    %3395 = vmatprep.mubr.bf16.mxu0 %v2560
    %3396 = vmatmul.mubr.bf16.gmra.mrb[0].mxu0 %v2559
    %v3397 = vpop.f32.mrb[0].mxu0
    %v3398 = vadd.f32 0.0, %v3397
    %v3399 = vpop.f32.mrb[0].mxu0
    %v3400 = vpop.f32.mrb[0].mxu0
    %v3401 = vadd.f32 0.0, %v3400
    %v3402 = vpop.f32.mrb[0].mxu0
    %3403 = vmatprep.mubr.bf16.mxu0 %v2564
    %3404 = vmatmul.mubr.bf16.gmra.mrb[0].mxu0 %v2563
    %v3405 = vpop.f32.mrb[0].mxu0
    %v3406 = vadd.f32 0.0, %v3405
    %v3407 = vpop.f32.mrb[0].mxu0
    %v3408 = vpop.f32.mrb[0].mxu0
    %v3409 = vadd.f32 0.0, %v3408
    %v3410 = vpop.f32.mrb[0].mxu0
    %3411 = vmatprep.mubr.bf16.mxu0 %v2568
    %3412 = vmatmul.mubr.bf16.gmra.mrb[0].mxu0 %v2567
    %v3413 = vpop.f32.mrb[0].mxu0
    %v3414 = vadd.f32 0.0, %v3413
    %v3415 = vpop.f32.mrb[0].mxu0
    %v3416 = vpop.f32.mrb[0].mxu0
    %v3417 = vadd.f32 0.0, %v3416
    %v3418 = vpop.f32.mrb[0].mxu0
    %3419 = vmatprep.mubr.bf16.mxu0 %v2572
    %3420 = vmatmul.mubr.bf16.gmra.mrb[0].mxu0 %v2571
    %v3421 = vpop.f32.mrb[0].mxu0
    %v3422 = vadd.f32 0.0, %v3421
    %v3423 = vpop.f32.mrb[0].mxu0
    %v3424 = vpop.f32.mrb[0].mxu0
    %v3425 = vadd.f32 0.0, %v3424
    %v3426 = vpop.f32.mrb[0].mxu0
    %3427 = vmatprep.mubr.bf16.mxu0 %v2576
    %3428 = vmatmul.mubr.bf16.gmra.mrb[0].mxu0 %v2575
    %v3429 = vpop.f32.mrb[0].mxu0
    %v3430 = vadd.f32 0.0, %v3429
    %v3431 = vpop.f32.mrb[0].mxu0
    %v3432 = vpop.f32.mrb[0].mxu0
    %v3433 = vadd.f32 0.0, %v3432
    %v3434 = vpop.f32.mrb[0].mxu0
    %3435 = vmatprep.mubr.bf16.mxu0 %v2580
    %3436 = vmatmul.mubr.bf16.gmra.mrb[0].mxu0 %v2579
    %v3437 = vpop.f32.mrb[0].mxu0
    %v3438 = vadd.f32 0.0, %v3437
    %v3439 = vpop.f32.mrb[0].mxu0
    %v3440 = vpop.f32.mrb[0].mxu0
    %v3441 = vadd.f32 0.0, %v3440
    %v3442 = vpop.f32.mrb[0].mxu0
    %3443 = vmatprep.mubr.bf16.mxu0 %v2584
    %3444 = vmatmul.mubr.bf16.gmra.mrb[0].mxu0 %v2583
    %v3445 = vpop.f32.mrb[0].mxu0
    %v3446 = vadd.f32 0.0, %v3445
    %v3447 = vpop.f32.mrb[0].mxu0
    %v3448 = vpop.f32.mrb[0].mxu0
    %v3449 = vadd.f32 0.0, %v3448
    %v3450 = vpop.f32.mrb[0].mxu0
    %3451 = vmatprep.mubr.bf16.mxu0 %v2588
    %3452 = vmatmul.mubr.bf16.gmra.mrb[0].mxu0 %v2587
    %v3453 = vpop.f32.mrb[0].mxu0
    %v3454 = vadd.f32 0.0, %v3453
    %v3455 = vpop.f32.mrb[0].mxu0
    %v3456 = vpop.f32.mrb[0].mxu0
    %v3457 = vadd.f32 0.0, %v3456
    %v3458 = vpop.f32.mrb[0].mxu0
    %3459 = vmatprep.mubr.bf16.mxu0 %v2592
    %3460 = vmatmul.mubr.bf16.gmra.mrb[0].mxu0 %v2591
    %v3461 = vpop.f32.mrb[0].mxu0
    %v3462 = vadd.f32 0.0, %v3461
    %v3463 = vpop.f32.mrb[0].mxu0
    %v3464 = vpop.f32.mrb[0].mxu0
    %v3465 = vadd.f32 0.0, %v3464
    %v3466 = vpop.f32.mrb[0].mxu0
    %3467 = vmatprep.mubr.bf16.mxu0 %v2596
    %3468 = vmatmul.mubr.bf16.gmra.mrb[0].mxu0 %v2595
    %v3469 = vpop.f32.mrb[0].mxu0
    %v3470 = vadd.f32 0.0, %v3469
    %v3471 = vpop.f32.mrb[0].mxu0
    %v3472 = vpop.f32.mrb[0].mxu0
    %v3473 = vadd.f32 0.0, %v3472
    %v3474 = vpop.f32.mrb[0].mxu0
    %3475 = vmatprep.mubr.bf16.mxu0 %v2600
    %3476 = vmatmul.mubr.bf16.gmra.mrb[0].mxu0 %v2599
    %v3477 = vpop.f32.mrb[0].mxu0
    %v3478 = vadd.f32 0.0, %v3477
    %v3479 = vpop.f32.mrb[0].mxu0
    %v3480 = vpop.f32.mrb[0].mxu0
    %v3481 = vadd.f32 0.0, %v3480
    %v3482 = vpop.f32.mrb[0].mxu0
    %3483 = vmatprep.mubr.bf16.mxu0 %v2604
    %3484 = vmatmul.mubr.bf16.gmra.mrb[0].mxu0 %v2603
    %v3485 = vpop.f32.mrb[0].mxu0
    %v3486 = vadd.f32 0.0, %v3485
    %v3487 = vpop.f32.mrb[0].mxu0
    %v3488 = vpop.f32.mrb[0].mxu0
    %v3489 = vadd.f32 0.0, %v3488
    %v3490 = vpop.f32.mrb[0].mxu0
    %3491 = vmatprep.mubr.bf16.mxu0 %v2608
    %3492 = vmatmul.mubr.bf16.gmra.mrb[0].mxu0 %v2607
    %v3493 = vpop.f32.mrb[0].mxu0
    %v3494 = vadd.f32 0.0, %v3493
    %v3495 = vpop.f32.mrb[0].mxu0
    %v3496 = vpop.f32.mrb[0].mxu0
    %v3497 = vadd.f32 0.0, %v3496
    %v3498 = vpop.f32.mrb[0].mxu0
    %3499 = vmatprep.mubr.bf16.mxu0 %v2612
    %3500 = vmatmul.mubr.bf16.gmra.mrb[0].mxu0 %v2611
    %v3501 = vpop.f32.mrb[0].mxu0
    %v3502 = vadd.f32 0.0, %v3501
    %v3503 = vpop.f32.mrb[0].mxu0
    %v3504 = vpop.f32.mrb[0].mxu0
    %v3505 = vadd.f32 0.0, %v3504
    %v3506 = vpop.f32.mrb[0].mxu0
    %3507 = vmatprep.mubr.bf16.mxu0 %v2616
    %3508 = vmatmul.mubr.bf16.gmra.mrb[0].mxu0 %v2615
    %v3509 = vpop.f32.mrb[0].mxu0
    %v3510 = vadd.f32 0.0, %v3509
    %v3511 = vpop.f32.mrb[0].mxu0
    %v3512 = vpop.f32.mrb[0].mxu0
    %v3513 = vadd.f32 0.0, %v3512
    %v3514 = vpop.f32.mrb[0].mxu0
    %3515 = vdwg.mxu0
    %3516 = vmatprep.subr.bf16.mxu0 0
    %3517 = vmatpush1.bf16.msra.mxu0 %v1163
    %3518 = vmatprep.subr.bf16.mxu0 0
    %3519 = vmatpush1.bf16.msra.mxu0 %v1164
    %3520 = vmatprep.subr.bf16.mxu0 0
    %3521 = vmatpush1.bf16.msra.mxu0 %v1165
    %3522 = vmatprep.subr.bf16.mxu0 0
    %3523 = vmatpush1.bf16.msra.mxu0 %v1166
    %3524 = vmatprep.subr.bf16.mxu0 0
    %3525 = vmatpush1.bf16.msra.mxu0 %v1167
    %3526 = vmatprep.subr.bf16.mxu0 0
    %3527 = vmatpush1.bf16.msra.mxu0 %v1168
    %3528 = vmatprep.subr.bf16.mxu0 0
    %3529 = vmatpush1.bf16.msra.mxu0 %v1169
    %3530 = vmatprep.subr.bf16.mxu0 0
    %3531 = vmatpush1.bf16.msra.mxu0 %v1170
    %3532 = vmatprep.subr.bf16.mxu0 0
    %3533 = vmatpush1.bf16.msra.mxu0 %v1171
    %3534 = vmatprep.subr.bf16.mxu0 0
    %3535 = vmatpush1.bf16.msra.mxu0 %v1172
    %3536 = vmatprep.subr.bf16.mxu0 0
    %3537 = vmatpush1.bf16.msra.mxu0 %v1173
    %3538 = vmatprep.subr.bf16.mxu0 0
    %3539 = vmatpush1.bf16.msra.mxu0 %v1174
    %3540 = vmatprep.subr.bf16.mxu0 0
    %3541 = vmatpush1.bf16.msra.mxu0 %v1175
    %3542 = vmatprep.subr.bf16.mxu0 0
    %3543 = vmatpush1.bf16.msra.mxu0 %v1176
    %3544 = vmatprep.subr.bf16.mxu0 0
    %3545 = vmatpush1.bf16.msra.mxu0 %v1177
    %3546 = vmatprep.subr.bf16.mxu0 0
    %3547 = vmatpush1.bf16.msra.mxu0 %v1178
    %3548 = vmatprep.mubr.bf16.mxu0 %v2334
    %3549 = vmatmul.mubr.bf16.gmra.mrb[0].mxu0 %v2333
    %v3550 = vpop.f32.mrb[0].mxu0
    %v3551 = vadd.f32 %v2942, %v3550
    %v3552 = vpop.f32.mrb[0].mxu0
    %v3553 = vpop.f32.mrb[0].mxu0
    %v3554 = vadd.f32 %v2945, %v3553
    %v3555 = vpop.f32.mrb[0].mxu0
    %3556 = vmatprep.mubr.bf16.mxu0 %v2338
    %3557 = vmatmul.mubr.bf16.gmra.mrb[0].mxu0 %v2337
    %v3558 = vpop.f32.mrb[0].mxu0
    %v3559 = vadd.f32 %v2950, %v3558
    %v3560 = vpop.f32.mrb[0].mxu0
    %v3561 = vpop.f32.mrb[0].mxu0
    %v3562 = vadd.f32 %v2953, %v3561
    %v3563 = vpop.f32.mrb[0].mxu0
    %3564 = vmatprep.mubr.bf16.mxu0 %v2342
    %3565 = vmatmul.mubr.bf16.gmra.mrb[0].mxu0 %v2341
    %v3566 = vpop.f32.mrb[0].mxu0
    %v3567 = vadd.f32 %v2958, %v3566
    %v3568 = vpop.f32.mrb[0].mxu0
    %v3569 = vpop.f32.mrb[0].mxu0
    %v3570 = vadd.f32 %v2961, %v3569
    %v3571 = vpop.f32.mrb[0].mxu0
    %3572 = vmatprep.mubr.bf16.mxu0 %v2346
    %3573 = vmatmul.mubr.bf16.gmra.mrb[0].mxu0 %v2345
    %v3574 = vpop.f32.mrb[0].mxu0
    %v3575 = vadd.f32 %v2966, %v3574
    %v3576 = vpop.f32.mrb[0].mxu0
    %v3577 = vpop.f32.mrb[0].mxu0
    %v3578 = vadd.f32 %v2969, %v3577
    %v3579 = vpop.f32.mrb[0].mxu0
    %3580 = vmatprep.mubr.bf16.mxu0 %v2350
    %3581 = vmatmul.mubr.bf16.gmra.mrb[0].mxu0 %v2349
    %v3582 = vpop.f32.mrb[0].mxu0
    %v3583 = vadd.f32 %v2974, %v3582
    %v3584 = vpop.f32.mrb[0].mxu0
    %v3585 = vpop.f32.mrb[0].mxu0
    %v3586 = vadd.f32 %v2977, %v3585
    %v3587 = vpop.f32.mrb[0].mxu0
    %3588 = vmatprep.mubr.bf16.mxu0 %v2354
    %3589 = vmatmul.mubr.bf16.gmra.mrb[0].mxu0 %v2353
    %v3590 = vpop.f32.mrb[0].mxu0
    %v3591 = vadd.f32 %v2982, %v3590
    %v3592 = vpop.f32.mrb[0].mxu0
    %v3593 = vpop.f32.mrb[0].mxu0
    %v3594 = vadd.f32 %v2985, %v3593
    %v3595 = vpop.f32.mrb[0].mxu0
    %3596 = vmatprep.mubr.bf16.mxu0 %v2358
    %3597 = vmatmul.mubr.bf16.gmra.mrb[0].mxu0 %v2357
    %v3598 = vpop.f32.mrb[0].mxu0
    %v3599 = vadd.f32 %v2990, %v3598
    %v3600 = vpop.f32.mrb[0].mxu0
    %v3601 = vpop.f32.mrb[0].mxu0
    %v3602 = vadd.f32 %v2993, %v3601
    %v3603 = vpop.f32.mrb[0].mxu0
    %3604 = vmatprep.mubr.bf16.mxu0 %v2362
    %3605 = vmatmul.mubr.bf16.gmra.mrb[0].mxu0 %v2361
    %v3606 = vpop.f32.mrb[0].mxu0
    %v3607 = vadd.f32 %v2998, %v3606
    %v3608 = vpop.f32.mrb[0].mxu0
    %v3609 = vpop.f32.mrb[0].mxu0
    %v3610 = vadd.f32 %v3001, %v3609
    %v3611 = vpop.f32.mrb[0].mxu0
    %3612 = vmatprep.mubr.bf16.mxu0 %v2366
    %3613 = vmatmul.mubr.bf16.gmra.mrb[0].mxu0 %v2365
    %v3614 = vpop.f32.mrb[0].mxu0
    %v3615 = vadd.f32 %v3006, %v3614
    %v3616 = vpop.f32.mrb[0].mxu0
    %v3617 = vpop.f32.mrb[0].mxu0
    %v3618 = vadd.f32 %v3009, %v3617
    %v3619 = vpop.f32.mrb[0].mxu0
    %3620 = vmatprep.mubr.bf16.mxu0 %v2370
    %3621 = vmatmul.mubr.bf16.gmra.mrb[0].mxu0 %v2369
    %v3622 = vpop.f32.mrb[0].mxu0
    %v3623 = vadd.f32 %v3014, %v3622
    %v3624 = vpop.f32.mrb[0].mxu0
    %v3625 = vpop.f32.mrb[0].mxu0
    %v3626 = vadd.f32 %v3017, %v3625
    %v3627 = vpop.f32.mrb[0].mxu0
    %3628 = vmatprep.mubr.bf16.mxu0 %v2374
    %3629 = vmatmul.mubr.bf16.gmra.mrb[0].mxu0 %v2373
    %v3630 = vpop.f32.mrb[0].mxu0
    %v3631 = vadd.f32 %v3022, %v3630
    %v3632 = vpop.f32.mrb[0].mxu0
    %v3633 = vpop.f32.mrb[0].mxu0
    %v3634 = vadd.f32 %v3025, %v3633
    %v3635 = vpop.f32.mrb[0].mxu0
    %3636 = vmatprep.mubr.bf16.mxu0 %v2378
    %3637 = vmatmul.mubr.bf16.gmra.mrb[0].mxu0 %v2377
    %v3638 = vpop.f32.mrb[0].mxu0
    %v3639 = vadd.f32 %v3030, %v3638
    %v3640 = vpop.f32.mrb[0].mxu0
    %v3641 = vpop.f32.mrb[0].mxu0
    %v3642 = vadd.f32 %v3033, %v3641
    %v3643 = vpop.f32.mrb[0].mxu0
    %3644 = vmatprep.mubr.bf16.mxu0 %v2382
    %3645 = vmatmul.mubr.bf16.gmra.mrb[0].mxu0 %v2381
    %v3646 = vpop.f32.mrb[0].mxu0
    %v3647 = vadd.f32 %v3038, %v3646
    %v3648 = vpop.f32.mrb[0].mxu0
    %v3649 = vpop.f32.mrb[0].mxu0
    %v3650 = vadd.f32 %v3041, %v3649
    %v3651 = vpop.f32.mrb[0].mxu0
    %3652 = vmatprep.mubr.bf16.mxu0 %v2386
    %3653 = vmatmul.mubr.bf16.gmra.mrb[0].mxu0 %v2385
    %v3654 = vpop.f32.mrb[0].mxu0
    %v3655 = vadd.f32 %v3046, %v3654
    %v3656 = vpop.f32.mrb[0].mxu0
    %v3657 = vpop.f32.mrb[0].mxu0
    %v3658 = vadd.f32 %v3049, %v3657
    %v3659 = vpop.f32.mrb[0].mxu0
    %3660 = vmatprep.mubr.bf16.mxu0 %v2390
    %3661 = vmatmul.mubr.bf16.gmra.mrb[0].mxu0 %v2389
    %v3662 = vpop.f32.mrb[0].mxu0
    %v3663 = vadd.f32 %v3054, %v3662
    %v3664 = vpop.f32.mrb[0].mxu0
    %v3665 = vpop.f32.mrb[0].mxu0
    %v3666 = vadd.f32 %v3057, %v3665
    %v3667 = vpop.f32.mrb[0].mxu0
    %3668 = vmatprep.mubr.bf16.mxu0 %v2394
    %3669 = vmatmul.mubr.bf16.gmra.mrb[0].mxu0 %v2393
    %v3670 = vpop.f32.mrb[0].mxu0
    %v3671 = vadd.f32 %v3062, %v3670
    %v3672 = vpop.f32.mrb[0].mxu0
    %v3673 = vpop.f32.mrb[0].mxu0
    %v3674 = vadd.f32 %v3065, %v3673
    %v3675 = vpop.f32.mrb[0].mxu0
    %3676 = vmatprep.mubr.bf16.mxu0 %v2398
    %3677 = vmatmul.mubr.bf16.gmra.mrb[0].mxu0 %v2397
    %v3678 = vpop.f32.mrb[0].mxu0
    %v3679 = vadd.f32 %v3070, %v3678
    %v3680 = vpop.f32.mrb[0].mxu0
    %v3681 = vpop.f32.mrb[0].mxu0
    %v3682 = vadd.f32 %v3073, %v3681
    %v3683 = vpop.f32.mrb[0].mxu0
    %3684 = vmatprep.mubr.bf16.mxu0 %v2402
    %3685 = vmatmul.mubr.bf16.gmra.mrb[0].mxu0 %v2401
    %v3686 = vpop.f32.mrb[0].mxu0
    %v3687 = vadd.f32 %v3078, %v3686
    %v3688 = vpop.f32.mrb[0].mxu0
    %v3689 = vpop.f32.mrb[0].mxu0
    %v3690 = vadd.f32 %v3081, %v3689
    %v3691 = vpop.f32.mrb[0].mxu0
    %3692 = vmatprep.mubr.bf16.mxu0 %v2406
    %3693 = vmatmul.mubr.bf16.gmra.mrb[0].mxu0 %v2405
    %v3694 = vpop.f32.mrb[0].mxu0
    %v3695 = vadd.f32 %v3086, %v3694
    %v3696 = vpop.f32.mrb[0].mxu0
    %v3697 = vpop.f32.mrb[0].mxu0
    %v3698 = vadd.f32 %v3089, %v3697
    %v3699 = vpop.f32.mrb[0].mxu0
    %3700 = vmatprep.mubr.bf16.mxu0 %v2410
    %3701 = vmatmul.mubr.bf16.gmra.mrb[0].mxu0 %v2409
    %v3702 = vpop.f32.mrb[0].mxu0
    %v3703 = vadd.f32 %v3094, %v3702
    %v3704 = vpop.f32.mrb[0].mxu0
    %v3705 = vpop.f32.mrb[0].mxu0
    %v3706 = vadd.f32 %v3097, %v3705
    %v3707 = vpop.f32.mrb[0].mxu0
    %3708 = vmatprep.mubr.bf16.mxu0 %v2414
    %3709 = vmatmul.mubr.bf16.gmra.mrb[0].mxu0 %v2413
    %v3710 = vpop.f32.mrb[0].mxu0
    %v3711 = vadd.f32 %v3102, %v3710
    %v3712 = vpop.f32.mrb[0].mxu0
    %v3713 = vpop.f32.mrb[0].mxu0
    %v3714 = vadd.f32 %v3105, %v3713
    %v3715 = vpop.f32.mrb[0].mxu0
    %3716 = vmatprep.mubr.bf16.mxu0 %v2418
    %3717 = vmatmul.mubr.bf16.gmra.mrb[0].mxu0 %v2417
    %v3718 = vpop.f32.mrb[0].mxu0
    %v3719 = vadd.f32 %v3110, %v3718
    %v3720 = vpop.f32.mrb[0].mxu0
    %v3721 = vpop.f32.mrb[0].mxu0
    %v3722 = vadd.f32 %v3113, %v3721
    %v3723 = vpop.f32.mrb[0].mxu0
    %3724 = vmatprep.mubr.bf16.mxu0 %v2422
    %3725 = vmatmul.mubr.bf16.gmra.mrb[0].mxu0 %v2421
    %v3726 = vpop.f32.mrb[0].mxu0
    %v3727 = vadd.f32 %v3118, %v3726
    %v3728 = vpop.f32.mrb[0].mxu0
    %v3729 = vpop.f32.mrb[0].mxu0
    %v3730 = vadd.f32 %v3121, %v3729
    %v3731 = vpop.f32.mrb[0].mxu0
    %3732 = vmatprep.mubr.bf16.mxu0 %v2426
    %3733 = vmatmul.mubr.bf16.gmra.mrb[0].mxu0 %v2425
    %v3734 = vpop.f32.mrb[0].mxu0
    %v3735 = vadd.f32 %v3126, %v3734
    %v3736 = vpop.f32.mrb[0].mxu0
    %v3737 = vpop.f32.mrb[0].mxu0
    %v3738 = vadd.f32 %v3129, %v3737
    %v3739 = vpop.f32.mrb[0].mxu0
    %3740 = vmatprep.mubr.bf16.mxu0 %v2430
    %3741 = vmatmul.mubr.bf16.gmra.mrb[0].mxu0 %v2429
    %v3742 = vpop.f32.mrb[0].mxu0
    %v3743 = vadd.f32 %v3134, %v3742
    %v3744 = vpop.f32.mrb[0].mxu0
    %v3745 = vpop.f32.mrb[0].mxu0
    %v3746 = vadd.f32 %v3137, %v3745
    %v3747 = vpop.f32.mrb[0].mxu0
    %3748 = vmatprep.mubr.bf16.mxu0 %v2434
    %3749 = vmatmul.mubr.bf16.gmra.mrb[0].mxu0 %v2433
    %v3750 = vpop.f32.mrb[0].mxu0
    %v3751 = vadd.f32 %v3142, %v3750
    %v3752 = vpop.f32.mrb[0].mxu0
    %v3753 = vpop.f32.mrb[0].mxu0
    %v3754 = vadd.f32 %v3145, %v3753
    %v3755 = vpop.f32.mrb[0].mxu0
    %3756 = vmatprep.mubr.bf16.mxu0 %v2438
    %3757 = vmatmul.mubr.bf16.gmra.mrb[0].mxu0 %v2437
    %v3758 = vpop.f32.mrb[0].mxu0
    %v3759 = vadd.f32 %v3150, %v3758
    %v3760 = vpop.f32.mrb[0].mxu0
    %v3761 = vpop.f32.mrb[0].mxu0
    %v3762 = vadd.f32 %v3153, %v3761
    %v3763 = vpop.f32.mrb[0].mxu0
    %3764 = vmatprep.mubr.bf16.mxu0 %v2442
    %3765 = vmatmul.mubr.bf16.gmra.mrb[0].mxu0 %v2441
    %v3766 = vpop.f32.mrb[0].mxu0
    %v3767 = vadd.f32 %v3158, %v3766
    %v3768 = vpop.f32.mrb[0].mxu0
    %v3769 = vpop.f32.mrb[0].mxu0
    %v3770 = vadd.f32 %v3161, %v3769
    %v3771 = vpop.f32.mrb[0].mxu0
    %3772 = vmatprep.mubr.bf16.mxu0 %v2446
    %3773 = vmatmul.mubr.bf16.gmra.mrb[0].mxu0 %v2445
    %v3774 = vpop.f32.mrb[0].mxu0
    %v3775 = vadd.f32 %v3166, %v3774
    %v3776 = vpop.f32.mrb[0].mxu0
    %v3777 = vpop.f32.mrb[0].mxu0
    %v3778 = vadd.f32 %v3169, %v3777
    %v3779 = vpop.f32.mrb[0].mxu0
    %3780 = vmatprep.mubr.bf16.mxu0 %v2450
    %3781 = vmatmul.mubr.bf16.gmra.mrb[0].mxu0 %v2449
    %v3782 = vpop.f32.mrb[0].mxu0
    %v3783 = vadd.f32 %v3174, %v3782
    %v3784 = vpop.f32.mrb[0].mxu0
    %v3785 = vpop.f32.mrb[0].mxu0
    %v3786 = vadd.f32 %v3177, %v3785
    %v3787 = vpop.f32.mrb[0].mxu0
    %3788 = vmatprep.mubr.bf16.mxu0 %v2454
    %3789 = vmatmul.mubr.bf16.gmra.mrb[0].mxu0 %v2453
    %v3790 = vpop.f32.mrb[0].mxu0
    %v3791 = vadd.f32 %v3182, %v3790
    %v3792 = vpop.f32.mrb[0].mxu0
    %v3793 = vpop.f32.mrb[0].mxu0
    %v3794 = vadd.f32 %v3185, %v3793
    %v3795 = vpop.f32.mrb[0].mxu0
    %3796 = vmatprep.mubr.bf16.mxu0 %v2458
    %3797 = vmatmul.mubr.bf16.gmra.mrb[0].mxu0 %v2457
    %v3798 = vpop.f32.mrb[0].mxu0
    %v3799 = vadd.f32 %v3190, %v3798
    %v3800 = vpop.f32.mrb[0].mxu0
    %v3801 = vpop.f32.mrb[0].mxu0
    %v3802 = vadd.f32 %v3193, %v3801
    %v3803 = vpop.f32.mrb[0].mxu0
    %3804 = vmatprep.mubr.bf16.mxu0 %v2462
    %3805 = vmatmul.mubr.bf16.gmra.mrb[0].mxu0 %v2461
    %v3806 = vpop.f32.mrb[0].mxu0
    %v3807 = vadd.f32 %v3198, %v3806
    %v3808 = vpop.f32.mrb[0].mxu0
    %v3809 = vpop.f32.mrb[0].mxu0
    %v3810 = vadd.f32 %v3201, %v3809
    %v3811 = vpop.f32.mrb[0].mxu0
    %3812 = vmatprep.mubr.bf16.mxu0 %v2466
    %3813 = vmatmul.mubr.bf16.gmra.mrb[0].mxu0 %v2465
    %v3814 = vpop.f32.mrb[0].mxu0
    %v3815 = vadd.f32 %v3206, %v3814
    %v3816 = vpop.f32.mrb[0].mxu0
    %v3817 = vpop.f32.mrb[0].mxu0
    %v3818 = vadd.f32 %v3209, %v3817
    %v3819 = vpop.f32.mrb[0].mxu0
    %3820 = vmatprep.mubr.bf16.mxu0 %v2470
    %3821 = vmatmul.mubr.bf16.gmra.mrb[0].mxu0 %v2469
    %v3822 = vpop.f32.mrb[0].mxu0
    %v3823 = vadd.f32 %v3214, %v3822
    %v3824 = vpop.f32.mrb[0].mxu0
    %v3825 = vpop.f32.mrb[0].mxu0
    %v3826 = vadd.f32 %v3217, %v3825
    %v3827 = vpop.f32.mrb[0].mxu0
    %3828 = vmatprep.mubr.bf16.mxu0 %v2474
    %3829 = vmatmul.mubr.bf16.gmra.mrb[0].mxu0 %v2473
    %v3830 = vpop.f32.mrb[0].mxu0
    %v3831 = vadd.f32 %v3222, %v3830
    %v3832 = vpop.f32.mrb[0].mxu0
    %v3833 = vpop.f32.mrb[0].mxu0
    %v3834 = vadd.f32 %v3225, %v3833
    %v3835 = vpop.f32.mrb[0].mxu0
    %3836 = vmatprep.mubr.bf16.mxu0 %v2478
    %3837 = vmatmul.mubr.bf16.gmra.mrb[0].mxu0 %v2477
    %v3838 = vpop.f32.mrb[0].mxu0
    %v3839 = vadd.f32 %v3230, %v3838
    %v3840 = vpop.f32.mrb[0].mxu0
    %v3841 = vpop.f32.mrb[0].mxu0
    %v3842 = vadd.f32 %v3233, %v3841
    %v3843 = vpop.f32.mrb[0].mxu0
    %3844 = vmatprep.mubr.bf16.mxu0 %v2482
    %3845 = vmatmul.mubr.bf16.gmra.mrb[0].mxu0 %v2481
    %v3846 = vpop.f32.mrb[0].mxu0
    %v3847 = vadd.f32 %v3238, %v3846
    %v3848 = vpop.f32.mrb[0].mxu0
    %v3849 = vpop.f32.mrb[0].mxu0
    %v3850 = vadd.f32 %v3241, %v3849
    %v3851 = vpop.f32.mrb[0].mxu0
    %3852 = vmatprep.mubr.bf16.mxu0 %v2486
    %3853 = vmatmul.mubr.bf16.gmra.mrb[0].mxu0 %v2485
    %v3854 = vpop.f32.mrb[0].mxu0
    %v3855 = vadd.f32 %v3246, %v3854
    %v3856 = vpop.f32.mrb[0].mxu0
    %v3857 = vpop.f32.mrb[0].mxu0
    %v3858 = vadd.f32 %v3249, %v3857
    %v3859 = vpop.f32.mrb[0].mxu0
    %3860 = vmatprep.mubr.bf16.mxu0 %v2490
    %3861 = vmatmul.mubr.bf16.gmra.mrb[0].mxu0 %v2489
    %v3862 = vpop.f32.mrb[0].mxu0
    %v3863 = vadd.f32 %v3254, %v3862
    %v3864 = vpop.f32.mrb[0].mxu0
    %v3865 = vpop.f32.mrb[0].mxu0
    %v3866 = vadd.f32 %v3257, %v3865
    %v3867 = vpop.f32.mrb[0].mxu0
    %3868 = vmatprep.mubr.bf16.mxu0 %v2494
    %3869 = vmatmul.mubr.bf16.gmra.mrb[0].mxu0 %v2493
    %v3870 = vpop.f32.mrb[0].mxu0
    %v3871 = vadd.f32 %v3262, %v3870
    %v3872 = vpop.f32.mrb[0].mxu0
    %v3873 = vpop.f32.mrb[0].mxu0
    %v3874 = vadd.f32 %v3265, %v3873
    %v3875 = vpop.f32.mrb[0].mxu0
    %3876 = vmatprep.mubr.bf16.mxu0 %v2498
    %3877 = vmatmul.mubr.bf16.gmra.mrb[0].mxu0 %v2497
    %v3878 = vpop.f32.mrb[0].mxu0
    %v3879 = vadd.f32 %v3270, %v3878
    %v3880 = vpop.f32.mrb[0].mxu0
    %v3881 = vpop.f32.mrb[0].mxu0
    %v3882 = vadd.f32 %v3273, %v3881
    %v3883 = vpop.f32.mrb[0].mxu0
    %3884 = vmatprep.mubr.bf16.mxu0 %v2502
    %3885 = vmatmul.mubr.bf16.gmra.mrb[0].mxu0 %v2501
    %v3886 = vpop.f32.mrb[0].mxu0
    %v3887 = vadd.f32 %v3278, %v3886
    %v3888 = vpop.f32.mrb[0].mxu0
    %v3889 = vpop.f32.mrb[0].mxu0
    %v3890 = vadd.f32 %v3281, %v3889
    %v3891 = vpop.f32.mrb[0].mxu0
    %3892 = vmatprep.mubr.bf16.mxu0 %v2506
    %3893 = vmatmul.mubr.bf16.gmra.mrb[0].mxu0 %v2505
    %v3894 = vpop.f32.mrb[0].mxu0
    %v3895 = vadd.f32 %v3286, %v3894
    %v3896 = vpop.f32.mrb[0].mxu0
    %v3897 = vpop.f32.mrb[0].mxu0
    %v3898 = vadd.f32 %v3289, %v3897
    %v3899 = vpop.f32.mrb[0].mxu0
    %3900 = vmatprep.mubr.bf16.mxu0 %v2510
    %3901 = vmatmul.mubr.bf16.gmra.mrb[0].mxu0 %v2509
    %v3902 = vpop.f32.mrb[0].mxu0
    %v3903 = vadd.f32 %v3294, %v3902
    %v3904 = vpop.f32.mrb[0].mxu0
    %v3905 = vpop.f32.mrb[0].mxu0
    %v3906 = vadd.f32 %v3297, %v3905
    %v3907 = vpop.f32.mrb[0].mxu0
    %3908 = vmatprep.mubr.bf16.mxu0 %v2514
    %3909 = vmatmul.mubr.bf16.gmra.mrb[0].mxu0 %v2513
    %v3910 = vpop.f32.mrb[0].mxu0
    %v3911 = vadd.f32 %v3302, %v3910
    %v3912 = vpop.f32.mrb[0].mxu0
    %v3913 = vpop.f32.mrb[0].mxu0
    %v3914 = vadd.f32 %v3305, %v3913
    %v3915 = vpop.f32.mrb[0].mxu0
    %3916 = vmatprep.mubr.bf16.mxu0 %v2518
    %3917 = vmatmul.mubr.bf16.gmra.mrb[0].mxu0 %v2517
    %v3918 = vpop.f32.mrb[0].mxu0
    %v3919 = vadd.f32 %v3310, %v3918
    %v3920 = vpop.f32.mrb[0].mxu0
    %v3921 = vpop.f32.mrb[0].mxu0
    %v3922 = vadd.f32 %v3313, %v3921
    %v3923 = vpop.f32.mrb[0].mxu0
    %3924 = vmatprep.mubr.bf16.mxu0 %v2522
    %3925 = vmatmul.mubr.bf16.gmra.mrb[0].mxu0 %v2521
    %v3926 = vpop.f32.mrb[0].mxu0
    %v3927 = vadd.f32 %v3318, %v3926
    %v3928 = vpop.f32.mrb[0].mxu0
    %v3929 = vpop.f32.mrb[0].mxu0
    %v3930 = vadd.f32 %v3321, %v3929
    %v3931 = vpop.f32.mrb[0].mxu0
    %3932 = vmatprep.mubr.bf16.mxu0 %v2526
    %3933 = vmatmul.mubr.bf16.gmra.mrb[0].mxu0 %v2525
    %v3934 = vpop.f32.mrb[0].mxu0
    %v3935 = vadd.f32 %v3326, %v3934
    %v3936 = vpop.f32.mrb[0].mxu0
    %v3937 = vpop.f32.mrb[0].mxu0
    %v3938 = vadd.f32 %v3329, %v3937
    %v3939 = vpop.f32.mrb[0].mxu0
    %3940 = vmatprep.mubr.bf16.mxu0 %v2530
    %3941 = vmatmul.mubr.bf16.gmra.mrb[0].mxu0 %v2529
    %v3942 = vpop.f32.mrb[0].mxu0
    %v3943 = vadd.f32 %v3334, %v3942
    %v3944 = vpop.f32.mrb[0].mxu0
    %v3945 = vpop.f32.mrb[0].mxu0
    %v3946 = vadd.f32 %v3337, %v3945
    %v3947 = vpop.f32.mrb[0].mxu0
    %3948 = vmatprep.mubr.bf16.mxu0 %v2534
    %3949 = vmatmul.mubr.bf16.gmra.mrb[0].mxu0 %v2533
    %v3950 = vpop.f32.mrb[0].mxu0
    %v3951 = vadd.f32 %v3342, %v3950
    %v3952 = vpop.f32.mrb[0].mxu0
    %v3953 = vpop.f32.mrb[0].mxu0
    %v3954 = vadd.f32 %v3345, %v3953
    %v3955 = vpop.f32.mrb[0].mxu0
    %3956 = vmatprep.mubr.bf16.mxu0 %v2538
    %3957 = vmatmul.mubr.bf16.gmra.mrb[0].mxu0 %v2537
    %v3958 = vpop.f32.mrb[0].mxu0
    %v3959 = vadd.f32 %v3350, %v3958
    %v3960 = vpop.f32.mrb[0].mxu0
    %v3961 = vpop.f32.mrb[0].mxu0
    %v3962 = vadd.f32 %v3353, %v3961
    %v3963 = vpop.f32.mrb[0].mxu0
    %3964 = vmatprep.mubr.bf16.mxu0 %v2542
    %3965 = vmatmul.mubr.bf16.gmra.mrb[0].mxu0 %v2541
    %v3966 = vpop.f32.mrb[0].mxu0
    %v3967 = vadd.f32 %v3358, %v3966
    %v3968 = vpop.f32.mrb[0].mxu0
    %v3969 = vpop.f32.mrb[0].mxu0
    %v3970 = vadd.f32 %v3361, %v3969
    %v3971 = vpop.f32.mrb[0].mxu0
    %3972 = vmatprep.mubr.bf16.mxu0 %v2546
    %3973 = vmatmul.mubr.bf16.gmra.mrb[0].mxu0 %v2545
    %v3974 = vpop.f32.mrb[0].mxu0
    %v3975 = vadd.f32 %v3366, %v3974
    %v3976 = vpop.f32.mrb[0].mxu0
    %v3977 = vpop.f32.mrb[0].mxu0
    %v3978 = vadd.f32 %v3369, %v3977
    %v3979 = vpop.f32.mrb[0].mxu0
    %3980 = vmatprep.mubr.bf16.mxu0 %v2550
    %3981 = vmatmul.mubr.bf16.gmra.mrb[0].mxu0 %v2549
    %v3982 = vpop.f32.mrb[0].mxu0
    %v3983 = vadd.f32 %v3374, %v3982
    %v3984 = vpop.f32.mrb[0].mxu0
    %v3985 = vpop.f32.mrb[0].mxu0
    %v3986 = vadd.f32 %v3377, %v3985
    %v3987 = vpop.f32.mrb[0].mxu0
    %3988 = vmatprep.mubr.bf16.mxu0 %v2554
    %3989 = vmatmul.mubr.bf16.gmra.mrb[0].mxu0 %v2553
    %v3990 = vpop.f32.mrb[0].mxu0
    %v3991 = vadd.f32 %v3382, %v3990
    %v3992 = vpop.f32.mrb[0].mxu0
    %v3993 = vpop.f32.mrb[0].mxu0
    %v3994 = vadd.f32 %v3385, %v3993
    %v3995 = vpop.f32.mrb[0].mxu0
    %3996 = vmatprep.mubr.bf16.mxu0 %v2558
    %3997 = vmatmul.mubr.bf16.gmra.mrb[0].mxu0 %v2557
    %v3998 = vpop.f32.mrb[0].mxu0
    %v3999 = vadd.f32 %v3390, %v3998
    %v4000 = vpop.f32.mrb[0].mxu0
    %v4001 = vpop.f32.mrb[0].mxu0
    %v4002 = vadd.f32 %v3393, %v4001
    %v4003 = vpop.f32.mrb[0].mxu0
    %4004 = vmatprep.mubr.bf16.mxu0 %v2562
    %4005 = vmatmul.mubr.bf16.gmra.mrb[0].mxu0 %v2561
    %v4006 = vpop.f32.mrb[0].mxu0
    %v4007 = vadd.f32 %v3398, %v4006
    %v4008 = vpop.f32.mrb[0].mxu0
    %v4009 = vpop.f32.mrb[0].mxu0
    %v4010 = vadd.f32 %v3401, %v4009
    %v4011 = vpop.f32.mrb[0].mxu0
    %4012 = vmatprep.mubr.bf16.mxu0 %v2566
    %4013 = vmatmul.mubr.bf16.gmra.mrb[0].mxu0 %v2565
    %v4014 = vpop.f32.mrb[0].mxu0
    %v4015 = vadd.f32 %v3406, %v4014
    %v4016 = vpop.f32.mrb[0].mxu0
    %v4017 = vpop.f32.mrb[0].mxu0
    %v4018 = vadd.f32 %v3409, %v4017
    %v4019 = vpop.f32.mrb[0].mxu0
    %4020 = vmatprep.mubr.bf16.mxu0 %v2570
    %4021 = vmatmul.mubr.bf16.gmra.mrb[0].mxu0 %v2569
    %v4022 = vpop.f32.mrb[0].mxu0
    %v4023 = vadd.f32 %v3414, %v4022
    %v4024 = vpop.f32.mrb[0].mxu0
    %v4025 = vpop.f32.mrb[0].mxu0
    %v4026 = vadd.f32 %v3417, %v4025
    %v4027 = vpop.f32.mrb[0].mxu0
    %4028 = vmatprep.mubr.bf16.mxu0 %v2574
    %4029 = vmatmul.mubr.bf16.gmra.mrb[0].mxu0 %v2573
    %v4030 = vpop.f32.mrb[0].mxu0
    %v4031 = vadd.f32 %v3422, %v4030
    %v4032 = vpop.f32.mrb[0].mxu0
    %v4033 = vpop.f32.mrb[0].mxu0
    %v4034 = vadd.f32 %v3425, %v4033
    %v4035 = vpop.f32.mrb[0].mxu0
    %4036 = vmatprep.mubr.bf16.mxu0 %v2578
    %4037 = vmatmul.mubr.bf16.gmra.mrb[0].mxu0 %v2577
    %v4038 = vpop.f32.mrb[0].mxu0
    %v4039 = vadd.f32 %v3430, %v4038
    %v4040 = vpop.f32.mrb[0].mxu0
    %v4041 = vpop.f32.mrb[0].mxu0
    %v4042 = vadd.f32 %v3433, %v4041
    %v4043 = vpop.f32.mrb[0].mxu0
    %4044 = vmatprep.mubr.bf16.mxu0 %v2582
    %4045 = vmatmul.mubr.bf16.gmra.mrb[0].mxu0 %v2581
    %v4046 = vpop.f32.mrb[0].mxu0
    %v4047 = vadd.f32 %v3438, %v4046
    %v4048 = vpop.f32.mrb[0].mxu0
    %v4049 = vpop.f32.mrb[0].mxu0
    %v4050 = vadd.f32 %v3441, %v4049
    %v4051 = vpop.f32.mrb[0].mxu0
    %4052 = vmatprep.mubr.bf16.mxu0 %v2586
    %4053 = vmatmul.mubr.bf16.gmra.mrb[0].mxu0 %v2585
    %v4054 = vpop.f32.mrb[0].mxu0
    %v4055 = vadd.f32 %v3446, %v4054
    %v4056 = vpop.f32.mrb[0].mxu0
    %v4057 = vpop.f32.mrb[0].mxu0
    %v4058 = vadd.f32 %v3449, %v4057
    %v4059 = vpop.f32.mrb[0].mxu0
    %4060 = vmatprep.mubr.bf16.mxu0 %v2590
    %4061 = vmatmul.mubr.bf16.gmra.mrb[0].mxu0 %v2589
    %v4062 = vpop.f32.mrb[0].mxu0
    %v4063 = vadd.f32 %v3454, %v4062
    %v4064 = vpop.f32.mrb[0].mxu0
    %v4065 = vpop.f32.mrb[0].mxu0
    %v4066 = vadd.f32 %v3457, %v4065
    %v4067 = vpop.f32.mrb[0].mxu0
    %4068 = vmatprep.mubr.bf16.mxu0 %v2594
    %4069 = vmatmul.mubr.bf16.gmra.mrb[0].mxu0 %v2593
    %v4070 = vpop.f32.mrb[0].mxu0
    %v4071 = vadd.f32 %v3462, %v4070
    %v4072 = vpop.f32.mrb[0].mxu0
    %v4073 = vpop.f32.mrb[0].mxu0
    %v4074 = vadd.f32 %v3465, %v4073
    %v4075 = vpop.f32.mrb[0].mxu0
    %4076 = vmatprep.mubr.bf16.mxu0 %v2598
    %4077 = vmatmul.mubr.bf16.gmra.mrb[0].mxu0 %v2597
    %v4078 = vpop.f32.mrb[0].mxu0
    %v4079 = vadd.f32 %v3470, %v4078
    %v4080 = vpop.f32.mrb[0].mxu0
    %v4081 = vpop.f32.mrb[0].mxu0
    %v4082 = vadd.f32 %v3473, %v4081
    %v4083 = vpop.f32.mrb[0].mxu0
    %4084 = vmatprep.mubr.bf16.mxu0 %v2602
    %4085 = vmatmul.mubr.bf16.gmra.mrb[0].mxu0 %v2601
    %v4086 = vpop.f32.mrb[0].mxu0
    %v4087 = vadd.f32 %v3478, %v4086
    %v4088 = vpop.f32.mrb[0].mxu0
    %v4089 = vpop.f32.mrb[0].mxu0
    %v4090 = vadd.f32 %v3481, %v4089
    %v4091 = vpop.f32.mrb[0].mxu0
    %4092 = vmatprep.mubr.bf16.mxu0 %v2606
    %4093 = vmatmul.mubr.bf16.gmra.mrb[0].mxu0 %v2605
    %v4094 = vpop.f32.mrb[0].mxu0
    %v4095 = vadd.f32 %v3486, %v4094
    %v4096 = vpop.f32.mrb[0].mxu0
    %v4097 = vpop.f32.mrb[0].mxu0
    %v4098 = vadd.f32 %v3489, %v4097
    %v4099 = vpop.f32.mrb[0].mxu0
    %4100 = vmatprep.mubr.bf16.mxu0 %v2610
    %4101 = vmatmul.mubr.bf16.gmra.mrb[0].mxu0 %v2609
    %v4102 = vpop.f32.mrb[0].mxu0
    %v4103 = vadd.f32 %v3494, %v4102
    %v4104 = vpop.f32.mrb[0].mxu0
    %v4105 = vpop.f32.mrb[0].mxu0
    %v4106 = vadd.f32 %v3497, %v4105
    %v4107 = vpop.f32.mrb[0].mxu0
    %4108 = vmatprep.mubr.bf16.mxu0 %v2614
    %4109 = vmatmul.mubr.bf16.gmra.mrb[0].mxu0 %v2613
    %v4110 = vpop.f32.mrb[0].mxu0
    %v4111 = vadd.f32 %v3502, %v4110
    %v4112 = vpop.f32.mrb[0].mxu0
    %v4113 = vpop.f32.mrb[0].mxu0
    %v4114 = vadd.f32 %v3505, %v4113
    %v4115 = vpop.f32.mrb[0].mxu0
    %4116 = vmatprep.mubr.bf16.mxu0 %v2618
    %4117 = vmatmul.mubr.bf16.gmra.mrb[0].mxu0 %v2617
    %v4118 = vpop.f32.mrb[0].mxu0
    %v4119 = vadd.f32 %v3510, %v4118
    %v4120 = vpop.f32.mrb[0].mxu0
    %v4121 = vpop.f32.mrb[0].mxu0
    %v4122 = vadd.f32 %v3513, %v4121
    %v4123 = vpop.f32.mrb[0].mxu0
    %4124 = vdwg.mxu0
    %v4125 = vpack.c.bf16 %v3554, %v3551
    %v4126 = vpack.c.bf16 %v3562, %v3559
    %v4127 = vpack.c.bf16 %v3570, %v3567
    %v4128 = vpack.c.bf16 %v3578, %v3575
    %v4129 = vpack.c.bf16 %v3586, %v3583
    %v4130 = vpack.c.bf16 %v3594, %v3591
    %v4131 = vpack.c.bf16 %v3602, %v3599
    %v4132 = vpack.c.bf16 %v3610, %v3607
    %v4133 = vpack.c.bf16 %v3618, %v3615
    %v4134 = vpack.c.bf16 %v3626, %v3623
    %v4135 = vpack.c.bf16 %v3634, %v3631
    %v4136 = vpack.c.bf16 %v3642, %v3639
    %v4137 = vpack.c.bf16 %v3650, %v3647
    %v4138 = vpack.c.bf16 %v3658, %v3655
    %v4139 = vpack.c.bf16 %v3666, %v3663
    %v4140 = vpack.c.bf16 %v3674, %v3671
    %v4141 = vpack.c.bf16 %v3682, %v3679
    %v4142 = vpack.c.bf16 %v3690, %v3687
    %v4143 = vpack.c.bf16 %v3698, %v3695
    %v4144 = vpack.c.bf16 %v3706, %v3703
    %v4145 = vpack.c.bf16 %v3714, %v3711
    %v4146 = vpack.c.bf16 %v3722, %v3719
    %v4147 = vpack.c.bf16 %v3730, %v3727
    %v4148 = vpack.c.bf16 %v3738, %v3735
    %v4149 = vpack.c.bf16 %v3746, %v3743
    %v4150 = vpack.c.bf16 %v3754, %v3751
    %v4151 = vpack.c.bf16 %v3762, %v3759
    %v4152 = vpack.c.bf16 %v3770, %v3767
    %v4153 = vpack.c.bf16 %v3778, %v3775
    %v4154 = vpack.c.bf16 %v3786, %v3783
    %v4155 = vpack.c.bf16 %v3794, %v3791
    %v4156 = vpack.c.bf16 %v3802, %v3799
    %v4157 = vpack.c.bf16 %v3810, %v3807
    %v4158 = vpack.c.bf16 %v3818, %v3815
    %v4159 = vpack.c.bf16 %v3826, %v3823
    %v4160 = vpack.c.bf16 %v3834, %v3831
    %v4161 = vpack.c.bf16 %v3842, %v3839
    %v4162 = vpack.c.bf16 %v3850, %v3847
    %v4163 = vpack.c.bf16 %v3858, %v3855
    %v4164 = vpack.c.bf16 %v3866, %v3863
    %v4165 = vpack.c.bf16 %v3874, %v3871
    %v4166 = vpack.c.bf16 %v3882, %v3879
    %v4167 = vpack.c.bf16 %v3890, %v3887
    %v4168 = vpack.c.bf16 %v3898, %v3895
    %v4169 = vpack.c.bf16 %v3906, %v3903
    %v4170 = vpack.c.bf16 %v3914, %v3911
    %v4171 = vpack.c.bf16 %v3922, %v3919
    %v4172 = vpack.c.bf16 %v3930, %v3927
    %v4173 = vpack.c.bf16 %v3938, %v3935
    %v4174 = vpack.c.bf16 %v3946, %v3943
    %v4175 = vpack.c.bf16 %v3954, %v3951
    %v4176 = vpack.c.bf16 %v3962, %v3959
    %v4177 = vpack.c.bf16 %v3970, %v3967
    %v4178 = vpack.c.bf16 %v3978, %v3975
    %v4179 = vpack.c.bf16 %v3986, %v3983
    %v4180 = vpack.c.bf16 %v3994, %v3991
    %v4181 = vpack.c.bf16 %v4002, %v3999
    %v4182 = vpack.c.bf16 %v4010, %v4007
    %v4183 = vpack.c.bf16 %v4018, %v4015
    %v4184 = vpack.c.bf16 %v4026, %v4023
    %v4185 = vpack.c.bf16 %v4034, %v4031
    %v4186 = vpack.c.bf16 %v4042, %v4039
    %v4187 = vpack.c.bf16 %v4050, %v4047
    %v4188 = vpack.c.bf16 %v4058, %v4055
    %v4189 = vpack.c.bf16 %v4066, %v4063
    %v4190 = vpack.c.bf16 %v4074, %v4071
    %v4191 = vpack.c.bf16 %v4082, %v4079
    %v4192 = vpack.c.bf16 %v4090, %v4087
    %v4193 = vpack.c.bf16 %v4098, %v4095
    %v4194 = vpack.c.bf16 %v4106, %v4103
    %v4195 = vpack.c.bf16 %v4114, %v4111
    %v4196 = vpack.c.bf16 %v4122, %v4119
    %v4197 = vld [vmem:[#allocation7] sm:$0xf]
    %v4198 = vld [vmem:[#allocation7 + $0x4] sm:$0xf]
    %v4199 = vld [vmem:[#allocation7 + $0x8] sm:$0xf]
    %v4200 = vld [vmem:[#allocation7 + $0xc] sm:$0xf]
    %v4201 = vld [vmem:[#allocation7 + $0x10] sm:$0xf]
    %v4202 = vld [vmem:[#allocation7 + $0x14] sm:$0xf]
    %v4203 = vld [vmem:[#allocation7 + $0x18] sm:$0xf]
    %v4204 = vld [vmem:[#allocation7 + $0x1c] sm:$0xf]
    %v4205 = vld [vmem:[#allocation7 + $0x20] sm:$0xf]
    %v4206 = vld [vmem:[#allocation7 + $0x24] sm:$0xf]
    %v4207 = vld [vmem:[#allocation7 + $0x28] sm:$0xf]
    %v4208 = vld [vmem:[#allocation7 + $0x2c] sm:$0xf]
    %v4209 = vld [vmem:[#allocation7 + $0x30] sm:$0xf]
    %v4210 = vld [vmem:[#allocation7 + $0x34] sm:$0xf]
    %v4211 = vld [vmem:[#allocation7 + $0x38] sm:$0xf]
    %v4212 = vld [vmem:[#allocation7 + $0x3c] sm:$0xf]
    %s4213 = scalar_lea.vmem [#allocation7], 64
    %v4214 = vld [vmem:[%s4213] sm:$0xf]
    %v4215 = vld [vmem:[%s4213 + $0x4] sm:$0xf]
    %v4216 = vld [vmem:[%s4213 + $0x8] sm:$0xf]
    %v4217 = vld [vmem:[%s4213 + $0xc] sm:$0xf]
    %v4218 = vld [vmem:[%s4213 + $0x10] sm:$0xf]
    %v4219 = vld [vmem:[%s4213 + $0x14] sm:$0xf]
    %v4220 = vld [vmem:[%s4213 + $0x18] sm:$0xf]
    %v4221 = vld [vmem:[%s4213 + $0x1c] sm:$0xf]
    %v4222 = vld [vmem:[%s4213 + $0x20] sm:$0xf]
    %v4223 = vld [vmem:[%s4213 + $0x24] sm:$0xf]
    %v4224 = vld [vmem:[%s4213 + $0x28] sm:$0xf]
    %v4225 = vld [vmem:[%s4213 + $0x2c] sm:$0xf]
    %v4226 = vld [vmem:[%s4213 + $0x30] sm:$0xf]
    %v4227 = vld [vmem:[%s4213 + $0x34] sm:$0xf]
    %v4228 = vld [vmem:[%s4213 + $0x38] sm:$0xf]
    %v4229 = vld [vmem:[%s4213 + $0x3c] sm:$0xf]
    %v4246 = vunpack.c.l.b16 %v4214
    %v4247 = vunpack.c.l.b16 %v4215
    %v4248 = vunpack.c.l.b16 %v4216
    %v4249 = vunpack.c.l.b16 %v4217
    %v4250 = vunpack.c.l.b16 %v4218
    %v4251 = vunpack.c.l.b16 %v4219
    %v4252 = vunpack.c.l.b16 %v4220
    %v4253 = vunpack.c.l.b16 %v4221
    %v4254 = vunpack.c.l.b16 %v4222
    %v4255 = vunpack.c.l.b16 %v4223
    %v4256 = vunpack.c.l.b16 %v4224
    %v4257 = vunpack.c.l.b16 %v4225
    %v4258 = vunpack.c.l.b16 %v4226
    %v4259 = vunpack.c.l.b16 %v4227
    %v4260 = vunpack.c.l.b16 %v4228
    %v4261 = vunpack.c.l.b16 %v4229
    %v4262 = vpack.c.b16 %v4247, %v4246
    %v4263 = vpack.c.b16 %v4249, %v4248
    %v4264 = vpack.c.b16 %v4251, %v4250
    %v4265 = vpack.c.b16 %v4253, %v4252
    %v4266 = vpack.c.b16 %v4255, %v4254
    %v4267 = vpack.c.b16 %v4257, %v4256
    %v4268 = vpack.c.b16 %v4259, %v4258
    %v4269 = vpack.c.b16 %v4261, %v4260
    %4278 = vmatprep.subr.bf16.mxu0 0
    %4279 = vmatpush1.bf16.msra.mxu0 %v4262
    %4280 = vmatprep.subr.bf16.mxu0 0
    %4281 = vmatpush1.bf16.msra.mxu0 %v4263
    %4282 = vmatprep.subr.bf16.mxu0 0
    %4283 = vmatpush1.bf16.msra.mxu0 %v4264
    %4284 = vmatprep.subr.bf16.mxu0 0
    %4285 = vmatpush1.bf16.msra.mxu0 %v4265
    %4286 = vmatprep.subr.bf16.mxu0 0
    %4287 = vmatpush1.bf16.msra.mxu0 %v4266
    %4288 = vmatprep.subr.bf16.mxu0 0
    %4289 = vmatpush1.bf16.msra.mxu0 %v4267
    %4290 = vmatprep.subr.bf16.mxu0 0
    %4291 = vmatpush1.bf16.msra.mxu0 %v4268
    %4292 = vmatprep.subr.bf16.mxu0 0
    %4293 = vmatpush1.bf16.msra.mxu0 %v4269
    %4294 = vmatprep.subr.bf16.mxu0 0
    %4295 = vmatpush1.bf16.msra.mxu0 0
    %4296 = vmatprep.subr.bf16.mxu0 0
    %4297 = vmatpush1.bf16.msra.mxu0 0
    %4298 = vmatprep.subr.bf16.mxu0 0
    %4299 = vmatpush1.bf16.msra.mxu0 0
    %4300 = vmatprep.subr.bf16.mxu0 0
    %4301 = vmatpush1.bf16.msra.mxu0 0
    %4302 = vmatprep.subr.bf16.mxu0 0
    %4303 = vmatpush1.bf16.msra.mxu0 0
    %4304 = vmatprep.subr.bf16.mxu0 0
    %4305 = vmatpush1.bf16.msra.mxu0 0
    %4306 = vmatprep.subr.bf16.mxu0 0
    %4307 = vmatpush1.bf16.msra.mxu0 0
    %4308 = vmatprep.subr.bf16.mxu0 0
    %4309 = vmatpush1.bf16.msra.mxu0 0
    %4310 = vmatprep.mubr.bf16.mxu0 0
    %4311 = vmatmul.mubr.bf16.gmra.mrb[0].mxu0 %v4133
    %v4312 = vpop.f32.mrb[0].mxu0
    %v4313 = vadd.f32 0.0, %v4312
    %v4314 = vpop.f32.mrb[0].mxu0
    %v4315 = vpop.f32.mrb[0].mxu0
    %v4316 = vadd.f32 0.0, %v4315
    %v4317 = vpop.f32.mrb[0].mxu0
    %4318 = vmatprep.mubr.bf16.mxu0 0
    %4319 = vmatmul.mubr.bf16.gmra.mrb[0].mxu0 %v4134
    %v4320 = vpop.f32.mrb[0].mxu0
    %v4321 = vadd.f32 0.0, %v4320
    %v4322 = vpop.f32.mrb[0].mxu0
    %v4323 = vpop.f32.mrb[0].mxu0
    %v4324 = vadd.f32 0.0, %v4323
    %v4325 = vpop.f32.mrb[0].mxu0
    %4326 = vmatprep.mubr.bf16.mxu0 0
    %4327 = vmatmul.mubr.bf16.gmra.mrb[0].mxu0 %v4135
    %v4328 = vpop.f32.mrb[0].mxu0
    %v4329 = vadd.f32 0.0, %v4328
    %v4330 = vpop.f32.mrb[0].mxu0
    %v4331 = vpop.f32.mrb[0].mxu0
    %v4332 = vadd.f32 0.0, %v4331
    %v4333 = vpop.f32.mrb[0].mxu0
    %4334 = vmatprep.mubr.bf16.mxu0 0
    %4335 = vmatmul.mubr.bf16.gmra.mrb[0].mxu0 %v4136
    %v4336 = vpop.f32.mrb[0].mxu0
    %v4337 = vadd.f32 0.0, %v4336
    %v4338 = vpop.f32.mrb[0].mxu0
    %v4339 = vpop.f32.mrb[0].mxu0
    %v4340 = vadd.f32 0.0, %v4339
    %v4341 = vpop.f32.mrb[0].mxu0
    %4342 = vmatprep.mubr.bf16.mxu0 0
    %4343 = vmatmul.mubr.bf16.gmra.mrb[0].mxu0 %v4137
    %v4344 = vpop.f32.mrb[0].mxu0
    %v4345 = vadd.f32 0.0, %v4344
    %v4346 = vpop.f32.mrb[0].mxu0
    %v4347 = vpop.f32.mrb[0].mxu0
    %v4348 = vadd.f32 0.0, %v4347
    %v4349 = vpop.f32.mrb[0].mxu0
    %4350 = vmatprep.mubr.bf16.mxu0 0
    %4351 = vmatmul.mubr.bf16.gmra.mrb[0].mxu0 %v4138
    %v4352 = vpop.f32.mrb[0].mxu0
    %v4353 = vadd.f32 0.0, %v4352
    %v4354 = vpop.f32.mrb[0].mxu0
    %v4355 = vpop.f32.mrb[0].mxu0
    %v4356 = vadd.f32 0.0, %v4355
    %v4357 = vpop.f32.mrb[0].mxu0
    %4358 = vmatprep.mubr.bf16.mxu0 0
    %4359 = vmatmul.mubr.bf16.gmra.mrb[0].mxu0 %v4139
    %v4360 = vpop.f32.mrb[0].mxu0
    %v4361 = vadd.f32 0.0, %v4360
    %v4362 = vpop.f32.mrb[0].mxu0
    %v4363 = vpop.f32.mrb[0].mxu0
    %v4364 = vadd.f32 0.0, %v4363
    %v4365 = vpop.f32.mrb[0].mxu0
    %4366 = vmatprep.mubr.bf16.mxu0 0
    %4367 = vmatmul.mubr.bf16.gmra.mrb[0].mxu0 %v4140
    %v4368 = vpop.f32.mrb[0].mxu0
    %v4369 = vadd.f32 0.0, %v4368
    %v4370 = vpop.f32.mrb[0].mxu0
    %v4371 = vpop.f32.mrb[0].mxu0
    %v4372 = vadd.f32 0.0, %v4371
    %v4373 = vpop.f32.mrb[0].mxu0
    %4374 = vdwg.mxu0
    %v4391 = vunpack.c.l.b16 %v4197
    %v4392 = vunpack.c.l.b16 %v4198
    %v4393 = vunpack.c.l.b16 %v4199
    %v4394 = vunpack.c.l.b16 %v4200
    %v4395 = vunpack.c.l.b16 %v4201
    %v4396 = vunpack.c.l.b16 %v4202
    %v4397 = vunpack.c.l.b16 %v4203
    %v4398 = vunpack.c.l.b16 %v4204
    %v4399 = vunpack.c.l.b16 %v4205
    %v4400 = vunpack.c.l.b16 %v4206
    %v4401 = vunpack.c.l.b16 %v4207
    %v4402 = vunpack.c.l.b16 %v4208
    %v4403 = vunpack.c.l.b16 %v4209
    %v4404 = vunpack.c.l.b16 %v4210
    %v4405 = vunpack.c.l.b16 %v4211
    %v4406 = vunpack.c.l.b16 %v4212
    %v4407 = vpack.c.b16 %v4392, %v4391
    %v4408 = vpack.c.b16 %v4394, %v4393
    %v4409 = vpack.c.b16 %v4396, %v4395
    %v4410 = vpack.c.b16 %v4398, %v4397
    %v4411 = vpack.c.b16 %v4400, %v4399
    %v4412 = vpack.c.b16 %v4402, %v4401
    %v4413 = vpack.c.b16 %v4404, %v4403
    %v4414 = vpack.c.b16 %v4406, %v4405
    %4423 = vmatprep.subr.bf16.mxu0 0
    %4424 = vmatpush1.bf16.msra.mxu0 %v4407
    %4425 = vmatprep.subr.bf16.mxu0 0
    %4426 = vmatpush1.bf16.msra.mxu0 %v4408
    %4427 = vmatprep.subr.bf16.mxu0 0
    %4428 = vmatpush1.bf16.msra.mxu0 %v4409
    %4429 = vmatprep.subr.bf16.mxu0 0
    %4430 = vmatpush1.bf16.msra.mxu0 %v4410
    %4431 = vmatprep.subr.bf16.mxu0 0
    %4432 = vmatpush1.bf16.msra.mxu0 %v4411
    %4433 = vmatprep.subr.bf16.mxu0 0
    %4434 = vmatpush1.bf16.msra.mxu0 %v4412
    %4435 = vmatprep.subr.bf16.mxu0 0
    %4436 = vmatpush1.bf16.msra.mxu0 %v4413
    %4437 = vmatprep.subr.bf16.mxu0 0
    %4438 = vmatpush1.bf16.msra.mxu0 %v4414
    %4439 = vmatprep.subr.bf16.mxu0 0
    %4440 = vmatpush1.bf16.msra.mxu0 0
    %4441 = vmatprep.subr.bf16.mxu0 0
    %4442 = vmatpush1.bf16.msra.mxu0 0
    %4443 = vmatprep.subr.bf16.mxu0 0
    %4444 = vmatpush1.bf16.msra.mxu0 0
    %4445 = vmatprep.subr.bf16.mxu0 0
    %4446 = vmatpush1.bf16.msra.mxu0 0
    %4447 = vmatprep.subr.bf16.mxu0 0
    %4448 = vmatpush1.bf16.msra.mxu0 0
    %4449 = vmatprep.subr.bf16.mxu0 0
    %4450 = vmatpush1.bf16.msra.mxu0 0
    %4451 = vmatprep.subr.bf16.mxu0 0
    %4452 = vmatpush1.bf16.msra.mxu0 0
    %4453 = vmatprep.subr.bf16.mxu0 0
    %4454 = vmatpush1.bf16.msra.mxu0 0
    %4455 = vmatprep.mubr.bf16.mxu0 0
    %4456 = vmatmul.mubr.bf16.gmra.mrb[0].mxu0 %v4125
    %v4457 = vpop.f32.mrb[0].mxu0
    %v4458 = vadd.f32 %v4313, %v4457
    %v4459 = vpop.f32.mrb[0].mxu0
    %v4460 = vpop.f32.mrb[0].mxu0
    %v4461 = vadd.f32 %v4316, %v4460
    %v4462 = vpop.f32.mrb[0].mxu0
    %4463 = vmatprep.mubr.bf16.mxu0 0
    %4464 = vmatmul.mubr.bf16.gmra.mrb[0].mxu0 %v4126
    %v4465 = vpop.f32.mrb[0].mxu0
    %v4466 = vadd.f32 %v4321, %v4465
    %v4467 = vpop.f32.mrb[0].mxu0
    %v4468 = vpop.f32.mrb[0].mxu0
    %v4469 = vadd.f32 %v4324, %v4468
    %v4470 = vpop.f32.mrb[0].mxu0
    %4471 = vmatprep.mubr.bf16.mxu0 0
    %4472 = vmatmul.mubr.bf16.gmra.mrb[0].mxu0 %v4127
    %v4473 = vpop.f32.mrb[0].mxu0
    %v4474 = vadd.f32 %v4329, %v4473
    %v4475 = vpop.f32.mrb[0].mxu0
    %v4476 = vpop.f32.mrb[0].mxu0
    %v4477 = vadd.f32 %v4332, %v4476
    %v4478 = vpop.f32.mrb[0].mxu0
    %4479 = vmatprep.mubr.bf16.mxu0 0
    %4480 = vmatmul.mubr.bf16.gmra.mrb[0].mxu0 %v4128
    %v4481 = vpop.f32.mrb[0].mxu0
    %v4482 = vadd.f32 %v4337, %v4481
    %v4483 = vpop.f32.mrb[0].mxu0
    %v4484 = vpop.f32.mrb[0].mxu0
    %v4485 = vadd.f32 %v4340, %v4484
    %v4486 = vpop.f32.mrb[0].mxu0
    %4487 = vmatprep.mubr.bf16.mxu0 0
    %4488 = vmatmul.mubr.bf16.gmra.mrb[0].mxu0 %v4129
    %v4489 = vpop.f32.mrb[0].mxu0
    %v4490 = vadd.f32 %v4345, %v4489
    %v4491 = vpop.f32.mrb[0].mxu0
    %v4492 = vpop.f32.mrb[0].mxu0
    %v4493 = vadd.f32 %v4348, %v4492
    %v4494 = vpop.f32.mrb[0].mxu0
    %4495 = vmatprep.mubr.bf16.mxu0 0
    %4496 = vmatmul.mubr.bf16.gmra.mrb[0].mxu0 %v4130
    %v4497 = vpop.f32.mrb[0].mxu0
    %v4498 = vadd.f32 %v4353, %v4497
    %v4499 = vpop.f32.mrb[0].mxu0
    %v4500 = vpop.f32.mrb[0].mxu0
    %v4501 = vadd.f32 %v4356, %v4500
    %v4502 = vpop.f32.mrb[0].mxu0
    %4503 = vmatprep.mubr.bf16.mxu0 0
    %4504 = vmatmul.mubr.bf16.gmra.mrb[0].mxu0 %v4131
    %v4505 = vpop.f32.mrb[0].mxu0
    %v4506 = vadd.f32 %v4361, %v4505
    %v4507 = vpop.f32.mrb[0].mxu0
    %v4508 = vpop.f32.mrb[0].mxu0
    %v4509 = vadd.f32 %v4364, %v4508
    %v4510 = vpop.f32.mrb[0].mxu0
    %4511 = vmatprep.mubr.bf16.mxu0 0
    %4512 = vmatmul.mubr.bf16.gmra.mrb[0].mxu0 %v4132
    %v4513 = vpop.f32.mrb[0].mxu0
    %v4514 = vadd.f32 %v4369, %v4513
    %v4515 = vpop.f32.mrb[0].mxu0
    %v4516 = vpop.f32.mrb[0].mxu0
    %v4517 = vadd.f32 %v4372, %v4516
    %v4518 = vpop.f32.mrb[0].mxu0
    %4519 = vdwg.mxu0
    %s4520 = scalar_lea.vmem [#allocation7], 128
    %v4521 = vld [vmem:[%s4520] sm:$0xf]
    %v4522 = vld [vmem:[%s4520 + $0x4] sm:$0xf]
    %v4523 = vld [vmem:[%s4520 + $0x8] sm:$0xf]
    %v4524 = vld [vmem:[%s4520 + $0xc] sm:$0xf]
    %v4525 = vld [vmem:[%s4520 + $0x10] sm:$0xf]
    %v4526 = vld [vmem:[%s4520 + $0x14] sm:$0xf]
    %v4527 = vld [vmem:[%s4520 + $0x18] sm:$0xf]
    %v4528 = vld [vmem:[%s4520 + $0x1c] sm:$0xf]
    %v4529 = vld [vmem:[%s4520 + $0x20] sm:$0xf]
    %v4530 = vld [vmem:[%s4520 + $0x24] sm:$0xf]
    %v4531 = vld [vmem:[%s4520 + $0x28] sm:$0xf]
    %v4532 = vld [vmem:[%s4520 + $0x2c] sm:$0xf]
    %v4533 = vld [vmem:[%s4520 + $0x30] sm:$0xf]
    %v4534 = vld [vmem:[%s4520 + $0x34] sm:$0xf]
    %v4535 = vld [vmem:[%s4520 + $0x38] sm:$0xf]
    %v4536 = vld [vmem:[%s4520 + $0x3c] sm:$0xf]
    %v4553 = vunpack.c.l.b16 %v4521
    %v4554 = vunpack.c.l.b16 %v4522
    %v4555 = vunpack.c.l.b16 %v4523
    %v4556 = vunpack.c.l.b16 %v4524
    %v4557 = vunpack.c.l.b16 %v4525
    %v4558 = vunpack.c.l.b16 %v4526
    %v4559 = vunpack.c.l.b16 %v4527
    %v4560 = vunpack.c.l.b16 %v4528
    %v4561 = vunpack.c.l.b16 %v4529
    %v4562 = vunpack.c.l.b16 %v4530
    %v4563 = vunpack.c.l.b16 %v4531
    %v4564 = vunpack.c.l.b16 %v4532
    %v4565 = vunpack.c.l.b16 %v4533
    %v4566 = vunpack.c.l.b16 %v4534
    %v4567 = vunpack.c.l.b16 %v4535
    %v4568 = vunpack.c.l.b16 %v4536
    %v4569 = vpack.c.b16 %v4554, %v4553
    %v4570 = vpack.c.b16 %v4556, %v4555
    %v4571 = vpack.c.b16 %v4558, %v4557
    %v4572 = vpack.c.b16 %v4560, %v4559
    %v4573 = vpack.c.b16 %v4562, %v4561
    %v4574 = vpack.c.b16 %v4564, %v4563
    %v4575 = vpack.c.b16 %v4566, %v4565
    %v4576 = vpack.c.b16 %v4568, %v4567
    %4585 = vmatprep.subr.bf16.mxu0 0
    %4586 = vmatpush1.bf16.msra.mxu0 %v4569
    %4587 = vmatprep.subr.bf16.mxu0 0
    %4588 = vmatpush1.bf16.msra.mxu0 %v4570
    %4589 = vmatprep.subr.bf16.mxu0 0
    %4590 = vmatpush1.bf16.msra.mxu0 %v4571
    %4591 = vmatprep.subr.bf16.mxu0 0
    %4592 = vmatpush1.bf16.msra.mxu0 %v4572
    %4593 = vmatprep.subr.bf16.mxu0 0
    %4594 = vmatpush1.bf16.msra.mxu0 %v4573
    %4595 = vmatprep.subr.bf16.mxu0 0
    %4596 = vmatpush1.bf16.msra.mxu0 %v4574
    %4597 = vmatprep.subr.bf16.mxu0 0
    %4598 = vmatpush1.bf16.msra.mxu0 %v4575
    %4599 = vmatprep.subr.bf16.mxu0 0
    %4600 = vmatpush1.bf16.msra.mxu0 %v4576
    %4601 = vmatprep.subr.bf16.mxu0 0
    %4602 = vmatpush1.bf16.msra.mxu0 0
    %4603 = vmatprep.subr.bf16.mxu0 0
    %4604 = vmatpush1.bf16.msra.mxu0 0
    %4605 = vmatprep.subr.bf16.mxu0 0
    %4606 = vmatpush1.bf16.msra.mxu0 0
    %4607 = vmatprep.subr.bf16.mxu0 0
    %4608 = vmatpush1.bf16.msra.mxu0 0
    %4609 = vmatprep.subr.bf16.mxu0 0
    %4610 = vmatpush1.bf16.msra.mxu0 0
    %4611 = vmatprep.subr.bf16.mxu0 0
    %4612 = vmatpush1.bf16.msra.mxu0 0
    %4613 = vmatprep.subr.bf16.mxu0 0
    %4614 = vmatpush1.bf16.msra.mxu0 0
    %4615 = vmatprep.subr.bf16.mxu0 0
    %4616 = vmatpush1.bf16.msra.mxu0 0
    %4617 = vmatprep.mubr.bf16.mxu0 0
    %4618 = vmatmul.mubr.bf16.gmra.mrb[0].mxu0 %v4141
    %v4619 = vpop.f32.mrb[0].mxu0
    %v4620 = vadd.f32 0.0, %v4619
    %v4621 = vpop.f32.mrb[0].mxu0
    %v4622 = vpop.f32.mrb[0].mxu0
    %v4623 = vadd.f32 0.0, %v4622
    %v4624 = vpop.f32.mrb[0].mxu0
    %4625 = vmatprep.mubr.bf16.mxu0 0
    %4626 = vmatmul.mubr.bf16.gmra.mrb[0].mxu0 %v4142
    %v4627 = vpop.f32.mrb[0].mxu0
    %v4628 = vadd.f32 0.0, %v4627
    %v4629 = vpop.f32.mrb[0].mxu0
    %v4630 = vpop.f32.mrb[0].mxu0
    %v4631 = vadd.f32 0.0, %v4630
    %v4632 = vpop.f32.mrb[0].mxu0
    %4633 = vmatprep.mubr.bf16.mxu0 0
    %4634 = vmatmul.mubr.bf16.gmra.mrb[0].mxu0 %v4143
    %v4635 = vpop.f32.mrb[0].mxu0
    %v4636 = vadd.f32 0.0, %v4635
    %v4637 = vpop.f32.mrb[0].mxu0
    %v4638 = vpop.f32.mrb[0].mxu0
    %v4639 = vadd.f32 0.0, %v4638
    %v4640 = vpop.f32.mrb[0].mxu0
    %4641 = vmatprep.mubr.bf16.mxu0 0
    %4642 = vmatmul.mubr.bf16.gmra.mrb[0].mxu0 %v4144
    %v4643 = vpop.f32.mrb[0].mxu0
    %v4644 = vadd.f32 0.0, %v4643
    %v4645 = vpop.f32.mrb[0].mxu0
    %v4646 = vpop.f32.mrb[0].mxu0
    %v4647 = vadd.f32 0.0, %v4646
    %v4648 = vpop.f32.mrb[0].mxu0
    %4649 = vmatprep.mubr.bf16.mxu0 0
    %4650 = vmatmul.mubr.bf16.gmra.mrb[0].mxu0 %v4145
    %v4651 = vpop.f32.mrb[0].mxu0
    %v4652 = vadd.f32 0.0, %v4651
    %v4653 = vpop.f32.mrb[0].mxu0
    %v4654 = vpop.f32.mrb[0].mxu0
    %v4655 = vadd.f32 0.0, %v4654
    %v4656 = vpop.f32.mrb[0].mxu0
    %4657 = vmatprep.mubr.bf16.mxu0 0
    %4658 = vmatmul.mubr.bf16.gmra.mrb[0].mxu0 %v4146
    %v4659 = vpop.f32.mrb[0].mxu0
    %v4660 = vadd.f32 0.0, %v4659
    %v4661 = vpop.f32.mrb[0].mxu0
    %v4662 = vpop.f32.mrb[0].mxu0
    %v4663 = vadd.f32 0.0, %v4662
    %v4664 = vpop.f32.mrb[0].mxu0
    %4665 = vmatprep.mubr.bf16.mxu0 0
    %4666 = vmatmul.mubr.bf16.gmra.mrb[0].mxu0 %v4147
    %v4667 = vpop.f32.mrb[0].mxu0
    %v4668 = vadd.f32 0.0, %v4667
    %v4669 = vpop.f32.mrb[0].mxu0
    %v4670 = vpop.f32.mrb[0].mxu0
    %v4671 = vadd.f32 0.0, %v4670
    %v4672 = vpop.f32.mrb[0].mxu0
    %4673 = vmatprep.mubr.bf16.mxu0 0
    %4674 = vmatmul.mubr.bf16.gmra.mrb[0].mxu0 %v4148
    %v4675 = vpop.f32.mrb[0].mxu0
    %v4676 = vadd.f32 0.0, %v4675
    %v4677 = vpop.f32.mrb[0].mxu0
    %v4678 = vpop.f32.mrb[0].mxu0
    %v4679 = vadd.f32 0.0, %v4678
    %v4680 = vpop.f32.mrb[0].mxu0
    %4681 = vdwg.mxu0
    %v4682 = vadd.f32 %v4458, %v4620
    %v4683 = vadd.f32 %v4461, %v4623
    %v4684 = vadd.f32 %v4466, %v4628
    %v4685 = vadd.f32 %v4469, %v4631
    %v4686 = vadd.f32 %v4474, %v4636
    %v4687 = vadd.f32 %v4477, %v4639
    %v4688 = vadd.f32 %v4482, %v4644
    %v4689 = vadd.f32 %v4485, %v4647
    %v4690 = vadd.f32 %v4490, %v4652
    %v4691 = vadd.f32 %v4493, %v4655
    %v4692 = vadd.f32 %v4498, %v4660
    %v4693 = vadd.f32 %v4501, %v4663
    %v4694 = vadd.f32 %v4506, %v4668
    %v4695 = vadd.f32 %v4509, %v4671
    %v4696 = vadd.f32 %v4514, %v4676
    %v4697 = vadd.f32 %v4517, %v4679
    %s4698 = scalar_lea.vmem [#allocation7], 192
    %v4699 = vld [vmem:[%s4698] sm:$0xf]
    %v4700 = vld [vmem:[%s4698 + $0x4] sm:$0xf]
    %v4701 = vld [vmem:[%s4698 + $0x8] sm:$0xf]
    %v4702 = vld [vmem:[%s4698 + $0xc] sm:$0xf]
    %v4703 = vld [vmem:[%s4698 + $0x10] sm:$0xf]
    %v4704 = vld [vmem:[%s4698 + $0x14] sm:$0xf]
    %v4705 = vld [vmem:[%s4698 + $0x18] sm:$0xf]
    %v4706 = vld [vmem:[%s4698 + $0x1c] sm:$0xf]
    %v4707 = vld [vmem:[%s4698 + $0x20] sm:$0xf]
    %v4708 = vld [vmem:[%s4698 + $0x24] sm:$0xf]
    %v4709 = vld [vmem:[%s4698 + $0x28] sm:$0xf]
    %v4710 = vld [vmem:[%s4698 + $0x2c] sm:$0xf]
    %v4711 = vld [vmem:[%s4698 + $0x30] sm:$0xf]
    %v4712 = vld [vmem:[%s4698 + $0x34] sm:$0xf]
    %v4713 = vld [vmem:[%s4698 + $0x38] sm:$0xf]
    %v4714 = vld [vmem:[%s4698 + $0x3c] sm:$0xf]
    %v4731 = vunpack.c.l.b16 %v4699
    %v4732 = vunpack.c.l.b16 %v4700
    %v4733 = vunpack.c.l.b16 %v4701
    %v4734 = vunpack.c.l.b16 %v4702
    %v4735 = vunpack.c.l.b16 %v4703
    %v4736 = vunpack.c.l.b16 %v4704
    %v4737 = vunpack.c.l.b16 %v4705
    %v4738 = vunpack.c.l.b16 %v4706
    %v4739 = vunpack.c.l.b16 %v4707
    %v4740 = vunpack.c.l.b16 %v4708
    %v4741 = vunpack.c.l.b16 %v4709
    %v4742 = vunpack.c.l.b16 %v4710
    %v4743 = vunpack.c.l.b16 %v4711
    %v4744 = vunpack.c.l.b16 %v4712
    %v4745 = vunpack.c.l.b16 %v4713
    %v4746 = vunpack.c.l.b16 %v4714
    %v4747 = vpack.c.b16 %v4732, %v4731
    %v4748 = vpack.c.b16 %v4734, %v4733
    %v4749 = vpack.c.b16 %v4736, %v4735
    %v4750 = vpack.c.b16 %v4738, %v4737
    %v4751 = vpack.c.b16 %v4740, %v4739
    %v4752 = vpack.c.b16 %v4742, %v4741
    %v4753 = vpack.c.b16 %v4744, %v4743
    %v4754 = vpack.c.b16 %v4746, %v4745
    %4763 = vmatprep.subr.bf16.mxu0 0
    %4764 = vmatpush1.bf16.msra.mxu0 %v4747
    %4765 = vmatprep.subr.bf16.mxu0 0
    %4766 = vmatpush1.bf16.msra.mxu0 %v4748
    %4767 = vmatprep.subr.bf16.mxu0 0
    %4768 = vmatpush1.bf16.msra.mxu0 %v4749
    %4769 = vmatprep.subr.bf16.mxu0 0
    %4770 = vmatpush1.bf16.msra.mxu0 %v4750
    %4771 = vmatprep.subr.bf16.mxu0 0
    %4772 = vmatpush1.bf16.msra.mxu0 %v4751
    %4773 = vmatprep.subr.bf16.mxu0 0
    %4774 = vmatpush1.bf16.msra.mxu0 %v4752
    %4775 = vmatprep.subr.bf16.mxu0 0
    %4776 = vmatpush1.bf16.msra.mxu0 %v4753
    %4777 = vmatprep.subr.bf16.mxu0 0
    %4778 = vmatpush1.bf16.msra.mxu0 %v4754
    %4779 = vmatprep.subr.bf16.mxu0 0
    %4780 = vmatpush1.bf16.msra.mxu0 0
    %4781 = vmatprep.subr.bf16.mxu0 0
    %4782 = vmatpush1.bf16.msra.mxu0 0
    %4783 = vmatprep.subr.bf16.mxu0 0
    %4784 = vmatpush1.bf16.msra.mxu0 0
    %4785 = vmatprep.subr.bf16.mxu0 0
    %4786 = vmatpush1.bf16.msra.mxu0 0
    %4787 = vmatprep.subr.bf16.mxu0 0
    %4788 = vmatpush1.bf16.msra.mxu0 0
    %4789 = vmatprep.subr.bf16.mxu0 0
    %4790 = vmatpush1.bf16.msra.mxu0 0
    %4791 = vmatprep.subr.bf16.mxu0 0
    %4792 = vmatpush1.bf16.msra.mxu0 0
    %4793 = vmatprep.subr.bf16.mxu0 0
    %4794 = vmatpush1.bf16.msra.mxu0 0
    %4795 = vmatprep.mubr.bf16.mxu0 0
    %4796 = vmatmul.mubr.bf16.gmra.mrb[0].mxu0 %v4149
    %v4797 = vpop.f32.mrb[0].mxu0
    %v4798 = vadd.f32 0.0, %v4797
    %v4799 = vpop.f32.mrb[0].mxu0
    %v4800 = vpop.f32.mrb[0].mxu0
    %v4801 = vadd.f32 0.0, %v4800
    %v4802 = vpop.f32.mrb[0].mxu0
    %4803 = vmatprep.mubr.bf16.mxu0 0
    %4804 = vmatmul.mubr.bf16.gmra.mrb[0].mxu0 %v4150
    %v4805 = vpop.f32.mrb[0].mxu0
    %v4806 = vadd.f32 0.0, %v4805
    %v4807 = vpop.f32.mrb[0].mxu0
    %v4808 = vpop.f32.mrb[0].mxu0
    %v4809 = vadd.f32 0.0, %v4808
    %v4810 = vpop.f32.mrb[0].mxu0
    %4811 = vmatprep.mubr.bf16.mxu0 0
    %4812 = vmatmul.mubr.bf16.gmra.mrb[0].mxu0 %v4151
    %v4813 = vpop.f32.mrb[0].mxu0
    %v4814 = vadd.f32 0.0, %v4813
    %v4815 = vpop.f32.mrb[0].mxu0
    %v4816 = vpop.f32.mrb[0].mxu0
    %v4817 = vadd.f32 0.0, %v4816
    %v4818 = vpop.f32.mrb[0].mxu0
    %4819 = vmatprep.mubr.bf16.mxu0 0
    %4820 = vmatmul.mubr.bf16.gmra.mrb[0].mxu0 %v4152
    %v4821 = vpop.f32.mrb[0].mxu0
    %v4822 = vadd.f32 0.0, %v4821
    %v4823 = vpop.f32.mrb[0].mxu0
    %v4824 = vpop.f32.mrb[0].mxu0
    %v4825 = vadd.f32 0.0, %v4824
    %v4826 = vpop.f32.mrb[0].mxu0
    %4827 = vmatprep.mubr.bf16.mxu0 0
    %4828 = vmatmul.mubr.bf16.gmra.mrb[0].mxu0 %v4153
    %v4829 = vpop.f32.mrb[0].mxu0
    %v4830 = vadd.f32 0.0, %v4829
    %v4831 = vpop.f32.mrb[0].mxu0
    %v4832 = vpop.f32.mrb[0].mxu0
    %v4833 = vadd.f32 0.0, %v4832
    %v4834 = vpop.f32.mrb[0].mxu0
    %4835 = vmatprep.mubr.bf16.mxu0 0
    %4836 = vmatmul.mubr.bf16.gmra.mrb[0].mxu0 %v4154
    %v4837 = vpop.f32.mrb[0].mxu0
    %v4838 = vadd.f32 0.0, %v4837
    %v4839 = vpop.f32.mrb[0].mxu0
    %v4840 = vpop.f32.mrb[0].mxu0
    %v4841 = vadd.f32 0.0, %v4840
    %v4842 = vpop.f32.mrb[0].mxu0
    %4843 = vmatprep.mubr.bf16.mxu0 0
    %4844 = vmatmul.mubr.bf16.gmra.mrb[0].mxu0 %v4155
    %v4845 = vpop.f32.mrb[0].mxu0
    %v4846 = vadd.f32 0.0, %v4845
    %v4847 = vpop.f32.mrb[0].mxu0
    %v4848 = vpop.f32.mrb[0].mxu0
    %v4849 = vadd.f32 0.0, %v4848
    %v4850 = vpop.f32.mrb[0].mxu0
    %4851 = vmatprep.mubr.bf16.mxu0 0
    %4852 = vmatmul.mubr.bf16.gmra.mrb[0].mxu0 %v4156
    %v4853 = vpop.f32.mrb[0].mxu0
    %v4854 = vadd.f32 0.0, %v4853
    %v4855 = vpop.f32.mrb[0].mxu0
    %v4856 = vpop.f32.mrb[0].mxu0
    %v4857 = vadd.f32 0.0, %v4856
    %v4858 = vpop.f32.mrb[0].mxu0
    %4859 = vdwg.mxu0
    %v4860 = vadd.f32 %v4682, %v4798
    %v4861 = vadd.f32 %v4683, %v4801
    %v4862 = vadd.f32 %v4684, %v4806
    %v4863 = vadd.f32 %v4685, %v4809
    %v4864 = vadd.f32 %v4686, %v4814
    %v4865 = vadd.f32 %v4687, %v4817
    %v4866 = vadd.f32 %v4688, %v4822
    %v4867 = vadd.f32 %v4689, %v4825
    %v4868 = vadd.f32 %v4690, %v4830
    %v4869 = vadd.f32 %v4691, %v4833
    %v4870 = vadd.f32 %v4692, %v4838
    %v4871 = vadd.f32 %v4693, %v4841
    %v4872 = vadd.f32 %v4694, %v4846
    %v4873 = vadd.f32 %v4695, %v4849
    %v4874 = vadd.f32 %v4696, %v4854
    %v4875 = vadd.f32 %v4697, %v4857
    %s4876 = scalar_lea.vmem [#allocation7], 256
    %v4877 = vld [vmem:[%s4876] sm:$0xf]
    %v4878 = vld [vmem:[%s4876 + $0x4] sm:$0xf]
    %v4879 = vld [vmem:[%s4876 + $0x8] sm:$0xf]
    %v4880 = vld [vmem:[%s4876 + $0xc] sm:$0xf]
    %v4881 = vld [vmem:[%s4876 + $0x10] sm:$0xf]
    %v4882 = vld [vmem:[%s4876 + $0x14] sm:$0xf]
    %v4883 = vld [vmem:[%s4876 + $0x18] sm:$0xf]
    %v4884 = vld [vmem:[%s4876 + $0x1c] sm:$0xf]
    %v4885 = vld [vmem:[%s4876 + $0x20] sm:$0xf]
    %v4886 = vld [vmem:[%s4876 + $0x24] sm:$0xf]
    %v4887 = vld [vmem:[%s4876 + $0x28] sm:$0xf]
    %v4888 = vld [vmem:[%s4876 + $0x2c] sm:$0xf]
    %v4889 = vld [vmem:[%s4876 + $0x30] sm:$0xf]
    %v4890 = vld [vmem:[%s4876 + $0x34] sm:$0xf]
    %v4891 = vld [vmem:[%s4876 + $0x38] sm:$0xf]
    %v4892 = vld [vmem:[%s4876 + $0x3c] sm:$0xf]
    %v4909 = vunpack.c.l.b16 %v4877
    %v4910 = vunpack.c.l.b16 %v4878
    %v4911 = vunpack.c.l.b16 %v4879
    %v4912 = vunpack.c.l.b16 %v4880
    %v4913 = vunpack.c.l.b16 %v4881
    %v4914 = vunpack.c.l.b16 %v4882
    %v4915 = vunpack.c.l.b16 %v4883
    %v4916 = vunpack.c.l.b16 %v4884
    %v4917 = vunpack.c.l.b16 %v4885
    %v4918 = vunpack.c.l.b16 %v4886
    %v4919 = vunpack.c.l.b16 %v4887
    %v4920 = vunpack.c.l.b16 %v4888
    %v4921 = vunpack.c.l.b16 %v4889
    %v4922 = vunpack.c.l.b16 %v4890
    %v4923 = vunpack.c.l.b16 %v4891
    %v4924 = vunpack.c.l.b16 %v4892
    %v4925 = vpack.c.b16 %v4910, %v4909
    %v4926 = vpack.c.b16 %v4912, %v4911
    %v4927 = vpack.c.b16 %v4914, %v4913
    %v4928 = vpack.c.b16 %v4916, %v4915
    %v4929 = vpack.c.b16 %v4918, %v4917
    %v4930 = vpack.c.b16 %v4920, %v4919
    %v4931 = vpack.c.b16 %v4922, %v4921
    %v4932 = vpack.c.b16 %v4924, %v4923
    %4941 = vmatprep.subr.bf16.mxu0 0
    %4942 = vmatpush1.bf16.msra.mxu0 %v4925
    %4943 = vmatprep.subr.bf16.mxu0 0
    %4944 = vmatpush1.bf16.msra.mxu0 %v4926
    %4945 = vmatprep.subr.bf16.mxu0 0
    %4946 = vmatpush1.bf16.msra.mxu0 %v4927
    %4947 = vmatprep.subr.bf16.mxu0 0
    %4948 = vmatpush1.bf16.msra.mxu0 %v4928
    %4949 = vmatprep.subr.bf16.mxu0 0
    %4950 = vmatpush1.bf16.msra.mxu0 %v4929
    %4951 = vmatprep.subr.bf16.mxu0 0
    %4952 = vmatpush1.bf16.msra.mxu0 %v4930
    %4953 = vmatprep.subr.bf16.mxu0 0
    %4954 = vmatpush1.bf16.msra.mxu0 %v4931
    %4955 = vmatprep.subr.bf16.mxu0 0
    %4956 = vmatpush1.bf16.msra.mxu0 %v4932
    %4957 = vmatprep.subr.bf16.mxu0 0
    %4958 = vmatpush1.bf16.msra.mxu0 0
    %4959 = vmatprep.subr.bf16.mxu0 0
    %4960 = vmatpush1.bf16.msra.mxu0 0
    %4961 = vmatprep.subr.bf16.mxu0 0
    %4962 = vmatpush1.bf16.msra.mxu0 0
    %4963 = vmatprep.subr.bf16.mxu0 0
    %4964 = vmatpush1.bf16.msra.mxu0 0
    %4965 = vmatprep.subr.bf16.mxu0 0
    %4966 = vmatpush1.bf16.msra.mxu0 0
    %4967 = vmatprep.subr.bf16.mxu0 0
    %4968 = vmatpush1.bf16.msra.mxu0 0
    %4969 = vmatprep.subr.bf16.mxu0 0
    %4970 = vmatpush1.bf16.msra.mxu0 0
    %4971 = vmatprep.subr.bf16.mxu0 0
    %4972 = vmatpush1.bf16.msra.mxu0 0
    %4973 = vmatprep.mubr.bf16.mxu0 0
    %4974 = vmatmul.mubr.bf16.gmra.mrb[0].mxu0 %v4157
    %v4975 = vpop.f32.mrb[0].mxu0
    %v4976 = vadd.f32 0.0, %v4975
    %v4977 = vpop.f32.mrb[0].mxu0
    %v4978 = vpop.f32.mrb[0].mxu0
    %v4979 = vadd.f32 0.0, %v4978
    %v4980 = vpop.f32.mrb[0].mxu0
    %4981 = vmatprep.mubr.bf16.mxu0 0
    %4982 = vmatmul.mubr.bf16.gmra.mrb[0].mxu0 %v4158
    %v4983 = vpop.f32.mrb[0].mxu0
    %v4984 = vadd.f32 0.0, %v4983
    %v4985 = vpop.f32.mrb[0].mxu0
    %v4986 = vpop.f32.mrb[0].mxu0
    %v4987 = vadd.f32 0.0, %v4986
    %v4988 = vpop.f32.mrb[0].mxu0
    %4989 = vmatprep.mubr.bf16.mxu0 0
    %4990 = vmatmul.mubr.bf16.gmra.mrb[0].mxu0 %v4159
    %v4991 = vpop.f32.mrb[0].mxu0
    %v4992 = vadd.f32 0.0, %v4991
    %v4993 = vpop.f32.mrb[0].mxu0
    %v4994 = vpop.f32.mrb[0].mxu0
    %v4995 = vadd.f32 0.0, %v4994
    %v4996 = vpop.f32.mrb[0].mxu0
    %4997 = vmatprep.mubr.bf16.mxu0 0
    %4998 = vmatmul.mubr.bf16.gmra.mrb[0].mxu0 %v4160
    %v4999 = vpop.f32.mrb[0].mxu0
    %v5000 = vadd.f32 0.0, %v4999
    %v5001 = vpop.f32.mrb[0].mxu0
    %v5002 = vpop.f32.mrb[0].mxu0
    %v5003 = vadd.f32 0.0, %v5002
    %v5004 = vpop.f32.mrb[0].mxu0
    %5005 = vmatprep.mubr.bf16.mxu0 0
    %5006 = vmatmul.mubr.bf16.gmra.mrb[0].mxu0 %v4161
    %v5007 = vpop.f32.mrb[0].mxu0
    %v5008 = vadd.f32 0.0, %v5007
    %v5009 = vpop.f32.mrb[0].mxu0
    %v5010 = vpop.f32.mrb[0].mxu0
    %v5011 = vadd.f32 0.0, %v5010
    %v5012 = vpop.f32.mrb[0].mxu0
    %5013 = vmatprep.mubr.bf16.mxu0 0
    %5014 = vmatmul.mubr.bf16.gmra.mrb[0].mxu0 %v4162
    %v5015 = vpop.f32.mrb[0].mxu0
    %v5016 = vadd.f32 0.0, %v5015
    %v5017 = vpop.f32.mrb[0].mxu0
    %v5018 = vpop.f32.mrb[0].mxu0
    %v5019 = vadd.f32 0.0, %v5018
    %v5020 = vpop.f32.mrb[0].mxu0
    %5021 = vmatprep.mubr.bf16.mxu0 0
    %5022 = vmatmul.mubr.bf16.gmra.mrb[0].mxu0 %v4163
    %v5023 = vpop.f32.mrb[0].mxu0
    %v5024 = vadd.f32 0.0, %v5023
    %v5025 = vpop.f32.mrb[0].mxu0
    %v5026 = vpop.f32.mrb[0].mxu0
    %v5027 = vadd.f32 0.0, %v5026
    %v5028 = vpop.f32.mrb[0].mxu0
    %5029 = vmatprep.mubr.bf16.mxu0 0
    %5030 = vmatmul.mubr.bf16.gmra.mrb[0].mxu0 %v4164
    %v5031 = vpop.f32.mrb[0].mxu0
    %v5032 = vadd.f32 0.0, %v5031
    %v5033 = vpop.f32.mrb[0].mxu0
    %v5034 = vpop.f32.mrb[0].mxu0
    %v5035 = vadd.f32 0.0, %v5034
    %v5036 = vpop.f32.mrb[0].mxu0
    %5037 = vdwg.mxu0
    %v5038 = vadd.f32 %v4860, %v4976
    %v5039 = vadd.f32 %v4861, %v4979
    %v5040 = vadd.f32 %v4862, %v4984
    %v5041 = vadd.f32 %v4863, %v4987
    %v5042 = vadd.f32 %v4864, %v4992
    %v5043 = vadd.f32 %v4865, %v4995
    %v5044 = vadd.f32 %v4866, %v5000
    %v5045 = vadd.f32 %v4867, %v5003
    %v5046 = vadd.f32 %v4868, %v5008
    %v5047 = vadd.f32 %v4869, %v5011
    %v5048 = vadd.f32 %v4870, %v5016
    %v5049 = vadd.f32 %v4871, %v5019
    %v5050 = vadd.f32 %v4872, %v5024
    %v5051 = vadd.f32 %v4873, %v5027
    %v5052 = vadd.f32 %v4874, %v5032
    %v5053 = vadd.f32 %v4875, %v5035
    %s5054 = scalar_lea.vmem [#allocation7], 320
    %v5055 = vld [vmem:[%s5054] sm:$0xf]
    %v5056 = vld [vmem:[%s5054 + $0x4] sm:$0xf]
    %v5057 = vld [vmem:[%s5054 + $0x8] sm:$0xf]
    %v5058 = vld [vmem:[%s5054 + $0xc] sm:$0xf]
    %v5059 = vld [vmem:[%s5054 + $0x10] sm:$0xf]
    %v5060 = vld [vmem:[%s5054 + $0x14] sm:$0xf]
    %v5061 = vld [vmem:[%s5054 + $0x18] sm:$0xf]
    %v5062 = vld [vmem:[%s5054 + $0x1c] sm:$0xf]
    %v5063 = vld [vmem:[%s5054 + $0x20] sm:$0xf]
    %v5064 = vld [vmem:[%s5054 + $0x24] sm:$0xf]
    %v5065 = vld [vmem:[%s5054 + $0x28] sm:$0xf]
    %v5066 = vld [vmem:[%s5054 + $0x2c] sm:$0xf]
    %v5067 = vld [vmem:[%s5054 + $0x30] sm:$0xf]
    %v5068 = vld [vmem:[%s5054 + $0x34] sm:$0xf]
    %v5069 = vld [vmem:[%s5054 + $0x38] sm:$0xf]
    %v5070 = vld [vmem:[%s5054 + $0x3c] sm:$0xf]
    %v5087 = vunpack.c.l.b16 %v5055
    %v5088 = vunpack.c.l.b16 %v5056
    %v5089 = vunpack.c.l.b16 %v5057
    %v5090 = vunpack.c.l.b16 %v5058
    %v5091 = vunpack.c.l.b16 %v5059
    %v5092 = vunpack.c.l.b16 %v5060
    %v5093 = vunpack.c.l.b16 %v5061
    %v5094 = vunpack.c.l.b16 %v5062
    %v5095 = vunpack.c.l.b16 %v5063
    %v5096 = vunpack.c.l.b16 %v5064
    %v5097 = vunpack.c.l.b16 %v5065
    %v5098 = vunpack.c.l.b16 %v5066
    %v5099 = vunpack.c.l.b16 %v5067
    %v5100 = vunpack.c.l.b16 %v5068
    %v5101 = vunpack.c.l.b16 %v5069
    %v5102 = vunpack.c.l.b16 %v5070
    %v5103 = vpack.c.b16 %v5088, %v5087
    %v5104 = vpack.c.b16 %v5090, %v5089
    %v5105 = vpack.c.b16 %v5092, %v5091
    %v5106 = vpack.c.b16 %v5094, %v5093
    %v5107 = vpack.c.b16 %v5096, %v5095
    %v5108 = vpack.c.b16 %v5098, %v5097
    %v5109 = vpack.c.b16 %v5100, %v5099
    %v5110 = vpack.c.b16 %v5102, %v5101
    %5119 = vmatprep.subr.bf16.mxu0 0
    %5120 = vmatpush1.bf16.msra.mxu0 %v5103
    %5121 = vmatprep.subr.bf16.mxu0 0
    %5122 = vmatpush1.bf16.msra.mxu0 %v5104
    %5123 = vmatprep.subr.bf16.mxu0 0
    %5124 = vmatpush1.bf16.msra.mxu0 %v5105
    %5125 = vmatprep.subr.bf16.mxu0 0
    %5126 = vmatpush1.bf16.msra.mxu0 %v5106
    %5127 = vmatprep.subr.bf16.mxu0 0
    %5128 = vmatpush1.bf16.msra.mxu0 %v5107
    %5129 = vmatprep.subr.bf16.mxu0 0
    %5130 = vmatpush1.bf16.msra.mxu0 %v5108
    %5131 = vmatprep.subr.bf16.mxu0 0
    %5132 = vmatpush1.bf16.msra.mxu0 %v5109
    %5133 = vmatprep.subr.bf16.mxu0 0
    %5134 = vmatpush1.bf16.msra.mxu0 %v5110
    %5135 = vmatprep.subr.bf16.mxu0 0
    %5136 = vmatpush1.bf16.msra.mxu0 0
    %5137 = vmatprep.subr.bf16.mxu0 0
    %5138 = vmatpush1.bf16.msra.mxu0 0
    %5139 = vmatprep.subr.bf16.mxu0 0
    %5140 = vmatpush1.bf16.msra.mxu0 0
    %5141 = vmatprep.subr.bf16.mxu0 0
    %5142 = vmatpush1.bf16.msra.mxu0 0
    %5143 = vmatprep.subr.bf16.mxu0 0
    %5144 = vmatpush1.bf16.msra.mxu0 0
    %5145 = vmatprep.subr.bf16.mxu0 0
    %5146 = vmatpush1.bf16.msra.mxu0 0
    %5147 = vmatprep.subr.bf16.mxu0 0
    %5148 = vmatpush1.bf16.msra.mxu0 0
    %5149 = vmatprep.subr.bf16.mxu0 0
    %5150 = vmatpush1.bf16.msra.mxu0 0
    %5151 = vmatprep.mubr.bf16.mxu0 0
    %5152 = vmatmul.mubr.bf16.gmra.mrb[0].mxu0 %v4165
    %v5153 = vpop.f32.mrb[0].mxu0
    %v5154 = vadd.f32 0.0, %v5153
    %v5155 = vpop.f32.mrb[0].mxu0
    %v5156 = vpop.f32.mrb[0].mxu0
    %v5157 = vadd.f32 0.0, %v5156
    %v5158 = vpop.f32.mrb[0].mxu0
    %5159 = vmatprep.mubr.bf16.mxu0 0
    %5160 = vmatmul.mubr.bf16.gmra.mrb[0].mxu0 %v4166
    %v5161 = vpop.f32.mrb[0].mxu0
    %v5162 = vadd.f32 0.0, %v5161
    %v5163 = vpop.f32.mrb[0].mxu0
    %v5164 = vpop.f32.mrb[0].mxu0
    %v5165 = vadd.f32 0.0, %v5164
    %v5166 = vpop.f32.mrb[0].mxu0
    %5167 = vmatprep.mubr.bf16.mxu0 0
    %5168 = vmatmul.mubr.bf16.gmra.mrb[0].mxu0 %v4167
    %v5169 = vpop.f32.mrb[0].mxu0
    %v5170 = vadd.f32 0.0, %v5169
    %v5171 = vpop.f32.mrb[0].mxu0
    %v5172 = vpop.f32.mrb[0].mxu0
    %v5173 = vadd.f32 0.0, %v5172
    %v5174 = vpop.f32.mrb[0].mxu0
    %5175 = vmatprep.mubr.bf16.mxu0 0
    %5176 = vmatmul.mubr.bf16.gmra.mrb[0].mxu0 %v4168
    %v5177 = vpop.f32.mrb[0].mxu0
    %v5178 = vadd.f32 0.0, %v5177
    %v5179 = vpop.f32.mrb[0].mxu0
    %v5180 = vpop.f32.mrb[0].mxu0
    %v5181 = vadd.f32 0.0, %v5180
    %v5182 = vpop.f32.mrb[0].mxu0
    %5183 = vmatprep.mubr.bf16.mxu0 0
    %5184 = vmatmul.mubr.bf16.gmra.mrb[0].mxu0 %v4169
    %v5185 = vpop.f32.mrb[0].mxu0
    %v5186 = vadd.f32 0.0, %v5185
    %v5187 = vpop.f32.mrb[0].mxu0
    %v5188 = vpop.f32.mrb[0].mxu0
    %v5189 = vadd.f32 0.0, %v5188
    %v5190 = vpop.f32.mrb[0].mxu0
    %5191 = vmatprep.mubr.bf16.mxu0 0
    %5192 = vmatmul.mubr.bf16.gmra.mrb[0].mxu0 %v4170
    %v5193 = vpop.f32.mrb[0].mxu0
    %v5194 = vadd.f32 0.0, %v5193
    %v5195 = vpop.f32.mrb[0].mxu0
    %v5196 = vpop.f32.mrb[0].mxu0
    %v5197 = vadd.f32 0.0, %v5196
    %v5198 = vpop.f32.mrb[0].mxu0
    %5199 = vmatprep.mubr.bf16.mxu0 0
    %5200 = vmatmul.mubr.bf16.gmra.mrb[0].mxu0 %v4171
    %v5201 = vpop.f32.mrb[0].mxu0
    %v5202 = vadd.f32 0.0, %v5201
    %v5203 = vpop.f32.mrb[0].mxu0
    %v5204 = vpop.f32.mrb[0].mxu0
    %v5205 = vadd.f32 0.0, %v5204
    %v5206 = vpop.f32.mrb[0].mxu0
    %5207 = vmatprep.mubr.bf16.mxu0 0
    %5208 = vmatmul.mubr.bf16.gmra.mrb[0].mxu0 %v4172
    %v5209 = vpop.f32.mrb[0].mxu0
    %v5210 = vadd.f32 0.0, %v5209
    %v5211 = vpop.f32.mrb[0].mxu0
    %v5212 = vpop.f32.mrb[0].mxu0
    %v5213 = vadd.f32 0.0, %v5212
    %v5214 = vpop.f32.mrb[0].mxu0
    %5215 = vdwg.mxu0
    %v5216 = vadd.f32 %v5038, %v5154
    %v5217 = vadd.f32 %v5039, %v5157
    %v5218 = vadd.f32 %v5040, %v5162
    %v5219 = vadd.f32 %v5041, %v5165
    %v5220 = vadd.f32 %v5042, %v5170
    %v5221 = vadd.f32 %v5043, %v5173
    %v5222 = vadd.f32 %v5044, %v5178
    %v5223 = vadd.f32 %v5045, %v5181
    %v5224 = vadd.f32 %v5046, %v5186
    %v5225 = vadd.f32 %v5047, %v5189
    %v5226 = vadd.f32 %v5048, %v5194
    %v5227 = vadd.f32 %v5049, %v5197
    %v5228 = vadd.f32 %v5050, %v5202
    %v5229 = vadd.f32 %v5051, %v5205
    %v5230 = vadd.f32 %v5052, %v5210
    %v5231 = vadd.f32 %v5053, %v5213
    %s5232 = scalar_lea.vmem [#allocation7], 384
    %v5233 = vld [vmem:[%s5232] sm:$0xf]
    %v5234 = vld [vmem:[%s5232 + $0x4] sm:$0xf]
    %v5235 = vld [vmem:[%s5232 + $0x8] sm:$0xf]
    %v5236 = vld [vmem:[%s5232 + $0xc] sm:$0xf]
    %v5237 = vld [vmem:[%s5232 + $0x10] sm:$0xf]
    %v5238 = vld [vmem:[%s5232 + $0x14] sm:$0xf]
    %v5239 = vld [vmem:[%s5232 + $0x18] sm:$0xf]
    %v5240 = vld [vmem:[%s5232 + $0x1c] sm:$0xf]
    %v5241 = vld [vmem:[%s5232 + $0x20] sm:$0xf]
    %v5242 = vld [vmem:[%s5232 + $0x24] sm:$0xf]
    %v5243 = vld [vmem:[%s5232 + $0x28] sm:$0xf]
    %v5244 = vld [vmem:[%s5232 + $0x2c] sm:$0xf]
    %v5245 = vld [vmem:[%s5232 + $0x30] sm:$0xf]
    %v5246 = vld [vmem:[%s5232 + $0x34] sm:$0xf]
    %v5247 = vld [vmem:[%s5232 + $0x38] sm:$0xf]
    %v5248 = vld [vmem:[%s5232 + $0x3c] sm:$0xf]
    %v5265 = vunpack.c.l.b16 %v5233
    %v5266 = vunpack.c.l.b16 %v5234
    %v5267 = vunpack.c.l.b16 %v5235
    %v5268 = vunpack.c.l.b16 %v5236
    %v5269 = vunpack.c.l.b16 %v5237
    %v5270 = vunpack.c.l.b16 %v5238
    %v5271 = vunpack.c.l.b16 %v5239
    %v5272 = vunpack.c.l.b16 %v5240
    %v5273 = vunpack.c.l.b16 %v5241
    %v5274 = vunpack.c.l.b16 %v5242
    %v5275 = vunpack.c.l.b16 %v5243
    %v5276 = vunpack.c.l.b16 %v5244
    %v5277 = vunpack.c.l.b16 %v5245
    %v5278 = vunpack.c.l.b16 %v5246
    %v5279 = vunpack.c.l.b16 %v5247
    %v5280 = vunpack.c.l.b16 %v5248
    %v5281 = vpack.c.b16 %v5266, %v5265
    %v5282 = vpack.c.b16 %v5268, %v5267
    %v5283 = vpack.c.b16 %v5270, %v5269
    %v5284 = vpack.c.b16 %v5272, %v5271
    %v5285 = vpack.c.b16 %v5274, %v5273
    %v5286 = vpack.c.b16 %v5276, %v5275
    %v5287 = vpack.c.b16 %v5278, %v5277
    %v5288 = vpack.c.b16 %v5280, %v5279
    %5297 = vmatprep.subr.bf16.mxu0 0
    %5298 = vmatpush1.bf16.msra.mxu0 %v5281
    %5299 = vmatprep.subr.bf16.mxu0 0
    %5300 = vmatpush1.bf16.msra.mxu0 %v5282
    %5301 = vmatprep.subr.bf16.mxu0 0
    %5302 = vmatpush1.bf16.msra.mxu0 %v5283
    %5303 = vmatprep.subr.bf16.mxu0 0
    %5304 = vmatpush1.bf16.msra.mxu0 %v5284
    %5305 = vmatprep.subr.bf16.mxu0 0
    %5306 = vmatpush1.bf16.msra.mxu0 %v5285
    %5307 = vmatprep.subr.bf16.mxu0 0
    %5308 = vmatpush1.bf16.msra.mxu0 %v5286
    %5309 = vmatprep.subr.bf16.mxu0 0
    %5310 = vmatpush1.bf16.msra.mxu0 %v5287
    %5311 = vmatprep.subr.bf16.mxu0 0
    %5312 = vmatpush1.bf16.msra.mxu0 %v5288
    %5313 = vmatprep.subr.bf16.mxu0 0
    %5314 = vmatpush1.bf16.msra.mxu0 0
    %5315 = vmatprep.subr.bf16.mxu0 0
    %5316 = vmatpush1.bf16.msra.mxu0 0
    %5317 = vmatprep.subr.bf16.mxu0 0
    %5318 = vmatpush1.bf16.msra.mxu0 0
    %5319 = vmatprep.subr.bf16.mxu0 0
    %5320 = vmatpush1.bf16.msra.mxu0 0
    %5321 = vmatprep.subr.bf16.mxu0 0
    %5322 = vmatpush1.bf16.msra.mxu0 0
    %5323 = vmatprep.subr.bf16.mxu0 0
    %5324 = vmatpush1.bf16.msra.mxu0 0
    %5325 = vmatprep.subr.bf16.mxu0 0
    %5326 = vmatpush1.bf16.msra.mxu0 0
    %5327 = vmatprep.subr.bf16.mxu0 0
    %5328 = vmatpush1.bf16.msra.mxu0 0
    %5329 = vmatprep.mubr.bf16.mxu0 0
    %5330 = vmatmul.mubr.bf16.gmra.mrb[0].mxu0 %v4173
    %v5331 = vpop.f32.mrb[0].mxu0
    %v5332 = vadd.f32 0.0, %v5331
    %v5333 = vpop.f32.mrb[0].mxu0
    %v5334 = vpop.f32.mrb[0].mxu0
    %v5335 = vadd.f32 0.0, %v5334
    %v5336 = vpop.f32.mrb[0].mxu0
    %5337 = vmatprep.mubr.bf16.mxu0 0
    %5338 = vmatmul.mubr.bf16.gmra.mrb[0].mxu0 %v4174
    %v5339 = vpop.f32.mrb[0].mxu0
    %v5340 = vadd.f32 0.0, %v5339
    %v5341 = vpop.f32.mrb[0].mxu0
    %v5342 = vpop.f32.mrb[0].mxu0
    %v5343 = vadd.f32 0.0, %v5342
    %v5344 = vpop.f32.mrb[0].mxu0
    %5345 = vmatprep.mubr.bf16.mxu0 0
    %5346 = vmatmul.mubr.bf16.gmra.mrb[0].mxu0 %v4175
    %v5347 = vpop.f32.mrb[0].mxu0
    %v5348 = vadd.f32 0.0, %v5347
    %v5349 = vpop.f32.mrb[0].mxu0
    %v5350 = vpop.f32.mrb[0].mxu0
    %v5351 = vadd.f32 0.0, %v5350
    %v5352 = vpop.f32.mrb[0].mxu0
    %5353 = vmatprep.mubr.bf16.mxu0 0
    %5354 = vmatmul.mubr.bf16.gmra.mrb[0].mxu0 %v4176
    %v5355 = vpop.f32.mrb[0].mxu0
    %v5356 = vadd.f32 0.0, %v5355
    %v5357 = vpop.f32.mrb[0].mxu0
    %v5358 = vpop.f32.mrb[0].mxu0
    %v5359 = vadd.f32 0.0, %v5358
    %v5360 = vpop.f32.mrb[0].mxu0
    %5361 = vmatprep.mubr.bf16.mxu0 0
    %5362 = vmatmul.mubr.bf16.gmra.mrb[0].mxu0 %v4177
    %v5363 = vpop.f32.mrb[0].mxu0
    %v5364 = vadd.f32 0.0, %v5363
    %v5365 = vpop.f32.mrb[0].mxu0
    %v5366 = vpop.f32.mrb[0].mxu0
    %v5367 = vadd.f32 0.0, %v5366
    %v5368 = vpop.f32.mrb[0].mxu0
    %5369 = vmatprep.mubr.bf16.mxu0 0
    %5370 = vmatmul.mubr.bf16.gmra.mrb[0].mxu0 %v4178
    %v5371 = vpop.f32.mrb[0].mxu0
    %v5372 = vadd.f32 0.0, %v5371
    %v5373 = vpop.f32.mrb[0].mxu0
    %v5374 = vpop.f32.mrb[0].mxu0
    %v5375 = vadd.f32 0.0, %v5374
    %v5376 = vpop.f32.mrb[0].mxu0
    %5377 = vmatprep.mubr.bf16.mxu0 0
    %5378 = vmatmul.mubr.bf16.gmra.mrb[0].mxu0 %v4179
    %v5379 = vpop.f32.mrb[0].mxu0
    %v5380 = vadd.f32 0.0, %v5379
    %v5381 = vpop.f32.mrb[0].mxu0
    %v5382 = vpop.f32.mrb[0].mxu0
    %v5383 = vadd.f32 0.0, %v5382
    %v5384 = vpop.f32.mrb[0].mxu0
    %5385 = vmatprep.mubr.bf16.mxu0 0
    %5386 = vmatmul.mubr.bf16.gmra.mrb[0].mxu0 %v4180
    %v5387 = vpop.f32.mrb[0].mxu0
    %v5388 = vadd.f32 0.0, %v5387
    %v5389 = vpop.f32.mrb[0].mxu0
    %v5390 = vpop.f32.mrb[0].mxu0
    %v5391 = vadd.f32 0.0, %v5390
    %v5392 = vpop.f32.mrb[0].mxu0
    %5393 = vdwg.mxu0
    %v5394 = vadd.f32 %v5216, %v5332
    %v5395 = vadd.f32 %v5217, %v5335
    %v5396 = vadd.f32 %v5218, %v5340
    %v5397 = vadd.f32 %v5219, %v5343
    %v5398 = vadd.f32 %v5220, %v5348
    %v5399 = vadd.f32 %v5221, %v5351
    %v5400 = vadd.f32 %v5222, %v5356
    %v5401 = vadd.f32 %v5223, %v5359
    %v5402 = vadd.f32 %v5224, %v5364
    %v5403 = vadd.f32 %v5225, %v5367
    %v5404 = vadd.f32 %v5226, %v5372
    %v5405 = vadd.f32 %v5227, %v5375
    %v5406 = vadd.f32 %v5228, %v5380
    %v5407 = vadd.f32 %v5229, %v5383
    %v5408 = vadd.f32 %v5230, %v5388
    %v5409 = vadd.f32 %v5231, %v5391
    %s5410 = scalar_lea.vmem [#allocation7], 448
    %v5411 = vld [vmem:[%s5410] sm:$0xf]
    %v5412 = vld [vmem:[%s5410 + $0x4] sm:$0xf]
    %v5413 = vld [vmem:[%s5410 + $0x8] sm:$0xf]
    %v5414 = vld [vmem:[%s5410 + $0xc] sm:$0xf]
    %v5415 = vld [vmem:[%s5410 + $0x10] sm:$0xf]
    %v5416 = vld [vmem:[%s5410 + $0x14] sm:$0xf]
    %v5417 = vld [vmem:[%s5410 + $0x18] sm:$0xf]
    %v5418 = vld [vmem:[%s5410 + $0x1c] sm:$0xf]
    %v5419 = vld [vmem:[%s5410 + $0x20] sm:$0xf]
    %v5420 = vld [vmem:[%s5410 + $0x24] sm:$0xf]
    %v5421 = vld [vmem:[%s5410 + $0x28] sm:$0xf]
    %v5422 = vld [vmem:[%s5410 + $0x2c] sm:$0xf]
    %v5423 = vld [vmem:[%s5410 + $0x30] sm:$0xf]
    %v5424 = vld [vmem:[%s5410 + $0x34] sm:$0xf]
    %v5425 = vld [vmem:[%s5410 + $0x38] sm:$0xf]
    %v5426 = vld [vmem:[%s5410 + $0x3c] sm:$0xf]
    %v5443 = vunpack.c.l.b16 %v5411
    %v5444 = vunpack.c.l.b16 %v5412
    %v5445 = vunpack.c.l.b16 %v5413
    %v5446 = vunpack.c.l.b16 %v5414
    %v5447 = vunpack.c.l.b16 %v5415
    %v5448 = vunpack.c.l.b16 %v5416
    %v5449 = vunpack.c.l.b16 %v5417
    %v5450 = vunpack.c.l.b16 %v5418
    %v5451 = vunpack.c.l.b16 %v5419
    %v5452 = vunpack.c.l.b16 %v5420
    %v5453 = vunpack.c.l.b16 %v5421
    %v5454 = vunpack.c.l.b16 %v5422
    %v5455 = vunpack.c.l.b16 %v5423
    %v5456 = vunpack.c.l.b16 %v5424
    %v5457 = vunpack.c.l.b16 %v5425
    %v5458 = vunpack.c.l.b16 %v5426
    %v5459 = vpack.c.b16 %v5444, %v5443
    %v5460 = vpack.c.b16 %v5446, %v5445
    %v5461 = vpack.c.b16 %v5448, %v5447
    %v5462 = vpack.c.b16 %v5450, %v5449
    %v5463 = vpack.c.b16 %v5452, %v5451
    %v5464 = vpack.c.b16 %v5454, %v5453
    %v5465 = vpack.c.b16 %v5456, %v5455
    %v5466 = vpack.c.b16 %v5458, %v5457
    %5475 = vmatprep.subr.bf16.mxu0 0
    %5476 = vmatpush1.bf16.msra.mxu0 %v5459
    %5477 = vmatprep.subr.bf16.mxu0 0
    %5478 = vmatpush1.bf16.msra.mxu0 %v5460
    %5479 = vmatprep.subr.bf16.mxu0 0
    %5480 = vmatpush1.bf16.msra.mxu0 %v5461
    %5481 = vmatprep.subr.bf16.mxu0 0
    %5482 = vmatpush1.bf16.msra.mxu0 %v5462
    %5483 = vmatprep.subr.bf16.mxu0 0
    %5484 = vmatpush1.bf16.msra.mxu0 %v5463
    %5485 = vmatprep.subr.bf16.mxu0 0
    %5486 = vmatpush1.bf16.msra.mxu0 %v5464
    %5487 = vmatprep.subr.bf16.mxu0 0
    %5488 = vmatpush1.bf16.msra.mxu0 %v5465
    %5489 = vmatprep.subr.bf16.mxu0 0
    %5490 = vmatpush1.bf16.msra.mxu0 %v5466
    %5491 = vmatprep.subr.bf16.mxu0 0
    %5492 = vmatpush1.bf16.msra.mxu0 0
    %5493 = vmatprep.subr.bf16.mxu0 0
    %5494 = vmatpush1.bf16.msra.mxu0 0
    %5495 = vmatprep.subr.bf16.mxu0 0
    %5496 = vmatpush1.bf16.msra.mxu0 0
    %5497 = vmatprep.subr.bf16.mxu0 0
    %5498 = vmatpush1.bf16.msra.mxu0 0
    %5499 = vmatprep.subr.bf16.mxu0 0
    %5500 = vmatpush1.bf16.msra.mxu0 0
    %5501 = vmatprep.subr.bf16.mxu0 0
    %5502 = vmatpush1.bf16.msra.mxu0 0
    %5503 = vmatprep.subr.bf16.mxu0 0
    %5504 = vmatpush1.bf16.msra.mxu0 0
    %5505 = vmatprep.subr.bf16.mxu0 0
    %5506 = vmatpush1.bf16.msra.mxu0 0
    %5507 = vmatprep.mubr.bf16.mxu0 0
    %5508 = vmatmul.mubr.bf16.gmra.mrb[0].mxu0 %v4181
    %v5509 = vpop.f32.mrb[0].mxu0
    %v5510 = vadd.f32 0.0, %v5509
    %v5511 = vpop.f32.mrb[0].mxu0
    %v5512 = vpop.f32.mrb[0].mxu0
    %v5513 = vadd.f32 0.0, %v5512
    %v5514 = vpop.f32.mrb[0].mxu0
    %5515 = vmatprep.mubr.bf16.mxu0 0
    %5516 = vmatmul.mubr.bf16.gmra.mrb[0].mxu0 %v4182
    %v5517 = vpop.f32.mrb[0].mxu0
    %v5518 = vadd.f32 0.0, %v5517
    %v5519 = vpop.f32.mrb[0].mxu0
    %v5520 = vpop.f32.mrb[0].mxu0
    %v5521 = vadd.f32 0.0, %v5520
    %v5522 = vpop.f32.mrb[0].mxu0
    %5523 = vmatprep.mubr.bf16.mxu0 0
    %5524 = vmatmul.mubr.bf16.gmra.mrb[0].mxu0 %v4183
    %v5525 = vpop.f32.mrb[0].mxu0
    %v5526 = vadd.f32 0.0, %v5525
    %v5527 = vpop.f32.mrb[0].mxu0
    %v5528 = vpop.f32.mrb[0].mxu0
    %v5529 = vadd.f32 0.0, %v5528
    %v5530 = vpop.f32.mrb[0].mxu0
    %5531 = vmatprep.mubr.bf16.mxu0 0
    %5532 = vmatmul.mubr.bf16.gmra.mrb[0].mxu0 %v4184
    %v5533 = vpop.f32.mrb[0].mxu0
    %v5534 = vadd.f32 0.0, %v5533
    %v5535 = vpop.f32.mrb[0].mxu0
    %v5536 = vpop.f32.mrb[0].mxu0
    %v5537 = vadd.f32 0.0, %v5536
    %v5538 = vpop.f32.mrb[0].mxu0
    %5539 = vmatprep.mubr.bf16.mxu0 0
    %5540 = vmatmul.mubr.bf16.gmra.mrb[0].mxu0 %v4185
    %v5541 = vpop.f32.mrb[0].mxu0
    %v5542 = vadd.f32 0.0, %v5541
    %v5543 = vpop.f32.mrb[0].mxu0
    %v5544 = vpop.f32.mrb[0].mxu0
    %v5545 = vadd.f32 0.0, %v5544
    %v5546 = vpop.f32.mrb[0].mxu0
    %5547 = vmatprep.mubr.bf16.mxu0 0
    %5548 = vmatmul.mubr.bf16.gmra.mrb[0].mxu0 %v4186
    %v5549 = vpop.f32.mrb[0].mxu0
    %v5550 = vadd.f32 0.0, %v5549
    %v5551 = vpop.f32.mrb[0].mxu0
    %v5552 = vpop.f32.mrb[0].mxu0
    %v5553 = vadd.f32 0.0, %v5552
    %v5554 = vpop.f32.mrb[0].mxu0
    %5555 = vmatprep.mubr.bf16.mxu0 0
    %5556 = vmatmul.mubr.bf16.gmra.mrb[0].mxu0 %v4187
    %v5557 = vpop.f32.mrb[0].mxu0
    %v5558 = vadd.f32 0.0, %v5557
    %v5559 = vpop.f32.mrb[0].mxu0
    %v5560 = vpop.f32.mrb[0].mxu0
    %v5561 = vadd.f32 0.0, %v5560
    %v5562 = vpop.f32.mrb[0].mxu0
    %5563 = vmatprep.mubr.bf16.mxu0 0
    %5564 = vmatmul.mubr.bf16.gmra.mrb[0].mxu0 %v4188
    %v5565 = vpop.f32.mrb[0].mxu0
    %v5566 = vadd.f32 0.0, %v5565
    %v5567 = vpop.f32.mrb[0].mxu0
    %v5568 = vpop.f32.mrb[0].mxu0
    %v5569 = vadd.f32 0.0, %v5568
    %v5570 = vpop.f32.mrb[0].mxu0
    %5571 = vdwg.mxu0
    %v5572 = vadd.f32 %v5394, %v5510
    %v5573 = vadd.f32 %v5395, %v5513
    %v5574 = vadd.f32 %v5396, %v5518
    %v5575 = vadd.f32 %v5397, %v5521
    %v5576 = vadd.f32 %v5398, %v5526
    %v5577 = vadd.f32 %v5399, %v5529
    %v5578 = vadd.f32 %v5400, %v5534
    %v5579 = vadd.f32 %v5401, %v5537
    %v5580 = vadd.f32 %v5402, %v5542
    %v5581 = vadd.f32 %v5403, %v5545
    %v5582 = vadd.f32 %v5404, %v5550
    %v5583 = vadd.f32 %v5405, %v5553
    %v5584 = vadd.f32 %v5406, %v5558
    %v5585 = vadd.f32 %v5407, %v5561
    %v5586 = vadd.f32 %v5408, %v5566
    %v5587 = vadd.f32 %v5409, %v5569
    %s5588 = scalar_lea.vmem [#allocation7], 512
    %v5589 = vld [vmem:[%s5588] sm:$0xf]
    %v5590 = vld [vmem:[%s5588 + $0x4] sm:$0xf]
    %v5591 = vld [vmem:[%s5588 + $0x8] sm:$0xf]
    %v5592 = vld [vmem:[%s5588 + $0xc] sm:$0xf]
    %v5593 = vld [vmem:[%s5588 + $0x10] sm:$0xf]
    %v5594 = vld [vmem:[%s5588 + $0x14] sm:$0xf]
    %v5595 = vld [vmem:[%s5588 + $0x18] sm:$0xf]
    %v5596 = vld [vmem:[%s5588 + $0x1c] sm:$0xf]
    %v5597 = vld [vmem:[%s5588 + $0x20] sm:$0xf]
    %v5598 = vld [vmem:[%s5588 + $0x24] sm:$0xf]
    %v5599 = vld [vmem:[%s5588 + $0x28] sm:$0xf]
    %v5600 = vld [vmem:[%s5588 + $0x2c] sm:$0xf]
    %v5601 = vld [vmem:[%s5588 + $0x30] sm:$0xf]
    %v5602 = vld [vmem:[%s5588 + $0x34] sm:$0xf]
    %v5603 = vld [vmem:[%s5588 + $0x38] sm:$0xf]
    %v5604 = vld [vmem:[%s5588 + $0x3c] sm:$0xf]
    %v5621 = vunpack.c.l.b16 %v5589
    %v5622 = vunpack.c.l.b16 %v5590
    %v5623 = vunpack.c.l.b16 %v5591
    %v5624 = vunpack.c.l.b16 %v5592
    %v5625 = vunpack.c.l.b16 %v5593
    %v5626 = vunpack.c.l.b16 %v5594
    %v5627 = vunpack.c.l.b16 %v5595
    %v5628 = vunpack.c.l.b16 %v5596
    %v5629 = vunpack.c.l.b16 %v5597
    %v5630 = vunpack.c.l.b16 %v5598
    %v5631 = vunpack.c.l.b16 %v5599
    %v5632 = vunpack.c.l.b16 %v5600
    %v5633 = vunpack.c.l.b16 %v5601
    %v5634 = vunpack.c.l.b16 %v5602
    %v5635 = vunpack.c.l.b16 %v5603
    %v5636 = vunpack.c.l.b16 %v5604
    %v5637 = vpack.c.b16 %v5622, %v5621
    %v5638 = vpack.c.b16 %v5624, %v5623
    %v5639 = vpack.c.b16 %v5626, %v5625
    %v5640 = vpack.c.b16 %v5628, %v5627
    %v5641 = vpack.c.b16 %v5630, %v5629
    %v5642 = vpack.c.b16 %v5632, %v5631
    %v5643 = vpack.c.b16 %v5634, %v5633
    %v5644 = vpack.c.b16 %v5636, %v5635
    %5653 = vmatprep.subr.bf16.mxu0 0
    %5654 = vmatpush1.bf16.msra.mxu0 %v5637
    %5655 = vmatprep.subr.bf16.mxu0 0
    %5656 = vmatpush1.bf16.msra.mxu0 %v5638
    %5657 = vmatprep.subr.bf16.mxu0 0
    %5658 = vmatpush1.bf16.msra.mxu0 %v5639
    %5659 = vmatprep.subr.bf16.mxu0 0
    %5660 = vmatpush1.bf16.msra.mxu0 %v5640
    %5661 = vmatprep.subr.bf16.mxu0 0
    %5662 = vmatpush1.bf16.msra.mxu0 %v5641
    %5663 = vmatprep.subr.bf16.mxu0 0
    %5664 = vmatpush1.bf16.msra.mxu0 %v5642
    %5665 = vmatprep.subr.bf16.mxu0 0
    %5666 = vmatpush1.bf16.msra.mxu0 %v5643
    %5667 = vmatprep.subr.bf16.mxu0 0
    %5668 = vmatpush1.bf16.msra.mxu0 %v5644
    %5669 = vmatprep.subr.bf16.mxu0 0
    %5670 = vmatpush1.bf16.msra.mxu0 0
    %5671 = vmatprep.subr.bf16.mxu0 0
    %5672 = vmatpush1.bf16.msra.mxu0 0
    %5673 = vmatprep.subr.bf16.mxu0 0
    %5674 = vmatpush1.bf16.msra.mxu0 0
    %5675 = vmatprep.subr.bf16.mxu0 0
    %5676 = vmatpush1.bf16.msra.mxu0 0
    %5677 = vmatprep.subr.bf16.mxu0 0
    %5678 = vmatpush1.bf16.msra.mxu0 0
    %5679 = vmatprep.subr.bf16.mxu0 0
    %5680 = vmatpush1.bf16.msra.mxu0 0
    %5681 = vmatprep.subr.bf16.mxu0 0
    %5682 = vmatpush1.bf16.msra.mxu0 0
    %5683 = vmatprep.subr.bf16.mxu0 0
    %5684 = vmatpush1.bf16.msra.mxu0 0
    %5685 = vmatprep.mubr.bf16.mxu0 0
    %5686 = vmatmul.mubr.bf16.gmra.mrb[0].mxu0 %v4189
    %v5687 = vpop.f32.mrb[0].mxu0
    %v5688 = vadd.f32 0.0, %v5687
    %v5689 = vpop.f32.mrb[0].mxu0
    %v5690 = vpop.f32.mrb[0].mxu0
    %v5691 = vadd.f32 0.0, %v5690
    %v5692 = vpop.f32.mrb[0].mxu0
    %5693 = vmatprep.mubr.bf16.mxu0 0
    %5694 = vmatmul.mubr.bf16.gmra.mrb[0].mxu0 %v4190
    %v5695 = vpop.f32.mrb[0].mxu0
    %v5696 = vadd.f32 0.0, %v5695
    %v5697 = vpop.f32.mrb[0].mxu0
    %v5698 = vpop.f32.mrb[0].mxu0
    %v5699 = vadd.f32 0.0, %v5698
    %v5700 = vpop.f32.mrb[0].mxu0
    %5701 = vmatprep.mubr.bf16.mxu0 0
    %5702 = vmatmul.mubr.bf16.gmra.mrb[0].mxu0 %v4191
    %v5703 = vpop.f32.mrb[0].mxu0
    %v5704 = vadd.f32 0.0, %v5703
    %v5705 = vpop.f32.mrb[0].mxu0
    %v5706 = vpop.f32.mrb[0].mxu0
    %v5707 = vadd.f32 0.0, %v5706
    %v5708 = vpop.f32.mrb[0].mxu0
    %5709 = vmatprep.mubr.bf16.mxu0 0
    %5710 = vmatmul.mubr.bf16.gmra.mrb[0].mxu0 %v4192
    %v5711 = vpop.f32.mrb[0].mxu0
    %v5712 = vadd.f32 0.0, %v5711
    %v5713 = vpop.f32.mrb[0].mxu0
    %v5714 = vpop.f32.mrb[0].mxu0
    %v5715 = vadd.f32 0.0, %v5714
    %v5716 = vpop.f32.mrb[0].mxu0
    %5717 = vmatprep.mubr.bf16.mxu0 0
    %5718 = vmatmul.mubr.bf16.gmra.mrb[0].mxu0 %v4193
    %v5719 = vpop.f32.mrb[0].mxu0
    %v5720 = vadd.f32 0.0, %v5719
    %v5721 = vpop.f32.mrb[0].mxu0
    %v5722 = vpop.f32.mrb[0].mxu0
    %v5723 = vadd.f32 0.0, %v5722
    %v5724 = vpop.f32.mrb[0].mxu0
    %5725 = vmatprep.mubr.bf16.mxu0 0
    %5726 = vmatmul.mubr.bf16.gmra.mrb[0].mxu0 %v4194
    %v5727 = vpop.f32.mrb[0].mxu0
    %v5728 = vadd.f32 0.0, %v5727
    %v5729 = vpop.f32.mrb[0].mxu0
    %v5730 = vpop.f32.mrb[0].mxu0
    %v5731 = vadd.f32 0.0, %v5730
    %v5732 = vpop.f32.mrb[0].mxu0
    %5733 = vmatprep.mubr.bf16.mxu0 0
    %5734 = vmatmul.mubr.bf16.gmra.mrb[0].mxu0 %v4195
    %v5735 = vpop.f32.mrb[0].mxu0
    %v5736 = vadd.f32 0.0, %v5735
    %v5737 = vpop.f32.mrb[0].mxu0
    %v5738 = vpop.f32.mrb[0].mxu0
    %v5739 = vadd.f32 0.0, %v5738
    %v5740 = vpop.f32.mrb[0].mxu0
    %5741 = vmatprep.mubr.bf16.mxu0 0
    %5742 = vmatmul.mubr.bf16.gmra.mrb[0].mxu0 %v4196
    %v5743 = vpop.f32.mrb[0].mxu0
    %v5744 = vadd.f32 0.0, %v5743
    %v5745 = vpop.f32.mrb[0].mxu0
    %v5746 = vpop.f32.mrb[0].mxu0
    %v5747 = vadd.f32 0.0, %v5746
    %v5748 = vpop.f32.mrb[0].mxu0
    %5749 = vdwg.mxu0
    %v5750 = vadd.f32 %v5572, %v5688
    %v5751 = vadd.f32 %v5573, %v5691
    %v5752 = vadd.f32 %v5574, %v5696
    %v5753 = vadd.f32 %v5575, %v5699
    %v5754 = vadd.f32 %v5576, %v5704
    %v5755 = vadd.f32 %v5577, %v5707
    %v5756 = vadd.f32 %v5578, %v5712
    %v5757 = vadd.f32 %v5579, %v5715
    %v5758 = vadd.f32 %v5580, %v5720
    %v5759 = vadd.f32 %v5581, %v5723
    %v5760 = vadd.f32 %v5582, %v5728
    %v5761 = vadd.f32 %v5583, %v5731
    %v5762 = vadd.f32 %v5584, %v5736
    %v5763 = vadd.f32 %v5585, %v5739
    %v5764 = vadd.f32 %v5586, %v5744
    %v5765 = vadd.f32 %v5587, %v5747
    %v5766 = vadd.f32 %v5750, %v5751
    %v5767 = vadd.f32 %v5766, %v5752
    %v5768 = vadd.f32 %v5767, %v5753
    %v5769 = vadd.f32 %v5768, %v5754
    %v5770 = vadd.f32 %v5769, %v5755
    %v5771 = vadd.f32 %v5770, %v5756
    %v5772 = vadd.f32 %v5771, %v5757
    %v5773 = vadd.f32 %v5772, %v5758
    %v5774 = vadd.f32 %v5773, %v5759
    %v5775 = vadd.f32 %v5774, %v5760
    %v5776 = vadd.f32 %v5775, %v5761
    %v5777 = vadd.f32 %v5776, %v5762
    %v5778 = vadd.f32 %v5777, %v5763
    %v5779 = vadd.f32 %v5778, %v5764
    %v5780 = vadd.f32 %v5779, %v5765
    %v5781 = vrot.slane %v5780, 4
    %v5782 = vadd.f32 %v5780, %v5781
    %v5783 = vrot.slane %v5782, 2
    %v5784 = vadd.f32 %v5782, %v5783
    %v5785 = vrot.slane %v5784, 1
    %v5786 = vadd.f32 %v5784, %v5785
    %v5787 = vrcp.pop 128.0
    %v5788 = vmul.f32 %v5786, %v5787
    %v5789 = vmul.f32 %v5750, %v5750
    %v5790 = vmul.f32 %v5751, %v5751
    %v5791 = vmul.f32 %v5752, %v5752
    %v5792 = vmul.f32 %v5753, %v5753
    %v5793 = vmul.f32 %v5754, %v5754
    %v5794 = vmul.f32 %v5755, %v5755
    %v5795 = vmul.f32 %v5756, %v5756
    %v5796 = vmul.f32 %v5757, %v5757
    %v5797 = vmul.f32 %v5758, %v5758
    %v5798 = vmul.f32 %v5759, %v5759
    %v5799 = vmul.f32 %v5760, %v5760
    %v5800 = vmul.f32 %v5761, %v5761
    %v5801 = vmul.f32 %v5762, %v5762
    %v5802 = vmul.f32 %v5763, %v5763
    %v5803 = vmul.f32 %v5764, %v5764
    %v5804 = vmul.f32 %v5765, %v5765
    %v5805 = vadd.f32 %v5789, %v5790
    %v5806 = vadd.f32 %v5805, %v5791
    %v5807 = vadd.f32 %v5806, %v5792
    %v5808 = vadd.f32 %v5807, %v5793
    %v5809 = vadd.f32 %v5808, %v5794
    %v5810 = vadd.f32 %v5809, %v5795
    %v5811 = vadd.f32 %v5810, %v5796
    %v5812 = vadd.f32 %v5811, %v5797
    %v5813 = vadd.f32 %v5812, %v5798
    %v5814 = vadd.f32 %v5813, %v5799
    %v5815 = vadd.f32 %v5814, %v5800
    %v5816 = vadd.f32 %v5815, %v5801
    %v5817 = vadd.f32 %v5816, %v5802
    %v5818 = vadd.f32 %v5817, %v5803
    %v5819 = vadd.f32 %v5818, %v5804
    %v5820 = vrot.slane %v5819, 4
    %v5821 = vadd.f32 %v5819, %v5820
    %v5822 = vrot.slane %v5821, 2
    %v5823 = vadd.f32 %v5821, %v5822
    %v5824 = vrot.slane %v5823, 1
    %v5825 = vadd.f32 %v5823, %v5824
    %v5826 = vmul.f32 %v5825, %v5787
    %v5827 = vmul.f32 %v5788, %v5788
    %v5828 = vsub.f32 %v5826, %v5827
    %v5829 = vmax.f32 %v5828, 0.0
    %v5830 = vadd.f32 %v5829, 1e-05
    %v5831 = vrsqrt.pop %v5830
    %v5832 = vmul.f32 %v121, %v5831
    %v5833 = vmul.f32 %v5788, %v5832
    %v5835 = vrot.slane %v5833, 7
    %v5837 = vsub.f32 %v121, %v5835
    %v5838 = vlaneseq
    %v5839 = vshrl.u32 %v5838, 7
    %v5840 = vsub.s32 2, %v5839
    %v5841 = vrot.slane %v5832, %v5840
    %v5842 = vmul.f32 %v5750, %v5841
    %v5843 = vmul.f32 %v5751, %v5841
    %v5844 = vmul.f32 %v5752, %v5841
    %v5845 = vmul.f32 %v5753, %v5841
    %v5846 = vmul.f32 %v5754, %v5841
    %v5847 = vmul.f32 %v5755, %v5841
    %v5848 = vmul.f32 %v5756, %v5841
    %v5849 = vmul.f32 %v5757, %v5841
    %v5850 = vmul.f32 %v5758, %v5841
    %v5851 = vmul.f32 %v5759, %v5841
    %v5852 = vmul.f32 %v5760, %v5841
    %v5853 = vmul.f32 %v5761, %v5841
    %v5854 = vmul.f32 %v5762, %v5841
    %v5855 = vmul.f32 %v5763, %v5841
    %v5856 = vmul.f32 %v5764, %v5841
    %v5857 = vmul.f32 %v5765, %v5841
    %v5858 = vlaneseq
    %v5859 = vshrl.u32 %v5858, 7
    %v5860 = vsub.s32 3, %v5859
    %v5861 = vrot.slane %v5837, %v5860
    %v5862 = vadd.f32 %v5842, %v5861
    %v5863 = vadd.f32 %v5843, %v5861
    %v5864 = vadd.f32 %v5844, %v5861
    %v5865 = vadd.f32 %v5845, %v5861
    %v5866 = vadd.f32 %v5846, %v5861
    %v5867 = vadd.f32 %v5847, %v5861
    %v5868 = vadd.f32 %v5848, %v5861
    %v5869 = vadd.f32 %v5849, %v5861
    %v5870 = vadd.f32 %v5850, %v5861
    %v5871 = vadd.f32 %v5851, %v5861
    %v5872 = vadd.f32 %v5852, %v5861
    %v5873 = vadd.f32 %v5853, %v5861
    %v5874 = vadd.f32 %v5854, %v5861
    %v5875 = vadd.f32 %v5855, %v5861
    %v5876 = vadd.f32 %v5856, %v5861
    %v5877 = vadd.f32 %v5857, %v5861
    %v5878 = vmax.f32 %v5862, 0.0
    %v5879 = vmax.f32 %v5863, 0.0
    %v5880 = vmax.f32 %v5864, 0.0
    %v5881 = vmax.f32 %v5865, 0.0
    %v5882 = vmax.f32 %v5866, 0.0
    %v5883 = vmax.f32 %v5867, 0.0
    %v5884 = vmax.f32 %v5868, 0.0
    %v5885 = vmax.f32 %v5869, 0.0
    %v5886 = vmax.f32 %v5870, 0.0
    %v5887 = vmax.f32 %v5871, 0.0
    %v5888 = vmax.f32 %v5872, 0.0
    %v5889 = vmax.f32 %v5873, 0.0
    %v5890 = vmax.f32 %v5874, 0.0
    %v5891 = vmax.f32 %v5875, 0.0
    %v5892 = vmax.f32 %v5876, 0.0
    %v5893 = vmax.f32 %v5877, 0.0
    %v5894 = vpack.c.bf16 %v5879, %v5878
    %v5895 = vpack.c.bf16 %v5881, %v5880
    %v5896 = vpack.c.bf16 %v5883, %v5882
    %v5897 = vpack.c.bf16 %v5885, %v5884
    %v5898 = vpack.c.bf16 %v5887, %v5886
    %v5899 = vpack.c.bf16 %v5889, %v5888
    %v5900 = vpack.c.bf16 %v5891, %v5890
    %v5901 = vpack.c.bf16 %v5893, %v5892
    %v5902 = vld [vmem:[#allocation10] sm:$0xf]
    %v5903 = vld [vmem:[#allocation10 + $0x4] sm:$0xf]
    %v5904 = vld [vmem:[#allocation10 + $0x8] sm:$0xf]
    %v5905 = vld [vmem:[#allocation10 + $0xc] sm:$0xf]
    %v5906 = vld [vmem:[#allocation10 + $0x10] sm:$0xf]
    %v5907 = vld [vmem:[#allocation10 + $0x14] sm:$0xf]
    %v5908 = vld [vmem:[#allocation10 + $0x18] sm:$0xf]
    %v5909 = vld [vmem:[#allocation10 + $0x1c] sm:$0xf]
    %v5910 = vld [vmem:[#allocation10 + $0x20] sm:$0xf]
    %v5911 = vld [vmem:[#allocation10 + $0x24] sm:$0xf]
    %v5912 = vld [vmem:[#allocation10 + $0x28] sm:$0xf]
    %v5913 = vld [vmem:[#allocation10 + $0x2c] sm:$0xf]
    %v5914 = vld [vmem:[#allocation10 + $0x30] sm:$0xf]
    %v5915 = vld [vmem:[#allocation10 + $0x34] sm:$0xf]
    %v5916 = vld [vmem:[#allocation10 + $0x38] sm:$0xf]
    %v5917 = vld [vmem:[#allocation10 + $0x3c] sm:$0xf]
    %v5934 = vunpack.c.l.b16 %v5902
    %v5935 = vunpack.c.l.b16 %v5903
    %v5936 = vunpack.c.l.b16 %v5904
    %v5937 = vunpack.c.l.b16 %v5905
    %v5938 = vunpack.c.l.b16 %v5906
    %v5939 = vunpack.c.l.b16 %v5907
    %v5940 = vunpack.c.l.b16 %v5908
    %v5941 = vunpack.c.l.b16 %v5909
    %v5942 = vunpack.c.l.b16 %v5910
    %v5943 = vunpack.c.l.b16 %v5911
    %v5944 = vunpack.c.l.b16 %v5912
    %v5945 = vunpack.c.l.b16 %v5913
    %v5946 = vunpack.c.l.b16 %v5914
    %v5947 = vunpack.c.l.b16 %v5915
    %v5948 = vunpack.c.l.b16 %v5916
    %v5949 = vunpack.c.l.b16 %v5917
    %v5950 = vpack.c.b16 %v5935, %v5934
    %v5951 = vpack.c.b16 %v5937, %v5936
    %v5952 = vpack.c.b16 %v5939, %v5938
    %v5953 = vpack.c.b16 %v5941, %v5940
    %v5954 = vpack.c.b16 %v5943, %v5942
    %v5955 = vpack.c.b16 %v5945, %v5944
    %v5956 = vpack.c.b16 %v5947, %v5946
    %v5957 = vpack.c.b16 %v5949, %v5948
    %5966 = vmatprep.subr.bf16.mxu0 0
    %5967 = vmatpush1.bf16.msra.mxu0 %v5950
    %5968 = vmatprep.subr.bf16.mxu0 0
    %5969 = vmatpush1.bf16.msra.mxu0 %v5951
    %5970 = vmatprep.subr.bf16.mxu0 0
    %5971 = vmatpush1.bf16.msra.mxu0 %v5952
    %5972 = vmatprep.subr.bf16.mxu0 0
    %5973 = vmatpush1.bf16.msra.mxu0 %v5953
    %5974 = vmatprep.subr.bf16.mxu0 0
    %5975 = vmatpush1.bf16.msra.mxu0 %v5954
    %5976 = vmatprep.subr.bf16.mxu0 0
    %5977 = vmatpush1.bf16.msra.mxu0 %v5955
    %5978 = vmatprep.subr.bf16.mxu0 0
    %5979 = vmatpush1.bf16.msra.mxu0 %v5956
    %5980 = vmatprep.subr.bf16.mxu0 0
    %5981 = vmatpush1.bf16.msra.mxu0 %v5957
    %5982 = vmatprep.subr.bf16.mxu0 0
    %5983 = vmatpush1.bf16.msra.mxu0 0
    %5984 = vmatprep.subr.bf16.mxu0 0
    %5985 = vmatpush1.bf16.msra.mxu0 0
    %5986 = vmatprep.subr.bf16.mxu0 0
    %5987 = vmatpush1.bf16.msra.mxu0 0
    %5988 = vmatprep.subr.bf16.mxu0 0
    %5989 = vmatpush1.bf16.msra.mxu0 0
    %5990 = vmatprep.subr.bf16.mxu0 0
    %5991 = vmatpush1.bf16.msra.mxu0 0
    %5992 = vmatprep.subr.bf16.mxu0 0
    %5993 = vmatpush1.bf16.msra.mxu0 0
    %5994 = vmatprep.subr.bf16.mxu0 0
    %5995 = vmatpush1.bf16.msra.mxu0 0
    %5996 = vmatprep.subr.bf16.mxu0 0
    %5997 = vmatpush1.bf16.msra.mxu0 0
    %5998 = vmatprep.mubr.bf16.mxu0 0
    %5999 = vmatmul.mubr.bf16.gmra.mrb[0].mxu0 %v5894
    %v6000 = vpop.f32.mrb[0].mxu0
    %v6001 = vadd.f32 0.0, %v6000
    %v6002 = vpop.f32.mrb[0].mxu0
    %v6003 = vpop.f32.mrb[0].mxu0
    %v6004 = vadd.f32 0.0, %v6003
    %v6005 = vpop.f32.mrb[0].mxu0
    %6006 = vmatprep.mubr.bf16.mxu0 0
    %6007 = vmatmul.mubr.bf16.gmra.mrb[0].mxu0 %v5895
    %v6008 = vpop.f32.mrb[0].mxu0
    %v6009 = vadd.f32 0.0, %v6008
    %v6010 = vpop.f32.mrb[0].mxu0
    %v6011 = vpop.f32.mrb[0].mxu0
    %v6012 = vadd.f32 0.0, %v6011
    %v6013 = vpop.f32.mrb[0].mxu0
    %6014 = vmatprep.mubr.bf16.mxu0 0
    %6015 = vmatmul.mubr.bf16.gmra.mrb[0].mxu0 %v5896
    %v6016 = vpop.f32.mrb[0].mxu0
    %v6017 = vadd.f32 0.0, %v6016
    %v6018 = vpop.f32.mrb[0].mxu0
    %v6019 = vpop.f32.mrb[0].mxu0
    %v6020 = vadd.f32 0.0, %v6019
    %v6021 = vpop.f32.mrb[0].mxu0
    %6022 = vmatprep.mubr.bf16.mxu0 0
    %6023 = vmatmul.mubr.bf16.gmra.mrb[0].mxu0 %v5897
    %v6024 = vpop.f32.mrb[0].mxu0
    %v6025 = vadd.f32 0.0, %v6024
    %v6026 = vpop.f32.mrb[0].mxu0
    %v6027 = vpop.f32.mrb[0].mxu0
    %v6028 = vadd.f32 0.0, %v6027
    %v6029 = vpop.f32.mrb[0].mxu0
    %6030 = vmatprep.mubr.bf16.mxu0 0
    %6031 = vmatmul.mubr.bf16.gmra.mrb[0].mxu0 %v5898
    %v6032 = vpop.f32.mrb[0].mxu0
    %v6033 = vadd.f32 0.0, %v6032
    %v6034 = vpop.f32.mrb[0].mxu0
    %v6035 = vpop.f32.mrb[0].mxu0
    %v6036 = vadd.f32 0.0, %v6035
    %v6037 = vpop.f32.mrb[0].mxu0
    %6038 = vmatprep.mubr.bf16.mxu0 0
    %6039 = vmatmul.mubr.bf16.gmra.mrb[0].mxu0 %v5899
    %v6040 = vpop.f32.mrb[0].mxu0
    %v6041 = vadd.f32 0.0, %v6040
    %v6042 = vpop.f32.mrb[0].mxu0
    %v6043 = vpop.f32.mrb[0].mxu0
    %v6044 = vadd.f32 0.0, %v6043
    %v6045 = vpop.f32.mrb[0].mxu0
    %6046 = vmatprep.mubr.bf16.mxu0 0
    %6047 = vmatmul.mubr.bf16.gmra.mrb[0].mxu0 %v5900
    %v6048 = vpop.f32.mrb[0].mxu0
    %v6049 = vadd.f32 0.0, %v6048
    %v6050 = vpop.f32.mrb[0].mxu0
    %v6051 = vpop.f32.mrb[0].mxu0
    %v6052 = vadd.f32 0.0, %v6051
    %v6053 = vpop.f32.mrb[0].mxu0
    %6054 = vmatprep.mubr.bf16.mxu0 0
    %6055 = vmatmul.mubr.bf16.gmra.mrb[0].mxu0 %v5901
    %v6056 = vpop.f32.mrb[0].mxu0
    %v6057 = vadd.f32 0.0, %v6056
    %v6058 = vpop.f32.mrb[0].mxu0
    %v6059 = vpop.f32.mrb[0].mxu0
    %v6060 = vadd.f32 0.0, %v6059
    %v6061 = vpop.f32.mrb[0].mxu0
    %6062 = vdwg.mxu0
    %v6063 = vadd.f32 %v6001, %v6004
    %v6064 = vadd.f32 %v6063, %v6009
    %v6065 = vadd.f32 %v6064, %v6012
    %v6066 = vadd.f32 %v6065, %v6017
    %v6067 = vadd.f32 %v6066, %v6020
    %v6068 = vadd.f32 %v6067, %v6025
    %v6069 = vadd.f32 %v6068, %v6028
    %v6070 = vadd.f32 %v6069, %v6033
    %v6071 = vadd.f32 %v6070, %v6036
    %v6072 = vadd.f32 %v6071, %v6041
    %v6073 = vadd.f32 %v6072, %v6044
    %v6074 = vadd.f32 %v6073, %v6049
    %v6075 = vadd.f32 %v6074, %v6052
    %v6076 = vadd.f32 %v6075, %v6057
    %v6077 = vadd.f32 %v6076, %v6060
    %v6078 = vrot.slane %v6077, 4
    %v6079 = vadd.f32 %v6077, %v6078
    %v6080 = vrot.slane %v6079, 2
    %v6081 = vadd.f32 %v6079, %v6080
    %v6082 = vrot.slane %v6081, 1
    %v6083 = vadd.f32 %v6081, %v6082
    %v6084 = vmul.f32 %v6083, %v5787
    %v6085 = vmul.f32 %v6001, %v6001
    %v6086 = vmul.f32 %v6004, %v6004
    %v6087 = vmul.f32 %v6009, %v6009
    %v6088 = vmul.f32 %v6012, %v6012
    %v6089 = vmul.f32 %v6017, %v6017
    %v6090 = vmul.f32 %v6020, %v6020
    %v6091 = vmul.f32 %v6025, %v6025
    %v6092 = vmul.f32 %v6028, %v6028
    %v6093 = vmul.f32 %v6033, %v6033
    %v6094 = vmul.f32 %v6036, %v6036
    %v6095 = vmul.f32 %v6041, %v6041
    %v6096 = vmul.f32 %v6044, %v6044
    %v6097 = vmul.f32 %v6049, %v6049
    %v6098 = vmul.f32 %v6052, %v6052
    %v6099 = vmul.f32 %v6057, %v6057
    %v6100 = vmul.f32 %v6060, %v6060
    %v6101 = vadd.f32 %v6085, %v6086
    %v6102 = vadd.f32 %v6101, %v6087
    %v6103 = vadd.f32 %v6102, %v6088
    %v6104 = vadd.f32 %v6103, %v6089
    %v6105 = vadd.f32 %v6104, %v6090
    %v6106 = vadd.f32 %v6105, %v6091
    %v6107 = vadd.f32 %v6106, %v6092
    %v6108 = vadd.f32 %v6107, %v6093
    %v6109 = vadd.f32 %v6108, %v6094
    %v6110 = vadd.f32 %v6109, %v6095
    %v6111 = vadd.f32 %v6110, %v6096
    %v6112 = vadd.f32 %v6111, %v6097
    %v6113 = vadd.f32 %v6112, %v6098
    %v6114 = vadd.f32 %v6113, %v6099
    %v6115 = vadd.f32 %v6114, %v6100
    %v6116 = vrot.slane %v6115, 4
    %v6117 = vadd.f32 %v6115, %v6116
    %v6118 = vrot.slane %v6117, 2
    %v6119 = vadd.f32 %v6117, %v6118
    %v6120 = vrot.slane %v6119, 1
    %v6121 = vadd.f32 %v6119, %v6120
    %v6122 = vmul.f32 %v6121, %v5787
    %v6123 = vmul.f32 %v6084, %v6084
    %v6124 = vsub.f32 %v6122, %v6123
    %v6125 = vmax.f32 %v6124, 0.0
    %v6126 = vadd.f32 %v6125, 1e-05
    %v6127 = vrsqrt.pop %v6126
    %v6128 = vmul.f32 %v121, %v6127
    %v6129 = vmul.f32 %v6084, %v6128
    %v6131 = vrot.slane %v6129, 7
    %v6133 = vsub.f32 %v121, %v6131
    %v6134 = vlaneseq
    %v6135 = vshrl.u32 %v6134, 7
    %v6136 = vsub.s32 4, %v6135
    %v6137 = vrot.slane %v6128, %v6136
    %v6138 = vmul.f32 %v6001, %v6137
    %v6139 = vmul.f32 %v6004, %v6137
    %v6140 = vmul.f32 %v6009, %v6137
    %v6141 = vmul.f32 %v6012, %v6137
    %v6142 = vmul.f32 %v6017, %v6137
    %v6143 = vmul.f32 %v6020, %v6137
    %v6144 = vmul.f32 %v6025, %v6137
    %v6145 = vmul.f32 %v6028, %v6137
    %v6146 = vmul.f32 %v6033, %v6137
    %v6147 = vmul.f32 %v6036, %v6137
    %v6148 = vmul.f32 %v6041, %v6137
    %v6149 = vmul.f32 %v6044, %v6137
    %v6150 = vmul.f32 %v6049, %v6137
    %v6151 = vmul.f32 %v6052, %v6137
    %v6152 = vmul.f32 %v6057, %v6137
    %v6153 = vmul.f32 %v6060, %v6137
    %v6154 = vlaneseq
    %v6155 = vshrl.u32 %v6154, 7
    %v6156 = vsub.s32 5, %v6155
    %v6157 = vrot.slane %v6133, %v6156
    %v6158 = vadd.f32 %v6138, %v6157
    %v6159 = vadd.f32 %v6139, %v6157
    %v6160 = vadd.f32 %v6140, %v6157
    %v6161 = vadd.f32 %v6141, %v6157
    %v6162 = vadd.f32 %v6142, %v6157
    %v6163 = vadd.f32 %v6143, %v6157
    %v6164 = vadd.f32 %v6144, %v6157
    %v6165 = vadd.f32 %v6145, %v6157
    %v6166 = vadd.f32 %v6146, %v6157
    %v6167 = vadd.f32 %v6147, %v6157
    %v6168 = vadd.f32 %v6148, %v6157
    %v6169 = vadd.f32 %v6149, %v6157
    %v6170 = vadd.f32 %v6150, %v6157
    %v6171 = vadd.f32 %v6151, %v6157
    %v6172 = vadd.f32 %v6152, %v6157
    %v6173 = vadd.f32 %v6153, %v6157
    %v6174 = vld [vmem:[#allocation8 + $0x400] sm:$0xff]
    %v6175 = vld [vmem:[#allocation8 + $0x408] sm:$0xff]
    %v6176 = vld [vmem:[#allocation8 + $0x410] sm:$0xff]
    %v6177 = vld [vmem:[#allocation8 + $0x418] sm:$0xff]
    %v6178 = vld [vmem:[#allocation8 + $0x420] sm:$0xff]
    %v6179 = vld [vmem:[#allocation8 + $0x428] sm:$0xff]
    %v6180 = vld [vmem:[#allocation8 + $0x430] sm:$0xff]
    %v6181 = vld [vmem:[#allocation8 + $0x438] sm:$0xff]
    %v6182 = vld [vmem:[#allocation8 + $0x440] sm:$0xff]
    %v6183 = vld [vmem:[#allocation8 + $0x448] sm:$0xff]
    %v6184 = vld [vmem:[#allocation8 + $0x450] sm:$0xff]
    %v6185 = vld [vmem:[#allocation8 + $0x458] sm:$0xff]
    %v6186 = vld [vmem:[#allocation8 + $0x460] sm:$0xff]
    %v6187 = vld [vmem:[#allocation8 + $0x468] sm:$0xff]
    %v6188 = vld [vmem:[#allocation8 + $0x470] sm:$0xff]
    %v6189 = vld [vmem:[#allocation8 + $0x478] sm:$0xff]
    %v6190 = vld [vmem:[#allocation8 + $0x480] sm:$0xff]
    %v6191 = vld [vmem:[#allocation8 + $0x488] sm:$0xff]
    %v6192 = vld [vmem:[#allocation8 + $0x490] sm:$0xff]
    %v6193 = vld [vmem:[#allocation8 + $0x498] sm:$0xff]
    %v6194 = vld [vmem:[#allocation8 + $0x4a0] sm:$0xff]
    %v6195 = vld [vmem:[#allocation8 + $0x4a8] sm:$0xff]
    %v6196 = vld [vmem:[#allocation8 + $0x4b0] sm:$0xff]
    %v6197 = vld [vmem:[#allocation8 + $0x4b8] sm:$0xff]
    %v6198 = vld [vmem:[#allocation8 + $0x4c0] sm:$0xff]
    %v6199 = vld [vmem:[#allocation8 + $0x4c8] sm:$0xff]
    %v6200 = vld [vmem:[#allocation8 + $0x4d0] sm:$0xff]
    %v6201 = vld [vmem:[#allocation8 + $0x4d8] sm:$0xff]
    %v6202 = vld [vmem:[#allocation8 + $0x4e0] sm:$0xff]
    %v6203 = vld [vmem:[#allocation8 + $0x4e8] sm:$0xff]
    %v6204 = vld [vmem:[#allocation8 + $0x4f0] sm:$0xff]
    %v6205 = vld [vmem:[#allocation8 + $0x4f8] sm:$0xff]
    %v6238 = vunpack.c.l.b16 %v6174
    %v6239 = vunpack.c.h.b16 %v6174
    %v6240 = vunpack.c.l.b16 %v6175
    %v6241 = vunpack.c.h.b16 %v6175
    %v6242 = vunpack.c.l.b16 %v6176
    %v6243 = vunpack.c.h.b16 %v6176
    %v6244 = vunpack.c.l.b16 %v6177
    %v6245 = vunpack.c.h.b16 %v6177
    %v6246 = vunpack.c.l.b16 %v6178
    %v6247 = vunpack.c.h.b16 %v6178
    %v6248 = vunpack.c.l.b16 %v6179
    %v6249 = vunpack.c.h.b16 %v6179
    %v6250 = vunpack.c.l.b16 %v6180
    %v6251 = vunpack.c.h.b16 %v6180
    %v6252 = vunpack.c.l.b16 %v6181
    %v6253 = vunpack.c.h.b16 %v6181
    %v6254 = vunpack.c.l.b16 %v6182
    %v6255 = vunpack.c.h.b16 %v6182
    %v6256 = vunpack.c.l.b16 %v6183
    %v6257 = vunpack.c.h.b16 %v6183
    %v6258 = vunpack.c.l.b16 %v6184
    %v6259 = vunpack.c.h.b16 %v6184
    %v6260 = vunpack.c.l.b16 %v6185
    %v6261 = vunpack.c.h.b16 %v6185
    %v6262 = vunpack.c.l.b16 %v6186
    %v6263 = vunpack.c.h.b16 %v6186
    %v6264 = vunpack.c.l.b16 %v6187
    %v6265 = vunpack.c.h.b16 %v6187
    %v6266 = vunpack.c.l.b16 %v6188
    %v6267 = vunpack.c.h.b16 %v6188
    %v6268 = vunpack.c.l.b16 %v6189
    %v6269 = vunpack.c.h.b16 %v6189
    %v6270 = vunpack.c.l.b16 %v6190
    %v6271 = vunpack.c.h.b16 %v6190
    %v6272 = vunpack.c.l.b16 %v6191
    %v6273 = vunpack.c.h.b16 %v6191
    %v6274 = vunpack.c.l.b16 %v6192
    %v6275 = vunpack.c.h.b16 %v6192
    %v6276 = vunpack.c.l.b16 %v6193
    %v6277 = vunpack.c.h.b16 %v6193
    %v6278 = vunpack.c.l.b16 %v6194
    %v6279 = vunpack.c.h.b16 %v6194
    %v6280 = vunpack.c.l.b16 %v6195
    %v6281 = vunpack.c.h.b16 %v6195
    %v6282 = vunpack.c.l.b16 %v6196
    %v6283 = vunpack.c.h.b16 %v6196
    %v6284 = vunpack.c.l.b16 %v6197
    %v6285 = vunpack.c.h.b16 %v6197
    %v6286 = vunpack.c.l.b16 %v6198
    %v6287 = vunpack.c.h.b16 %v6198
    %v6288 = vunpack.c.l.b16 %v6199
    %v6289 = vunpack.c.h.b16 %v6199
    %v6290 = vunpack.c.l.b16 %v6200
    %v6291 = vunpack.c.h.b16 %v6200
    %v6292 = vunpack.c.l.b16 %v6201
    %v6293 = vunpack.c.h.b16 %v6201
    %v6294 = vunpack.c.l.b16 %v6202
    %v6295 = vunpack.c.h.b16 %v6202
    %v6296 = vunpack.c.l.b16 %v6203
    %v6297 = vunpack.c.h.b16 %v6203
    %v6298 = vunpack.c.l.b16 %v6204
    %v6299 = vunpack.c.h.b16 %v6204
    %v6300 = vunpack.c.l.b16 %v6205
    %v6301 = vunpack.c.h.b16 %v6205
    %v6302 = vpack.c.b16 %v6242, %v6238
    %v6303 = vpack.c.b16 %v6243, %v6239
    %v6304 = vpack.c.b16 %v6244, %v6240
    %v6305 = vpack.c.b16 %v6245, %v6241
    %v6306 = vpack.c.b16 %v6250, %v6246
    %v6307 = vpack.c.b16 %v6251, %v6247
    %v6308 = vpack.c.b16 %v6252, %v6248
    %v6309 = vpack.c.b16 %v6253, %v6249
    %v6310 = vpack.c.b16 %v6258, %v6254
    %v6311 = vpack.c.b16 %v6259, %v6255
    %v6312 = vpack.c.b16 %v6260, %v6256
    %v6313 = vpack.c.b16 %v6261, %v6257
    %v6314 = vpack.c.b16 %v6266, %v6262
    %v6315 = vpack.c.b16 %v6267, %v6263
    %v6316 = vpack.c.b16 %v6268, %v6264
    %v6317 = vpack.c.b16 %v6269, %v6265
    %v6318 = vpack.c.b16 %v6274, %v6270
    %v6319 = vpack.c.b16 %v6275, %v6271
    %v6320 = vpack.c.b16 %v6276, %v6272
    %v6321 = vpack.c.b16 %v6277, %v6273
    %v6322 = vpack.c.b16 %v6282, %v6278
    %v6323 = vpack.c.b16 %v6283, %v6279
    %v6324 = vpack.c.b16 %v6284, %v6280
    %v6325 = vpack.c.b16 %v6285, %v6281
    %v6326 = vpack.c.b16 %v6290, %v6286
    %v6327 = vpack.c.b16 %v6291, %v6287
    %v6328 = vpack.c.b16 %v6292, %v6288
    %v6329 = vpack.c.b16 %v6293, %v6289
    %v6330 = vpack.c.b16 %v6298, %v6294
    %v6331 = vpack.c.b16 %v6299, %v6295
    %v6332 = vpack.c.b16 %v6300, %v6296
    %v6333 = vpack.c.b16 %v6301, %v6297
    %6366 = vmatprep.subr.bf16.mxu0 0
    %6367 = vmatpush1.bf16.msra.mxu0 %v330
    %6368 = vmatprep.subr.bf16.mxu0 0
    %6369 = vmatpush1.bf16.msra.mxu0 %v331
    %6370 = vmatprep.subr.bf16.mxu0 0
    %6371 = vmatpush1.bf16.msra.mxu0 %v332
    %6372 = vmatprep.subr.bf16.mxu0 0
    %6373 = vmatpush1.bf16.msra.mxu0 %v333
    %6374 = vmatprep.subr.bf16.mxu0 0
    %6375 = vmatpush1.bf16.msra.mxu0 %v334
    %6376 = vmatprep.subr.bf16.mxu0 0
    %6377 = vmatpush1.bf16.msra.mxu0 %v335
    %6378 = vmatprep.subr.bf16.mxu0 0
    %6379 = vmatpush1.bf16.msra.mxu0 %v336
    %6380 = vmatprep.subr.bf16.mxu0 0
    %6381 = vmatpush1.bf16.msra.mxu0 %v337
    %6382 = vmatprep.subr.bf16.mxu0 0
    %6383 = vmatpush1.bf16.msra.mxu0 %v338
    %6384 = vmatprep.subr.bf16.mxu0 0
    %6385 = vmatpush1.bf16.msra.mxu0 %v339
    %6386 = vmatprep.subr.bf16.mxu0 0
    %6387 = vmatpush1.bf16.msra.mxu0 %v340
    %6388 = vmatprep.subr.bf16.mxu0 0
    %6389 = vmatpush1.bf16.msra.mxu0 %v341
    %6390 = vmatprep.subr.bf16.mxu0 0
    %6391 = vmatpush1.bf16.msra.mxu0 %v342
    %6392 = vmatprep.subr.bf16.mxu0 0
    %6393 = vmatpush1.bf16.msra.mxu0 %v343
    %6394 = vmatprep.subr.bf16.mxu0 0
    %6395 = vmatpush1.bf16.msra.mxu0 %v344
    %6396 = vmatprep.subr.bf16.mxu0 0
    %6397 = vmatpush1.bf16.msra.mxu0 %v345
    %6398 = vmatprep.mubr.bf16.mxu0 %v6303
    %6399 = vmatmul.mubr.bf16.gmra.mrb[0].mxu0 %v6302
    %v6400 = vpop.f32.mrb[0].mxu0
    %v6401 = vadd.f32 0.0, %v6400
    %v6402 = vpop.f32.mrb[0].mxu0
    %v6403 = vpop.f32.mrb[0].mxu0
    %v6404 = vadd.f32 0.0, %v6403
    %v6405 = vpop.f32.mrb[0].mxu0
    %6406 = vmatprep.mubr.bf16.mxu0 %v6307
    %6407 = vmatmul.mubr.bf16.gmra.mrb[0].mxu0 %v6306
    %v6408 = vpop.f32.mrb[0].mxu0
    %v6409 = vadd.f32 0.0, %v6408
    %v6410 = vpop.f32.mrb[0].mxu0
    %v6411 = vpop.f32.mrb[0].mxu0
    %v6412 = vadd.f32 0.0, %v6411
    %v6413 = vpop.f32.mrb[0].mxu0
    %6414 = vmatprep.mubr.bf16.mxu0 %v6311
    %6415 = vmatmul.mubr.bf16.gmra.mrb[0].mxu0 %v6310
    %v6416 = vpop.f32.mrb[0].mxu0
    %v6417 = vadd.f32 0.0, %v6416
    %v6418 = vpop.f32.mrb[0].mxu0
    %v6419 = vpop.f32.mrb[0].mxu0
    %v6420 = vadd.f32 0.0, %v6419
    %v6421 = vpop.f32.mrb[0].mxu0
    %6422 = vmatprep.mubr.bf16.mxu0 %v6315
    %6423 = vmatmul.mubr.bf16.gmra.mrb[0].mxu0 %v6314
    %v6424 = vpop.f32.mrb[0].mxu0
    %v6425 = vadd.f32 0.0, %v6424
    %v6426 = vpop.f32.mrb[0].mxu0
    %v6427 = vpop.f32.mrb[0].mxu0
    %v6428 = vadd.f32 0.0, %v6427
    %v6429 = vpop.f32.mrb[0].mxu0
    %6430 = vmatprep.mubr.bf16.mxu0 %v6319
    %6431 = vmatmul.mubr.bf16.gmra.mrb[0].mxu0 %v6318
    %v6432 = vpop.f32.mrb[0].mxu0
    %v6433 = vadd.f32 0.0, %v6432
    %v6434 = vpop.f32.mrb[0].mxu0
    %v6435 = vpop.f32.mrb[0].mxu0
    %v6436 = vadd.f32 0.0, %v6435
    %v6437 = vpop.f32.mrb[0].mxu0
    %6438 = vmatprep.mubr.bf16.mxu0 %v6323
    %6439 = vmatmul.mubr.bf16.gmra.mrb[0].mxu0 %v6322
    %v6440 = vpop.f32.mrb[0].mxu0
    %v6441 = vadd.f32 0.0, %v6440
    %v6442 = vpop.f32.mrb[0].mxu0
    %v6443 = vpop.f32.mrb[0].mxu0
    %v6444 = vadd.f32 0.0, %v6443
    %v6445 = vpop.f32.mrb[0].mxu0
    %6446 = vmatprep.mubr.bf16.mxu0 %v6327
    %6447 = vmatmul.mubr.bf16.gmra.mrb[0].mxu0 %v6326
    %v6448 = vpop.f32.mrb[0].mxu0
    %v6449 = vadd.f32 0.0, %v6448
    %v6450 = vpop.f32.mrb[0].mxu0
    %v6451 = vpop.f32.mrb[0].mxu0
    %v6452 = vadd.f32 0.0, %v6451
    %v6453 = vpop.f32.mrb[0].mxu0
    %6454 = vmatprep.mubr.bf16.mxu0 %v6331
    %6455 = vmatmul.mubr.bf16.gmra.mrb[0].mxu0 %v6330
    %v6456 = vpop.f32.mrb[0].mxu0
    %v6457 = vadd.f32 0.0, %v6456
    %v6458 = vpop.f32.mrb[0].mxu0
    %v6459 = vpop.f32.mrb[0].mxu0
    %v6460 = vadd.f32 0.0, %v6459
    %v6461 = vpop.f32.mrb[0].mxu0
    %6462 = vdwg.mxu0
    %6463 = vmatprep.subr.bf16.mxu0 0
    %6464 = vmatpush1.bf16.msra.mxu0 %v346
    %6465 = vmatprep.subr.bf16.mxu0 0
    %6466 = vmatpush1.bf16.msra.mxu0 %v347
    %6467 = vmatprep.subr.bf16.mxu0 0
    %6468 = vmatpush1.bf16.msra.mxu0 %v348
    %6469 = vmatprep.subr.bf16.mxu0 0
    %6470 = vmatpush1.bf16.msra.mxu0 %v349
    %6471 = vmatprep.subr.bf16.mxu0 0
    %6472 = vmatpush1.bf16.msra.mxu0 %v350
    %6473 = vmatprep.subr.bf16.mxu0 0
    %6474 = vmatpush1.bf16.msra.mxu0 %v351
    %6475 = vmatprep.subr.bf16.mxu0 0
    %6476 = vmatpush1.bf16.msra.mxu0 %v352
    %6477 = vmatprep.subr.bf16.mxu0 0
    %6478 = vmatpush1.bf16.msra.mxu0 %v353
    %6479 = vmatprep.subr.bf16.mxu0 0
    %6480 = vmatpush1.bf16.msra.mxu0 %v354
    %6481 = vmatprep.subr.bf16.mxu0 0
    %6482 = vmatpush1.bf16.msra.mxu0 %v355
    %6483 = vmatprep.subr.bf16.mxu0 0
    %6484 = vmatpush1.bf16.msra.mxu0 %v356
    %6485 = vmatprep.subr.bf16.mxu0 0
    %6486 = vmatpush1.bf16.msra.mxu0 %v357
    %6487 = vmatprep.subr.bf16.mxu0 0
    %6488 = vmatpush1.bf16.msra.mxu0 %v358
    %6489 = vmatprep.subr.bf16.mxu0 0
    %6490 = vmatpush1.bf16.msra.mxu0 %v359
    %6491 = vmatprep.subr.bf16.mxu0 0
    %6492 = vmatpush1.bf16.msra.mxu0 %v360
    %6493 = vmatprep.subr.bf16.mxu0 0
    %6494 = vmatpush1.bf16.msra.mxu0 %v361
    %6495 = vmatprep.mubr.bf16.mxu0 %v6305
    %6496 = vmatmul.mubr.bf16.gmra.mrb[0].mxu0 %v6304
    %v6497 = vpop.f32.mrb[0].mxu0
    %v6498 = vadd.f32 %v6401, %v6497
    %v6499 = vpop.f32.mrb[0].mxu0
    %v6500 = vpop.f32.mrb[0].mxu0
    %v6501 = vadd.f32 %v6404, %v6500
    %v6502 = vpop.f32.mrb[0].mxu0
    %6503 = vmatprep.mubr.bf16.mxu0 %v6309
    %6504 = vmatmul.mubr.bf16.gmra.mrb[0].mxu0 %v6308
    %v6505 = vpop.f32.mrb[0].mxu0
    %v6506 = vadd.f32 %v6409, %v6505
    %v6507 = vpop.f32.mrb[0].mxu0
    %v6508 = vpop.f32.mrb[0].mxu0
    %v6509 = vadd.f32 %v6412, %v6508
    %v6510 = vpop.f32.mrb[0].mxu0
    %6511 = vmatprep.mubr.bf16.mxu0 %v6313
    %6512 = vmatmul.mubr.bf16.gmra.mrb[0].mxu0 %v6312
    %v6513 = vpop.f32.mrb[0].mxu0
    %v6514 = vadd.f32 %v6417, %v6513
    %v6515 = vpop.f32.mrb[0].mxu0
    %v6516 = vpop.f32.mrb[0].mxu0
    %v6517 = vadd.f32 %v6420, %v6516
    %v6518 = vpop.f32.mrb[0].mxu0
    %6519 = vmatprep.mubr.bf16.mxu0 %v6317
    %6520 = vmatmul.mubr.bf16.gmra.mrb[0].mxu0 %v6316
    %v6521 = vpop.f32.mrb[0].mxu0
    %v6522 = vadd.f32 %v6425, %v6521
    %v6523 = vpop.f32.mrb[0].mxu0
    %v6524 = vpop.f32.mrb[0].mxu0
    %v6525 = vadd.f32 %v6428, %v6524
    %v6526 = vpop.f32.mrb[0].mxu0
    %6527 = vmatprep.mubr.bf16.mxu0 %v6321
    %6528 = vmatmul.mubr.bf16.gmra.mrb[0].mxu0 %v6320
    %v6529 = vpop.f32.mrb[0].mxu0
    %v6530 = vadd.f32 %v6433, %v6529
    %v6531 = vpop.f32.mrb[0].mxu0
    %v6532 = vpop.f32.mrb[0].mxu0
    %v6533 = vadd.f32 %v6436, %v6532
    %v6534 = vpop.f32.mrb[0].mxu0
    %6535 = vmatprep.mubr.bf16.mxu0 %v6325
    %6536 = vmatmul.mubr.bf16.gmra.mrb[0].mxu0 %v6324
    %v6537 = vpop.f32.mrb[0].mxu0
    %v6538 = vadd.f32 %v6441, %v6537
    %v6539 = vpop.f32.mrb[0].mxu0
    %v6540 = vpop.f32.mrb[0].mxu0
    %v6541 = vadd.f32 %v6444, %v6540
    %v6542 = vpop.f32.mrb[0].mxu0
    %6543 = vmatprep.mubr.bf16.mxu0 %v6329
    %6544 = vmatmul.mubr.bf16.gmra.mrb[0].mxu0 %v6328
    %v6545 = vpop.f32.mrb[0].mxu0
    %v6546 = vadd.f32 %v6449, %v6545
    %v6547 = vpop.f32.mrb[0].mxu0
    %v6548 = vpop.f32.mrb[0].mxu0
    %v6549 = vadd.f32 %v6452, %v6548
    %v6550 = vpop.f32.mrb[0].mxu0
    %6551 = vmatprep.mubr.bf16.mxu0 %v6333
    %6552 = vmatmul.mubr.bf16.gmra.mrb[0].mxu0 %v6332
    %v6553 = vpop.f32.mrb[0].mxu0
    %v6554 = vadd.f32 %v6457, %v6553
    %v6555 = vpop.f32.mrb[0].mxu0
    %v6556 = vpop.f32.mrb[0].mxu0
    %v6557 = vadd.f32 %v6460, %v6556
    %v6558 = vpop.f32.mrb[0].mxu0
    %6559 = vdwg.mxu0
    %v6560 = vpack.c.bf16 %v6501, %v6498
    %v6561 = vpack.c.bf16 %v6509, %v6506
    %v6562 = vpack.c.bf16 %v6517, %v6514
    %v6563 = vpack.c.bf16 %v6525, %v6522
    %v6564 = vpack.c.bf16 %v6533, %v6530
    %v6565 = vpack.c.bf16 %v6541, %v6538
    %v6566 = vpack.c.bf16 %v6549, %v6546
    %v6567 = vpack.c.bf16 %v6557, %v6554
    %v6568 = vld [vmem:[#allocation11] sm:$0xf]
    %v6569 = vld [vmem:[#allocation11 + $0x4] sm:$0xf]
    %v6570 = vld [vmem:[#allocation11 + $0x8] sm:$0xf]
    %v6571 = vld [vmem:[#allocation11 + $0xc] sm:$0xf]
    %v6572 = vld [vmem:[#allocation11 + $0x10] sm:$0xf]
    %v6573 = vld [vmem:[#allocation11 + $0x14] sm:$0xf]
    %v6574 = vld [vmem:[#allocation11 + $0x18] sm:$0xf]
    %v6575 = vld [vmem:[#allocation11 + $0x1c] sm:$0xf]
    %v6576 = vld [vmem:[#allocation11 + $0x20] sm:$0xf]
    %v6577 = vld [vmem:[#allocation11 + $0x24] sm:$0xf]
    %v6578 = vld [vmem:[#allocation11 + $0x28] sm:$0xf]
    %v6579 = vld [vmem:[#allocation11 + $0x2c] sm:$0xf]
    %v6580 = vld [vmem:[#allocation11 + $0x30] sm:$0xf]
    %v6581 = vld [vmem:[#allocation11 + $0x34] sm:$0xf]
    %v6582 = vld [vmem:[#allocation11 + $0x38] sm:$0xf]
    %v6583 = vld [vmem:[#allocation11 + $0x3c] sm:$0xf]
    %v6600 = vunpack.c.l.b16 %v6568
    %v6601 = vunpack.c.l.b16 %v6569
    %v6602 = vunpack.c.l.b16 %v6570
    %v6603 = vunpack.c.l.b16 %v6571
    %v6604 = vunpack.c.l.b16 %v6572
    %v6605 = vunpack.c.l.b16 %v6573
    %v6606 = vunpack.c.l.b16 %v6574
    %v6607 = vunpack.c.l.b16 %v6575
    %v6608 = vunpack.c.l.b16 %v6576
    %v6609 = vunpack.c.l.b16 %v6577
    %v6610 = vunpack.c.l.b16 %v6578
    %v6611 = vunpack.c.l.b16 %v6579
    %v6612 = vunpack.c.l.b16 %v6580
    %v6613 = vunpack.c.l.b16 %v6581
    %v6614 = vunpack.c.l.b16 %v6582
    %v6615 = vunpack.c.l.b16 %v6583
    %v6616 = vpack.c.b16 %v6601, %v6600
    %v6617 = vpack.c.b16 %v6603, %v6602
    %v6618 = vpack.c.b16 %v6605, %v6604
    %v6619 = vpack.c.b16 %v6607, %v6606
    %v6620 = vpack.c.b16 %v6609, %v6608
    %v6621 = vpack.c.b16 %v6611, %v6610
    %v6622 = vpack.c.b16 %v6613, %v6612
    %v6623 = vpack.c.b16 %v6615, %v6614
    %6632 = vmatprep.subr.bf16.mxu0 0
    %6633 = vmatpush1.bf16.msra.mxu0 %v6616
    %6634 = vmatprep.subr.bf16.mxu0 0
    %6635 = vmatpush1.bf16.msra.mxu0 %v6617
    %6636 = vmatprep.subr.bf16.mxu0 0
    %6637 = vmatpush1.bf16.msra.mxu0 %v6618
    %6638 = vmatprep.subr.bf16.mxu0 0
    %6639 = vmatpush1.bf16.msra.mxu0 %v6619
    %6640 = vmatprep.subr.bf16.mxu0 0
    %6641 = vmatpush1.bf16.msra.mxu0 %v6620
    %6642 = vmatprep.subr.bf16.mxu0 0
    %6643 = vmatpush1.bf16.msra.mxu0 %v6621
    %6644 = vmatprep.subr.bf16.mxu0 0
    %6645 = vmatpush1.bf16.msra.mxu0 %v6622
    %6646 = vmatprep.subr.bf16.mxu0 0
    %6647 = vmatpush1.bf16.msra.mxu0 %v6623
    %6648 = vmatprep.subr.bf16.mxu0 0
    %6649 = vmatpush1.bf16.msra.mxu0 0
    %6650 = vmatprep.subr.bf16.mxu0 0
    %6651 = vmatpush1.bf16.msra.mxu0 0
    %6652 = vmatprep.subr.bf16.mxu0 0
    %6653 = vmatpush1.bf16.msra.mxu0 0
    %6654 = vmatprep.subr.bf16.mxu0 0
    %6655 = vmatpush1.bf16.msra.mxu0 0
    %6656 = vmatprep.subr.bf16.mxu0 0
    %6657 = vmatpush1.bf16.msra.mxu0 0
    %6658 = vmatprep.subr.bf16.mxu0 0
    %6659 = vmatpush1.bf16.msra.mxu0 0
    %6660 = vmatprep.subr.bf16.mxu0 0
    %6661 = vmatpush1.bf16.msra.mxu0 0
    %6662 = vmatprep.subr.bf16.mxu0 0
    %6663 = vmatpush1.bf16.msra.mxu0 0
    %6664 = vmatprep.mubr.bf16.mxu0 0
    %6665 = vmatmul.mubr.bf16.gmra.mrb[0].mxu0 %v6560
    %v6666 = vpop.f32.mrb[0].mxu0
    %v6667 = vadd.f32 0.0, %v6666
    %v6668 = vpop.f32.mrb[0].mxu0
    %v6669 = vpop.f32.mrb[0].mxu0
    %v6670 = vadd.f32 0.0, %v6669
    %v6671 = vpop.f32.mrb[0].mxu0
    %6672 = vmatprep.mubr.bf16.mxu0 0
    %6673 = vmatmul.mubr.bf16.gmra.mrb[0].mxu0 %v6561
    %v6674 = vpop.f32.mrb[0].mxu0
    %v6675 = vadd.f32 0.0, %v6674
    %v6676 = vpop.f32.mrb[0].mxu0
    %v6677 = vpop.f32.mrb[0].mxu0
    %v6678 = vadd.f32 0.0, %v6677
    %v6679 = vpop.f32.mrb[0].mxu0
    %6680 = vmatprep.mubr.bf16.mxu0 0
    %6681 = vmatmul.mubr.bf16.gmra.mrb[0].mxu0 %v6562
    %v6682 = vpop.f32.mrb[0].mxu0
    %v6683 = vadd.f32 0.0, %v6682
    %v6684 = vpop.f32.mrb[0].mxu0
    %v6685 = vpop.f32.mrb[0].mxu0
    %v6686 = vadd.f32 0.0, %v6685
    %v6687 = vpop.f32.mrb[0].mxu0
    %6688 = vmatprep.mubr.bf16.mxu0 0
    %6689 = vmatmul.mubr.bf16.gmra.mrb[0].mxu0 %v6563
    %v6690 = vpop.f32.mrb[0].mxu0
    %v6691 = vadd.f32 0.0, %v6690
    %v6692 = vpop.f32.mrb[0].mxu0
    %v6693 = vpop.f32.mrb[0].mxu0
    %v6694 = vadd.f32 0.0, %v6693
    %v6695 = vpop.f32.mrb[0].mxu0
    %6696 = vmatprep.mubr.bf16.mxu0 0
    %6697 = vmatmul.mubr.bf16.gmra.mrb[0].mxu0 %v6564
    %v6698 = vpop.f32.mrb[0].mxu0
    %v6699 = vadd.f32 0.0, %v6698
    %v6700 = vpop.f32.mrb[0].mxu0
    %v6701 = vpop.f32.mrb[0].mxu0
    %v6702 = vadd.f32 0.0, %v6701
    %v6703 = vpop.f32.mrb[0].mxu0
    %6704 = vmatprep.mubr.bf16.mxu0 0
    %6705 = vmatmul.mubr.bf16.gmra.mrb[0].mxu0 %v6565
    %v6706 = vpop.f32.mrb[0].mxu0
    %v6707 = vadd.f32 0.0, %v6706
    %v6708 = vpop.f32.mrb[0].mxu0
    %v6709 = vpop.f32.mrb[0].mxu0
    %v6710 = vadd.f32 0.0, %v6709
    %v6711 = vpop.f32.mrb[0].mxu0
    %6712 = vmatprep.mubr.bf16.mxu0 0
    %6713 = vmatmul.mubr.bf16.gmra.mrb[0].mxu0 %v6566
    %v6714 = vpop.f32.mrb[0].mxu0
    %v6715 = vadd.f32 0.0, %v6714
    %v6716 = vpop.f32.mrb[0].mxu0
    %v6717 = vpop.f32.mrb[0].mxu0
    %v6718 = vadd.f32 0.0, %v6717
    %v6719 = vpop.f32.mrb[0].mxu0
    %6720 = vmatprep.mubr.bf16.mxu0 0
    %6721 = vmatmul.mubr.bf16.gmra.mrb[0].mxu0 %v6567
    %v6722 = vpop.f32.mrb[0].mxu0
    %v6723 = vadd.f32 0.0, %v6722
    %v6724 = vpop.f32.mrb[0].mxu0
    %v6725 = vpop.f32.mrb[0].mxu0
    %v6726 = vadd.f32 0.0, %v6725
    %v6727 = vpop.f32.mrb[0].mxu0
    %6728 = vdwg.mxu0
    %v6729 = vadd.f32 %v6667, %v6670
    %v6730 = vadd.f32 %v6729, %v6675
    %v6731 = vadd.f32 %v6730, %v6678
    %v6732 = vadd.f32 %v6731, %v6683
    %v6733 = vadd.f32 %v6732, %v6686
    %v6734 = vadd.f32 %v6733, %v6691
    %v6735 = vadd.f32 %v6734, %v6694
    %v6736 = vadd.f32 %v6735, %v6699
    %v6737 = vadd.f32 %v6736, %v6702
    %v6738 = vadd.f32 %v6737, %v6707
    %v6739 = vadd.f32 %v6738, %v6710
    %v6740 = vadd.f32 %v6739, %v6715
    %v6741 = vadd.f32 %v6740, %v6718
    %v6742 = vadd.f32 %v6741, %v6723
    %v6743 = vadd.f32 %v6742, %v6726
    %v6744 = vrot.slane %v6743, 4
    %v6745 = vadd.f32 %v6743, %v6744
    %v6746 = vrot.slane %v6745, 2
    %v6747 = vadd.f32 %v6745, %v6746
    %v6748 = vrot.slane %v6747, 1
    %v6749 = vadd.f32 %v6747, %v6748
    %v6750 = vmul.f32 %v6749, %v5787
    %v6751 = vmul.f32 %v6667, %v6667
    %v6752 = vmul.f32 %v6670, %v6670
    %v6753 = vmul.f32 %v6675, %v6675
    %v6754 = vmul.f32 %v6678, %v6678
    %v6755 = vmul.f32 %v6683, %v6683
    %v6756 = vmul.f32 %v6686, %v6686
    %v6757 = vmul.f32 %v6691, %v6691
    %v6758 = vmul.f32 %v6694, %v6694
    %v6759 = vmul.f32 %v6699, %v6699
    %v6760 = vmul.f32 %v6702, %v6702
    %v6761 = vmul.f32 %v6707, %v6707
    %v6762 = vmul.f32 %v6710, %v6710
    %v6763 = vmul.f32 %v6715, %v6715
    %v6764 = vmul.f32 %v6718, %v6718
    %v6765 = vmul.f32 %v6723, %v6723
    %v6766 = vmul.f32 %v6726, %v6726
    %v6767 = vadd.f32 %v6751, %v6752
    %v6768 = vadd.f32 %v6767, %v6753
    %v6769 = vadd.f32 %v6768, %v6754
    %v6770 = vadd.f32 %v6769, %v6755
    %v6771 = vadd.f32 %v6770, %v6756
    %v6772 = vadd.f32 %v6771, %v6757
    %v6773 = vadd.f32 %v6772, %v6758
    %v6774 = vadd.f32 %v6773, %v6759
    %v6775 = vadd.f32 %v6774, %v6760
    %v6776 = vadd.f32 %v6775, %v6761
    %v6777 = vadd.f32 %v6776, %v6762
    %v6778 = vadd.f32 %v6777, %v6763
    %v6779 = vadd.f32 %v6778, %v6764
    %v6780 = vadd.f32 %v6779, %v6765
    %v6781 = vadd.f32 %v6780, %v6766
    %v6782 = vrot.slane %v6781, 4
    %v6783 = vadd.f32 %v6781, %v6782
    %v6784 = vrot.slane %v6783, 2
    %v6785 = vadd.f32 %v6783, %v6784
    %v6786 = vrot.slane %v6785, 1
    %v6787 = vadd.f32 %v6785, %v6786
    %v6788 = vmul.f32 %v6787, %v5787
    %v6789 = vmul.f32 %v6750, %v6750
    %v6790 = vsub.f32 %v6788, %v6789
    %v6791 = vmax.f32 %v6790, 0.0
    %v6792 = vadd.f32 %v6791, 1e-05
    %v6793 = vrsqrt.pop %v6792
    %v6794 = vmul.f32 %v121, %v6793
    %v6795 = vmul.f32 %v6750, %v6794
    %v6797 = vrot.slane %v6795, 7
    %v6799 = vsub.f32 %v121, %v6797
    %v6800 = vlaneseq
    %v6801 = vshrl.u32 %v6800, 7
    %v6802 = vsub.s32 6, %v6801
    %v6803 = vrot.slane %v6794, %v6802
    %v6804 = vmul.f32 %v6667, %v6803
    %v6805 = vmul.f32 %v6670, %v6803
    %v6806 = vmul.f32 %v6675, %v6803
    %v6807 = vmul.f32 %v6678, %v6803
    %v6808 = vmul.f32 %v6683, %v6803
    %v6809 = vmul.f32 %v6686, %v6803
    %v6810 = vmul.f32 %v6691, %v6803
    %v6811 = vmul.f32 %v6694, %v6803
    %v6812 = vmul.f32 %v6699, %v6803
    %v6813 = vmul.f32 %v6702, %v6803
    %v6814 = vmul.f32 %v6707, %v6803
    %v6815 = vmul.f32 %v6710, %v6803
    %v6816 = vmul.f32 %v6715, %v6803
    %v6817 = vmul.f32 %v6718, %v6803
    %v6818 = vmul.f32 %v6723, %v6803
    %v6819 = vmul.f32 %v6726, %v6803
    %v6820 = vlaneseq
    %v6821 = vshrl.u32 %v6820, 7
    %v6822 = vsub.s32 7, %v6821
    %v6823 = vrot.slane %v6799, %v6822
    %v6824 = vadd.f32 %v6804, %v6823
    %v6825 = vadd.f32 %v6805, %v6823
    %v6826 = vadd.f32 %v6806, %v6823
    %v6827 = vadd.f32 %v6807, %v6823
    %v6828 = vadd.f32 %v6808, %v6823
    %v6829 = vadd.f32 %v6809, %v6823
    %v6830 = vadd.f32 %v6810, %v6823
    %v6831 = vadd.f32 %v6811, %v6823
    %v6832 = vadd.f32 %v6812, %v6823
    %v6833 = vadd.f32 %v6813, %v6823
    %v6834 = vadd.f32 %v6814, %v6823
    %v6835 = vadd.f32 %v6815, %v6823
    %v6836 = vadd.f32 %v6816, %v6823
    %v6837 = vadd.f32 %v6817, %v6823
    %v6838 = vadd.f32 %v6818, %v6823
    %v6839 = vadd.f32 %v6819, %v6823
    %v6840 = vadd.f32 %v6158, %v6824
    %v6841 = vadd.f32 %v6159, %v6825
    %v6842 = vadd.f32 %v6160, %v6826
    %v6843 = vadd.f32 %v6161, %v6827
    %v6844 = vadd.f32 %v6162, %v6828
    %v6845 = vadd.f32 %v6163, %v6829
    %v6846 = vadd.f32 %v6164, %v6830
    %v6847 = vadd.f32 %v6165, %v6831
    %v6848 = vadd.f32 %v6166, %v6832
    %v6849 = vadd.f32 %v6167, %v6833
    %v6850 = vadd.f32 %v6168, %v6834
    %v6851 = vadd.f32 %v6169, %v6835
    %v6852 = vadd.f32 %v6170, %v6836
    %v6853 = vadd.f32 %v6171, %v6837
    %v6854 = vadd.f32 %v6172, %v6838
    %v6855 = vadd.f32 %v6173, %v6839
    %v6856 = vmax.f32 %v6840, 0.0
    %v6857 = vmax.f32 %v6841, 0.0
    %v6858 = vmax.f32 %v6842, 0.0
    %v6859 = vmax.f32 %v6843, 0.0
    %v6860 = vmax.f32 %v6844, 0.0
    %v6861 = vmax.f32 %v6845, 0.0
    %v6862 = vmax.f32 %v6846, 0.0
    %v6863 = vmax.f32 %v6847, 0.0
    %v6864 = vmax.f32 %v6848, 0.0
    %v6865 = vmax.f32 %v6849, 0.0
    %v6866 = vmax.f32 %v6850, 0.0
    %v6867 = vmax.f32 %v6851, 0.0
    %v6868 = vmax.f32 %v6852, 0.0
    %v6869 = vmax.f32 %v6853, 0.0
    %v6870 = vmax.f32 %v6854, 0.0
    %v6871 = vmax.f32 %v6855, 0.0
    %6872 = vst [vmem:[#allocation14] sm:$0xff] %v6856
    %6873 = vst [vmem:[#allocation14 + $0x8] sm:$0xff] %v6857
    %6874 = vst [vmem:[#allocation14 + $0x10] sm:$0xff] %v6858
    %6875 = vst [vmem:[#allocation14 + $0x18] sm:$0xff] %v6859
    %6876 = vst [vmem:[#allocation14 + $0x20] sm:$0xff] %v6860
    %6877 = vst [vmem:[#allocation14 + $0x28] sm:$0xff] %v6861
    %6878 = vst [vmem:[#allocation14 + $0x30] sm:$0xff] %v6862
    %6879 = vst [vmem:[#allocation14 + $0x38] sm:$0xff] %v6863
    %6880 = vst [vmem:[#allocation14 + $0x40] sm:$0xff] %v6864
    %6881 = vst [vmem:[#allocation14 + $0x48] sm:$0xff] %v6865
    %6882 = vst [vmem:[#allocation14 + $0x50] sm:$0xff] %v6866
    %6883 = vst [vmem:[#allocation14 + $0x58] sm:$0xff] %v6867
    %6884 = vst [vmem:[#allocation14 + $0x60] sm:$0xff] %v6868
    %6885 = vst [vmem:[#allocation14 + $0x68] sm:$0xff] %v6869
    %6886 = vst [vmem:[#allocation14 + $0x70] sm:$0xff] %v6870
    %6887 = vst [vmem:[#allocation14 + $0x78] sm:$0xff] %v6871
    // Predicated region
    $region58: #{tpu_custom_call.1} parent=1 // pred_check
      _
    $region59: #{tpu_custom_call.1} parent=1 // pred_check_branch
      %6889 = sbr.rel (0) target = $region61
    $region60: #{tpu_custom_call.1} parent=1 // pred_region
      %s6891 = ssub.s32 2048, 2048
      %6892 = vsyncadd [#allocation4], %s6891
      %s6893 = sshll.u32 [#allocation14], 4
      %s6894 = int_to_ptr.vmem [resolvable:$true] %s6893
      %6899 = dma.vmem_to_hbm [thread:$0]  %s6894, 2048, %s7, [#allocation4], 128, 128, 8
    $region61: #{tpu_custom_call.1} parent=1 // pred_fallthru
      _
    // Predicated region
    $region62: #{tpu_custom_call.1} parent=1 // pred_check
      _
    $region63: #{tpu_custom_call.1} parent=1 // pred_check_branch
      %6901 = sbr.rel (0) target = $region65
    $region64: #{tpu_custom_call.1} parent=1 // pred_region
      %6902 = dma.done [#allocation4], 2048
    $region65: #{tpu_custom_call.1} parent=1 // pred_fallthru
      _
    %6903 = vsyncpa [#allocation3], 1
    %6904 = vsyncpa [#allocation6], 1
    %6905 = vsyncpa [#allocation9], 1
    %6906 = vsyncpa [#allocation12], 1
    %6907 = vsyncpa [#allocation4], 1

</llo_original>
